<compile_context>
chip_gen: v7x
topology: tpu7x:2x2x1
jax: 0.10.0
libtpu: 0.0.40
codegen_flags: <defaults>
</compile_context>

<pallas_src>
import jax
import jax.numpy as jnp
from jax.experimental import pallas as pl
from jax.experimental.pallas import tpu as pltpu

EPS = 1e-5        # PyTorch BatchNorm2d default eps
LANE = 128        # lane width -> channel padding granularity


def _round_up(x, m):
    return ((x + m - 1) // m) * m


# ---------------------------------------------------------------------------
# Generation-aware VMEM sizing
# ---------------------------------------------------------------------------
def _vmem_capacity_bytes():
    try:
        info = pltpu.get_tpu_info()
        cap = int(getattr(info, "vmem_capacity_bytes", 0) or 0)
        if cap > 0:
            return cap
    except Exception:
        pass
    return 64 * 1024 * 1024          # v7x-safe fallback


def _vmem_limit_bytes():
    # ~0.75x physical VMEM: ~96 MiB on v5e/v6e (128 MiB parts), ~48 MiB on v7x.
    return int(min(_vmem_capacity_bytes() * 3 // 4, 100 * 1024 * 1024))


def _conv_budget_bytes():
    return int(_vmem_limit_bytes() * 0.85)


# ---------------------------------------------------------------------------
# Tile sizing
# ---------------------------------------------------------------------------
def _pick_tile_h(H, W, cin_p, cout_p, budget):
    """Largest TILE_H dividing H whose conv working set fits `budget` bytes."""
    best = 1
    for th in range(1, H + 1):
        if H % th:
            continue
        thw = th * W
        need = (
            2 * (th + 2) * W * cin_p * 2          # xband (double-buffered bf16)
            + (th + 2) * (W + 2) * cin_p * 2      # activated band (bf16)
            + (th + 2) * W * cin_p * 4            # f32 affine temporary
            + 2 * thw * 3 * cin_p * 2             # ky patch (bf16, x2 slack)
            + thw * cout_p * 4                    # f32 accumulator
            + 2 * thw * cout_p * 2                # y output (double-buffered)
            + 2 * 9 * cin_p * cout_p * 2          # resident weights (x2 buffers)
            + (1 << 20)                           # misc headroom
        )
        if need <= budget:
            best = th
    return best


def _pick_tile_rows(rows, c, budget):
    """Row tile for the elementwise BN+ReLU pass.  Returns (tile_r, padded_rows)."""
    per_row = c * 12                               # bf16 in/out (x2 bufs) + f32 temps
    cap = max(8, min(rows, budget // per_row))
    cap = (cap // 8) * 8
    best = 0
    for tr in range(8, cap + 1, 8):
        if rows % tr == 0:
            best = tr
    if best >= min(512, rows):                     # good divisor (or whole small array)
        return best, rows
    tr = max(8, min(cap, 1024))                    # pad to a multiple of tr instead
    return tr, _round_up(rows, tr)


# ---------------------------------------------------------------------------
# Fused (prev-layer BN+ReLU) -> 3x3 conv -> per-tile BN stats kernel
# ---------------------------------------------------------------------------
def _make_conv_kernel(tile_h, W, T, apply_act):
    """Conv kernel specialized for (tile_h, W, T, apply_act).

    Refs:
      x_hbm     : (N, H, W, Cin_p) bf16, raw HBM (previous layer's *pre-BN* conv
                  output, or the network input for the first layer)
      w_ref     : (3, 3*Cin_p, Cout_p) bf16, (ky, kx*Cin_p + ci, co)
      scale_ref : (1, Cin_p) f32  previous layer's BN scale   (unused if !apply_act)
      shift_ref : (1, Cin_p) f32  previous layer's BN shift
      y_ref     : (1, 1, tile_h*W, Cout_p) bf16 raw conv output block
      sum_ref   : (1, 1, 1, Cout_p) f32 per-tile sum of the conv output
      sq_ref    : (1, 1, 1, Cout_p) f32 per-tile sum of squares
      xband     : (2, tile_h+2, W, Cin_p) bf16 double-buffered raw input rows
      aband     : (tile_h+2, W+2, Cin_p) bf16 activated, zero-halo band
      sem       : DMA semaphores (2 slots x {main, top-halo, bottom-halo})
    """
    thw = tile_h * W

    def kernel(x_hbm, w_ref, scale_ref, shift_ref,
               y_ref, sum_ref, sq_ref, xband, aband, sem):
        n = pl.program_id(0)
        t = pl.program_id(1)
        cin = xband.shape[3]
        cout = y_ref.shape[3]
        slot = t % 2

        # --- band DMA helpers (conditions are a function of the band index only,
        #     so starts (possibly issued one step earlier) and waits always match).
        def main_copy(bt, bslot):
            return pltpu.make_async_copy(
                x_hbm.at[n, pl.ds(bt * tile_h, tile_h)],
                xband.at[bslot, pl.ds(1, tile_h)],
                sem.at[bslot, 0])

        def top_copy(bt, bslot):
            return pltpu.make_async_copy(
                x_hbm.at[n, bt * tile_h - 1], xband.at[bslot, 0],
                sem.at[bslot, 1])

        def bot_copy(bt, bslot):
            return pltpu.make_async_copy(
                x_hbm.at[n, (bt + 1) * tile_h], xband.at[bslot, tile_h + 1],
                sem.at[bslot, 2])

        def start_band(bt, bslot):
            main_copy(bt, bslot).start()

            @pl.when(bt > 0)
            def _():
                top_copy(bt, bslot).start()

            @pl.when(bt < T - 1)
            def _():
                bot_copy(bt, bslot).start()

        def wait_band(bt, bslot):
            main_copy(bt, bslot).wait()

            @pl.when(bt > 0)
            def _():
                top_copy(bt, bslot).wait()

            @pl.when(bt < T - 1)
            def _():
                bot_copy(bt, bslot).wait()

        # Band 0 of each image was not prefetched: fetch it now.
        @pl.when(t == 0)
        def _():
            start_band(t, slot)

        # Prefetch the next band into the other slot (overlaps wait + compute).
        @pl.when(t + 1 < T)
        def _():
            start_band(t + 1, (t + 1) % 2)

        wait_band(t, slot)

        # --- fused BatchNorm(train) + ReLU of the previous layer (f32 math,
        #     bf16 only right before the MXU) ---
        raw = xband[slot]                                   # (tile_h+2, W, Cin_p)
        if apply_act:
            act = jnp.maximum(
                raw.astype(jnp.float32) * scale_ref[...] + shift_ref[...],
                0.0).astype(jnp.bfloat16)
        else:                                               # first layer: raw input
            act = raw
        aband[:, 1:W + 1, :] = act
        zero_col = jnp.zeros((tile_h + 2, 1, cin), jnp.bfloat16)
        aband[:, 0:1, :] = zero_col                          # left spatial padding
        aband[:, W + 1:W + 2, :] = zero_col                  # right spatial padding

        @pl.when(t == 0)                                     # image top padding row
        def _():
            aband[0, :, :] = jnp.zeros((W + 2, cin), jnp.bfloat16)

        @pl.when(t == T - 1)                                 # image bottom padding row
        def _():
            aband[tile_h + 1, :, :] = jnp.zeros((W + 2, cin), jnp.bfloat16)

        # --- 3x3 conv as 3 MXU dots with K = 3*Cin_p (kx folded into K) ---
        acc = jnp.zeros((thw, cout), jnp.float32)
        for ky in range(3):
            patch = jnp.concatenate(
                [aband[ky:ky + tile_h, 0:W, :],
                 aband[ky:ky + tile_h, 1:W + 1, :],
                 aband[ky:ky + tile_h, 2:W + 2, :]], axis=-1)
            acc = acc + jnp.dot(patch.reshape(thw, 3 * cin), w_ref[ky],
                                preferred_element_type=jnp.float32)

        y_ref[0, 0] = acc.astype(y_ref.dtype)
        # Per-tile partial BN statistics of THIS layer's conv output (after the
        # last dot, keeping the accumulate chain uninterrupted).
        sum_ref[0, 0] = jnp.sum(acc, axis=0, keepdims=True)
        sq_ref[0, 0] = jnp.sum(acc * acc, axis=0, keepdims=True)

    return kernel


# ---------------------------------------------------------------------------
# Final-layer BN + ReLU elementwise kernel
# ---------------------------------------------------------------------------
def _bn_relu_kernel(y_ref, scale_ref, shift_ref, o_ref):
    # y: (TILE_R, C) bf16; scale/shift: (1, C) f32.  f32 math (v5e-safe).
    y = y_ref[...].astype(jnp.float32)
    o_ref[...] = jnp.maximum(
        y * scale_ref[...] + shift_ref[...], 0.0).astype(o_ref.dtype)


def _apply_bn_relu(y, scale, shift):
    """y: (N, H, W, C) bf16 raw conv output.  Returns ReLU(BN(y)) in bf16."""
    N, H, W, C = y.shape
    rows = N * H * W
    tile_r, rows_p = _pick_tile_rows(rows, C, _conv_budget_bytes())
    y_flat = y.reshape(rows, C)
    if rows_p != rows:
        y_flat = jnp.pad(y_flat, ((0, rows_p - rows), (0, 0)))
    out = pl.pallas_call(
        _bn_relu_kernel,
        out_shape=jax.ShapeDtypeStruct((rows_p, C), jnp.bfloat16),
        grid=(rows_p // tile_r,),
        in_specs=[
            pl.BlockSpec((tile_r, C), lambda r: (r, 0)),
            pl.BlockSpec((1, C), lambda r: (0, 0)),
            pl.BlockSpec((1, C), lambda r: (0, 0)),
        ],
        out_specs=pl.BlockSpec((tile_r, C), lambda r: (r, 0)),
        compiler_params=pltpu.CompilerParams(
            dimension_semantics=("parallel",),
            vmem_limit_bytes=_vmem_limit_bytes()),
    )(y_flat, scale, shift)
    if rows_p != rows:
        out = out[:rows]
    return out.reshape(N, H, W, C)


# ---------------------------------------------------------------------------
# One layer: (fused prev BN+ReLU) -> conv3x3 -> batch statistics
# ---------------------------------------------------------------------------
def _conv_stats_layer(x, scale_in, shift_in, w_pt, gamma, beta, apply_act):
    """x: (N, H, W, Cin_p) bf16 raw activation (pre-BN of the previous layer, or
    the network input when apply_act=False).  Returns (raw conv output
    (N, H, W, Cout_p) bf16, BN scale (1, Cout_p) f32, BN shift (1, Cout_p) f32)."""
    N, H, W, cin_p = x.shape
    cout, cin = w_pt.shape[0], w_pt.shape[1]
    cout_p = _round_up(cout, LANE)

    # Weights: OIHW -> (ky, kx*Cin_p + ci, co), zero-padded channels, bf16.
    w_k = jnp.transpose(w_pt, (2, 3, 1, 0))                          # (3,3,cin,cout)
    w_k = jnp.pad(w_k, ((0, 0), (0, 0), (0, cin_p - cin), (0, cout_p - cout)))
    w_k = w_k.reshape(3, 3 * cin_p, cout_p).astype(jnp.bfloat16)
    gamma_p = jnp.pad(gamma, (0, cout_p - cout)).astype(jnp.float32)
    beta_p = jnp.pad(beta, (0, cout_p - cout)).astype(jnp.float32)

    tile_h = _pick_tile_h(H, W, cin_p, cout_p, _conv_budget_bytes())
    T = H // tile_h
    thw = tile_h * W

    kernel = _make_conv_kernel(tile_h, W, T, apply_act)

    y, s_p, sq_p = pl.pallas_call(
        kernel,
        out_shape=(
            jax.ShapeDtypeStruct((N, T, thw, cout_p), jnp.bfloat16),
            jax.ShapeDtypeStruct((N, T, 1, cout_p), jnp.float32),
            jax.ShapeDtypeStruct((N, T, 1, cout_p), jnp.float32),
        ),
        grid=(N, T),
        in_specs=[
            pl.BlockSpec(memory_space=pl.ANY),                           # activation (HBM)
            pl.BlockSpec((3, 3 * cin_p, cout_p), lambda n, t: (0, 0, 0)),  # weights
            pl.BlockSpec((1, cin_p), lambda n, t: (0, 0)),               # prev BN scale
            pl.BlockSpec((1, cin_p), lambda n, t: (0, 0)),               # prev BN shift
        ],
        out_specs=(
            pl.BlockSpec((1, 1, thw, cout_p), lambda n, t: (n, t, 0, 0)),
            pl.BlockSpec((1, 1, 1, cout_p), lambda n, t: (n, t, 0, 0)),
            pl.BlockSpec((1, 1, 1, cout_p), lambda n, t: (n, t, 0, 0)),
        ),
        scratch_shapes=[
            pltpu.VMEM((2, tile_h + 2, W, cin_p), jnp.bfloat16),  # double-buffered band
            pltpu.VMEM((tile_h + 2, W + 2, cin_p), jnp.bfloat16),  # activated halo band
            pltpu.SemaphoreType.DMA((2, 3)),
        ],
        compiler_params=pltpu.CompilerParams(
            # T must be "arbitrary": the cross-step DMA prefetch relies on the
            # in-order band sequence per core.  N is sharded across TCs (v7x).
            dimension_semantics=("parallel", "arbitrary"),
            vmem_limit_bytes=_vmem_limit_bytes()),
    )(x, w_k, scale_in, shift_in)

    # Training-mode BN statistics from the fused per-tile partials (f32).
    # The conv bias cancels exactly under batch-mean subtraction, so it is
    # folded away: (y + b - E[y + b]) * g/std + beta == y*scale + shift.
    cnt = float(N * H * W)
    s = jnp.sum(s_p[:, :, 0, :], axis=(0, 1))
    sq = jnp.sum(sq_p[:, :, 0, :], axis=(0, 1))
    mean = s / cnt
    var = jnp.maximum(sq / cnt - mean * mean, 0.0)    # biased variance (PyTorch BN)
    inv = gamma_p / jnp.sqrt(var + EPS)
    scale_out = inv.reshape(1, cout_p)
    shift_out = (beta_p - mean * inv).reshape(1, cout_p)

    return y.reshape(N, H, W, cout_p), scale_out, shift_out


# ---------------------------------------------------------------------------
# SegNetEnc: parameters + forward
# ---------------------------------------------------------------------------
def init_segnet_enc_params(key, in_channels, out_channels, num_layers):
    chans = [(in_channels, in_channels // 2)]
    chans += [(in_channels // 2, in_channels // 2)] * num_layers
    chans += [(in_channels // 2, out_channels)]
    params = []
    for ci, co in chans:
        key, k1, k2, k3, k4 = jax.random.split(key, 5)
        w = jax.random.normal(k1, (co, ci, 3, 3), jnp.float32) * 0.2     # Conv2d weight
        b = jax.random.normal(k2, (co,), jnp.float32) * 0.1              # Conv2d bias
        gamma = 1.0 + 0.1 * jax.random.normal(k3, (co,), jnp.float32)    # BN weight
        beta = 0.1 * jax.random.normal(k4, (co,), jnp.float32)           # BN bias
        params.append((w, b, gamma, beta))
    return params


@jax.jit
def segnet_enc_forward(x_nchw, params):
    N, C, H, W = x_nchw.shape
    cin_p = _round_up(C, LANE)
    x = jnp.transpose(x_nchw, (0, 2, 3, 1)).astype(jnp.float32)          # NCHW -> NHWC
    x = jnp.pad(x, ((0, 0), (0, 0), (0, 0), (0, cin_p - C))).astype(jnp.bfloat16)

    scale = jnp.ones((1, cin_p), jnp.float32)       # identity "previous BN"
    shift = jnp.zeros((1, cin_p), jnp.float32)
    apply_act = False                               # no ReLU on the network input

    for (w, b, gamma, beta) in params:
        # `b` is intentionally unused: training-mode BN cancels the conv bias.
        x, scale, shift = _conv_stats_layer(x, scale, shift, w, gamma, beta, apply_act)
        apply_act = True

    # Last layer's BN + ReLU has no following conv to fuse into.
    x = _apply_bn_relu(x, scale, shift)

    cout = params[-1][0].shape[0]
    out = x[..., :cout].astype(jnp.float32)
    return jnp.transpose(out, (0, 3, 1, 2))                              # back to NCHW


# pure-JAX f32 reference (semantics of the PyTorch module, training-mode BN)
def ref_forward(x_nchw, params):
    x = x_nchw.astype(jnp.float32)
    for (w, b, gamma, beta) in params:
        y = jax.lax.conv_general_dilated(
            x, w, window_strides=(1, 1), padding="SAME",
            dimension_numbers=("NCHW", "OIHW", "NCHW")) + b[None, :, None, None]
        mean = y.mean(axis=(0, 2, 3), keepdims=True)
        var = ((y - mean) ** 2).mean(axis=(0, 2, 3), keepdims=True)
        y = (y - mean) / jnp.sqrt(var + EPS) * gamma[None, :, None, None] \
            + beta[None, :, None, None]
        x = jnp.maximum(y, 0.0)
    return x


if __name__ == "__main__":
    key = jax.random.PRNGKey(0)
    kx, kp = jax.random.split(key)

    in_channels, out_channels, num_layers = 4, 8, 1
    x = jax.random.normal(kx, (2, in_channels, 16, 16), jnp.float32)
    params = init_segnet_enc_params(kp, in_channels, out_channels, num_layers)

    out = segnet_enc_forward(x, params)
    out = jax.block_until_ready(out)

    ref = ref_forward(x, params)
    assert out.shape == ref.shape == (2, out_channels, 16, 16)
    max_err = float(jnp.max(jnp.abs(out - ref)))
    # bf16 activations/weights on the MXU vs a pure-f32 reference -> bf16 tolerance.
    assert jnp.allclose(out, ref, rtol=3e-2, atol=3e-2), f"max abs err {max_err}"

    print("KERNEL_OK")
</pallas_src>

<mosaic_0001>
module attributes {stable_mosaic.version = 11 : i64} {
  func.func @kernel(%arg0: i32, %arg1: i32, %arg2: memref<2x16x16x128xbf16, #tpu.memory_space<any>>, %arg3: memref<3x384x128xbf16, #tpu.memory_space<vmem>>, %arg4: memref<1x128xf32, #tpu.memory_space<vmem>>, %arg5: memref<1x128xf32, #tpu.memory_space<vmem>>, %arg6: memref<1x1x256x128xbf16, #tpu.memory_space<vmem>>, %arg7: memref<1x1x1x128xf32, #tpu.memory_space<vmem>>, %arg8: memref<1x1x1x128xf32, #tpu.memory_space<vmem>>, %arg9: memref<2x18x16x128xbf16, #tpu.memory_space<vmem>>, %arg10: memref<18x18x128xbf16, #tpu.memory_space<vmem>>, %arg11: memref<2x3x!tpu.dma_semaphore, #tpu.memory_space<semaphore_mem>>) attributes {dimension_semantics = [#tpu.dimension_semantics<parallel>, #tpu.dimension_semantics<arbitrary>], iteration_bounds = array<i64: 2, 1>, scalar_prefetch = 0 : i64, scratch_operands = 3 : i64, tpu.core_type = #tpu.core_type<tc>, window_params = [{}, {pipeline_mode = #tpu.pipeline_mode<synchronous>, transform_indices = @transform_1, window_bounds = array<i64: 3, 384, 128>}, {pipeline_mode = #tpu.pipeline_mode<synchronous>, transform_indices = @transform_2, window_bounds = array<i64: 1, 128>}, {pipeline_mode = #tpu.pipeline_mode<synchronous>, transform_indices = @transform_3, window_bounds = array<i64: 1, 128>}, {transform_indices = @transform_4, window_bounds = array<i64: 1, 1, 256, 128>}, {transform_indices = @transform_5, window_bounds = array<i64: 1, 1, 1, 128>}, {transform_indices = @transform_6, window_bounds = array<i64: 1, 1, 1, 128>}]} {
    %c2_i32 = arith.constant 2 : i32
    %c0_i32 = arith.constant 0 : i32
    %0 = arith.cmpi eq, %c2_i32, %c0_i32 : i32
    %c1_i32 = arith.constant 1 : i32
    %1 = arith.select %0, %c1_i32, %c2_i32 : i32
    %2 = arith.remsi %arg1, %1 : i32
    %c0_i32_0 = arith.constant 0 : i32
    %3 = arith.cmpi ne, %2, %c0_i32_0 : i32
    %c0_i32_1 = arith.constant 0 : i32
    %4 = arith.cmpi slt, %2, %c0_i32_1 : i32
    %c0_i32_2 = arith.constant 0 : i32
    %5 = arith.cmpi slt, %1, %c0_i32_2 : i32
    %6 = arith.xori %4, %5 : i1
    %7 = arith.andi %6, %3 : i1
    %8 = arith.addi %2, %1 : i32
    %9 = arith.select %7, %8, %2 : i32
    %c0_i32_3 = arith.constant 0 : i32
    %10 = arith.cmpi eq, %arg1, %c0_i32_3 : i32
    %11 = arith.extui %10 : i1 to i32
    %c0_i32_4 = arith.constant 0 : i32
    %12 = arith.cmpi ne, %11, %c0_i32_4 : i32
    scf.if %12 {
      %c16_i32_84 = arith.constant 16 : i32
      %86 = arith.muli %arg1, %c16_i32_84 : i32
      %c0_i32_85 = arith.constant 0 : i32
      %c0_i32_86 = arith.constant 0 : i32
      %c0_i32_87 = arith.constant 0 : i32
      %87 = tpu.memref_slice %arg2[%arg0, %86, %c0_i32_86, %c0_i32_87] : memref<2x16x16x128xbf16, #tpu.memory_space<any>> -> memref<1x16x16x128xbf16, #tpu.memory_space<any>>
      %88 = tpu.memref_squeeze %87 : memref<1x16x16x128xbf16, #tpu.memory_space<any>> -> memref<16x16x128xbf16, #tpu.memory_space<any>>
      %c1_i32_88 = arith.constant 1 : i32
      %c0_i32_89 = arith.constant 0 : i32
      %c0_i32_90 = arith.constant 0 : i32
      %89 = tpu.memref_slice %arg9[%9, %c1_i32_88, %c0_i32_89, %c0_i32_90] : memref<2x18x16x128xbf16, #tpu.memory_space<vmem>> -> memref<1x16x16x128xbf16, #tpu.memory_space<vmem>>
      %90 = tpu.memref_squeeze %89 : memref<1x16x16x128xbf16, #tpu.memory_space<vmem>> -> memref<16x16x128xbf16, #tpu.memory_space<vmem>>
      %91 = tpu.memref_slice %arg11[%9, %c0_i32_85] : memref<2x3x!tpu.dma_semaphore, #tpu.memory_space<semaphore_mem>> -> memref<1x1x!tpu.dma_semaphore, #tpu.memory_space<semaphore_mem>>
      %92 = tpu.memref_squeeze %91 : memref<1x1x!tpu.dma_semaphore, #tpu.memory_space<semaphore_mem>> -> memref<!tpu.dma_semaphore, #tpu.memory_space<semaphore_mem>>
      tpu.enqueue_dma source(%88 : memref<16x16x128xbf16, #tpu.memory_space<any>>) target(%90 : memref<16x16x128xbf16, #tpu.memory_space<vmem>>) target_semaphore(%92 : memref<!tpu.dma_semaphore, #tpu.memory_space<semaphore_mem>>)
      %c0_i32_91 = arith.constant 0 : i32
      %93 = arith.cmpi sgt, %arg1, %c0_i32_91 : i32
      %94 = arith.extui %93 : i1 to i32
      %c0_i32_92 = arith.constant 0 : i32
      %95 = arith.cmpi ne, %94, %c0_i32_92 : i32
      scf.if %95 {
        %c16_i32_95 = arith.constant 16 : i32
        %99 = arith.muli %arg1, %c16_i32_95 : i32
        %c1_i32_96 = arith.constant 1 : i32
        %100 = arith.subi %99, %c1_i32_96 : i32
        %c0_i32_97 = arith.constant 0 : i32
        %c1_i32_98 = arith.constant 1 : i32
        %c0_i32_99 = arith.constant 0 : i32
        %c0_i32_100 = arith.constant 0 : i32
        %101 = tpu.memref_slice %arg2[%arg0, %100, %c0_i32_99, %c0_i32_100] : memref<2x16x16x128xbf16, #tpu.memory_space<any>> -> memref<1x1x16x128xbf16, #tpu.memory_space<any>>
        %102 = tpu.memref_squeeze %101 : memref<1x1x16x128xbf16, #tpu.memory_space<any>> -> memref<16x128xbf16, #tpu.memory_space<any>>
        %c0_i32_101 = arith.constant 0 : i32
        %c0_i32_102 = arith.constant 0 : i32
        %103 = tpu.memref_slice %arg9[%9, %c0_i32_97, %c0_i32_101, %c0_i32_102] : memref<2x18x16x128xbf16, #tpu.memory_space<vmem>> -> memref<1x1x16x128xbf16, #tpu.memory_space<vmem>>
        %104 = tpu.memref_squeeze %103 : memref<1x1x16x128xbf16, #tpu.memory_space<vmem>> -> memref<16x128xbf16, #tpu.memory_space<vmem>>
        %105 = tpu.memref_slice %arg11[%9, %c1_i32_98] : memref<2x3x!tpu.dma_semaphore, #tpu.memory_space<semaphore_mem>> -> memref<1x1x!tpu.dma_semaphore, #tpu.memory_space<semaphore_mem>>
        %106 = tpu.memref_squeeze %105 : memref<1x1x!tpu.dma_semaphore, #tpu.memory_space<semaphore_mem>> -> memref<!tpu.dma_semaphore, #tpu.memory_space<semaphore_mem>>
        tpu.enqueue_dma source(%102 : memref<16x128xbf16, #tpu.memory_space<any>>) target(%104 : memref<16x128xbf16, #tpu.memory_space<vmem>>) target_semaphore(%106 : memref<!tpu.dma_semaphore, #tpu.memory_space<semaphore_mem>>)
      } else {
      }
      %c0_i32_93 = arith.constant 0 : i32
      %96 = arith.cmpi slt, %arg1, %c0_i32_93 : i32
      %97 = arith.extui %96 : i1 to i32
      %c0_i32_94 = arith.constant 0 : i32
      %98 = arith.cmpi ne, %97, %c0_i32_94 : i32
      scf.if %98 {
        %c1_i32_95 = arith.constant 1 : i32
        %99 = arith.addi %arg1, %c1_i32_95 : i32
        %c16_i32_96 = arith.constant 16 : i32
        %100 = arith.muli %99, %c16_i32_96 : i32
        %c17_i32 = arith.constant 17 : i32
        %c2_i32_97 = arith.constant 2 : i32
        %c0_i32_98 = arith.constant 0 : i32
        %c0_i32_99 = arith.constant 0 : i32
        %101 = tpu.memref_slice %arg2[%arg0, %100, %c0_i32_98, %c0_i32_99] : memref<2x16x16x128xbf16, #tpu.memory_space<any>> -> memref<1x1x16x128xbf16, #tpu.memory_space<any>>
        %102 = tpu.memref_squeeze %101 : memref<1x1x16x128xbf16, #tpu.memory_space<any>> -> memref<16x128xbf16, #tpu.memory_space<any>>
        %c0_i32_100 = arith.constant 0 : i32
        %c0_i32_101 = arith.constant 0 : i32
        %103 = tpu.memref_slice %arg9[%9, %c17_i32, %c0_i32_100, %c0_i32_101] : memref<2x18x16x128xbf16, #tpu.memory_space<vmem>> -> memref<1x1x16x128xbf16, #tpu.memory_space<vmem>>
        %104 = tpu.memref_squeeze %103 : memref<1x1x16x128xbf16, #tpu.memory_space<vmem>> -> memref<16x128xbf16, #tpu.memory_space<vmem>>
        %105 = tpu.memref_slice %arg11[%9, %c2_i32_97] : memref<2x3x!tpu.dma_semaphore, #tpu.memory_space<semaphore_mem>> -> memref<1x1x!tpu.dma_semaphore, #tpu.memory_space<semaphore_mem>>
        %106 = tpu.memref_squeeze %105 : memref<1x1x!tpu.dma_semaphore, #tpu.memory_space<semaphore_mem>> -> memref<!tpu.dma_semaphore, #tpu.memory_space<semaphore_mem>>
        tpu.enqueue_dma source(%102 : memref<16x128xbf16, #tpu.memory_space<any>>) target(%104 : memref<16x128xbf16, #tpu.memory_space<vmem>>) target_semaphore(%106 : memref<!tpu.dma_semaphore, #tpu.memory_space<semaphore_mem>>)
      } else {
      }
    } else {
    }
    %c1_i32_5 = arith.constant 1 : i32
    %13 = arith.addi %arg1, %c1_i32_5 : i32
    %c1_i32_6 = arith.constant 1 : i32
    %14 = arith.cmpi slt, %13, %c1_i32_6 : i32
    %15 = arith.extui %14 : i1 to i32
    %c0_i32_7 = arith.constant 0 : i32
    %16 = arith.cmpi ne, %15, %c0_i32_7 : i32
    scf.if %16 {
      %c1_i32_84 = arith.constant 1 : i32
      %86 = arith.addi %arg1, %c1_i32_84 : i32
      %c1_i32_85 = arith.constant 1 : i32
      %87 = arith.addi %arg1, %c1_i32_85 : i32
      %c2_i32_86 = arith.constant 2 : i32
      %c0_i32_87 = arith.constant 0 : i32
      %88 = arith.cmpi eq, %c2_i32_86, %c0_i32_87 : i32
      %c1_i32_88 = arith.constant 1 : i32
      %89 = arith.select %88, %c1_i32_88, %c2_i32_86 : i32
      %90 = arith.remsi %87, %89 : i32
      %c0_i32_89 = arith.constant 0 : i32
      %91 = arith.cmpi ne, %90, %c0_i32_89 : i32
      %c0_i32_90 = arith.constant 0 : i32
      %92 = arith.cmpi slt, %90, %c0_i32_90 : i32
      %c0_i32_91 = arith.constant 0 : i32
      %93 = arith.cmpi slt, %89, %c0_i32_91 : i32
      %94 = arith.xori %92, %93 : i1
      %95 = arith.andi %94, %91 : i1
      %96 = arith.addi %90, %89 : i32
      %97 = arith.select %95, %96, %90 : i32
      %c16_i32_92 = arith.constant 16 : i32
      %98 = arith.muli %86, %c16_i32_92 : i32
      %c0_i32_93 = arith.constant 0 : i32
      %c0_i32_94 = arith.constant 0 : i32
      %c0_i32_95 = arith.constant 0 : i32
      %99 = tpu.memref_slice %arg2[%arg0, %98, %c0_i32_94, %c0_i32_95] : memref<2x16x16x128xbf16, #tpu.memory_space<any>> -> memref<1x16x16x128xbf16, #tpu.memory_space<any>>
      %100 = tpu.memref_squeeze %99 : memref<1x16x16x128xbf16, #tpu.memory_space<any>> -> memref<16x16x128xbf16, #tpu.memory_space<any>>
      %c1_i32_96 = arith.constant 1 : i32
      %c0_i32_97 = arith.constant 0 : i32
      %c0_i32_98 = arith.constant 0 : i32
      %101 = tpu.memref_slice %arg9[%97, %c1_i32_96, %c0_i32_97, %c0_i32_98] : memref<2x18x16x128xbf16, #tpu.memory_space<vmem>> -> memref<1x16x16x128xbf16, #tpu.memory_space<vmem>>
      %102 = tpu.memref_squeeze %101 : memref<1x16x16x128xbf16, #tpu.memory_space<vmem>> -> memref<16x16x128xbf16, #tpu.memory_space<vmem>>
      %103 = tpu.memref_slice %arg11[%97, %c0_i32_93] : memref<2x3x!tpu.dma_semaphore, #tpu.memory_space<semaphore_mem>> -> memref<1x1x!tpu.dma_semaphore, #tpu.memory_space<semaphore_mem>>
      %104 = tpu.memref_squeeze %103 : memref<1x1x!tpu.dma_semaphore, #tpu.memory_space<semaphore_mem>> -> memref<!tpu.dma_semaphore, #tpu.memory_space<semaphore_mem>>
      tpu.enqueue_dma source(%100 : memref<16x16x128xbf16, #tpu.memory_space<any>>) target(%102 : memref<16x16x128xbf16, #tpu.memory_space<vmem>>) target_semaphore(%104 : memref<!tpu.dma_semaphore, #tpu.memory_space<semaphore_mem>>)
      %c0_i32_99 = arith.constant 0 : i32
      %105 = arith.cmpi sgt, %86, %c0_i32_99 : i32
      %106 = arith.extui %105 : i1 to i32
      %c0_i32_100 = arith.constant 0 : i32
      %107 = arith.cmpi ne, %106, %c0_i32_100 : i32
      scf.if %107 {
        %c16_i32_103 = arith.constant 16 : i32
        %111 = arith.muli %86, %c16_i32_103 : i32
        %c1_i32_104 = arith.constant 1 : i32
        %112 = arith.subi %111, %c1_i32_104 : i32
        %c0_i32_105 = arith.constant 0 : i32
        %c1_i32_106 = arith.constant 1 : i32
        %c0_i32_107 = arith.constant 0 : i32
        %c0_i32_108 = arith.constant 0 : i32
        %113 = tpu.memref_slice %arg2[%arg0, %112, %c0_i32_107, %c0_i32_108] : memref<2x16x16x128xbf16, #tpu.memory_space<any>> -> memref<1x1x16x128xbf16, #tpu.memory_space<any>>
        %114 = tpu.memref_squeeze %113 : memref<1x1x16x128xbf16, #tpu.memory_space<any>> -> memref<16x128xbf16, #tpu.memory_space<any>>
        %c0_i32_109 = arith.constant 0 : i32
        %c0_i32_110 = arith.constant 0 : i32
        %115 = tpu.memref_slice %arg9[%97, %c0_i32_105, %c0_i32_109, %c0_i32_110] : memref<2x18x16x128xbf16, #tpu.memory_space<vmem>> -> memref<1x1x16x128xbf16, #tpu.memory_space<vmem>>
        %116 = tpu.memref_squeeze %115 : memref<1x1x16x128xbf16, #tpu.memory_space<vmem>> -> memref<16x128xbf16, #tpu.memory_space<vmem>>
        %117 = tpu.memref_slice %arg11[%97, %c1_i32_106] : memref<2x3x!tpu.dma_semaphore, #tpu.memory_space<semaphore_mem>> -> memref<1x1x!tpu.dma_semaphore, #tpu.memory_space<semaphore_mem>>
        %118 = tpu.memref_squeeze %117 : memref<1x1x!tpu.dma_semaphore, #tpu.memory_space<semaphore_mem>> -> memref<!tpu.dma_semaphore, #tpu.memory_space<semaphore_mem>>
        tpu.enqueue_dma source(%114 : memref<16x128xbf16, #tpu.memory_space<any>>) target(%116 : memref<16x128xbf16, #tpu.memory_space<vmem>>) target_semaphore(%118 : memref<!tpu.dma_semaphore, #tpu.memory_space<semaphore_mem>>)
      } else {
      }
      %c0_i32_101 = arith.constant 0 : i32
      %108 = arith.cmpi slt, %86, %c0_i32_101 : i32
      %109 = arith.extui %108 : i1 to i32
      %c0_i32_102 = arith.constant 0 : i32
      %110 = arith.cmpi ne, %109, %c0_i32_102 : i32
      scf.if %110 {
        %c1_i32_103 = arith.constant 1 : i32
        %111 = arith.addi %86, %c1_i32_103 : i32
        %c16_i32_104 = arith.constant 16 : i32
        %112 = arith.muli %111, %c16_i32_104 : i32
        %c17_i32 = arith.constant 17 : i32
        %c2_i32_105 = arith.constant 2 : i32
        %c0_i32_106 = arith.constant 0 : i32
        %c0_i32_107 = arith.constant 0 : i32
        %113 = tpu.memref_slice %arg2[%arg0, %112, %c0_i32_106, %c0_i32_107] : memref<2x16x16x128xbf16, #tpu.memory_space<any>> -> memref<1x1x16x128xbf16, #tpu.memory_space<any>>
        %114 = tpu.memref_squeeze %113 : memref<1x1x16x128xbf16, #tpu.memory_space<any>> -> memref<16x128xbf16, #tpu.memory_space<any>>
        %c0_i32_108 = arith.constant 0 : i32
        %c0_i32_109 = arith.constant 0 : i32
        %115 = tpu.memref_slice %arg9[%97, %c17_i32, %c0_i32_108, %c0_i32_109] : memref<2x18x16x128xbf16, #tpu.memory_space<vmem>> -> memref<1x1x16x128xbf16, #tpu.memory_space<vmem>>
        %116 = tpu.memref_squeeze %115 : memref<1x1x16x128xbf16, #tpu.memory_space<vmem>> -> memref<16x128xbf16, #tpu.memory_space<vmem>>
        %117 = tpu.memref_slice %arg11[%97, %c2_i32_105] : memref<2x3x!tpu.dma_semaphore, #tpu.memory_space<semaphore_mem>> -> memref<1x1x!tpu.dma_semaphore, #tpu.memory_space<semaphore_mem>>
        %118 = tpu.memref_squeeze %117 : memref<1x1x!tpu.dma_semaphore, #tpu.memory_space<semaphore_mem>> -> memref<!tpu.dma_semaphore, #tpu.memory_space<semaphore_mem>>
        tpu.enqueue_dma source(%114 : memref<16x128xbf16, #tpu.memory_space<any>>) target(%116 : memref<16x128xbf16, #tpu.memory_space<vmem>>) target_semaphore(%118 : memref<!tpu.dma_semaphore, #tpu.memory_space<semaphore_mem>>)
      } else {
      }
    } else {
    }
    %c16_i32 = arith.constant 16 : i32
    %17 = arith.muli %arg1, %c16_i32 : i32
    %c0_i32_8 = arith.constant 0 : i32
    %c0_i32_9 = arith.constant 0 : i32
    %c0_i32_10 = arith.constant 0 : i32
    %18 = tpu.memref_slice %arg2[%arg0, %17, %c0_i32_9, %c0_i32_10] : memref<2x16x16x128xbf16, #tpu.memory_space<any>> -> memref<1x16x16x128xbf16, #tpu.memory_space<any>>
    %19 = tpu.memref_squeeze %18 : memref<1x16x16x128xbf16, #tpu.memory_space<any>> -> memref<16x16x128xbf16, #tpu.memory_space<any>>
    %c1_i32_11 = arith.constant 1 : i32
    %c0_i32_12 = arith.constant 0 : i32
    %c0_i32_13 = arith.constant 0 : i32
    %20 = tpu.memref_slice %arg9[%9, %c1_i32_11, %c0_i32_12, %c0_i32_13] : memref<2x18x16x128xbf16, #tpu.memory_space<vmem>> -> memref<1x16x16x128xbf16, #tpu.memory_space<vmem>>
    %21 = tpu.memref_squeeze %20 : memref<1x16x16x128xbf16, #tpu.memory_space<vmem>> -> memref<16x16x128xbf16, #tpu.memory_space<vmem>>
    %22 = tpu.memref_slice %arg11[%9, %c0_i32_8] : memref<2x3x!tpu.dma_semaphore, #tpu.memory_space<semaphore_mem>> -> memref<1x1x!tpu.dma_semaphore, #tpu.memory_space<semaphore_mem>>
    %23 = tpu.memref_squeeze %22 : memref<1x1x!tpu.dma_semaphore, #tpu.memory_space<semaphore_mem>> -> memref<!tpu.dma_semaphore, #tpu.memory_space<semaphore_mem>>
    tpu.wait_dma2 semaphore(%23 : memref<!tpu.dma_semaphore, #tpu.memory_space<semaphore_mem>>) src(%19 : memref<16x16x128xbf16, #tpu.memory_space<any>>) dst(%21 : memref<16x16x128xbf16, #tpu.memory_space<vmem>>)
    %c0_i32_14 = arith.constant 0 : i32
    %24 = arith.cmpi sgt, %arg1, %c0_i32_14 : i32
    %25 = arith.extui %24 : i1 to i32
    %c0_i32_15 = arith.constant 0 : i32
    %26 = arith.cmpi ne, %25, %c0_i32_15 : i32
    scf.if %26 {
      %c16_i32_84 = arith.constant 16 : i32
      %86 = arith.muli %arg1, %c16_i32_84 : i32
      %c1_i32_85 = arith.constant 1 : i32
      %87 = arith.subi %86, %c1_i32_85 : i32
      %c0_i32_86 = arith.constant 0 : i32
      %c1_i32_87 = arith.constant 1 : i32
      %c0_i32_88 = arith.constant 0 : i32
      %c0_i32_89 = arith.constant 0 : i32
      %88 = tpu.memref_slice %arg2[%arg0, %87, %c0_i32_88, %c0_i32_89] : memref<2x16x16x128xbf16, #tpu.memory_space<any>> -> memref<1x1x16x128xbf16, #tpu.memory_space<any>>
      %89 = tpu.memref_squeeze %88 : memref<1x1x16x128xbf16, #tpu.memory_space<any>> -> memref<16x128xbf16, #tpu.memory_space<any>>
      %c0_i32_90 = arith.constant 0 : i32
      %c0_i32_91 = arith.constant 0 : i32
      %90 = tpu.memref_slice %arg9[%9, %c0_i32_86, %c0_i32_90, %c0_i32_91] : memref<2x18x16x128xbf16, #tpu.memory_space<vmem>> -> memref<1x1x16x128xbf16, #tpu.memory_space<vmem>>
      %91 = tpu.memref_squeeze %90 : memref<1x1x16x128xbf16, #tpu.memory_space<vmem>> -> memref<16x128xbf16, #tpu.memory_space<vmem>>
      %92 = tpu.memref_slice %arg11[%9, %c1_i32_87] : memref<2x3x!tpu.dma_semaphore, #tpu.memory_space<semaphore_mem>> -> memref<1x1x!tpu.dma_semaphore, #tpu.memory_space<semaphore_mem>>
      %93 = tpu.memref_squeeze %92 : memref<1x1x!tpu.dma_semaphore, #tpu.memory_space<semaphore_mem>> -> memref<!tpu.dma_semaphore, #tpu.memory_space<semaphore_mem>>
      tpu.wait_dma2 semaphore(%93 : memref<!tpu.dma_semaphore, #tpu.memory_space<semaphore_mem>>) src(%89 : memref<16x128xbf16, #tpu.memory_space<any>>) dst(%91 : memref<16x128xbf16, #tpu.memory_space<vmem>>)
    } else {
    }
    %c0_i32_16 = arith.constant 0 : i32
    %27 = arith.cmpi slt, %arg1, %c0_i32_16 : i32
    %28 = arith.extui %27 : i1 to i32
    %c0_i32_17 = arith.constant 0 : i32
    %29 = arith.cmpi ne, %28, %c0_i32_17 : i32
    scf.if %29 {
      %c1_i32_84 = arith.constant 1 : i32
      %86 = arith.addi %arg1, %c1_i32_84 : i32
      %c16_i32_85 = arith.constant 16 : i32
      %87 = arith.muli %86, %c16_i32_85 : i32
      %c17_i32 = arith.constant 17 : i32
      %c2_i32_86 = arith.constant 2 : i32
      %c0_i32_87 = arith.constant 0 : i32
      %c0_i32_88 = arith.constant 0 : i32
      %88 = tpu.memref_slice %arg2[%arg0, %87, %c0_i32_87, %c0_i32_88] : memref<2x16x16x128xbf16, #tpu.memory_space<any>> -> memref<1x1x16x128xbf16, #tpu.memory_space<any>>
      %89 = tpu.memref_squeeze %88 : memref<1x1x16x128xbf16, #tpu.memory_space<any>> -> memref<16x128xbf16, #tpu.memory_space<any>>
      %c0_i32_89 = arith.constant 0 : i32
      %c0_i32_90 = arith.constant 0 : i32
      %90 = tpu.memref_slice %arg9[%9, %c17_i32, %c0_i32_89, %c0_i32_90] : memref<2x18x16x128xbf16, #tpu.memory_space<vmem>> -> memref<1x1x16x128xbf16, #tpu.memory_space<vmem>>
      %91 = tpu.memref_squeeze %90 : memref<1x1x16x128xbf16, #tpu.memory_space<vmem>> -> memref<16x128xbf16, #tpu.memory_space<vmem>>
      %92 = tpu.memref_slice %arg11[%9, %c2_i32_86] : memref<2x3x!tpu.dma_semaphore, #tpu.memory_space<semaphore_mem>> -> memref<1x1x!tpu.dma_semaphore, #tpu.memory_space<semaphore_mem>>
      %93 = tpu.memref_squeeze %92 : memref<1x1x!tpu.dma_semaphore, #tpu.memory_space<semaphore_mem>> -> memref<!tpu.dma_semaphore, #tpu.memory_space<semaphore_mem>>
      tpu.wait_dma2 semaphore(%93 : memref<!tpu.dma_semaphore, #tpu.memory_space<semaphore_mem>>) src(%89 : memref<16x128xbf16, #tpu.memory_space<any>>) dst(%91 : memref<16x128xbf16, #tpu.memory_space<vmem>>)
    } else {
    }
    %30 = arith.index_cast %9 : i32 to index
    %c0 = arith.constant 0 : index
    %c0_18 = arith.constant 0 : index
    %c0_19 = arith.constant 0 : index
    %31 = vector.load %arg9[%30, %c0, %c0_18, %c0_19] : memref<2x18x16x128xbf16, #tpu.memory_space<vmem>>, vector<1x18x16x128xbf16>
    %32 = vector.shape_cast %31 : vector<1x18x16x128xbf16> to vector<18x16x128xbf16>
    %c0_20 = arith.constant 0 : index
    %c1 = arith.constant 1 : index
    %c0_21 = arith.constant 0 : index
    %33 = vector.load %arg10[%c0_20, %c1, %c0_21] : memref<18x18x128xbf16, #tpu.memory_space<vmem>>, vector<18x16x128xbf16>
    tpu.vector_store %arg10[%c0_20, %c1, %c0_21], %32 {strides = array<i32>} : memref<18x18x128xbf16, #tpu.memory_space<vmem>>, vector<18x16x128xbf16>,
    %cst = arith.constant 0.000000e+00 : bf16
    %34 = vector.broadcast %cst : bf16 to vector<18x1x128xbf16>
    %c0_22 = arith.constant 0 : index
    %c0_23 = arith.constant 0 : index
    %c0_24 = arith.constant 0 : index
    %35 = vector.load %arg10[%c0_22, %c0_23, %c0_24] : memref<18x18x128xbf16, #tpu.memory_space<vmem>>, vector<18x1x128xbf16>
    tpu.vector_store %arg10[%c0_22, %c0_23, %c0_24], %34 {strides = array<i32>} : memref<18x18x128xbf16, #tpu.memory_space<vmem>>, vector<18x1x128xbf16>,
    %c0_25 = arith.constant 0 : index
    %c17 = arith.constant 17 : index
    %c0_26 = arith.constant 0 : index
    %36 = vector.load %arg10[%c0_25, %c17, %c0_26] : memref<18x18x128xbf16, #tpu.memory_space<vmem>>, vector<18x1x128xbf16>
    tpu.vector_store %arg10[%c0_25, %c17, %c0_26], %34 {strides = array<i32>} : memref<18x18x128xbf16, #tpu.memory_space<vmem>>, vector<18x1x128xbf16>,
    %c0_i32_27 = arith.constant 0 : i32
    %37 = arith.cmpi eq, %arg1, %c0_i32_27 : i32
    %38 = arith.extui %37 : i1 to i32
    %c0_i32_28 = arith.constant 0 : i32
    %39 = arith.cmpi ne, %38, %c0_i32_28 : i32
    scf.if %39 {
      %cst_84 = arith.constant 0.000000e+00 : bf16
      %86 = vector.broadcast %cst_84 : bf16 to vector<18x128xbf16>
      %c0_85 = arith.constant 0 : index
      %c0_86 = arith.constant 0 : index
      %c0_87 = arith.constant 0 : index
      %87 = vector.load %arg10[%c0_85, %c0_86, %c0_87] : memref<18x18x128xbf16, #tpu.memory_space<vmem>>, vector<1x18x128xbf16>
      %88 = vector.shape_cast %87 : vector<1x18x128xbf16> to vector<18x128xbf16>
      %89 = vector.shape_cast %86 : vector<18x128xbf16> to vector<1x18x128xbf16>
      tpu.vector_store %arg10[%c0_85, %c0_86, %c0_87], %89 {strides = array<i32>} : memref<18x18x128xbf16, #tpu.memory_space<vmem>>, vector<1x18x128xbf16>,
    } else {
    }
    %c0_i32_29 = arith.constant 0 : i32
    %40 = arith.cmpi eq, %arg1, %c0_i32_29 : i32
    %41 = arith.extui %40 : i1 to i32
    %c0_i32_30 = arith.constant 0 : i32
    %42 = arith.cmpi ne, %41, %c0_i32_30 : i32
    scf.if %42 {
      %cst_84 = arith.constant 0.000000e+00 : bf16
      %86 = vector.broadcast %cst_84 : bf16 to vector<18x128xbf16>
      %c17_85 = arith.constant 17 : index
      %c0_86 = arith.constant 0 : index
      %c0_87 = arith.constant 0 : index
      %87 = vector.load %arg10[%c17_85, %c0_86, %c0_87] : memref<18x18x128xbf16, #tpu.memory_space<vmem>>, vector<1x18x128xbf16>
      %88 = vector.shape_cast %87 : vector<1x18x128xbf16> to vector<18x128xbf16>
      %89 = vector.shape_cast %86 : vector<18x128xbf16> to vector<1x18x128xbf16>
      tpu.vector_store %arg10[%c17_85, %c0_86, %c0_87], %89 {strides = array<i32>} : memref<18x18x128xbf16, #tpu.memory_space<vmem>>, vector<1x18x128xbf16>,
    } else {
    }
    %cst_31 = arith.constant 0.000000e+00 : f32
    %43 = vector.broadcast %cst_31 : f32 to vector<256x128xf32>
    %c0_32 = arith.constant 0 : index
    %c0_33 = arith.constant 0 : index
    %c0_34 = arith.constant 0 : index
    %44 = vector.load %arg10[%c0_32, %c0_33, %c0_34] : memref<18x18x128xbf16, #tpu.memory_space<vmem>>, vector<16x16x128xbf16>
    %c0_35 = arith.constant 0 : index
    %c1_36 = arith.constant 1 : index
    %c0_37 = arith.constant 0 : index
    %45 = vector.load %arg10[%c0_35, %c1_36, %c0_37] : memref<18x18x128xbf16, #tpu.memory_space<vmem>>, vector<16x16x128xbf16>
    %c0_38 = arith.constant 0 : index
    %c2 = arith.constant 2 : index
    %c0_39 = arith.constant 0 : index
    %46 = vector.load %arg10[%c0_38, %c2, %c0_39] : memref<18x18x128xbf16, #tpu.memory_space<vmem>>, vector<16x16x128xbf16>
    %47 = tpu.concatenate %44, %45, %46 in 2 : vector<16x16x128xbf16>, vector<16x16x128xbf16>, vector<16x16x128xbf16> -> vector<16x16x384xbf16>
    %48 = vector.shape_cast %47 : vector<16x16x384xbf16> to vector<256x384xbf16>
    %c0_40 = arith.constant 0 : index
    %c0_41 = arith.constant 0 : index
    %c0_42 = arith.constant 0 : index
    %49 = vector.load %arg3[%c0_40, %c0_41, %c0_42] : memref<3x384x128xbf16, #tpu.memory_space<vmem>>, vector<1x384x128xbf16>
    %50 = vector.shape_cast %49 : vector<1x384x128xbf16> to vector<384x128xbf16>
    %cst_43 = arith.constant dense<0.000000e+00> : vector<256x128xf32>
    %51 = tpu.matmul %48, %50, %cst_43 {dimension_numbers = #tpu.dot_dimension_numbers<[1], [0], [0], [1], [0, 0, 1, 1], [], []>} : vector<256x384xbf16>, vector<384x128xbf16>, vector<256x128xf32> -> vector<256x128xf32>
    %52 = arith.addf %43, %51 : vector<256x128xf32>
    %c1_44 = arith.constant 1 : index
    %c0_45 = arith.constant 0 : index
    %c0_46 = arith.constant 0 : index
    %53 = vector.load %arg10[%c1_44, %c0_45, %c0_46] : memref<18x18x128xbf16, #tpu.memory_space<vmem>>, vector<16x16x128xbf16>
    %c1_47 = arith.constant 1 : index
    %c1_48 = arith.constant 1 : index
    %c0_49 = arith.constant 0 : index
    %54 = vector.load %arg10[%c1_47, %c1_48, %c0_49] : memref<18x18x128xbf16, #tpu.memory_space<vmem>>, vector<16x16x128xbf16>
    %c1_50 = arith.constant 1 : index
    %c2_51 = arith.constant 2 : index
    %c0_52 = arith.constant 0 : index
    %55 = vector.load %arg10[%c1_50, %c2_51, %c0_52] : memref<18x18x128xbf16, #tpu.memory_space<vmem>>, vector<16x16x128xbf16>
    %56 = tpu.concatenate %53, %54, %55 in 2 : vector<16x16x128xbf16>, vector<16x16x128xbf16>, vector<16x16x128xbf16> -> vector<16x16x384xbf16>
    %57 = vector.shape_cast %56 : vector<16x16x384xbf16> to vector<256x384xbf16>
    %c1_53 = arith.constant 1 : index
    %c0_54 = arith.constant 0 : index
    %c0_55 = arith.constant 0 : index
    %58 = vector.load %arg3[%c1_53, %c0_54, %c0_55] : memref<3x384x128xbf16, #tpu.memory_space<vmem>>, vector<1x384x128xbf16>
    %59 = vector.shape_cast %58 : vector<1x384x128xbf16> to vector<384x128xbf16>
    %cst_56 = arith.constant dense<0.000000e+00> : vector<256x128xf32>
    %60 = tpu.matmul %57, %59, %cst_56 {dimension_numbers = #tpu.dot_dimension_numbers<[1], [0], [0], [1], [0, 0, 1, 1], [], []>} : vector<256x384xbf16>, vector<384x128xbf16>, vector<256x128xf32> -> vector<256x128xf32>
    %61 = arith.addf %52, %60 : vector<256x128xf32>
    %c2_57 = arith.constant 2 : index
    %c0_58 = arith.constant 0 : index
    %c0_59 = arith.constant 0 : index
    %62 = vector.load %arg10[%c2_57, %c0_58, %c0_59] : memref<18x18x128xbf16, #tpu.memory_space<vmem>>, vector<16x16x128xbf16>
    %c2_60 = arith.constant 2 : index
    %c1_61 = arith.constant 1 : index
    %c0_62 = arith.constant 0 : index
    %63 = vector.load %arg10[%c2_60, %c1_61, %c0_62] : memref<18x18x128xbf16, #tpu.memory_space<vmem>>, vector<16x16x128xbf16>
    %c2_63 = arith.constant 2 : index
    %c2_64 = arith.constant 2 : index
    %c0_65 = arith.constant 0 : index
    %64 = vector.load %arg10[%c2_63, %c2_64, %c0_65] : memref<18x18x128xbf16, #tpu.memory_space<vmem>>, vector<16x16x128xbf16>
    %65 = tpu.concatenate %62, %63, %64 in 2 : vector<16x16x128xbf16>, vector<16x16x128xbf16>, vector<16x16x128xbf16> -> vector<16x16x384xbf16>
    %66 = vector.shape_cast %65 : vector<16x16x384xbf16> to vector<256x384xbf16>
    %c2_66 = arith.constant 2 : index
    %c0_67 = arith.constant 0 : index
    %c0_68 = arith.constant 0 : index
    %67 = vector.load %arg3[%c2_66, %c0_67, %c0_68] : memref<3x384x128xbf16, #tpu.memory_space<vmem>>, vector<1x384x128xbf16>
    %68 = vector.shape_cast %67 : vector<1x384x128xbf16> to vector<384x128xbf16>
    %cst_69 = arith.constant dense<0.000000e+00> : vector<256x128xf32>
    %69 = tpu.matmul %66, %68, %cst_69 {dimension_numbers = #tpu.dot_dimension_numbers<[1], [0], [0], [1], [0, 0, 1, 1], [], []>} : vector<256x384xbf16>, vector<384x128xbf16>, vector<256x128xf32> -> vector<256x128xf32>
    %70 = arith.addf %61, %69 : vector<256x128xf32>
    %71 = arith.truncf %70 : vector<256x128xf32> to vector<256x128xbf16>
    %c0_70 = arith.constant 0 : index
    %c0_71 = arith.constant 0 : index
    %c0_72 = arith.constant 0 : index
    %c0_73 = arith.constant 0 : index
    %72 = vector.load %arg6[%c0_70, %c0_71, %c0_72, %c0_73] : memref<1x1x256x128xbf16, #tpu.memory_space<vmem>>, vector<1x1x256x128xbf16>
    %73 = vector.shape_cast %72 : vector<1x1x256x128xbf16> to vector<256x128xbf16>
    %74 = vector.shape_cast %71 : vector<256x128xbf16> to vector<1x1x256x128xbf16>
    tpu.vector_store %arg6[%c0_70, %c0_71, %c0_72, %c0_73], %74 {strides = array<i32>} : memref<1x1x256x128xbf16, #tpu.memory_space<vmem>>, vector<1x1x256x128xbf16>,
    %cst_74 = arith.constant dense<0.000000e+00> : vector<128xf32>
    %75 = vector.multi_reduction <add>, %70, %cst_74 [0] : vector<256x128xf32> to vector<128xf32>
    %76 = vector.shape_cast %75 : vector<128xf32> to vector<1x128xf32>
    %c0_75 = arith.constant 0 : index
    %c0_76 = arith.constant 0 : index
    %c0_77 = arith.constant 0 : index
    %c0_78 = arith.constant 0 : index
    %77 = vector.load %arg7[%c0_75, %c0_76, %c0_77, %c0_78] : memref<1x1x1x128xf32, #tpu.memory_space<vmem>>, vector<1x1x1x128xf32>
    %78 = vector.shape_cast %77 : vector<1x1x1x128xf32> to vector<1x128xf32>
    %79 = vector.shape_cast %76 : vector<1x128xf32> to vector<1x1x1x128xf32>
    tpu.vector_store %arg7[%c0_75, %c0_76, %c0_77, %c0_78], %79 {strides = array<i32>} : memref<1x1x1x128xf32, #tpu.memory_space<vmem>>, vector<1x1x1x128xf32>,
    %80 = arith.mulf %70, %70 : vector<256x128xf32>
    %cst_79 = arith.constant dense<0.000000e+00> : vector<128xf32>
    %81 = vector.multi_reduction <add>, %80, %cst_79 [0] : vector<256x128xf32> to vector<128xf32>
    %82 = vector.shape_cast %81 : vector<128xf32> to vector<1x128xf32>
    %c0_80 = arith.constant 0 : index
    %c0_81 = arith.constant 0 : index
    %c0_82 = arith.constant 0 : index
    %c0_83 = arith.constant 0 : index
    %83 = vector.load %arg8[%c0_80, %c0_81, %c0_82, %c0_83] : memref<1x1x1x128xf32, #tpu.memory_space<vmem>>, vector<1x1x1x128xf32>
    %84 = vector.shape_cast %83 : vector<1x1x1x128xf32> to vector<1x128xf32>
    %85 = vector.shape_cast %82 : vector<1x128xf32> to vector<1x1x1x128xf32>
    tpu.vector_store %arg8[%c0_80, %c0_81, %c0_82, %c0_83], %85 {strides = array<i32>} : memref<1x1x1x128xf32, #tpu.memory_space<vmem>>, vector<1x1x1x128xf32>,
    return
  }
  func.func @transform_1(%arg0: i32, %arg1: i32) -> (i32, i32, i32) {
    %c0_i32 = arith.constant 0 : i32
    %c0_i32_0 = arith.constant 0 : i32
    %c0_i32_1 = arith.constant 0 : i32
    %c0_i32_2 = arith.constant 0 : i32
    return %c0_i32, %c0_i32_0, %c0_i32_1 : i32, i32, i32
  }
  func.func @transform_2(%arg0: i32, %arg1: i32) -> (i32, i32) {
    %c0_i32 = arith.constant 0 : i32
    %c0_i32_0 = arith.constant 0 : i32
    %c0_i32_1 = arith.constant 0 : i32
    return %c0_i32, %c0_i32_0 : i32, i32
  }
  func.func @transform_3(%arg0: i32, %arg1: i32) -> (i32, i32) {
    %c0_i32 = arith.constant 0 : i32
    %c0_i32_0 = arith.constant 0 : i32
    %c0_i32_1 = arith.constant 0 : i32
    return %c0_i32, %c0_i32_0 : i32, i32
  }
  func.func @transform_4(%arg0: i32, %arg1: i32) -> (i32, i32, i32, i32) {
    %c0_i32 = arith.constant 0 : i32
    %c0_i32_0 = arith.constant 0 : i32
    %c0_i32_1 = arith.constant 0 : i32
    return %arg0, %arg1, %c0_i32, %c0_i32_0 : i32, i32, i32, i32
  }
  func.func @transform_5(%arg0: i32, %arg1: i32) -> (i32, i32, i32, i32) {
    %c0_i32 = arith.constant 0 : i32
    %c0_i32_0 = arith.constant 0 : i32
    %c0_i32_1 = arith.constant 0 : i32
    return %arg0, %arg1, %c0_i32, %c0_i32_0 : i32, i32, i32, i32
  }
  func.func @transform_6(%arg0: i32, %arg1: i32) -> (i32, i32, i32, i32) {
    %c0_i32 = arith.constant 0 : i32
    %c0_i32_0 = arith.constant 0 : i32
    %c0_i32_1 = arith.constant 0 : i32
    return %arg0, %arg1, %c0_i32, %c0_i32_0 : i32, i32, i32, i32
  }
}

module attributes {stable_mosaic.version = 11 : i64} {
  func.func @kernel(%arg0: i32, %arg1: i32, %arg2: memref<2x16x16x128xbf16, #tpu.memory_space<any>>, %arg3: memref<3x384x128xbf16, #tpu.memory_space<vmem>>, %arg4: memref<1x128xf32, #tpu.memory_space<vmem>>, %arg5: memref<1x128xf32, #tpu.memory_space<vmem>>, %arg6: memref<1x1x256x128xbf16, #tpu.memory_space<vmem>>, %arg7: memref<1x1x1x128xf32, #tpu.memory_space<vmem>>, %arg8: memref<1x1x1x128xf32, #tpu.memory_space<vmem>>, %arg9: memref<2x18x16x128xbf16, #tpu.memory_space<vmem>>, %arg10: memref<18x18x128xbf16, #tpu.memory_space<vmem>>, %arg11: memref<2x3x!tpu.dma_semaphore, #tpu.memory_space<semaphore_mem>>) attributes {dimension_semantics = [#tpu.dimension_semantics<parallel>, #tpu.dimension_semantics<arbitrary>], iteration_bounds = array<i64: 2, 1>, scalar_prefetch = 0 : i64, scratch_operands = 3 : i64, tpu.core_type = #tpu.core_type<tc>, window_params = [{}, {pipeline_mode = #tpu.pipeline_mode<synchronous>, transform_indices = @transform_1, window_bounds = array<i64: 3, 384, 128>}, {pipeline_mode = #tpu.pipeline_mode<synchronous>, transform_indices = @transform_2, window_bounds = array<i64: 1, 128>}, {pipeline_mode = #tpu.pipeline_mode<synchronous>, transform_indices = @transform_3, window_bounds = array<i64: 1, 128>}, {transform_indices = @transform_4, window_bounds = array<i64: 1, 1, 256, 128>}, {transform_indices = @transform_5, window_bounds = array<i64: 1, 1, 1, 128>}, {transform_indices = @transform_6, window_bounds = array<i64: 1, 1, 1, 128>}]} {
    %c2_i32 = arith.constant 2 : i32
    %c0_i32 = arith.constant 0 : i32
    %0 = arith.cmpi eq, %c2_i32, %c0_i32 : i32
    %c1_i32 = arith.constant 1 : i32
    %1 = arith.select %0, %c1_i32, %c2_i32 : i32
    %2 = arith.remsi %arg1, %1 : i32
    %c0_i32_0 = arith.constant 0 : i32
    %3 = arith.cmpi ne, %2, %c0_i32_0 : i32
    %c0_i32_1 = arith.constant 0 : i32
    %4 = arith.cmpi slt, %2, %c0_i32_1 : i32
    %c0_i32_2 = arith.constant 0 : i32
    %5 = arith.cmpi slt, %1, %c0_i32_2 : i32
    %6 = arith.xori %4, %5 : i1
    %7 = arith.andi %6, %3 : i1
    %8 = arith.addi %2, %1 : i32
    %9 = arith.select %7, %8, %2 : i32
    %c0_i32_3 = arith.constant 0 : i32
    %10 = arith.cmpi eq, %arg1, %c0_i32_3 : i32
    %11 = arith.extui %10 : i1 to i32
    %c0_i32_4 = arith.constant 0 : i32
    %12 = arith.cmpi ne, %11, %c0_i32_4 : i32
    scf.if %12 {
      %c16_i32_89 = arith.constant 16 : i32
      %98 = arith.muli %arg1, %c16_i32_89 : i32
      %c0_i32_90 = arith.constant 0 : i32
      %c0_i32_91 = arith.constant 0 : i32
      %c0_i32_92 = arith.constant 0 : i32
      %99 = tpu.memref_slice %arg2[%arg0, %98, %c0_i32_91, %c0_i32_92] : memref<2x16x16x128xbf16, #tpu.memory_space<any>> -> memref<1x16x16x128xbf16, #tpu.memory_space<any>>
      %100 = tpu.memref_squeeze %99 : memref<1x16x16x128xbf16, #tpu.memory_space<any>> -> memref<16x16x128xbf16, #tpu.memory_space<any>>
      %c1_i32_93 = arith.constant 1 : i32
      %c0_i32_94 = arith.constant 0 : i32
      %c0_i32_95 = arith.constant 0 : i32
      %101 = tpu.memref_slice %arg9[%9, %c1_i32_93, %c0_i32_94, %c0_i32_95] : memref<2x18x16x128xbf16, #tpu.memory_space<vmem>> -> memref<1x16x16x128xbf16, #tpu.memory_space<vmem>>
      %102 = tpu.memref_squeeze %101 : memref<1x16x16x128xbf16, #tpu.memory_space<vmem>> -> memref<16x16x128xbf16, #tpu.memory_space<vmem>>
      %103 = tpu.memref_slice %arg11[%9, %c0_i32_90] : memref<2x3x!tpu.dma_semaphore, #tpu.memory_space<semaphore_mem>> -> memref<1x1x!tpu.dma_semaphore, #tpu.memory_space<semaphore_mem>>
      %104 = tpu.memref_squeeze %103 : memref<1x1x!tpu.dma_semaphore, #tpu.memory_space<semaphore_mem>> -> memref<!tpu.dma_semaphore, #tpu.memory_space<semaphore_mem>>
      tpu.enqueue_dma source(%100 : memref<16x16x128xbf16, #tpu.memory_space<any>>) target(%102 : memref<16x16x128xbf16, #tpu.memory_space<vmem>>) target_semaphore(%104 : memref<!tpu.dma_semaphore, #tpu.memory_space<semaphore_mem>>)
      %c0_i32_96 = arith.constant 0 : i32
      %105 = arith.cmpi sgt, %arg1, %c0_i32_96 : i32
      %106 = arith.extui %105 : i1 to i32
      %c0_i32_97 = arith.constant 0 : i32
      %107 = arith.cmpi ne, %106, %c0_i32_97 : i32
      scf.if %107 {
        %c16_i32_100 = arith.constant 16 : i32
        %111 = arith.muli %arg1, %c16_i32_100 : i32
        %c1_i32_101 = arith.constant 1 : i32
        %112 = arith.subi %111, %c1_i32_101 : i32
        %c0_i32_102 = arith.constant 0 : i32
        %c1_i32_103 = arith.constant 1 : i32
        %c0_i32_104 = arith.constant 0 : i32
        %c0_i32_105 = arith.constant 0 : i32
        %113 = tpu.memref_slice %arg2[%arg0, %112, %c0_i32_104, %c0_i32_105] : memref<2x16x16x128xbf16, #tpu.memory_space<any>> -> memref<1x1x16x128xbf16, #tpu.memory_space<any>>
        %114 = tpu.memref_squeeze %113 : memref<1x1x16x128xbf16, #tpu.memory_space<any>> -> memref<16x128xbf16, #tpu.memory_space<any>>
        %c0_i32_106 = arith.constant 0 : i32
        %c0_i32_107 = arith.constant 0 : i32
        %115 = tpu.memref_slice %arg9[%9, %c0_i32_102, %c0_i32_106, %c0_i32_107] : memref<2x18x16x128xbf16, #tpu.memory_space<vmem>> -> memref<1x1x16x128xbf16, #tpu.memory_space<vmem>>
        %116 = tpu.memref_squeeze %115 : memref<1x1x16x128xbf16, #tpu.memory_space<vmem>> -> memref<16x128xbf16, #tpu.memory_space<vmem>>
        %117 = tpu.memref_slice %arg11[%9, %c1_i32_103] : memref<2x3x!tpu.dma_semaphore, #tpu.memory_space<semaphore_mem>> -> memref<1x1x!tpu.dma_semaphore, #tpu.memory_space<semaphore_mem>>
        %118 = tpu.memref_squeeze %117 : memref<1x1x!tpu.dma_semaphore, #tpu.memory_space<semaphore_mem>> -> memref<!tpu.dma_semaphore, #tpu.memory_space<semaphore_mem>>
        tpu.enqueue_dma source(%114 : memref<16x128xbf16, #tpu.memory_space<any>>) target(%116 : memref<16x128xbf16, #tpu.memory_space<vmem>>) target_semaphore(%118 : memref<!tpu.dma_semaphore, #tpu.memory_space<semaphore_mem>>)
      } else {
      }
      %c0_i32_98 = arith.constant 0 : i32
      %108 = arith.cmpi slt, %arg1, %c0_i32_98 : i32
      %109 = arith.extui %108 : i1 to i32
      %c0_i32_99 = arith.constant 0 : i32
      %110 = arith.cmpi ne, %109, %c0_i32_99 : i32
      scf.if %110 {
        %c1_i32_100 = arith.constant 1 : i32
        %111 = arith.addi %arg1, %c1_i32_100 : i32
        %c16_i32_101 = arith.constant 16 : i32
        %112 = arith.muli %111, %c16_i32_101 : i32
        %c17_i32 = arith.constant 17 : i32
        %c2_i32_102 = arith.constant 2 : i32
        %c0_i32_103 = arith.constant 0 : i32
        %c0_i32_104 = arith.constant 0 : i32
        %113 = tpu.memref_slice %arg2[%arg0, %112, %c0_i32_103, %c0_i32_104] : memref<2x16x16x128xbf16, #tpu.memory_space<any>> -> memref<1x1x16x128xbf16, #tpu.memory_space<any>>
        %114 = tpu.memref_squeeze %113 : memref<1x1x16x128xbf16, #tpu.memory_space<any>> -> memref<16x128xbf16, #tpu.memory_space<any>>
        %c0_i32_105 = arith.constant 0 : i32
        %c0_i32_106 = arith.constant 0 : i32
        %115 = tpu.memref_slice %arg9[%9, %c17_i32, %c0_i32_105, %c0_i32_106] : memref<2x18x16x128xbf16, #tpu.memory_space<vmem>> -> memref<1x1x16x128xbf16, #tpu.memory_space<vmem>>
        %116 = tpu.memref_squeeze %115 : memref<1x1x16x128xbf16, #tpu.memory_space<vmem>> -> memref<16x128xbf16, #tpu.memory_space<vmem>>
        %117 = tpu.memref_slice %arg11[%9, %c2_i32_102] : memref<2x3x!tpu.dma_semaphore, #tpu.memory_space<semaphore_mem>> -> memref<1x1x!tpu.dma_semaphore, #tpu.memory_space<semaphore_mem>>
        %118 = tpu.memref_squeeze %117 : memref<1x1x!tpu.dma_semaphore, #tpu.memory_space<semaphore_mem>> -> memref<!tpu.dma_semaphore, #tpu.memory_space<semaphore_mem>>
        tpu.enqueue_dma source(%114 : memref<16x128xbf16, #tpu.memory_space<any>>) target(%116 : memref<16x128xbf16, #tpu.memory_space<vmem>>) target_semaphore(%118 : memref<!tpu.dma_semaphore, #tpu.memory_space<semaphore_mem>>)
      } else {
      }
    } else {
    }
    %c1_i32_5 = arith.constant 1 : i32
    %13 = arith.addi %arg1, %c1_i32_5 : i32
    %c1_i32_6 = arith.constant 1 : i32
    %14 = arith.cmpi slt, %13, %c1_i32_6 : i32
    %15 = arith.extui %14 : i1 to i32
    %c0_i32_7 = arith.constant 0 : i32
    %16 = arith.cmpi ne, %15, %c0_i32_7 : i32
    scf.if %16 {
      %c1_i32_89 = arith.constant 1 : i32
      %98 = arith.addi %arg1, %c1_i32_89 : i32
      %c1_i32_90 = arith.constant 1 : i32
      %99 = arith.addi %arg1, %c1_i32_90 : i32
      %c2_i32_91 = arith.constant 2 : i32
      %c0_i32_92 = arith.constant 0 : i32
      %100 = arith.cmpi eq, %c2_i32_91, %c0_i32_92 : i32
      %c1_i32_93 = arith.constant 1 : i32
      %101 = arith.select %100, %c1_i32_93, %c2_i32_91 : i32
      %102 = arith.remsi %99, %101 : i32
      %c0_i32_94 = arith.constant 0 : i32
      %103 = arith.cmpi ne, %102, %c0_i32_94 : i32
      %c0_i32_95 = arith.constant 0 : i32
      %104 = arith.cmpi slt, %102, %c0_i32_95 : i32
      %c0_i32_96 = arith.constant 0 : i32
      %105 = arith.cmpi slt, %101, %c0_i32_96 : i32
      %106 = arith.xori %104, %105 : i1
      %107 = arith.andi %106, %103 : i1
      %108 = arith.addi %102, %101 : i32
      %109 = arith.select %107, %108, %102 : i32
      %c16_i32_97 = arith.constant 16 : i32
      %110 = arith.muli %98, %c16_i32_97 : i32
      %c0_i32_98 = arith.constant 0 : i32
      %c0_i32_99 = arith.constant 0 : i32
      %c0_i32_100 = arith.constant 0 : i32
      %111 = tpu.memref_slice %arg2[%arg0, %110, %c0_i32_99, %c0_i32_100] : memref<2x16x16x128xbf16, #tpu.memory_space<any>> -> memref<1x16x16x128xbf16, #tpu.memory_space<any>>
      %112 = tpu.memref_squeeze %111 : memref<1x16x16x128xbf16, #tpu.memory_space<any>> -> memref<16x16x128xbf16, #tpu.memory_space<any>>
      %c1_i32_101 = arith.constant 1 : i32
      %c0_i32_102 = arith.constant 0 : i32
      %c0_i32_103 = arith.constant 0 : i32
      %113 = tpu.memref_slice %arg9[%109, %c1_i32_101, %c0_i32_102, %c0_i32_103] : memref<2x18x16x128xbf16, #tpu.memory_space<vmem>> -> memref<1x16x16x128xbf16, #tpu.memory_space<vmem>>
      %114 = tpu.memref_squeeze %113 : memref<1x16x16x128xbf16, #tpu.memory_space<vmem>> -> memref<16x16x128xbf16, #tpu.memory_space<vmem>>
      %115 = tpu.memref_slice %arg11[%109, %c0_i32_98] : memref<2x3x!tpu.dma_semaphore, #tpu.memory_space<semaphore_mem>> -> memref<1x1x!tpu.dma_semaphore, #tpu.memory_space<semaphore_mem>>
      %116 = tpu.memref_squeeze %115 : memref<1x1x!tpu.dma_semaphore, #tpu.memory_space<semaphore_mem>> -> memref<!tpu.dma_semaphore, #tpu.memory_space<semaphore_mem>>
      tpu.enqueue_dma source(%112 : memref<16x16x128xbf16, #tpu.memory_space<any>>) target(%114 : memref<16x16x128xbf16, #tpu.memory_space<vmem>>) target_semaphore(%116 : memref<!tpu.dma_semaphore, #tpu.memory_space<semaphore_mem>>)
      %c0_i32_104 = arith.constant 0 : i32
      %117 = arith.cmpi sgt, %98, %c0_i32_104 : i32
      %118 = arith.extui %117 : i1 to i32
      %c0_i32_105 = arith.constant 0 : i32
      %119 = arith.cmpi ne, %118, %c0_i32_105 : i32
      scf.if %119 {
        %c16_i32_108 = arith.constant 16 : i32
        %123 = arith.muli %98, %c16_i32_108 : i32
        %c1_i32_109 = arith.constant 1 : i32
        %124 = arith.subi %123, %c1_i32_109 : i32
        %c0_i32_110 = arith.constant 0 : i32
        %c1_i32_111 = arith.constant 1 : i32
        %c0_i32_112 = arith.constant 0 : i32
        %c0_i32_113 = arith.constant 0 : i32
        %125 = tpu.memref_slice %arg2[%arg0, %124, %c0_i32_112, %c0_i32_113] : memref<2x16x16x128xbf16, #tpu.memory_space<any>> -> memref<1x1x16x128xbf16, #tpu.memory_space<any>>
        %126 = tpu.memref_squeeze %125 : memref<1x1x16x128xbf16, #tpu.memory_space<any>> -> memref<16x128xbf16, #tpu.memory_space<any>>
        %c0_i32_114 = arith.constant 0 : i32
        %c0_i32_115 = arith.constant 0 : i32
        %127 = tpu.memref_slice %arg9[%109, %c0_i32_110, %c0_i32_114, %c0_i32_115] : memref<2x18x16x128xbf16, #tpu.memory_space<vmem>> -> memref<1x1x16x128xbf16, #tpu.memory_space<vmem>>
        %128 = tpu.memref_squeeze %127 : memref<1x1x16x128xbf16, #tpu.memory_space<vmem>> -> memref<16x128xbf16, #tpu.memory_space<vmem>>
        %129 = tpu.memref_slice %arg11[%109, %c1_i32_111] : memref<2x3x!tpu.dma_semaphore, #tpu.memory_space<semaphore_mem>> -> memref<1x1x!tpu.dma_semaphore, #tpu.memory_space<semaphore_mem>>
        %130 = tpu.memref_squeeze %129 : memref<1x1x!tpu.dma_semaphore, #tpu.memory_space<semaphore_mem>> -> memref<!tpu.dma_semaphore, #tpu.memory_space<semaphore_mem>>
        tpu.enqueue_dma source(%126 : memref<16x128xbf16, #tpu.memory_space<any>>) target(%128 : memref<16x128xbf16, #tpu.memory_space<vmem>>) target_semaphore(%130 : memref<!tpu.dma_semaphore, #tpu.memory_space<semaphore_mem>>)
      } else {
      }
      %c0_i32_106 = arith.constant 0 : i32
      %120 = arith.cmpi slt, %98, %c0_i32_106 : i32
      %121 = arith.extui %120 : i1 to i32
      %c0_i32_107 = arith.constant 0 : i32
      %122 = arith.cmpi ne, %121, %c0_i32_107 : i32
      scf.if %122 {
        %c1_i32_108 = arith.constant 1 : i32
        %123 = arith.addi %98, %c1_i32_108 : i32
        %c16_i32_109 = arith.constant 16 : i32
        %124 = arith.muli %123, %c16_i32_109 : i32
        %c17_i32 = arith.constant 17 : i32
        %c2_i32_110 = arith.constant 2 : i32
        %c0_i32_111 = arith.constant 0 : i32
        %c0_i32_112 = arith.constant 0 : i32
        %125 = tpu.memref_slice %arg2[%arg0, %124, %c0_i32_111, %c0_i32_112] : memref<2x16x16x128xbf16, #tpu.memory_space<any>> -> memref<1x1x16x128xbf16, #tpu.memory_space<any>>
        %126 = tpu.memref_squeeze %125 : memref<1x1x16x128xbf16, #tpu.memory_space<any>> -> memref<16x128xbf16, #tpu.memory_space<any>>
        %c0_i32_113 = arith.constant 0 : i32
        %c0_i32_114 = arith.constant 0 : i32
        %127 = tpu.memref_slice %arg9[%109, %c17_i32, %c0_i32_113, %c0_i32_114] : memref<2x18x16x128xbf16, #tpu.memory_space<vmem>> -> memref<1x1x16x128xbf16, #tpu.memory_space<vmem>>
        %128 = tpu.memref_squeeze %127 : memref<1x1x16x128xbf16, #tpu.memory_space<vmem>> -> memref<16x128xbf16, #tpu.memory_space<vmem>>
        %129 = tpu.memref_slice %arg11[%109, %c2_i32_110] : memref<2x3x!tpu.dma_semaphore, #tpu.memory_space<semaphore_mem>> -> memref<1x1x!tpu.dma_semaphore, #tpu.memory_space<semaphore_mem>>
        %130 = tpu.memref_squeeze %129 : memref<1x1x!tpu.dma_semaphore, #tpu.memory_space<semaphore_mem>> -> memref<!tpu.dma_semaphore, #tpu.memory_space<semaphore_mem>>
        tpu.enqueue_dma source(%126 : memref<16x128xbf16, #tpu.memory_space<any>>) target(%128 : memref<16x128xbf16, #tpu.memory_space<vmem>>) target_semaphore(%130 : memref<!tpu.dma_semaphore, #tpu.memory_space<semaphore_mem>>)
      } else {
      }
    } else {
    }
    %c16_i32 = arith.constant 16 : i32
    %17 = arith.muli %arg1, %c16_i32 : i32
    %c0_i32_8 = arith.constant 0 : i32
    %c0_i32_9 = arith.constant 0 : i32
    %c0_i32_10 = arith.constant 0 : i32
    %18 = tpu.memref_slice %arg2[%arg0, %17, %c0_i32_9, %c0_i32_10] : memref<2x16x16x128xbf16, #tpu.memory_space<any>> -> memref<1x16x16x128xbf16, #tpu.memory_space<any>>
    %19 = tpu.memref_squeeze %18 : memref<1x16x16x128xbf16, #tpu.memory_space<any>> -> memref<16x16x128xbf16, #tpu.memory_space<any>>
    %c1_i32_11 = arith.constant 1 : i32
    %c0_i32_12 = arith.constant 0 : i32
    %c0_i32_13 = arith.constant 0 : i32
    %20 = tpu.memref_slice %arg9[%9, %c1_i32_11, %c0_i32_12, %c0_i32_13] : memref<2x18x16x128xbf16, #tpu.memory_space<vmem>> -> memref<1x16x16x128xbf16, #tpu.memory_space<vmem>>
    %21 = tpu.memref_squeeze %20 : memref<1x16x16x128xbf16, #tpu.memory_space<vmem>> -> memref<16x16x128xbf16, #tpu.memory_space<vmem>>
    %22 = tpu.memref_slice %arg11[%9, %c0_i32_8] : memref<2x3x!tpu.dma_semaphore, #tpu.memory_space<semaphore_mem>> -> memref<1x1x!tpu.dma_semaphore, #tpu.memory_space<semaphore_mem>>
    %23 = tpu.memref_squeeze %22 : memref<1x1x!tpu.dma_semaphore, #tpu.memory_space<semaphore_mem>> -> memref<!tpu.dma_semaphore, #tpu.memory_space<semaphore_mem>>
    tpu.wait_dma2 semaphore(%23 : memref<!tpu.dma_semaphore, #tpu.memory_space<semaphore_mem>>) src(%19 : memref<16x16x128xbf16, #tpu.memory_space<any>>) dst(%21 : memref<16x16x128xbf16, #tpu.memory_space<vmem>>)
    %c0_i32_14 = arith.constant 0 : i32
    %24 = arith.cmpi sgt, %arg1, %c0_i32_14 : i32
    %25 = arith.extui %24 : i1 to i32
    %c0_i32_15 = arith.constant 0 : i32
    %26 = arith.cmpi ne, %25, %c0_i32_15 : i32
    scf.if %26 {
      %c16_i32_89 = arith.constant 16 : i32
      %98 = arith.muli %arg1, %c16_i32_89 : i32
      %c1_i32_90 = arith.constant 1 : i32
      %99 = arith.subi %98, %c1_i32_90 : i32
      %c0_i32_91 = arith.constant 0 : i32
      %c1_i32_92 = arith.constant 1 : i32
      %c0_i32_93 = arith.constant 0 : i32
      %c0_i32_94 = arith.constant 0 : i32
      %100 = tpu.memref_slice %arg2[%arg0, %99, %c0_i32_93, %c0_i32_94] : memref<2x16x16x128xbf16, #tpu.memory_space<any>> -> memref<1x1x16x128xbf16, #tpu.memory_space<any>>
      %101 = tpu.memref_squeeze %100 : memref<1x1x16x128xbf16, #tpu.memory_space<any>> -> memref<16x128xbf16, #tpu.memory_space<any>>
      %c0_i32_95 = arith.constant 0 : i32
      %c0_i32_96 = arith.constant 0 : i32
      %102 = tpu.memref_slice %arg9[%9, %c0_i32_91, %c0_i32_95, %c0_i32_96] : memref<2x18x16x128xbf16, #tpu.memory_space<vmem>> -> memref<1x1x16x128xbf16, #tpu.memory_space<vmem>>
      %103 = tpu.memref_squeeze %102 : memref<1x1x16x128xbf16, #tpu.memory_space<vmem>> -> memref<16x128xbf16, #tpu.memory_space<vmem>>
      %104 = tpu.memref_slice %arg11[%9, %c1_i32_92] : memref<2x3x!tpu.dma_semaphore, #tpu.memory_space<semaphore_mem>> -> memref<1x1x!tpu.dma_semaphore, #tpu.memory_space<semaphore_mem>>
      %105 = tpu.memref_squeeze %104 : memref<1x1x!tpu.dma_semaphore, #tpu.memory_space<semaphore_mem>> -> memref<!tpu.dma_semaphore, #tpu.memory_space<semaphore_mem>>
      tpu.wait_dma2 semaphore(%105 : memref<!tpu.dma_semaphore, #tpu.memory_space<semaphore_mem>>) src(%101 : memref<16x128xbf16, #tpu.memory_space<any>>) dst(%103 : memref<16x128xbf16, #tpu.memory_space<vmem>>)
    } else {
    }
    %c0_i32_16 = arith.constant 0 : i32
    %27 = arith.cmpi slt, %arg1, %c0_i32_16 : i32
    %28 = arith.extui %27 : i1 to i32
    %c0_i32_17 = arith.constant 0 : i32
    %29 = arith.cmpi ne, %28, %c0_i32_17 : i32
    scf.if %29 {
      %c1_i32_89 = arith.constant 1 : i32
      %98 = arith.addi %arg1, %c1_i32_89 : i32
      %c16_i32_90 = arith.constant 16 : i32
      %99 = arith.muli %98, %c16_i32_90 : i32
      %c17_i32 = arith.constant 17 : i32
      %c2_i32_91 = arith.constant 2 : i32
      %c0_i32_92 = arith.constant 0 : i32
      %c0_i32_93 = arith.constant 0 : i32
      %100 = tpu.memref_slice %arg2[%arg0, %99, %c0_i32_92, %c0_i32_93] : memref<2x16x16x128xbf16, #tpu.memory_space<any>> -> memref<1x1x16x128xbf16, #tpu.memory_space<any>>
      %101 = tpu.memref_squeeze %100 : memref<1x1x16x128xbf16, #tpu.memory_space<any>> -> memref<16x128xbf16, #tpu.memory_space<any>>
      %c0_i32_94 = arith.constant 0 : i32
      %c0_i32_95 = arith.constant 0 : i32
      %102 = tpu.memref_slice %arg9[%9, %c17_i32, %c0_i32_94, %c0_i32_95] : memref<2x18x16x128xbf16, #tpu.memory_space<vmem>> -> memref<1x1x16x128xbf16, #tpu.memory_space<vmem>>
      %103 = tpu.memref_squeeze %102 : memref<1x1x16x128xbf16, #tpu.memory_space<vmem>> -> memref<16x128xbf16, #tpu.memory_space<vmem>>
      %104 = tpu.memref_slice %arg11[%9, %c2_i32_91] : memref<2x3x!tpu.dma_semaphore, #tpu.memory_space<semaphore_mem>> -> memref<1x1x!tpu.dma_semaphore, #tpu.memory_space<semaphore_mem>>
      %105 = tpu.memref_squeeze %104 : memref<1x1x!tpu.dma_semaphore, #tpu.memory_space<semaphore_mem>> -> memref<!tpu.dma_semaphore, #tpu.memory_space<semaphore_mem>>
      tpu.wait_dma2 semaphore(%105 : memref<!tpu.dma_semaphore, #tpu.memory_space<semaphore_mem>>) src(%101 : memref<16x128xbf16, #tpu.memory_space<any>>) dst(%103 : memref<16x128xbf16, #tpu.memory_space<vmem>>)
    } else {
    }
    %30 = arith.index_cast %9 : i32 to index
    %c0 = arith.constant 0 : index
    %c0_18 = arith.constant 0 : index
    %c0_19 = arith.constant 0 : index
    %31 = vector.load %arg9[%30, %c0, %c0_18, %c0_19] : memref<2x18x16x128xbf16, #tpu.memory_space<vmem>>, vector<1x18x16x128xbf16>
    %32 = vector.shape_cast %31 : vector<1x18x16x128xbf16> to vector<18x16x128xbf16>
    %33 = arith.extf %32 : vector<18x16x128xbf16> to vector<18x16x128xf32>
    %c0_20 = arith.constant 0 : index
    %c0_21 = arith.constant 0 : index
    %34 = vector.load %arg4[%c0_20, %c0_21] : memref<1x128xf32, #tpu.memory_space<vmem>>, vector<1x128xf32>
    %35 = vector.shape_cast %34 : vector<1x128xf32> to vector<1x1x128xf32>
    %36 = vector.broadcast %35 : vector<1x1x128xf32> to vector<18x16x128xf32>
    %37 = arith.mulf %33, %36 : vector<18x16x128xf32>
    %c0_22 = arith.constant 0 : index
    %c0_23 = arith.constant 0 : index
    %38 = vector.load %arg5[%c0_22, %c0_23] : memref<1x128xf32, #tpu.memory_space<vmem>>, vector<1x128xf32>
    %39 = vector.shape_cast %38 : vector<1x128xf32> to vector<1x1x128xf32>
    %40 = vector.broadcast %39 : vector<1x1x128xf32> to vector<18x16x128xf32>
    %41 = arith.addf %37, %40 : vector<18x16x128xf32>
    %cst = arith.constant 0.000000e+00 : f32
    %42 = vector.broadcast %cst : f32 to vector<18x16x128xf32>
    %43 = arith.maximumf %41, %42 : vector<18x16x128xf32>
    %44 = arith.truncf %43 : vector<18x16x128xf32> to vector<18x16x128xbf16>
    %c0_24 = arith.constant 0 : index
    %c1 = arith.constant 1 : index
    %c0_25 = arith.constant 0 : index
    %45 = vector.load %arg10[%c0_24, %c1, %c0_25] : memref<18x18x128xbf16, #tpu.memory_space<vmem>>, vector<18x16x128xbf16>
    tpu.vector_store %arg10[%c0_24, %c1, %c0_25], %44 {strides = array<i32>} : memref<18x18x128xbf16, #tpu.memory_space<vmem>>, vector<18x16x128xbf16>,
    %cst_26 = arith.constant 0.000000e+00 : bf16
    %46 = vector.broadcast %cst_26 : bf16 to vector<18x1x128xbf16>
    %c0_27 = arith.constant 0 : index
    %c0_28 = arith.constant 0 : index
    %c0_29 = arith.constant 0 : index
    %47 = vector.load %arg10[%c0_27, %c0_28, %c0_29] : memref<18x18x128xbf16, #tpu.memory_space<vmem>>, vector<18x1x128xbf16>
    tpu.vector_store %arg10[%c0_27, %c0_28, %c0_29], %46 {strides = array<i32>} : memref<18x18x128xbf16, #tpu.memory_space<vmem>>, vector<18x1x128xbf16>,
    %c0_30 = arith.constant 0 : index
    %c17 = arith.constant 17 : index
    %c0_31 = arith.constant 0 : index
    %48 = vector.load %arg10[%c0_30, %c17, %c0_31] : memref<18x18x128xbf16, #tpu.memory_space<vmem>>, vector<18x1x128xbf16>
    tpu.vector_store %arg10[%c0_30, %c17, %c0_31], %46 {strides = array<i32>} : memref<18x18x128xbf16, #tpu.memory_space<vmem>>, vector<18x1x128xbf16>,
    %c0_i32_32 = arith.constant 0 : i32
    %49 = arith.cmpi eq, %arg1, %c0_i32_32 : i32
    %50 = arith.extui %49 : i1 to i32
    %c0_i32_33 = arith.constant 0 : i32
    %51 = arith.cmpi ne, %50, %c0_i32_33 : i32
    scf.if %51 {
      %cst_89 = arith.constant 0.000000e+00 : bf16
      %98 = vector.broadcast %cst_89 : bf16 to vector<18x128xbf16>
      %c0_90 = arith.constant 0 : index
      %c0_91 = arith.constant 0 : index
      %c0_92 = arith.constant 0 : index
      %99 = vector.load %arg10[%c0_90, %c0_91, %c0_92] : memref<18x18x128xbf16, #tpu.memory_space<vmem>>, vector<1x18x128xbf16>
      %100 = vector.shape_cast %99 : vector<1x18x128xbf16> to vector<18x128xbf16>
      %101 = vector.shape_cast %98 : vector<18x128xbf16> to vector<1x18x128xbf16>
      tpu.vector_store %arg10[%c0_90, %c0_91, %c0_92], %101 {strides = array<i32>} : memref<18x18x128xbf16, #tpu.memory_space<vmem>>, vector<1x18x128xbf16>,
    } else {
    }
    %c0_i32_34 = arith.constant 0 : i32
    %52 = arith.cmpi eq, %arg1, %c0_i32_34 : i32
    %53 = arith.extui %52 : i1 to i32
    %c0_i32_35 = arith.constant 0 : i32
    %54 = arith.cmpi ne, %53, %c0_i32_35 : i32
    scf.if %54 {
      %cst_89 = arith.constant 0.000000e+00 : bf16
      %98 = vector.broadcast %cst_89 : bf16 to vector<18x128xbf16>
      %c17_90 = arith.constant 17 : index
      %c0_91 = arith.constant 0 : index
      %c0_92 = arith.constant 0 : index
      %99 = vector.load %arg10[%c17_90, %c0_91, %c0_92] : memref<18x18x128xbf16, #tpu.memory_space<vmem>>, vector<1x18x128xbf16>
      %100 = vector.shape_cast %99 : vector<1x18x128xbf16> to vector<18x128xbf16>
      %101 = vector.shape_cast %98 : vector<18x128xbf16> to vector<1x18x128xbf16>
      tpu.vector_store %arg10[%c17_90, %c0_91, %c0_92], %101 {strides = array<i32>} : memref<18x18x128xbf16, #tpu.memory_space<vmem>>, vector<1x18x128xbf16>,
    } else {
    }
    %cst_36 = arith.constant 0.000000e+00 : f32
    %55 = vector.broadcast %cst_36 : f32 to vector<256x128xf32>
    %c0_37 = arith.constant 0 : index
    %c0_38 = arith.constant 0 : index
    %c0_39 = arith.constant 0 : index
    %56 = vector.load %arg10[%c0_37, %c0_38, %c0_39] : memref<18x18x128xbf16, #tpu.memory_space<vmem>>, vector<16x16x128xbf16>
    %c0_40 = arith.constant 0 : index
    %c1_41 = arith.constant 1 : index
    %c0_42 = arith.constant 0 : index
    %57 = vector.load %arg10[%c0_40, %c1_41, %c0_42] : memref<18x18x128xbf16, #tpu.memory_space<vmem>>, vector<16x16x128xbf16>
    %c0_43 = arith.constant 0 : index
    %c2 = arith.constant 2 : index
    %c0_44 = arith.constant 0 : index
    %58 = vector.load %arg10[%c0_43, %c2, %c0_44] : memref<18x18x128xbf16, #tpu.memory_space<vmem>>, vector<16x16x128xbf16>
    %59 = tpu.concatenate %56, %57, %58 in 2 : vector<16x16x128xbf16>, vector<16x16x128xbf16>, vector<16x16x128xbf16> -> vector<16x16x384xbf16>
    %60 = vector.shape_cast %59 : vector<16x16x384xbf16> to vector<256x384xbf16>
    %c0_45 = arith.constant 0 : index
    %c0_46 = arith.constant 0 : index
    %c0_47 = arith.constant 0 : index
    %61 = vector.load %arg3[%c0_45, %c0_46, %c0_47] : memref<3x384x128xbf16, #tpu.memory_space<vmem>>, vector<1x384x128xbf16>
    %62 = vector.shape_cast %61 : vector<1x384x128xbf16> to vector<384x128xbf16>
    %cst_48 = arith.constant dense<0.000000e+00> : vector<256x128xf32>
    %63 = tpu.matmul %60, %62, %cst_48 {dimension_numbers = #tpu.dot_dimension_numbers<[1], [0], [0], [1], [0, 0, 1, 1], [], []>} : vector<256x384xbf16>, vector<384x128xbf16>, vector<256x128xf32> -> vector<256x128xf32>
    %64 = arith.addf %55, %63 : vector<256x128xf32>
    %c1_49 = arith.constant 1 : index
    %c0_50 = arith.constant 0 : index
    %c0_51 = arith.constant 0 : index
    %65 = vector.load %arg10[%c1_49, %c0_50, %c0_51] : memref<18x18x128xbf16, #tpu.memory_space<vmem>>, vector<16x16x128xbf16>
    %c1_52 = arith.constant 1 : index
    %c1_53 = arith.constant 1 : index
    %c0_54 = arith.constant 0 : index
    %66 = vector.load %arg10[%c1_52, %c1_53, %c0_54] : memref<18x18x128xbf16, #tpu.memory_space<vmem>>, vector<16x16x128xbf16>
    %c1_55 = arith.constant 1 : index
    %c2_56 = arith.constant 2 : index
    %c0_57 = arith.constant 0 : index
    %67 = vector.load %arg10[%c1_55, %c2_56, %c0_57] : memref<18x18x128xbf16, #tpu.memory_space<vmem>>, vector<16x16x128xbf16>
    %68 = tpu.concatenate %65, %66, %67 in 2 : vector<16x16x128xbf16>, vector<16x16x128xbf16>, vector<16x16x128xbf16> -> vector<16x16x384xbf16>
    %69 = vector.shape_cast %68 : vector<16x16x384xbf16> to vector<256x384xbf16>
    %c1_58 = arith.constant 1 : index
    %c0_59 = arith.constant 0 : index
    %c0_60 = arith.constant 0 : index
    %70 = vector.load %arg3[%c1_58, %c0_59, %c0_60] : memref<3x384x128xbf16, #tpu.memory_space<vmem>>, vector<1x384x128xbf16>
    %71 = vector.shape_cast %70 : vector<1x384x128xbf16> to vector<384x128xbf16>
    %cst_61 = arith.constant dense<0.000000e+00> : vector<256x128xf32>
    %72 = tpu.matmul %69, %71, %cst_61 {dimension_numbers = #tpu.dot_dimension_numbers<[1], [0], [0], [1], [0, 0, 1, 1], [], []>} : vector<256x384xbf16>, vector<384x128xbf16>, vector<256x128xf32> -> vector<256x128xf32>
    %73 = arith.addf %64, %72 : vector<256x128xf32>
    %c2_62 = arith.constant 2 : index
    %c0_63 = arith.constant 0 : index
    %c0_64 = arith.constant 0 : index
    %74 = vector.load %arg10[%c2_62, %c0_63, %c0_64] : memref<18x18x128xbf16, #tpu.memory_space<vmem>>, vector<16x16x128xbf16>
    %c2_65 = arith.constant 2 : index
    %c1_66 = arith.constant 1 : index
    %c0_67 = arith.constant 0 : index
    %75 = vector.load %arg10[%c2_65, %c1_66, %c0_67] : memref<18x18x128xbf16, #tpu.memory_space<vmem>>, vector<16x16x128xbf16>
    %c2_68 = arith.constant 2 : index
    %c2_69 = arith.constant 2 : index
    %c0_70 = arith.constant 0 : index
    %76 = vector.load %arg10[%c2_68, %c2_69, %c0_70] : memref<18x18x128xbf16, #tpu.memory_space<vmem>>, vector<16x16x128xbf16>
    %77 = tpu.concatenate %74, %75, %76 in 2 : vector<16x16x128xbf16>, vector<16x16x128xbf16>, vector<16x16x128xbf16> -> vector<16x16x384xbf16>
    %78 = vector.shape_cast %77 : vector<16x16x384xbf16> to vector<256x384xbf16>
    %c2_71 = arith.constant 2 : index
    %c0_72 = arith.constant 0 : index
    %c0_73 = arith.constant 0 : index
    %79 = vector.load %arg3[%c2_71, %c0_72, %c0_73] : memref<3x384x128xbf16, #tpu.memory_space<vmem>>, vector<1x384x128xbf16>
    %80 = vector.shape_cast %79 : vector<1x384x128xbf16> to vector<384x128xbf16>
    %cst_74 = arith.constant dense<0.000000e+00> : vector<256x128xf32>
    %81 = tpu.matmul %78, %80, %cst_74 {dimension_numbers = #tpu.dot_dimension_numbers<[1], [0], [0], [1], [0, 0, 1, 1], [], []>} : vector<256x384xbf16>, vector<384x128xbf16>, vector<256x128xf32> -> vector<256x128xf32>
    %82 = arith.addf %73, %81 : vector<256x128xf32>
    %83 = arith.truncf %82 : vector<256x128xf32> to vector<256x128xbf16>
    %c0_75 = arith.constant 0 : index
    %c0_76 = arith.constant 0 : index
    %c0_77 = arith.constant 0 : index
    %c0_78 = arith.constant 0 : index
    %84 = vector.load %arg6[%c0_75, %c0_76, %c0_77, %c0_78] : memref<1x1x256x128xbf16, #tpu.memory_space<vmem>>, vector<1x1x256x128xbf16>
    %85 = vector.shape_cast %84 : vector<1x1x256x128xbf16> to vector<256x128xbf16>
    %86 = vector.shape_cast %83 : vector<256x128xbf16> to vector<1x1x256x128xbf16>
    tpu.vector_store %arg6[%c0_75, %c0_76, %c0_77, %c0_78], %86 {strides = array<i32>} : memref<1x1x256x128xbf16, #tpu.memory_space<vmem>>, vector<1x1x256x128xbf16>,
    %cst_79 = arith.constant dense<0.000000e+00> : vector<128xf32>
    %87 = vector.multi_reduction <add>, %82, %cst_79 [0] : vector<256x128xf32> to vector<128xf32>
    %88 = vector.shape_cast %87 : vector<128xf32> to vector<1x128xf32>
    %c0_80 = arith.constant 0 : index
    %c0_81 = arith.constant 0 : index
    %c0_82 = arith.constant 0 : index
    %c0_83 = arith.constant 0 : index
    %89 = vector.load %arg7[%c0_80, %c0_81, %c0_82, %c0_83] : memref<1x1x1x128xf32, #tpu.memory_space<vmem>>, vector<1x1x1x128xf32>
    %90 = vector.shape_cast %89 : vector<1x1x1x128xf32> to vector<1x128xf32>
    %91 = vector.shape_cast %88 : vector<1x128xf32> to vector<1x1x1x128xf32>
    tpu.vector_store %arg7[%c0_80, %c0_81, %c0_82, %c0_83], %91 {strides = array<i32>} : memref<1x1x1x128xf32, #tpu.memory_space<vmem>>, vector<1x1x1x128xf32>,
    %92 = arith.mulf %82, %82 : vector<256x128xf32>
    %cst_84 = arith.constant dense<0.000000e+00> : vector<128xf32>
    %93 = vector.multi_reduction <add>, %92, %cst_84 [0] : vector<256x128xf32> to vector<128xf32>
    %94 = vector.shape_cast %93 : vector<128xf32> to vector<1x128xf32>
    %c0_85 = arith.constant 0 : index
    %c0_86 = arith.constant 0 : index
    %c0_87 = arith.constant 0 : index
    %c0_88 = arith.constant 0 : index
    %95 = vector.load %arg8[%c0_85, %c0_86, %c0_87, %c0_88] : memref<1x1x1x128xf32, #tpu.memory_space<vmem>>, vector<1x1x1x128xf32>
    %96 = vector.shape_cast %95 : vector<1x1x1x128xf32> to vector<1x128xf32>
    %97 = vector.shape_cast %94 : vector<1x128xf32> to vector<1x1x1x128xf32>
    tpu.vector_store %arg8[%c0_85, %c0_86, %c0_87, %c0_88], %97 {strides = array<i32>} : memref<1x1x1x128xf32, #tpu.memory_space<vmem>>, vector<1x1x1x128xf32>,
    return
  }
  func.func @transform_1(%arg0: i32, %arg1: i32) -> (i32, i32, i32) {
    %c0_i32 = arith.constant 0 : i32
    %c0_i32_0 = arith.constant 0 : i32
    %c0_i32_1 = arith.constant 0 : i32
    %c0_i32_2 = arith.constant 0 : i32
    return %c0_i32, %c0_i32_0, %c0_i32_1 : i32, i32, i32
  }
  func.func @transform_2(%arg0: i32, %arg1: i32) -> (i32, i32) {
    %c0_i32 = arith.constant 0 : i32
    %c0_i32_0 = arith.constant 0 : i32
    %c0_i32_1 = arith.constant 0 : i32
    return %c0_i32, %c0_i32_0 : i32, i32
  }
  func.func @transform_3(%arg0: i32, %arg1: i32) -> (i32, i32) {
    %c0_i32 = arith.constant 0 : i32
    %c0_i32_0 = arith.constant 0 : i32
    %c0_i32_1 = arith.constant 0 : i32
    return %c0_i32, %c0_i32_0 : i32, i32
  }
  func.func @transform_4(%arg0: i32, %arg1: i32) -> (i32, i32, i32, i32) {
    %c0_i32 = arith.constant 0 : i32
    %c0_i32_0 = arith.constant 0 : i32
    %c0_i32_1 = arith.constant 0 : i32
    return %arg0, %arg1, %c0_i32, %c0_i32_0 : i32, i32, i32, i32
  }
  func.func @transform_5(%arg0: i32, %arg1: i32) -> (i32, i32, i32, i32) {
    %c0_i32 = arith.constant 0 : i32
    %c0_i32_0 = arith.constant 0 : i32
    %c0_i32_1 = arith.constant 0 : i32
    return %arg0, %arg1, %c0_i32, %c0_i32_0 : i32, i32, i32, i32
  }
  func.func @transform_6(%arg0: i32, %arg1: i32) -> (i32, i32, i32, i32) {
    %c0_i32 = arith.constant 0 : i32
    %c0_i32_0 = arith.constant 0 : i32
    %c0_i32_1 = arith.constant 0 : i32
    return %arg0, %arg1, %c0_i32, %c0_i32_0 : i32, i32, i32, i32
  }
}

module attributes {stable_mosaic.version = 11 : i64} {
  func.func @_bn_relu_kernel(%arg0: i32, %arg1: memref<512x128xbf16, #tpu.memory_space<vmem>>, %arg2: memref<1x128xf32, #tpu.memory_space<vmem>>, %arg3: memref<1x128xf32, #tpu.memory_space<vmem>>, %arg4: memref<512x128xbf16, #tpu.memory_space<vmem>>) attributes {dimension_semantics = [#tpu.dimension_semantics<parallel>], iteration_bounds = array<i64: 1>, scalar_prefetch = 0 : i64, scratch_operands = 0 : i64, tpu.core_type = #tpu.core_type<tc>, window_params = [{transform_indices = @transform_0, window_bounds = array<i64: 512, 128>}, {pipeline_mode = #tpu.pipeline_mode<synchronous>, transform_indices = @transform_1, window_bounds = array<i64: 1, 128>}, {pipeline_mode = #tpu.pipeline_mode<synchronous>, transform_indices = @transform_2, window_bounds = array<i64: 1, 128>}, {transform_indices = @transform_3, window_bounds = array<i64: 512, 128>}]} {
    %c0 = arith.constant 0 : index
    %c0_0 = arith.constant 0 : index
    %0 = vector.load %arg1[%c0, %c0_0] : memref<512x128xbf16, #tpu.memory_space<vmem>>, vector<512x128xbf16>
    %1 = arith.extf %0 : vector<512x128xbf16> to vector<512x128xf32>
    %c0_1 = arith.constant 0 : index
    %c0_2 = arith.constant 0 : index
    %2 = vector.load %arg2[%c0_1, %c0_2] : memref<1x128xf32, #tpu.memory_space<vmem>>, vector<1x128xf32>
    %3 = vector.broadcast %2 : vector<1x128xf32> to vector<512x128xf32>
    %4 = arith.mulf %1, %3 : vector<512x128xf32>
    %c0_3 = arith.constant 0 : index
    %c0_4 = arith.constant 0 : index
    %5 = vector.load %arg3[%c0_3, %c0_4] : memref<1x128xf32, #tpu.memory_space<vmem>>, vector<1x128xf32>
    %6 = vector.broadcast %5 : vector<1x128xf32> to vector<512x128xf32>
    %7 = arith.addf %4, %6 : vector<512x128xf32>
    %cst = arith.constant 0.000000e+00 : f32
    %8 = vector.broadcast %cst : f32 to vector<512x128xf32>
    %9 = arith.maximumf %7, %8 : vector<512x128xf32>
    %10 = arith.truncf %9 : vector<512x128xf32> to vector<512x128xbf16>
    %c0_5 = arith.constant 0 : index
    %c0_6 = arith.constant 0 : index
    %11 = vector.load %arg4[%c0_5, %c0_6] : memref<512x128xbf16, #tpu.memory_space<vmem>>, vector<512x128xbf16>
    tpu.vector_store %arg4[%c0_5, %c0_6], %10 {strides = array<i32>} : memref<512x128xbf16, #tpu.memory_space<vmem>>, vector<512x128xbf16>,
    return
  }
  func.func @transform_0(%arg0: i32) -> (i32, i32) {
    %c0_i32 = arith.constant 0 : i32
    %c0_i32_0 = arith.constant 0 : i32
    return %arg0, %c0_i32 : i32, i32
  }
  func.func @transform_1(%arg0: i32) -> (i32, i32) {
    %c0_i32 = arith.constant 0 : i32
    %c0_i32_0 = arith.constant 0 : i32
    %c0_i32_1 = arith.constant 0 : i32
    return %c0_i32, %c0_i32_0 : i32, i32
  }
  func.func @transform_2(%arg0: i32) -> (i32, i32) {
    %c0_i32 = arith.constant 0 : i32
    %c0_i32_0 = arith.constant 0 : i32
    %c0_i32_1 = arith.constant 0 : i32
    return %c0_i32, %c0_i32_0 : i32, i32
  }
  func.func @transform_3(%arg0: i32) -> (i32, i32) {
    %c0_i32 = arith.constant 0 : i32
    %c0_i32_0 = arith.constant 0 : i32
    return %arg0, %c0_i32 : i32, i32
  }
}

</mosaic_0001>

<llo_original>
// kernel: segnet_enc_forward.7
$region0: #{segnet_enc_forward.7}
  #allocation0 [shape = 'u32[]', space=smem, size = 0x4, offset = 0x4, fixed_abs, tag = 'smem constant byte address 0x4 - core index']
  #allocation1 [shape = 'u32[144,128]{1,0:T(1,128)}', space=vmem, size = 0x12000, scoped, tag = 'internal scratch']
  %s0 = inlined_call_operand.vmem [shape: bf16[512,128], index: 0, kind: input, shape index: {}]
  %s1 = inlined_call_operand.vmem [shape: f32[1,128], index: 1, kind: input, shape index: {}]
  %s2 = inlined_call_operand.vmem [shape: f32[1,128], index: 2, kind: input, shape index: {}]
  %s3 = inlined_call_operand.vmem [shape: bf16[512,128], index: 3, kind: output, shape index: {}]
  %s4 = sld [smem:[#allocation0]]
  $region22: #{segnet_enc_forward.7} parent=0
    _
  %s6 = ssub.s32 1, %s4
  %s7 = scalar_select 0, %s6, %s4
  // Predicated region
  $region2: #{segnet_enc_forward.7} parent=0 // pred_check
    _
  $region3: #{segnet_enc_forward.7} parent=0 // pred_check_branch
    %9 = sbr.rel (0) target = $region5
  $region4: #{segnet_enc_forward.7} parent=0 // pred_region
    _
  $region5: #{segnet_enc_forward.7} parent=0 // pred_fallthru
    _
  // Predicated region
  $region6: #{segnet_enc_forward.7} parent=0 // pred_check
    _
  $region7: #{segnet_enc_forward.7} parent=0 // pred_check_branch
    %11 = sbr.rel (0) target = $region9
  $region8: #{segnet_enc_forward.7} parent=0 // pred_region
    _
  $region9: #{segnet_enc_forward.7} parent=0 // pred_fallthru
    _
  // Predicated region
  $region10: #{segnet_enc_forward.7} parent=0 // pred_check
    _
  $region11: #{segnet_enc_forward.7} parent=0 // pred_check_branch
    %13 = sbr.rel (0) target = $region13
  $region12: #{segnet_enc_forward.7} parent=0 // pred_region
    _
  $region13: #{segnet_enc_forward.7} parent=0 // pred_fallthru
    _
  %v14 = vld [vmem:[%s0] sm:$0xf]
  %v15 = vld [vmem:[%s0 + $0x4] sm:$0xf]
  %v16 = vld [vmem:[%s0 + $0x8] sm:$0xf]
  %v17 = vld [vmem:[%s0 + $0xc] sm:$0xf]
  %v18 = vld [vmem:[%s0 + $0x10] sm:$0xf]
  %v19 = vld [vmem:[%s0 + $0x14] sm:$0xf]
  %v20 = vld [vmem:[%s0 + $0x18] sm:$0xf]
  %v21 = vld [vmem:[%s0 + $0x1c] sm:$0xf]
  %v22 = vld [vmem:[%s0 + $0x20] sm:$0xf]
  %v23 = vld [vmem:[%s0 + $0x24] sm:$0xf]
  %v24 = vld [vmem:[%s0 + $0x28] sm:$0xf]
  %v25 = vld [vmem:[%s0 + $0x2c] sm:$0xf]
  %v26 = vld [vmem:[%s0 + $0x30] sm:$0xf]
  %v27 = vld [vmem:[%s0 + $0x34] sm:$0xf]
  %v28 = vld [vmem:[%s0 + $0x38] sm:$0xf]
  %v29 = vld [vmem:[%s0 + $0x3c] sm:$0xf]
  %v30 = vld [vmem:[%s0 + $0x40] sm:$0xf]
  %v31 = vld [vmem:[%s0 + $0x44] sm:$0xf]
  %v32 = vld [vmem:[%s0 + $0x48] sm:$0xf]
  %v33 = vld [vmem:[%s0 + $0x4c] sm:$0xf]
  %v34 = vld [vmem:[%s0 + $0x50] sm:$0xf]
  %v35 = vld [vmem:[%s0 + $0x54] sm:$0xf]
  %v36 = vld [vmem:[%s0 + $0x58] sm:$0xf]
  %v37 = vld [vmem:[%s0 + $0x5c] sm:$0xf]
  %v38 = vld [vmem:[%s0 + $0x60] sm:$0xf]
  %v39 = vld [vmem:[%s0 + $0x64] sm:$0xf]
  %v40 = vld [vmem:[%s0 + $0x68] sm:$0xf]
  %v41 = vld [vmem:[%s0 + $0x6c] sm:$0xf]
  %v42 = vld [vmem:[%s0 + $0x70] sm:$0xf]
  %v43 = vld [vmem:[%s0 + $0x74] sm:$0xf]
  %v44 = vld [vmem:[%s0 + $0x78] sm:$0xf]
  %v45 = vld [vmem:[%s0 + $0x7c] sm:$0xf]
  %v46 = vld [vmem:[%s0 + $0x80] sm:$0xf]
  %v47 = vld [vmem:[%s0 + $0x84] sm:$0xf]
  %v48 = vld [vmem:[%s0 + $0x88] sm:$0xf]
  %v49 = vld [vmem:[%s0 + $0x8c] sm:$0xf]
  %v50 = vld [vmem:[%s0 + $0x90] sm:$0xf]
  %v51 = vld [vmem:[%s0 + $0x94] sm:$0xf]
  %v52 = vld [vmem:[%s0 + $0x98] sm:$0xf]
  %v53 = vld [vmem:[%s0 + $0x9c] sm:$0xf]
  %v54 = vld [vmem:[%s0 + $0xa0] sm:$0xf]
  %v55 = vld [vmem:[%s0 + $0xa4] sm:$0xf]
  %v56 = vld [vmem:[%s0 + $0xa8] sm:$0xf]
  %v57 = vld [vmem:[%s0 + $0xac] sm:$0xf]
  %v58 = vld [vmem:[%s0 + $0xb0] sm:$0xf]
  %v59 = vld [vmem:[%s0 + $0xb4] sm:$0xf]
  %v60 = vld [vmem:[%s0 + $0xb8] sm:$0xf]
  %v61 = vld [vmem:[%s0 + $0xbc] sm:$0xf]
  %v62 = vld [vmem:[%s0 + $0xc0] sm:$0xf]
  %v63 = vld [vmem:[%s0 + $0xc4] sm:$0xf]
  %v64 = vld [vmem:[%s0 + $0xc8] sm:$0xf]
  %v65 = vld [vmem:[%s0 + $0xcc] sm:$0xf]
  %v66 = vld [vmem:[%s0 + $0xd0] sm:$0xf]
  %v67 = vld [vmem:[%s0 + $0xd4] sm:$0xf]
  %v68 = vld [vmem:[%s0 + $0xd8] sm:$0xf]
  %v69 = vld [vmem:[%s0 + $0xdc] sm:$0xf]
  %v70 = vld [vmem:[%s0 + $0xe0] sm:$0xf]
  %v71 = vld [vmem:[%s0 + $0xe4] sm:$0xf]
  %v72 = vld [vmem:[%s0 + $0xe8] sm:$0xf]
  %v73 = vld [vmem:[%s0 + $0xec] sm:$0xf]
  %v74 = vld [vmem:[%s0 + $0xf0] sm:$0xf]
  %v75 = vld [vmem:[%s0 + $0xf4] sm:$0xf]
  %v76 = vld [vmem:[%s0 + $0xf8] sm:$0xf]
  %v77 = vld [vmem:[%s0 + $0xfc] sm:$0xf]
  %v78 = vunpack.c.l.bf16 %v14
  %v79 = vunpack.c.l.bf16 %v15
  %v80 = vunpack.c.l.bf16 %v16
  %v81 = vunpack.c.l.bf16 %v17
  %v82 = vunpack.c.l.bf16 %v18
  %v83 = vunpack.c.l.bf16 %v19
  %v84 = vunpack.c.l.bf16 %v20
  %v85 = vunpack.c.l.bf16 %v21
  %v86 = vunpack.c.l.bf16 %v22
  %v87 = vunpack.c.l.bf16 %v23
  %v88 = vunpack.c.l.bf16 %v24
  %v89 = vunpack.c.l.bf16 %v25
  %v90 = vunpack.c.l.bf16 %v26
  %v91 = vunpack.c.l.bf16 %v27
  %v92 = vunpack.c.l.bf16 %v28
  %v93 = vunpack.c.l.bf16 %v29
  %v94 = vunpack.c.l.bf16 %v30
  %v95 = vunpack.c.l.bf16 %v31
  %v96 = vunpack.c.l.bf16 %v32
  %v97 = vunpack.c.l.bf16 %v33
  %v98 = vunpack.c.l.bf16 %v34
  %v99 = vunpack.c.l.bf16 %v35
  %v100 = vunpack.c.l.bf16 %v36
  %v101 = vunpack.c.l.bf16 %v37
  %v102 = vunpack.c.l.bf16 %v38
  %v103 = vunpack.c.l.bf16 %v39
  %v104 = vunpack.c.l.bf16 %v40
  %v105 = vunpack.c.l.bf16 %v41
  %v106 = vunpack.c.l.bf16 %v42
  %v107 = vunpack.c.l.bf16 %v43
  %v108 = vunpack.c.l.bf16 %v44
  %v109 = vunpack.c.l.bf16 %v45
  %v110 = vunpack.c.l.bf16 %v46
  %v111 = vunpack.c.l.bf16 %v47
  %v112 = vunpack.c.l.bf16 %v48
  %v113 = vunpack.c.l.bf16 %v49
  %v114 = vunpack.c.l.bf16 %v50
  %v115 = vunpack.c.l.bf16 %v51
  %v116 = vunpack.c.l.bf16 %v52
  %v117 = vunpack.c.l.bf16 %v53
  %v118 = vunpack.c.l.bf16 %v54
  %v119 = vunpack.c.l.bf16 %v55
  %v120 = vunpack.c.l.bf16 %v56
  %v121 = vunpack.c.l.bf16 %v57
  %v122 = vunpack.c.l.bf16 %v58
  %v123 = vunpack.c.l.bf16 %v59
  %v124 = vunpack.c.l.bf16 %v60
  %v125 = vunpack.c.l.bf16 %v61
  %v126 = vunpack.c.l.bf16 %v62
  %v127 = vunpack.c.l.bf16 %v63
  %v128 = vunpack.c.l.bf16 %v64
  %v129 = vunpack.c.l.bf16 %v65
  %v130 = vunpack.c.l.bf16 %v66
  %v131 = vunpack.c.l.bf16 %v67
  %v132 = vunpack.c.l.bf16 %v68
  %v133 = vunpack.c.l.bf16 %v69
  %v134 = vunpack.c.l.bf16 %v70
  %v135 = vunpack.c.l.bf16 %v71
  %v136 = vunpack.c.l.bf16 %v72
  %v137 = vunpack.c.l.bf16 %v73
  %v138 = vunpack.c.l.bf16 %v74
  %v139 = vunpack.c.l.bf16 %v75
  %v140 = vunpack.c.l.bf16 %v76
  %v141 = vunpack.c.l.bf16 %v77
  %v142 = vld [vmem:[%s1] sm:$0x1]
  %v144 = vlaneseq
  %v145 = vshrl.u32 %v144, 7
  %v146 = vsub.s32 0, %v145
  %v147 = vrot.slane %v142, %v146
  %v149 = vmul.f32 %v78, %v147
  %v150 = vmul.f32 %v79, %v147
  %v151 = vmul.f32 %v80, %v147
  %v152 = vmul.f32 %v81, %v147
  %v153 = vmul.f32 %v82, %v147
  %v154 = vmul.f32 %v83, %v147
  %v155 = vmul.f32 %v84, %v147
  %v156 = vmul.f32 %v85, %v147
  %v157 = vmul.f32 %v86, %v147
  %v158 = vmul.f32 %v87, %v147
  %v159 = vmul.f32 %v88, %v147
  %v160 = vmul.f32 %v89, %v147
  %v161 = vmul.f32 %v90, %v147
  %v162 = vmul.f32 %v91, %v147
  %v163 = vmul.f32 %v92, %v147
  %v164 = vmul.f32 %v93, %v147
  %v165 = vmul.f32 %v94, %v147
  %v166 = vmul.f32 %v95, %v147
  %v167 = vmul.f32 %v96, %v147
  %v168 = vmul.f32 %v97, %v147
  %v169 = vmul.f32 %v98, %v147
  %v170 = vmul.f32 %v99, %v147
  %v171 = vmul.f32 %v100, %v147
  %v172 = vmul.f32 %v101, %v147
  %v173 = vmul.f32 %v102, %v147
  %v174 = vmul.f32 %v103, %v147
  %v175 = vmul.f32 %v104, %v147
  %v176 = vmul.f32 %v105, %v147
  %v177 = vmul.f32 %v106, %v147
  %v178 = vmul.f32 %v107, %v147
  %v179 = vmul.f32 %v108, %v147
  %v180 = vmul.f32 %v109, %v147
  %v181 = vmul.f32 %v110, %v147
  %v182 = vmul.f32 %v111, %v147
  %v183 = vmul.f32 %v112, %v147
  %v184 = vmul.f32 %v113, %v147
  %v185 = vmul.f32 %v114, %v147
  %v186 = vmul.f32 %v115, %v147
  %v187 = vmul.f32 %v116, %v147
  %v188 = vmul.f32 %v117, %v147
  %v189 = vmul.f32 %v118, %v147
  %v190 = vmul.f32 %v119, %v147
  %v191 = vmul.f32 %v120, %v147
  %v192 = vmul.f32 %v121, %v147
  %v193 = vmul.f32 %v122, %v147
  %v194 = vmul.f32 %v123, %v147
  %v195 = vmul.f32 %v124, %v147
  %v196 = vmul.f32 %v125, %v147
  %v197 = vmul.f32 %v126, %v147
  %v198 = vmul.f32 %v127, %v147
  %v199 = vmul.f32 %v128, %v147
  %v200 = vmul.f32 %v129, %v147
  %v201 = vmul.f32 %v130, %v147
  %v202 = vmul.f32 %v131, %v147
  %v203 = vmul.f32 %v132, %v147
  %v204 = vmul.f32 %v133, %v147
  %v205 = vmul.f32 %v134, %v147
  %v206 = vmul.f32 %v135, %v147
  %v207 = vmul.f32 %v136, %v147
  %v208 = vmul.f32 %v137, %v147
  %v209 = vmul.f32 %v138, %v147
  %v210 = vmul.f32 %v139, %v147
  %v211 = vmul.f32 %v140, %v147
  %v212 = vmul.f32 %v141, %v147
  %v213 = vld [vmem:[%s2] sm:$0x1]
  %v215 = vlaneseq
  %v216 = vshrl.u32 %v215, 7
  %v217 = vsub.s32 0, %v216
  %v218 = vrot.slane %v213, %v217
  %v220 = vadd.f32 %v149, %v218
  %v221 = vadd.f32 %v150, %v218
  %v222 = vadd.f32 %v151, %v218
  %v223 = vadd.f32 %v152, %v218
  %v224 = vadd.f32 %v153, %v218
  %v225 = vadd.f32 %v154, %v218
  %v226 = vadd.f32 %v155, %v218
  %v227 = vadd.f32 %v156, %v218
  %v228 = vadd.f32 %v157, %v218
  %v229 = vadd.f32 %v158, %v218
  %v230 = vadd.f32 %v159, %v218
  %v231 = vadd.f32 %v160, %v218
  %v232 = vadd.f32 %v161, %v218
  %v233 = vadd.f32 %v162, %v218
  %v234 = vadd.f32 %v163, %v218
  %v235 = vadd.f32 %v164, %v218
  %v236 = vadd.f32 %v165, %v218
  %v237 = vadd.f32 %v166, %v218
  %v238 = vadd.f32 %v167, %v218
  %v239 = vadd.f32 %v168, %v218
  %v240 = vadd.f32 %v169, %v218
  %v241 = vadd.f32 %v170, %v218
  %v242 = vadd.f32 %v171, %v218
  %v243 = vadd.f32 %v172, %v218
  %v244 = vadd.f32 %v173, %v218
  %v245 = vadd.f32 %v174, %v218
  %v246 = vadd.f32 %v175, %v218
  %v247 = vadd.f32 %v176, %v218
  %v248 = vadd.f32 %v177, %v218
  %v249 = vadd.f32 %v178, %v218
  %v250 = vadd.f32 %v179, %v218
  %v251 = vadd.f32 %v180, %v218
  %v252 = vadd.f32 %v181, %v218
  %v253 = vadd.f32 %v182, %v218
  %v254 = vadd.f32 %v183, %v218
  %v255 = vadd.f32 %v184, %v218
  %v256 = vadd.f32 %v185, %v218
  %v257 = vadd.f32 %v186, %v218
  %v258 = vadd.f32 %v187, %v218
  %v259 = vadd.f32 %v188, %v218
  %v260 = vadd.f32 %v189, %v218
  %v261 = vadd.f32 %v190, %v218
  %v262 = vadd.f32 %v191, %v218
  %v263 = vadd.f32 %v192, %v218
  %v264 = vadd.f32 %v193, %v218
  %v265 = vadd.f32 %v194, %v218
  %v266 = vadd.f32 %v195, %v218
  %v267 = vadd.f32 %v196, %v218
  %v268 = vadd.f32 %v197, %v218
  %v269 = vadd.f32 %v198, %v218
  %v270 = vadd.f32 %v199, %v218
  %v271 = vadd.f32 %v200, %v218
  %v272 = vadd.f32 %v201, %v218
  %v273 = vadd.f32 %v202, %v218
  %v274 = vadd.f32 %v203, %v218
  %v275 = vadd.f32 %v204, %v218
  %v276 = vadd.f32 %v205, %v218
  %v277 = vadd.f32 %v206, %v218
  %v278 = vadd.f32 %v207, %v218
  %v279 = vadd.f32 %v208, %v218
  %v280 = vadd.f32 %v209, %v218
  %v281 = vadd.f32 %v210, %v218
  %v282 = vadd.f32 %v211, %v218
  %v283 = vadd.f32 %v212, %v218
  %v284 = vmax.f32 %v220, 0.0
  %v285 = vmax.f32 %v221, 0.0
  %v286 = vmax.f32 %v222, 0.0
  %v287 = vmax.f32 %v223, 0.0
  %v288 = vmax.f32 %v224, 0.0
  %v289 = vmax.f32 %v225, 0.0
  %v290 = vmax.f32 %v226, 0.0
  %v291 = vmax.f32 %v227, 0.0
  %v292 = vmax.f32 %v228, 0.0
  %v293 = vmax.f32 %v229, 0.0
  %v294 = vmax.f32 %v230, 0.0
  %v295 = vmax.f32 %v231, 0.0
  %v296 = vmax.f32 %v232, 0.0
  %v297 = vmax.f32 %v233, 0.0
  %v298 = vmax.f32 %v234, 0.0
  %v299 = vmax.f32 %v235, 0.0
  %v300 = vmax.f32 %v236, 0.0
  %v301 = vmax.f32 %v237, 0.0
  %v302 = vmax.f32 %v238, 0.0
  %v303 = vmax.f32 %v239, 0.0
  %v304 = vmax.f32 %v240, 0.0
  %v305 = vmax.f32 %v241, 0.0
  %v306 = vmax.f32 %v242, 0.0
  %v307 = vmax.f32 %v243, 0.0
  %v308 = vmax.f32 %v244, 0.0
  %v309 = vmax.f32 %v245, 0.0
  %v310 = vmax.f32 %v246, 0.0
  %v311 = vmax.f32 %v247, 0.0
  %v312 = vmax.f32 %v248, 0.0
  %v313 = vmax.f32 %v249, 0.0
  %v314 = vmax.f32 %v250, 0.0
  %v315 = vmax.f32 %v251, 0.0
  %v316 = vmax.f32 %v252, 0.0
  %v317 = vmax.f32 %v253, 0.0
  %v318 = vmax.f32 %v254, 0.0
  %v319 = vmax.f32 %v255, 0.0
  %v320 = vmax.f32 %v256, 0.0
  %v321 = vmax.f32 %v257, 0.0
  %v322 = vmax.f32 %v258, 0.0
  %v323 = vmax.f32 %v259, 0.0
  %v324 = vmax.f32 %v260, 0.0
  %v325 = vmax.f32 %v261, 0.0
  %v326 = vmax.f32 %v262, 0.0
  %v327 = vmax.f32 %v263, 0.0
  %v328 = vmax.f32 %v264, 0.0
  %v329 = vmax.f32 %v265, 0.0
  %v330 = vmax.f32 %v266, 0.0
  %v331 = vmax.f32 %v267, 0.0
  %v332 = vmax.f32 %v268, 0.0
  %v333 = vmax.f32 %v269, 0.0
  %v334 = vmax.f32 %v270, 0.0
  %v335 = vmax.f32 %v271, 0.0
  %v336 = vmax.f32 %v272, 0.0
  %v337 = vmax.f32 %v273, 0.0
  %v338 = vmax.f32 %v274, 0.0
  %v339 = vmax.f32 %v275, 0.0
  %v340 = vmax.f32 %v276, 0.0
  %v341 = vmax.f32 %v277, 0.0
  %v342 = vmax.f32 %v278, 0.0
  %v343 = vmax.f32 %v279, 0.0
  %v344 = vmax.f32 %v280, 0.0
  %v345 = vmax.f32 %v281, 0.0
  %v346 = vmax.f32 %v282, 0.0
  %v347 = vmax.f32 %v283, 0.0
  %v348 = vpack.c.bf16 %v285, %v284
  %v349 = vpack.c.bf16 %v287, %v286
  %v350 = vpack.c.bf16 %v289, %v288
  %v351 = vpack.c.bf16 %v291, %v290
  %v352 = vpack.c.bf16 %v293, %v292
  %v353 = vpack.c.bf16 %v295, %v294
  %v354 = vpack.c.bf16 %v297, %v296
  %v355 = vpack.c.bf16 %v299, %v298
  %v356 = vpack.c.bf16 %v301, %v300
  %v357 = vpack.c.bf16 %v303, %v302
  %v358 = vpack.c.bf16 %v305, %v304
  %v359 = vpack.c.bf16 %v307, %v306
  %v360 = vpack.c.bf16 %v309, %v308
  %v361 = vpack.c.bf16 %v311, %v310
  %v362 = vpack.c.bf16 %v313, %v312
  %v363 = vpack.c.bf16 %v315, %v314
  %v364 = vpack.c.bf16 %v317, %v316
  %v365 = vpack.c.bf16 %v319, %v318
  %v366 = vpack.c.bf16 %v321, %v320
  %v367 = vpack.c.bf16 %v323, %v322
  %v368 = vpack.c.bf16 %v325, %v324
  %v369 = vpack.c.bf16 %v327, %v326
  %v370 = vpack.c.bf16 %v329, %v328
  %v371 = vpack.c.bf16 %v331, %v330
  %v372 = vpack.c.bf16 %v333, %v332
  %v373 = vpack.c.bf16 %v335, %v334
  %v374 = vpack.c.bf16 %v337, %v336
  %v375 = vpack.c.bf16 %v339, %v338
  %v376 = vpack.c.bf16 %v341, %v340
  %v377 = vpack.c.bf16 %v343, %v342
  %v378 = vpack.c.bf16 %v345, %v344
  %v379 = vpack.c.bf16 %v347, %v346
  %v412 = vunpack.c.l.b16 %v348
  %v413 = vunpack.c.h.b16 %v348
  %v414 = vunpack.c.l.b16 %v349
  %v415 = vunpack.c.h.b16 %v349
  %v416 = vunpack.c.l.b16 %v350
  %v417 = vunpack.c.h.b16 %v350
  %v418 = vunpack.c.l.b16 %v351
  %v419 = vunpack.c.h.b16 %v351
  %v420 = vunpack.c.l.b16 %v352
  %v421 = vunpack.c.h.b16 %v352
  %v422 = vunpack.c.l.b16 %v353
  %v423 = vunpack.c.h.b16 %v353
  %v424 = vunpack.c.l.b16 %v354
  %v425 = vunpack.c.h.b16 %v354
  %v426 = vunpack.c.l.b16 %v355
  %v427 = vunpack.c.h.b16 %v355
  %v428 = vunpack.c.l.b16 %v356
  %v429 = vunpack.c.h.b16 %v356
  %v430 = vunpack.c.l.b16 %v357
  %v431 = vunpack.c.h.b16 %v357
  %v432 = vunpack.c.l.b16 %v358
  %v433 = vunpack.c.h.b16 %v358
  %v434 = vunpack.c.l.b16 %v359
  %v435 = vunpack.c.h.b16 %v359
  %v436 = vunpack.c.l.b16 %v360
  %v437 = vunpack.c.h.b16 %v360
  %v438 = vunpack.c.l.b16 %v361
  %v439 = vunpack.c.h.b16 %v361
  %v440 = vunpack.c.l.b16 %v362
  %v441 = vunpack.c.h.b16 %v362
  %v442 = vunpack.c.l.b16 %v363
  %v443 = vunpack.c.h.b16 %v363
  %v444 = vunpack.c.l.b16 %v364
  %v445 = vunpack.c.h.b16 %v364
  %v446 = vunpack.c.l.b16 %v365
  %v447 = vunpack.c.h.b16 %v365
  %v448 = vunpack.c.l.b16 %v366
  %v449 = vunpack.c.h.b16 %v366
  %v450 = vunpack.c.l.b16 %v367
  %v451 = vunpack.c.h.b16 %v367
  %v452 = vunpack.c.l.b16 %v368
  %v453 = vunpack.c.h.b16 %v368
  %v454 = vunpack.c.l.b16 %v369
  %v455 = vunpack.c.h.b16 %v369
  %v456 = vunpack.c.l.b16 %v370
  %v457 = vunpack.c.h.b16 %v370
  %v458 = vunpack.c.l.b16 %v371
  %v459 = vunpack.c.h.b16 %v371
  %v460 = vunpack.c.l.b16 %v372
  %v461 = vunpack.c.h.b16 %v372
  %v462 = vunpack.c.l.b16 %v373
  %v463 = vunpack.c.h.b16 %v373
  %v464 = vunpack.c.l.b16 %v374
  %v465 = vunpack.c.h.b16 %v374
  %v466 = vunpack.c.l.b16 %v375
  %v467 = vunpack.c.h.b16 %v375
  %v468 = vunpack.c.l.b16 %v376
  %v469 = vunpack.c.h.b16 %v376
  %v470 = vunpack.c.l.b16 %v377
  %v471 = vunpack.c.h.b16 %v377
  %v472 = vunpack.c.l.b16 %v378
  %v473 = vunpack.c.h.b16 %v378
  %v474 = vunpack.c.l.b16 %v379
  %v475 = vunpack.c.h.b16 %v379
  %v476 = vpack.c.b16 %v412, %v412
  %v477 = vpack.c.b16 %v413, %v413
  %v478 = vpack.c.b16 %v414, %v414
  %v479 = vpack.c.b16 %v415, %v415
  %v480 = vpack.c.b16 %v416, %v416
  %v481 = vpack.c.b16 %v417, %v417
  %v482 = vpack.c.b16 %v418, %v418
  %v483 = vpack.c.b16 %v419, %v419
  %v484 = vpack.c.b16 %v420, %v420
  %v485 = vpack.c.b16 %v421, %v421
  %v486 = vpack.c.b16 %v422, %v422
  %v487 = vpack.c.b16 %v423, %v423
  %v488 = vpack.c.b16 %v424, %v424
  %v489 = vpack.c.b16 %v425, %v425
  %v490 = vpack.c.b16 %v426, %v426
  %v491 = vpack.c.b16 %v427, %v427
  %v492 = vpack.c.b16 %v428, %v428
  %v493 = vpack.c.b16 %v429, %v429
  %v494 = vpack.c.b16 %v430, %v430
  %v495 = vpack.c.b16 %v431, %v431
  %v496 = vpack.c.b16 %v432, %v432
  %v497 = vpack.c.b16 %v433, %v433
  %v498 = vpack.c.b16 %v434, %v434
  %v499 = vpack.c.b16 %v435, %v435
  %v500 = vpack.c.b16 %v436, %v436
  %v501 = vpack.c.b16 %v437, %v437
  %v502 = vpack.c.b16 %v438, %v438
  %v503 = vpack.c.b16 %v439, %v439
  %v504 = vpack.c.b16 %v440, %v440
  %v505 = vpack.c.b16 %v441, %v441
  %v506 = vpack.c.b16 %v442, %v442
  %v507 = vpack.c.b16 %v443, %v443
  %v508 = vpack.c.b16 %v444, %v444
  %v509 = vpack.c.b16 %v445, %v445
  %v510 = vpack.c.b16 %v446, %v446
  %v511 = vpack.c.b16 %v447, %v447
  %v512 = vpack.c.b16 %v448, %v448
  %v513 = vpack.c.b16 %v449, %v449
  %v514 = vpack.c.b16 %v450, %v450
  %v515 = vpack.c.b16 %v451, %v451
  %v516 = vpack.c.b16 %v452, %v452
  %v517 = vpack.c.b16 %v453, %v453
  %v518 = vpack.c.b16 %v454, %v454
  %v519 = vpack.c.b16 %v455, %v455
  %v520 = vpack.c.b16 %v456, %v456
  %v521 = vpack.c.b16 %v457, %v457
  %v522 = vpack.c.b16 %v458, %v458
  %v523 = vpack.c.b16 %v459, %v459
  %v524 = vpack.c.b16 %v460, %v460
  %v525 = vpack.c.b16 %v461, %v461
  %v526 = vpack.c.b16 %v462, %v462
  %v527 = vpack.c.b16 %v463, %v463
  %v528 = vpack.c.b16 %v464, %v464
  %v529 = vpack.c.b16 %v465, %v465
  %v530 = vpack.c.b16 %v466, %v466
  %v531 = vpack.c.b16 %v467, %v467
  %v532 = vpack.c.b16 %v468, %v468
  %v533 = vpack.c.b16 %v469, %v469
  %v534 = vpack.c.b16 %v470, %v470
  %v535 = vpack.c.b16 %v471, %v471
  %v536 = vpack.c.b16 %v472, %v472
  %v537 = vpack.c.b16 %v473, %v473
  %v538 = vpack.c.b16 %v474, %v474
  %v539 = vpack.c.b16 %v475, %v475
  %604 = vst [vmem:[%s3] sm:$0xf] %v476
  %605 = vst [vmem:[%s3 + $0x4] sm:$0xf] %v477
  %606 = vst [vmem:[%s3 + $0x8] sm:$0xf] %v478
  %607 = vst [vmem:[%s3 + $0xc] sm:$0xf] %v479
  %608 = vst [vmem:[%s3 + $0x10] sm:$0xf] %v480
  %609 = vst [vmem:[%s3 + $0x14] sm:$0xf] %v481
  %610 = vst [vmem:[%s3 + $0x18] sm:$0xf] %v482
  %611 = vst [vmem:[%s3 + $0x1c] sm:$0xf] %v483
  %612 = vst [vmem:[%s3 + $0x20] sm:$0xf] %v484
  %613 = vst [vmem:[%s3 + $0x24] sm:$0xf] %v485
  %614 = vst [vmem:[%s3 + $0x28] sm:$0xf] %v486
  %615 = vst [vmem:[%s3 + $0x2c] sm:$0xf] %v487
  %616 = vst [vmem:[%s3 + $0x30] sm:$0xf] %v488
  %617 = vst [vmem:[%s3 + $0x34] sm:$0xf] %v489
  %618 = vst [vmem:[%s3 + $0x38] sm:$0xf] %v490
  %619 = vst [vmem:[%s3 + $0x3c] sm:$0xf] %v491
  %620 = vst [vmem:[%s3 + $0x40] sm:$0xf] %v492
  %621 = vst [vmem:[%s3 + $0x44] sm:$0xf] %v493
  %622 = vst [vmem:[%s3 + $0x48] sm:$0xf] %v494
  %623 = vst [vmem:[%s3 + $0x4c] sm:$0xf] %v495
  %624 = vst [vmem:[%s3 + $0x50] sm:$0xf] %v496
  %625 = vst [vmem:[%s3 + $0x54] sm:$0xf] %v497
  %626 = vst [vmem:[%s3 + $0x58] sm:$0xf] %v498
  %627 = vst [vmem:[%s3 + $0x5c] sm:$0xf] %v499
  %628 = vst [vmem:[%s3 + $0x60] sm:$0xf] %v500
  %629 = vst [vmem:[%s3 + $0x64] sm:$0xf] %v501
  %630 = vst [vmem:[%s3 + $0x68] sm:$0xf] %v502
  %631 = vst [vmem:[%s3 + $0x6c] sm:$0xf] %v503
  %632 = vst [vmem:[%s3 + $0x70] sm:$0xf] %v504
  %633 = vst [vmem:[%s3 + $0x74] sm:$0xf] %v505
  %634 = vst [vmem:[%s3 + $0x78] sm:$0xf] %v506
  %635 = vst [vmem:[%s3 + $0x7c] sm:$0xf] %v507
  %636 = vst [vmem:[%s3 + $0x80] sm:$0xf] %v508
  %637 = vst [vmem:[%s3 + $0x84] sm:$0xf] %v509
  %638 = vst [vmem:[%s3 + $0x88] sm:$0xf] %v510
  %639 = vst [vmem:[%s3 + $0x8c] sm:$0xf] %v511
  %640 = vst [vmem:[%s3 + $0x90] sm:$0xf] %v512
  %641 = vst [vmem:[%s3 + $0x94] sm:$0xf] %v513
  %642 = vst [vmem:[%s3 + $0x98] sm:$0xf] %v514
  %643 = vst [vmem:[%s3 + $0x9c] sm:$0xf] %v515
  %644 = vst [vmem:[%s3 + $0xa0] sm:$0xf] %v516
  %645 = vst [vmem:[%s3 + $0xa4] sm:$0xf] %v517
  %646 = vst [vmem:[%s3 + $0xa8] sm:$0xf] %v518
  %647 = vst [vmem:[%s3 + $0xac] sm:$0xf] %v519
  %648 = vst [vmem:[%s3 + $0xb0] sm:$0xf] %v520
  %649 = vst [vmem:[%s3 + $0xb4] sm:$0xf] %v521
  %650 = vst [vmem:[%s3 + $0xb8] sm:$0xf] %v522
  %651 = vst [vmem:[%s3 + $0xbc] sm:$0xf] %v523
  %652 = vst [vmem:[%s3 + $0xc0] sm:$0xf] %v524
  %653 = vst [vmem:[%s3 + $0xc4] sm:$0xf] %v525
  %654 = vst [vmem:[%s3 + $0xc8] sm:$0xf] %v526
  %655 = vst [vmem:[%s3 + $0xcc] sm:$0xf] %v527
  %656 = vst [vmem:[%s3 + $0xd0] sm:$0xf] %v528
  %657 = vst [vmem:[%s3 + $0xd4] sm:$0xf] %v529
  %658 = vst [vmem:[%s3 + $0xd8] sm:$0xf] %v530
  %659 = vst [vmem:[%s3 + $0xdc] sm:$0xf] %v531
  %660 = vst [vmem:[%s3 + $0xe0] sm:$0xf] %v532
  %661 = vst [vmem:[%s3 + $0xe4] sm:$0xf] %v533
  %662 = vst [vmem:[%s3 + $0xe8] sm:$0xf] %v534
  %663 = vst [vmem:[%s3 + $0xec] sm:$0xf] %v535
  %664 = vst [vmem:[%s3 + $0xf0] sm:$0xf] %v536
  %665 = vst [vmem:[%s3 + $0xf4] sm:$0xf] %v537
  %666 = vst [vmem:[%s3 + $0xf8] sm:$0xf] %v538
  %667 = vst [vmem:[%s3 + $0xfc] sm:$0xf] %v539
  // Predicated region
  $region14: #{segnet_enc_forward.7} parent=0 // pred_check
    _
  $region15: #{segnet_enc_forward.7} parent=0 // pred_check_branch
    %669 = sbr.rel (0) target = $region17
  $region16: #{segnet_enc_forward.7} parent=0 // pred_region
    _
  $region17: #{segnet_enc_forward.7} parent=0 // pred_fallthru
    _
  // Predicated region
  $region18: #{segnet_enc_forward.7} parent=0 // pred_check
    _
  $region19: #{segnet_enc_forward.7} parent=0 // pred_check_branch
    %671 = sbr.rel (0) target = $region21
  $region20: #{segnet_enc_forward.7} parent=0 // pred_region
    _
  $region21: #{segnet_enc_forward.7} parent=0 // pred_fallthru
    _

// kernel: segnet_enc_forward.4
$region0: #{segnet_enc_forward.4}
  #allocation0 [shape = 'u32[]', space=smem, size = 0x4, offset = 0x4, fixed_abs, tag = 'smem constant byte address 0x4 - core index']
  #allocation1 [shape = 'u32[144,128]{1,0:T(1,128)}', space=vmem, size = 0x12000, scoped, tag = 'internal scratch']
  #allocation2 [shape = 'bf16[2,18,16,128]{3,2,1,0:T(16,128)(2,1)}', space=vmem, size = 0x24000, scoped, tag = 'scratch operand']
  #allocation3 [shape = 'bf16[18,18,128]{2,1,0:T(8,128)(2,1)}', space=vmem, size = 0x1b000, scoped, tag = 'scratch operand']
  #allocation4 [shape = 's32[6]{0}', space=sflag, size = 0x18, scoped, tag = 'scratch operand']
  #allocation5 [shape = 's32[]', space=sflag, size = 0x4, offset = 0, fixed_abs, tag = 'sflag constant byte address 0x0 - dummy sync flag']
  #allocation6 [shape = 's32[]', space=sflag, size = 0x4, offset = 0, fixed_abs, tag = 'sflag constant byte address 0x0 - dummy sync flag']
  #allocation7 [shape = 's32[]', space=sflag, size = 0x4, offset = 0, fixed_abs, tag = 'sflag constant byte address 0x0 - dummy sync flag']
  #allocation8 [shape = 's32[]', space=sflag, size = 0x4, offset = 0, fixed_abs, tag = 'sflag constant byte address 0x0 - dummy sync flag']
  #allocation9 [shape = 's32[]', space=sflag, size = 0x4, offset = 0, fixed_abs, tag = 'sflag constant byte address 0x0 - dummy sync flag']
  #allocation10 [shape = 's32[]', space=sflag, size = 0x4, offset = 0, fixed_abs, tag = 'sflag constant byte address 0x0 - dummy sync flag']
  %s0 = inlined_call_operand.vmem [shape: bf16[2,16,16,128], index: 0, kind: input, shape index: {}]
  %s1 = inlined_call_operand.vmem [shape: bf16[3,384,128], index: 1, kind: input, shape index: {}]
  %s2 = inlined_call_operand.vmem [shape: f32[1,128], index: 2, kind: input, shape index: {}]
  %s3 = inlined_call_operand.vmem [shape: f32[1,128], index: 3, kind: input, shape index: {}]
  %s4 = inlined_call_operand.vmem [shape: bf16[2,1,256,128], index: 4, kind: output, shape index: {0}]
  %s5 = inlined_call_operand.vmem [shape: f32[2,1,1,128], index: 5, kind: output, shape index: {1}]
  %s6 = inlined_call_operand.vmem [shape: f32[2,1,1,128], index: 6, kind: output, shape index: {2}]
  %7 = xla_tuple %s4, %s5, %s6
  %s8 = sld [smem:[#allocation0]]
  $region301: #{segnet_enc_forward.4} parent=0
    _
  %s10 = ssub.s32 1, %s8
  %s11 = scalar_select 0, %s10, %s8
  loop: start=0, step=1, limit=4
  $region2: #{segnet_enc_forward.4} parent=0 // loop_pre_header
    _
  $region3: #{segnet_enc_forward.4} parent=0 // loop_header
    %s13 = sphi 0, %s17
    %p14 = scmp.ge.s32.totalorder %s13, 4
    %s20 = sphi 0, %s32
    %s21 = sphi 0, %s28
    %s22 = sphi 0, %s20
    %s23 = sphi 0, %s21
    %s24 = sphi 0, %s22
    %s25 = sphi 0, %s23
    %s33 = sphi 0, %s33
    %s35 = sphi 0, %s33
    %s36 = sphi 0, %s35
    %s50 = sphi 0, %s36
    %s54 = sphi 0, %s54
    %s56 = sphi 0, %s54
    %s57 = sphi 0, %s56
    %s71 = sphi 0, %s57
    %s75 = sphi 0, %s75
    %s77 = sphi 0, %s75
    %s78 = sphi 0, %s77
    %s92 = sphi 0, %s78
    %s100 = sphi 0, %s102
    %s103 = sphi 0, %s100
    %s104 = sphi 0, %s103
    %s120 = sphi 0, %s104
    %s128 = sphi 0, %s130
    %s131 = sphi 0, %s128
    %s132 = sphi 0, %s131
    %s148 = sphi 0, %s132
    %s156 = sphi 0, %s158
    %s159 = sphi 0, %s156
    %s160 = sphi 0, %s159
    %s176 = sphi 0, %s160
  $region4: #{segnet_enc_forward.4} parent=0 // loop_header_branch
    %16 = sbr.rel (%p14) target = $region8
  $region5: #{segnet_enc_forward.4} parent=0 // loop_body
    %s18 = ssub.s32 %s13, 1
    %s19 = ssub.s32 %s13, 2
    %s26 = sadd.s32 1, %s21
    %p27 = scmp.ge.s32.totalorder %s26, 1
    %s28 = scalar_select %p27, 0, %s26
    %s29 = sadd.s32 1, %s20
    %s30 = scalar_select %p27, %s29, %s20
    %p31 = scmp.ge.s32.totalorder %s30, 2
    %s32 = scalar_select %p31, 0, %s30
    %s34 = sadd.s32 %s33, 1
    %p37 = scmp.eq.s32.totalorder %s13, 1
    %p38 = scmp.ne.s32.totalorder %s33, %s35
    %p39 = scmp.eq.s32.totalorder %s13, 0
    %p40 = por %p38, %p39
    %p41 = scmp.ne.s32.totalorder %s33, %s35
    %p42 = scmp.eq.s32.totalorder %s18, 1
    %p43 = por %p41, %p42
    %p44 = scmp.ne.s32.totalorder %s35, %s36
    %p45 = scmp.eq.s32.totalorder %s18, 0
    %p46 = por %p44, %p45
    %p47 = scmp.ne.s32.totalorder %s35, %s36
    %p48 = scmp.eq.s32.totalorder %s19, 1
    %p49 = por %p47, %p48
    %p51 = scmp.ne.s32.totalorder %s36, %s50
    %p52 = scmp.eq.s32.totalorder %s19, 0
    %p53 = por %p51, %p52
    %s55 = sadd.s32 %s54, 1
    %p58 = scmp.eq.s32.totalorder %s13, 1
    %p59 = scmp.ne.s32.totalorder %s54, %s56
    %p60 = scmp.eq.s32.totalorder %s13, 0
    %p61 = por %p59, %p60
    %p62 = scmp.ne.s32.totalorder %s54, %s56
    %p63 = scmp.eq.s32.totalorder %s18, 1
    %p64 = por %p62, %p63
    %p65 = scmp.ne.s32.totalorder %s56, %s57
    %p66 = scmp.eq.s32.totalorder %s18, 0
    %p67 = por %p65, %p66
    %p68 = scmp.ne.s32.totalorder %s56, %s57
    %p69 = scmp.eq.s32.totalorder %s19, 1
    %p70 = por %p68, %p69
    %p72 = scmp.ne.s32.totalorder %s57, %s71
    %p73 = scmp.eq.s32.totalorder %s19, 0
    %p74 = por %p72, %p73
    %s76 = sadd.s32 %s75, 1
    %p79 = scmp.eq.s32.totalorder %s13, 1
    %p80 = scmp.ne.s32.totalorder %s75, %s77
    %p81 = scmp.eq.s32.totalorder %s13, 0
    %p82 = por %p80, %p81
    %p83 = scmp.ne.s32.totalorder %s75, %s77
    %p84 = scmp.eq.s32.totalorder %s18, 1
    %p85 = por %p83, %p84
    %p86 = scmp.ne.s32.totalorder %s77, %s78
    %p87 = scmp.eq.s32.totalorder %s18, 0
    %p88 = por %p86, %p87
    %p89 = scmp.ne.s32.totalorder %s77, %s78
    %p90 = scmp.eq.s32.totalorder %s19, 1
    %p91 = por %p89, %p90
    %p93 = scmp.ne.s32.totalorder %s78, %s92
    %p94 = scmp.eq.s32.totalorder %s19, 0
    %p95 = por %p93, %p94
    %s96 = ssub.s32 %s20, %s32
    %s97 = ssub.s32 %s21, %s28
    %s98 = sor.u32 %s96, %s97
    %p99 = scmp.eq.s32.totalorder %s98, 0
    %s101 = sadd.s32 %s100, 1
    %s102 = scalar_select %p99, %s100, %s101
    %p105 = pneg %p99
    %p106 = scmp.eq.s32.totalorder %s13, 1
    %p107 = por %p105, %p106
    %p108 = scmp.ne.s32.totalorder %s100, %s103
    %p109 = scmp.eq.s32.totalorder %s13, 0
    %p110 = por %p108, %p109
    %p111 = scmp.ne.s32.totalorder %s100, %s103
    %p112 = scmp.eq.s32.totalorder %s18, 1
    %p113 = por %p111, %p112
    %p114 = scmp.ne.s32.totalorder %s103, %s104
    %p115 = scmp.eq.s32.totalorder %s18, 0
    %p116 = por %p114, %p115
    %p117 = scmp.ne.s32.totalorder %s103, %s104
    %p118 = scmp.eq.s32.totalorder %s19, 1
    %p119 = por %p117, %p118
    %p121 = scmp.ne.s32.totalorder %s104, %s120
    %p122 = scmp.eq.s32.totalorder %s19, 0
    %p123 = por %p121, %p122
    %s124 = ssub.s32 %s20, %s32
    %s125 = ssub.s32 %s21, %s28
    %s126 = sor.u32 %s124, %s125
    %p127 = scmp.eq.s32.totalorder %s126, 0
    %s129 = sadd.s32 %s128, 1
    %s130 = scalar_select %p127, %s128, %s129
    %p133 = pneg %p127
    %p134 = scmp.eq.s32.totalorder %s13, 1
    %p135 = por %p133, %p134
    %p136 = scmp.ne.s32.totalorder %s128, %s131
    %p137 = scmp.eq.s32.totalorder %s13, 0
    %p138 = por %p136, %p137
    %p139 = scmp.ne.s32.totalorder %s128, %s131
    %p140 = scmp.eq.s32.totalorder %s18, 1
    %p141 = por %p139, %p140
    %p142 = scmp.ne.s32.totalorder %s131, %s132
    %p143 = scmp.eq.s32.totalorder %s18, 0
    %p144 = por %p142, %p143
    %p145 = scmp.ne.s32.totalorder %s131, %s132
    %p146 = scmp.eq.s32.totalorder %s19, 1
    %p147 = por %p145, %p146
    %p149 = scmp.ne.s32.totalorder %s132, %s148
    %p150 = scmp.eq.s32.totalorder %s19, 0
    %p151 = por %p149, %p150
    %s152 = ssub.s32 %s20, %s32
    %s153 = ssub.s32 %s21, %s28
    %s154 = sor.u32 %s152, %s153
    %p155 = scmp.eq.s32.totalorder %s154, 0
    %s157 = sadd.s32 %s156, 1
    %s158 = scalar_select %p155, %s156, %s157
    %p161 = pneg %p155
    %p162 = scmp.eq.s32.totalorder %s13, 1
    %p163 = por %p161, %p162
    %p164 = scmp.ne.s32.totalorder %s156, %s159
    %p165 = scmp.eq.s32.totalorder %s13, 0
    %p166 = por %p164, %p165
    %p167 = scmp.ne.s32.totalorder %s156, %s159
    %p168 = scmp.eq.s32.totalorder %s18, 1
    %p169 = por %p167, %p168
    %p170 = scmp.ne.s32.totalorder %s159, %s160
    %p171 = scmp.eq.s32.totalorder %s18, 0
    %p172 = por %p170, %p171
    %p173 = scmp.ne.s32.totalorder %s159, %s160
    %p174 = scmp.eq.s32.totalorder %s19, 1
    %p175 = por %p173, %p174
    %p177 = scmp.ne.s32.totalorder %s160, %s176
    %p178 = scmp.eq.s32.totalorder %s19, 0
    %p179 = por %p177, %p178
    %p180 = scmp.le.s32.totalorder 1, %s13
    %p181 = scmp.lt.s32.totalorder %s13, 3
    %p182 = pnand %p180, %p181
    %p183 = pneg %p182
    // Predicated region
    $region9: #{segnet_enc_forward.4} parent=5 // pred_check
      _
    $region10: #{segnet_enc_forward.4} parent=5 // pred_check_branch
      %185 = sbr.rel (%p182) target = $region12
    $region11: #{segnet_enc_forward.4} parent=5 // pred_region
      %s186 = ssub.s32 %s13, 1
      // Predicated region
      $region13: #{segnet_enc_forward.4} parent=11 // pred_check
        %p187 = pneg %p46
      $region14: #{segnet_enc_forward.4} parent=11 // pred_check_branch
        %189 = sbr.rel (%p187) target = $region16
      $region15: #{segnet_enc_forward.4} parent=11 // pred_region
        _
      $region16: #{segnet_enc_forward.4} parent=11 // pred_fallthru
        _
      // Predicated region
      $region17: #{segnet_enc_forward.4} parent=11 // pred_check
        %p190 = pneg %p67
      $region18: #{segnet_enc_forward.4} parent=11 // pred_check_branch
        %192 = sbr.rel (%p190) target = $region20
      $region19: #{segnet_enc_forward.4} parent=11 // pred_region
        _
      $region20: #{segnet_enc_forward.4} parent=11 // pred_fallthru
        _
      // Predicated region
      $region21: #{segnet_enc_forward.4} parent=11 // pred_check
        %p193 = pneg %p88
      $region22: #{segnet_enc_forward.4} parent=11 // pred_check_branch
        %195 = sbr.rel (%p193) target = $region24
      $region23: #{segnet_enc_forward.4} parent=11 // pred_region
        _
      $region24: #{segnet_enc_forward.4} parent=11 // pred_fallthru
        _
    $region12: #{segnet_enc_forward.4} parent=5 // pred_fallthru
      _
    %p196 = scmp.lt.s32.totalorder %s13, 2
    // Predicated region
    $region25: #{segnet_enc_forward.4} parent=5 // pred_check
      %p197 = pneg %p196
    $region26: #{segnet_enc_forward.4} parent=5 // pred_check_branch
      %199 = sbr.rel (%p197) target = $region28
    $region27: #{segnet_enc_forward.4} parent=5 // pred_region
      _
    $region28: #{segnet_enc_forward.4} parent=5 // pred_fallthru
      _
    %p200 = scmp.le.s32.totalorder 1, %s13
    %p201 = scmp.lt.s32.totalorder %s13, 3
    %p202 = pnand %p200, %p201
    %p203 = pneg %p202
    // Predicated region
    $region29: #{segnet_enc_forward.4} parent=5 // pred_check
      _
    $region30: #{segnet_enc_forward.4} parent=5 // pred_check_branch
      %205 = sbr.rel (%p202) target = $region32
    $region31: #{segnet_enc_forward.4} parent=5 // pred_region
      %s206 = ssub.s32 %s13, 1
      %p207 = pneg %p46
      %p208 = pneg %p43
      %p209 = pneg %p67
      %p210 = pneg %p64
      %p211 = pneg %p88
      %p212 = pneg %p85
      %p213 = pneg %p116
      %p214 = pneg %p113
      %p215 = scmp.lt.s32.totalorder %s22, 1
      %s216 = scalar_select %p215, %s22, 1
      %p217 = scmp.lt.s32.totalorder %s23, 0
      %s218 = scalar_select %p217, %s23, 0
      %s219 = smul.addr %s218, 32
      %s220 = smul.addr %s216, 32
      %s221 = sadd.s32 %s219, %s220
      %s222 = smul.addr %s221, 4
      %s223 = scalar_lea.vmem %s4, %s222
      %p224 = pneg %p144
      %p225 = pneg %p141
      %p226 = scmp.lt.s32.totalorder %s22, 1
      %s227 = scalar_select %p226, %s22, 1
      %p228 = scmp.lt.s32.totalorder %s23, 0
      %s229 = scalar_select %p228, %s23, 0
      %s230 = sadd.s32 %s229, %s227
      %s231 = scalar_lea.vmem %s5, %s230
      %p232 = pneg %p172
      %p233 = pneg %p169
      %p234 = scmp.lt.s32.totalorder %s22, 1
      %s235 = scalar_select %p234, %s22, 1
      %p236 = scmp.lt.s32.totalorder %s23, 0
      %s237 = scalar_select %p236, %s23, 0
      %s238 = sadd.s32 %s237, %s235
      %s239 = scalar_lea.vmem %s6, %s238
      %p240 = scmp.lt.s32.totalorder %s22, 1
      %s241 = scalar_select %p240, %s22, 1
      %p242 = scmp.lt.s32.totalorder %s23, 0
      %s243 = scalar_select %p242, %s23, 0
      %s244 = smul.addr %s243, 32
      %s245 = smul.addr %s241, 32
      %s246 = sadd.s32 %s244, %s245
      %s247 = smul.addr %s246, 4
      %s248 = scalar_lea.vmem %s4, %s247
      %p249 = scmp.lt.s32.totalorder %s22, 1
      %s250 = scalar_select %p249, %s22, 1
      %p251 = scmp.lt.s32.totalorder %s23, 0
      %s252 = scalar_select %p251, %s23, 0
      %s253 = sadd.s32 %s252, %s250
      %s254 = scalar_lea.vmem %s5, %s253
      %p255 = scmp.lt.s32.totalorder %s22, 1
      %s256 = scalar_select %p255, %s22, 1
      %p257 = scmp.lt.s32.totalorder %s23, 0
      %s258 = scalar_select %p257, %s23, 0
      %s259 = sadd.s32 %s258, %s256
      %s260 = scalar_lea.vmem %s6, %s259
      %p262 = scmp.lt.s32.totalorder %s23, 0
      %s263 = ssub.s32 0, %s23
      %s264 = scalar_select %p262, %s263, %s23
      %s265 = sand.u32 %s264, 1
      %s266 = ssub.s32 0, %s265
      %s267 = scalar_select %p262, %s266, %s265
      %p268 = scmp.ne.s32.totalorder %s267, 0
      %p269 = scmp.lt.s32.totalorder %s267, 0
      %p270 = pnand %p269, %p268
      %p271 = pneg %p270
      %s272 = sadd.s32 %s267, 2
      %s273 = scalar_select %p271, %s272, %s267
      %p274 = scmp.eq.s32.totalorder %s23, 0
      // Predicated region
      $region33: #{segnet_enc_forward.4} parent=31 // pred_check
        %p275 = pneg %p274
      $region34: #{segnet_enc_forward.4} parent=31 // pred_check_branch
        %277 = sbr.rel (%p275) target = $region36
      $region35: #{segnet_enc_forward.4} parent=31 // pred_region
        %s278 = smul.u32 %s23, 16
        %s279 = smul.u32 %s278, 2
        %s280 = smul.u32 %s22, 32
        %s281 = sadd.s32 %s279, %s280
        %s282 = smul.addr %s281, 4
        %s283 = scalar_lea.vmem %s0, %s282
        %s284 = smul.u32 %s273, 18
        %s285 = sadd.s32 1, %s284
        %s286 = smul.addr %s285, 8
        %s287 = scalar_lea.vmem [#allocation2], %s286
        %s288 = smul.u32 %s273, 3
        %s289 = scalar_lea.sflag [#allocation4], %s288
        %p291 = scmp.lt.u32.totalorder 128, 8
        %p292 = pneg %p291
        // Predicated region
        $region37: #{segnet_enc_forward.4} parent=35 // pred_check
          _
        $region38: #{segnet_enc_forward.4} parent=35 // pred_check_branch
          %294 = sbr.rel (%p291) target = $region40
        $region39: #{segnet_enc_forward.4} parent=35 // pred_region
          %s309 = sand.u32 128, 7
          %p310 = scmp.eq.s32.totalorder %s309, 0
          // Predicated region
          $region52: #{segnet_enc_forward.4} parent=39 // pred_check
            %p311 = pneg %p310
          $region53: #{segnet_enc_forward.4} parent=39 // pred_check_branch
            %313 = sbr.rel (%p311) target = $region55
          $region54: #{segnet_enc_forward.4} parent=39 // pred_region
            loop: start=0, step=1, limit=1
            $region56: #{segnet_enc_forward.4} parent=54 // loop_pre_header
              _
            $region57: #{segnet_enc_forward.4} parent=54 // loop_header
              %s315 = sphi 0, %s319
              %p316 = scmp.ge.s32.totalorder %s315, 1
              %s320 = sphi %s283, %s283
              %s321 = sphi %s287, %s287
            $region58: #{segnet_enc_forward.4} parent=54 // loop_header_branch
              %318 = sbr.rel (%p316) target = $region62
            $region59: #{segnet_enc_forward.4} parent=54 // loop_body
              %v322 = vld [vmem:[%s320] sm:$0xff]
              %323 = vst [vmem:[%s321] sm:$0xff] %v322
              %v324 = vld [vmem:[%s320 + $0x8] sm:$0xff]
              %325 = vst [vmem:[%s321 + $0x8] sm:$0xff] %v324
              %v326 = vld [vmem:[%s320 + $0x10] sm:$0xff]
              %327 = vst [vmem:[%s321 + $0x10] sm:$0xff] %v326
              %v328 = vld [vmem:[%s320 + $0x18] sm:$0xff]
              %329 = vst [vmem:[%s321 + $0x18] sm:$0xff] %v328
              %v330 = vld [vmem:[%s320 + $0x20] sm:$0xff]
              %331 = vst [vmem:[%s321 + $0x20] sm:$0xff] %v330
              %v332 = vld [vmem:[%s320 + $0x28] sm:$0xff]
              %333 = vst [vmem:[%s321 + $0x28] sm:$0xff] %v332
              %v334 = vld [vmem:[%s320 + $0x30] sm:$0xff]
              %335 = vst [vmem:[%s321 + $0x30] sm:$0xff] %v334
              %v336 = vld [vmem:[%s320 + $0x38] sm:$0xff]
              %337 = vst [vmem:[%s321 + $0x38] sm:$0xff] %v336
              %v338 = vld [vmem:[%s320 + $0x40] sm:$0xff]
              %339 = vst [vmem:[%s321 + $0x40] sm:$0xff] %v338
              %v340 = vld [vmem:[%s320 + $0x48] sm:$0xff]
              %341 = vst [vmem:[%s321 + $0x48] sm:$0xff] %v340
              %v342 = vld [vmem:[%s320 + $0x50] sm:$0xff]
              %343 = vst [vmem:[%s321 + $0x50] sm:$0xff] %v342
              %v344 = vld [vmem:[%s320 + $0x58] sm:$0xff]
              %345 = vst [vmem:[%s321 + $0x58] sm:$0xff] %v344
              %v346 = vld [vmem:[%s320 + $0x60] sm:$0xff]
              %347 = vst [vmem:[%s321 + $0x60] sm:$0xff] %v346
              %v348 = vld [vmem:[%s320 + $0x68] sm:$0xff]
              %349 = vst [vmem:[%s321 + $0x68] sm:$0xff] %v348
              %v350 = vld [vmem:[%s320 + $0x70] sm:$0xff]
              %351 = vst [vmem:[%s321 + $0x70] sm:$0xff] %v350
              %v352 = vld [vmem:[%s320 + $0x78] sm:$0xff]
              %353 = vst [vmem:[%s321 + $0x78] sm:$0xff] %v352
            $region60: #{segnet_enc_forward.4} parent=54 // loop_footer
              %s319 = sadd.s32 1, %s315
            $region61: #{segnet_enc_forward.4} parent=54 // loop_footer_branch
              %314 = sbr.rel target = $region57
            $region62: #{segnet_enc_forward.4} parent=54 // loop_exit
              _
          $region55: #{segnet_enc_forward.4} parent=39 // pred_fallthru
            _
          %p354 = pneg %p310
          // Predicated region
          $region63: #{segnet_enc_forward.4} parent=39 // pred_check
            _
          $region64: #{segnet_enc_forward.4} parent=39 // pred_check_branch
            %356 = sbr.rel (%p310) target = $region66
          $region65: #{segnet_enc_forward.4} parent=39 // pred_region
            %s357 = sand.u32 128, 7
          $region66: #{segnet_enc_forward.4} parent=39 // pred_fallthru
            _
        $region40: #{segnet_enc_forward.4} parent=35 // pred_fallthru
          _
        // Predicated region
        $region41: #{segnet_enc_forward.4} parent=35 // pred_check
          %p295 = pneg %p291
        $region42: #{segnet_enc_forward.4} parent=35 // pred_check_branch
          %297 = sbr.rel (%p295) target = $region44
        $region43: #{segnet_enc_forward.4} parent=35 // pred_region
          %s298 = sshllo.u32 0, 128
          loop: start=0, step=1, limit=1
          $region45: #{segnet_enc_forward.4} parent=43 // loop_pre_header
            _
          $region46: #{segnet_enc_forward.4} parent=43 // loop_header
            %s300 = sphi 0, %s304
            %p301 = scmp.ge.s32.totalorder %s300, 1
            %s305 = sphi %s283, %s283
            %s306 = sphi %s287, %s287
          $region47: #{segnet_enc_forward.4} parent=43 // loop_header_branch
            %303 = sbr.rel (%p301) target = $region51
          $region48: #{segnet_enc_forward.4} parent=43 // loop_body
            %v307 = vld [vmem:[%s305] sm:%s298]
            %308 = vst [vmem:[%s306] sm:%s298] %v307
          $region49: #{segnet_enc_forward.4} parent=43 // loop_footer
            %s304 = sadd.s32 1, %s300
          $region50: #{segnet_enc_forward.4} parent=43 // loop_footer_branch
            %299 = sbr.rel target = $region46
          $region51: #{segnet_enc_forward.4} parent=43 // loop_exit
            _
        $region44: #{segnet_enc_forward.4} parent=35 // pred_fallthru
          _
        // Predicated region
        $region67: #{segnet_enc_forward.4} parent=35 // pred_check
          _
        $region68: #{segnet_enc_forward.4} parent=35 // pred_check_branch
          %360 = sbr.rel (0) target = $region70
        $region69: #{segnet_enc_forward.4} parent=35 // pred_region
          %361 = vsyncadd %s289, 2048
        $region70: #{segnet_enc_forward.4} parent=35 // pred_fallthru
          _
        %p362 = scmp.gt.s32.totalorder %s23, 0
        // Predicated region
        $region71: #{segnet_enc_forward.4} parent=35 // pred_check
          %p363 = pneg %p362
        $region72: #{segnet_enc_forward.4} parent=35 // pred_check_branch
          %365 = sbr.rel (%p363) target = $region74
        $region73: #{segnet_enc_forward.4} parent=35 // pred_region
          %s366 = ssub.s32 %s278, 1
          %s367 = smul.u32 %s366, 2
          %s368 = sadd.s32 %s367, %s280
          %s369 = smul.addr %s368, 4
          %s370 = scalar_lea.vmem %s0, %s369
          %s371 = smul.addr %s284, 8
          %s372 = scalar_lea.vmem [#allocation2], %s371
          %s373 = sadd.s32 1, %s288
          %s374 = scalar_lea.sflag [#allocation4], %s373
          %p376 = scmp.lt.u32.totalorder 8, 8
          %p377 = pneg %p376
          // Predicated region
          $region75: #{segnet_enc_forward.4} parent=73 // pred_check
            _
          $region76: #{segnet_enc_forward.4} parent=73 // pred_check_branch
            %379 = sbr.rel (%p376) target = $region78
          $region77: #{segnet_enc_forward.4} parent=73 // pred_region
            %s394 = sand.u32 8, 7
            %p395 = scmp.eq.s32.totalorder %s394, 0
            // Predicated region
            $region90: #{segnet_enc_forward.4} parent=77 // pred_check
              %p396 = pneg %p395
            $region91: #{segnet_enc_forward.4} parent=77 // pred_check_branch
              %398 = sbr.rel (%p396) target = $region93
            $region92: #{segnet_enc_forward.4} parent=77 // pred_region
              loop: start=0, step=1, limit=1
              $region94: #{segnet_enc_forward.4} parent=92 // loop_pre_header
                _
              $region95: #{segnet_enc_forward.4} parent=92 // loop_header
                %s400 = sphi 0, %s404
                %p401 = scmp.ge.s32.totalorder %s400, 1
                %s405 = sphi %s370, %s370
                %s406 = sphi %s372, %s372
              $region96: #{segnet_enc_forward.4} parent=92 // loop_header_branch
                %403 = sbr.rel (%p401) target = $region100
              $region97: #{segnet_enc_forward.4} parent=92 // loop_body
                %v407 = vld [vmem:[%s405] sm:$0xff]
                %408 = vst [vmem:[%s406] sm:$0xff] %v407
              $region98: #{segnet_enc_forward.4} parent=92 // loop_footer
                %s404 = sadd.s32 1, %s400
              $region99: #{segnet_enc_forward.4} parent=92 // loop_footer_branch
                %399 = sbr.rel target = $region95
              $region100: #{segnet_enc_forward.4} parent=92 // loop_exit
                _
            $region93: #{segnet_enc_forward.4} parent=77 // pred_fallthru
              _
            %p409 = pneg %p395
            // Predicated region
            $region101: #{segnet_enc_forward.4} parent=77 // pred_check
              _
            $region102: #{segnet_enc_forward.4} parent=77 // pred_check_branch
              %411 = sbr.rel (%p395) target = $region104
            $region103: #{segnet_enc_forward.4} parent=77 // pred_region
              %s412 = sand.u32 8, 7
            $region104: #{segnet_enc_forward.4} parent=77 // pred_fallthru
              _
          $region78: #{segnet_enc_forward.4} parent=73 // pred_fallthru
            _
          // Predicated region
          $region79: #{segnet_enc_forward.4} parent=73 // pred_check
            %p380 = pneg %p376
          $region80: #{segnet_enc_forward.4} parent=73 // pred_check_branch
            %382 = sbr.rel (%p380) target = $region82
          $region81: #{segnet_enc_forward.4} parent=73 // pred_region
            %s383 = sshllo.u32 0, 8
            loop: start=0, step=1, limit=1
            $region83: #{segnet_enc_forward.4} parent=81 // loop_pre_header
              _
            $region84: #{segnet_enc_forward.4} parent=81 // loop_header
              %s385 = sphi 0, %s389
              %p386 = scmp.ge.s32.totalorder %s385, 1
              %s390 = sphi %s370, %s370
              %s391 = sphi %s372, %s372
            $region85: #{segnet_enc_forward.4} parent=81 // loop_header_branch
              %388 = sbr.rel (%p386) target = $region89
            $region86: #{segnet_enc_forward.4} parent=81 // loop_body
              %v392 = vld [vmem:[%s390] sm:%s383]
              %393 = vst [vmem:[%s391] sm:%s383] %v392
            $region87: #{segnet_enc_forward.4} parent=81 // loop_footer
              %s389 = sadd.s32 1, %s385
            $region88: #{segnet_enc_forward.4} parent=81 // loop_footer_branch
              %384 = sbr.rel target = $region84
            $region89: #{segnet_enc_forward.4} parent=81 // loop_exit
              _
          $region82: #{segnet_enc_forward.4} parent=73 // pred_fallthru
            _
          // Predicated region
          $region105: #{segnet_enc_forward.4} parent=73 // pred_check
            _
          $region106: #{segnet_enc_forward.4} parent=73 // pred_check_branch
            %415 = sbr.rel (0) target = $region108
          $region107: #{segnet_enc_forward.4} parent=73 // pred_region
            %416 = vsyncadd %s374, 128
          $region108: #{segnet_enc_forward.4} parent=73 // pred_fallthru
            _
        $region74: #{segnet_enc_forward.4} parent=35 // pred_fallthru
          _
        %p417 = scmp.lt.s32.totalorder %s23, 0
        // Predicated region
        $region109: #{segnet_enc_forward.4} parent=35 // pred_check
          %p418 = pneg %p417
        $region110: #{segnet_enc_forward.4} parent=35 // pred_check_branch
          %420 = sbr.rel (%p418) target = $region112
        $region111: #{segnet_enc_forward.4} parent=35 // pred_region
          %s421 = sadd.s32 %s23, 1
          %s422 = smul.u32 %s421, 16
          %s423 = smul.u32 %s422, 2
          %s424 = sadd.s32 %s423, %s280
          %s425 = smul.addr %s424, 4
          %s426 = scalar_lea.vmem %s0, %s425
          %s427 = sadd.s32 17, %s284
          %s428 = smul.addr %s427, 8
          %s429 = scalar_lea.vmem [#allocation2], %s428
          %s430 = sadd.s32 2, %s288
          %s431 = scalar_lea.sflag [#allocation4], %s430
          %p433 = scmp.lt.u32.totalorder 8, 8
          %p434 = pneg %p433
          // Predicated region
          $region113: #{segnet_enc_forward.4} parent=111 // pred_check
            _
          $region114: #{segnet_enc_forward.4} parent=111 // pred_check_branch
            %436 = sbr.rel (%p433) target = $region116
          $region115: #{segnet_enc_forward.4} parent=111 // pred_region
            %s451 = sand.u32 8, 7
            %p452 = scmp.eq.s32.totalorder %s451, 0
            // Predicated region
            $region128: #{segnet_enc_forward.4} parent=115 // pred_check
              %p453 = pneg %p452
            $region129: #{segnet_enc_forward.4} parent=115 // pred_check_branch
              %455 = sbr.rel (%p453) target = $region131
            $region130: #{segnet_enc_forward.4} parent=115 // pred_region
              loop: start=0, step=1, limit=1
              $region132: #{segnet_enc_forward.4} parent=130 // loop_pre_header
                _
              $region133: #{segnet_enc_forward.4} parent=130 // loop_header
                %s457 = sphi 0, %s461
                %p458 = scmp.ge.s32.totalorder %s457, 1
                %s462 = sphi %s426, %s426
                %s463 = sphi %s429, %s429
              $region134: #{segnet_enc_forward.4} parent=130 // loop_header_branch
                %460 = sbr.rel (%p458) target = $region138
              $region135: #{segnet_enc_forward.4} parent=130 // loop_body
                %v464 = vld [vmem:[%s462] sm:$0xff]
                %465 = vst [vmem:[%s463] sm:$0xff] %v464
              $region136: #{segnet_enc_forward.4} parent=130 // loop_footer
                %s461 = sadd.s32 1, %s457
              $region137: #{segnet_enc_forward.4} parent=130 // loop_footer_branch
                %456 = sbr.rel target = $region133
              $region138: #{segnet_enc_forward.4} parent=130 // loop_exit
                _
            $region131: #{segnet_enc_forward.4} parent=115 // pred_fallthru
              _
            %p466 = pneg %p452
            // Predicated region
            $region139: #{segnet_enc_forward.4} parent=115 // pred_check
              _
            $region140: #{segnet_enc_forward.4} parent=115 // pred_check_branch
              %468 = sbr.rel (%p452) target = $region142
            $region141: #{segnet_enc_forward.4} parent=115 // pred_region
              %s469 = sand.u32 8, 7
            $region142: #{segnet_enc_forward.4} parent=115 // pred_fallthru
              _
          $region116: #{segnet_enc_forward.4} parent=111 // pred_fallthru
            _
          // Predicated region
          $region117: #{segnet_enc_forward.4} parent=111 // pred_check
            %p437 = pneg %p433
          $region118: #{segnet_enc_forward.4} parent=111 // pred_check_branch
            %439 = sbr.rel (%p437) target = $region120
          $region119: #{segnet_enc_forward.4} parent=111 // pred_region
            %s440 = sshllo.u32 0, 8
            loop: start=0, step=1, limit=1
            $region121: #{segnet_enc_forward.4} parent=119 // loop_pre_header
              _
            $region122: #{segnet_enc_forward.4} parent=119 // loop_header
              %s442 = sphi 0, %s446
              %p443 = scmp.ge.s32.totalorder %s442, 1
              %s447 = sphi %s426, %s426
              %s448 = sphi %s429, %s429
            $region123: #{segnet_enc_forward.4} parent=119 // loop_header_branch
              %445 = sbr.rel (%p443) target = $region127
            $region124: #{segnet_enc_forward.4} parent=119 // loop_body
              %v449 = vld [vmem:[%s447] sm:%s440]
              %450 = vst [vmem:[%s448] sm:%s440] %v449
            $region125: #{segnet_enc_forward.4} parent=119 // loop_footer
              %s446 = sadd.s32 1, %s442
            $region126: #{segnet_enc_forward.4} parent=119 // loop_footer_branch
              %441 = sbr.rel target = $region122
            $region127: #{segnet_enc_forward.4} parent=119 // loop_exit
              _
          $region120: #{segnet_enc_forward.4} parent=111 // pred_fallthru
            _
          // Predicated region
          $region143: #{segnet_enc_forward.4} parent=111 // pred_check
            _
          $region144: #{segnet_enc_forward.4} parent=111 // pred_check_branch
            %472 = sbr.rel (0) target = $region146
          $region145: #{segnet_enc_forward.4} parent=111 // pred_region
            %473 = vsyncadd %s431, 128
          $region146: #{segnet_enc_forward.4} parent=111 // pred_fallthru
            _
        $region112: #{segnet_enc_forward.4} parent=35 // pred_fallthru
          _
      $region36: #{segnet_enc_forward.4} parent=31 // pred_fallthru
        _
      %s474 = sadd.s32 %s23, 1
      %p475 = scmp.lt.s32.totalorder %s474, 1
      // Predicated region
      $region147: #{segnet_enc_forward.4} parent=31 // pred_check
        %p476 = pneg %p475
      $region148: #{segnet_enc_forward.4} parent=31 // pred_check_branch
        %478 = sbr.rel (%p476) target = $region150
      $region149: #{segnet_enc_forward.4} parent=31 // pred_region
        %p479 = scmp.lt.s32.totalorder %s474, 0
        %s480 = ssub.s32 0, %s474
        %s481 = scalar_select %p479, %s480, %s474
        %s482 = sand.u32 %s481, 1
        %s483 = ssub.s32 0, %s482
        %s484 = scalar_select %p479, %s483, %s482
        %p485 = scmp.ne.s32.totalorder %s484, 0
        %p486 = scmp.lt.s32.totalorder %s484, 0
        %p487 = pnand %p486, %p485
        %p488 = pneg %p487
        %s489 = sadd.s32 %s484, 2
        %s490 = scalar_select %p488, %s489, %s484
        %s491 = smul.u32 %s474, 16
        %s492 = smul.u32 %s491, 2
        %s493 = smul.u32 %s22, 32
        %s494 = sadd.s32 %s492, %s493
        %s495 = smul.addr %s494, 4
        %s496 = scalar_lea.vmem %s0, %s495
        %s497 = smul.u32 %s490, 18
        %s498 = sadd.s32 1, %s497
        %s499 = smul.addr %s498, 8
        %s500 = scalar_lea.vmem [#allocation2], %s499
        %s501 = smul.u32 %s490, 3
        %s502 = scalar_lea.sflag [#allocation4], %s501
        %p504 = scmp.lt.u32.totalorder 128, 8
        %p505 = pneg %p504
        // Predicated region
        $region151: #{segnet_enc_forward.4} parent=149 // pred_check
          _
        $region152: #{segnet_enc_forward.4} parent=149 // pred_check_branch
          %507 = sbr.rel (%p504) target = $region154
        $region153: #{segnet_enc_forward.4} parent=149 // pred_region
          %s522 = sand.u32 128, 7
          %p523 = scmp.eq.s32.totalorder %s522, 0
          // Predicated region
          $region166: #{segnet_enc_forward.4} parent=153 // pred_check
            %p524 = pneg %p523
          $region167: #{segnet_enc_forward.4} parent=153 // pred_check_branch
            %526 = sbr.rel (%p524) target = $region169
          $region168: #{segnet_enc_forward.4} parent=153 // pred_region
            loop: start=0, step=1, limit=1
            $region170: #{segnet_enc_forward.4} parent=168 // loop_pre_header
              _
            $region171: #{segnet_enc_forward.4} parent=168 // loop_header
              %s528 = sphi 0, %s532
              %p529 = scmp.ge.s32.totalorder %s528, 1
              %s533 = sphi %s496, %s496
              %s534 = sphi %s500, %s500
            $region172: #{segnet_enc_forward.4} parent=168 // loop_header_branch
              %531 = sbr.rel (%p529) target = $region176
            $region173: #{segnet_enc_forward.4} parent=168 // loop_body
              %v535 = vld [vmem:[%s533] sm:$0xff]
              %536 = vst [vmem:[%s534] sm:$0xff] %v535
              %v537 = vld [vmem:[%s533 + $0x8] sm:$0xff]
              %538 = vst [vmem:[%s534 + $0x8] sm:$0xff] %v537
              %v539 = vld [vmem:[%s533 + $0x10] sm:$0xff]
              %540 = vst [vmem:[%s534 + $0x10] sm:$0xff] %v539
              %v541 = vld [vmem:[%s533 + $0x18] sm:$0xff]
              %542 = vst [vmem:[%s534 + $0x18] sm:$0xff] %v541
              %v543 = vld [vmem:[%s533 + $0x20] sm:$0xff]
              %544 = vst [vmem:[%s534 + $0x20] sm:$0xff] %v543
              %v545 = vld [vmem:[%s533 + $0x28] sm:$0xff]
              %546 = vst [vmem:[%s534 + $0x28] sm:$0xff] %v545
              %v547 = vld [vmem:[%s533 + $0x30] sm:$0xff]
              %548 = vst [vmem:[%s534 + $0x30] sm:$0xff] %v547
              %v549 = vld [vmem:[%s533 + $0x38] sm:$0xff]
              %550 = vst [vmem:[%s534 + $0x38] sm:$0xff] %v549
              %v551 = vld [vmem:[%s533 + $0x40] sm:$0xff]
              %552 = vst [vmem:[%s534 + $0x40] sm:$0xff] %v551
              %v553 = vld [vmem:[%s533 + $0x48] sm:$0xff]
              %554 = vst [vmem:[%s534 + $0x48] sm:$0xff] %v553
              %v555 = vld [vmem:[%s533 + $0x50] sm:$0xff]
              %556 = vst [vmem:[%s534 + $0x50] sm:$0xff] %v555
              %v557 = vld [vmem:[%s533 + $0x58] sm:$0xff]
              %558 = vst [vmem:[%s534 + $0x58] sm:$0xff] %v557
              %v559 = vld [vmem:[%s533 + $0x60] sm:$0xff]
              %560 = vst [vmem:[%s534 + $0x60] sm:$0xff] %v559
              %v561 = vld [vmem:[%s533 + $0x68] sm:$0xff]
              %562 = vst [vmem:[%s534 + $0x68] sm:$0xff] %v561
              %v563 = vld [vmem:[%s533 + $0x70] sm:$0xff]
              %564 = vst [vmem:[%s534 + $0x70] sm:$0xff] %v563
              %v565 = vld [vmem:[%s533 + $0x78] sm:$0xff]
              %566 = vst [vmem:[%s534 + $0x78] sm:$0xff] %v565
            $region174: #{segnet_enc_forward.4} parent=168 // loop_footer
              %s532 = sadd.s32 1, %s528
            $region175: #{segnet_enc_forward.4} parent=168 // loop_footer_branch
              %527 = sbr.rel target = $region171
            $region176: #{segnet_enc_forward.4} parent=168 // loop_exit
              _
          $region169: #{segnet_enc_forward.4} parent=153 // pred_fallthru
            _
          %p567 = pneg %p523
          // Predicated region
          $region177: #{segnet_enc_forward.4} parent=153 // pred_check
            _
          $region178: #{segnet_enc_forward.4} parent=153 // pred_check_branch
            %569 = sbr.rel (%p523) target = $region180
          $region179: #{segnet_enc_forward.4} parent=153 // pred_region
            %s570 = sand.u32 128, 7
          $region180: #{segnet_enc_forward.4} parent=153 // pred_fallthru
            _
        $region154: #{segnet_enc_forward.4} parent=149 // pred_fallthru
          _
        // Predicated region
        $region155: #{segnet_enc_forward.4} parent=149 // pred_check
          %p508 = pneg %p504
        $region156: #{segnet_enc_forward.4} parent=149 // pred_check_branch
          %510 = sbr.rel (%p508) target = $region158
        $region157: #{segnet_enc_forward.4} parent=149 // pred_region
          %s511 = sshllo.u32 0, 128
          loop: start=0, step=1, limit=1
          $region159: #{segnet_enc_forward.4} parent=157 // loop_pre_header
            _
          $region160: #{segnet_enc_forward.4} parent=157 // loop_header
            %s513 = sphi 0, %s517
            %p514 = scmp.ge.s32.totalorder %s513, 1
            %s518 = sphi %s496, %s496
            %s519 = sphi %s500, %s500
          $region161: #{segnet_enc_forward.4} parent=157 // loop_header_branch
            %516 = sbr.rel (%p514) target = $region165
          $region162: #{segnet_enc_forward.4} parent=157 // loop_body
            %v520 = vld [vmem:[%s518] sm:%s511]
            %521 = vst [vmem:[%s519] sm:%s511] %v520
          $region163: #{segnet_enc_forward.4} parent=157 // loop_footer
            %s517 = sadd.s32 1, %s513
          $region164: #{segnet_enc_forward.4} parent=157 // loop_footer_branch
            %512 = sbr.rel target = $region160
          $region165: #{segnet_enc_forward.4} parent=157 // loop_exit
            _
        $region158: #{segnet_enc_forward.4} parent=149 // pred_fallthru
          _
        // Predicated region
        $region181: #{segnet_enc_forward.4} parent=149 // pred_check
          _
        $region182: #{segnet_enc_forward.4} parent=149 // pred_check_branch
          %573 = sbr.rel (0) target = $region184
        $region183: #{segnet_enc_forward.4} parent=149 // pred_region
          %574 = vsyncadd %s502, 2048
        $region184: #{segnet_enc_forward.4} parent=149 // pred_fallthru
          _
        %p575 = scmp.gt.s32.totalorder %s474, 0
        // Predicated region
        $region185: #{segnet_enc_forward.4} parent=149 // pred_check
          %p576 = pneg %p575
        $region186: #{segnet_enc_forward.4} parent=149 // pred_check_branch
          %578 = sbr.rel (%p576) target = $region188
        $region187: #{segnet_enc_forward.4} parent=149 // pred_region
          %s579 = ssub.s32 %s491, 1
          %s580 = smul.u32 %s579, 2
          %s581 = sadd.s32 %s580, %s493
          %s582 = smul.addr %s581, 4
          %s583 = scalar_lea.vmem %s0, %s582
          %s584 = smul.addr %s497, 8
          %s585 = scalar_lea.vmem [#allocation2], %s584
          %s586 = sadd.s32 1, %s501
          %s587 = scalar_lea.sflag [#allocation4], %s586
          %p589 = scmp.lt.u32.totalorder 8, 8
          %p590 = pneg %p589
          // Predicated region
          $region189: #{segnet_enc_forward.4} parent=187 // pred_check
            _
          $region190: #{segnet_enc_forward.4} parent=187 // pred_check_branch
            %592 = sbr.rel (%p589) target = $region192
          $region191: #{segnet_enc_forward.4} parent=187 // pred_region
            %s607 = sand.u32 8, 7
            %p608 = scmp.eq.s32.totalorder %s607, 0
            // Predicated region
            $region204: #{segnet_enc_forward.4} parent=191 // pred_check
              %p609 = pneg %p608
            $region205: #{segnet_enc_forward.4} parent=191 // pred_check_branch
              %611 = sbr.rel (%p609) target = $region207
            $region206: #{segnet_enc_forward.4} parent=191 // pred_region
              loop: start=0, step=1, limit=1
              $region208: #{segnet_enc_forward.4} parent=206 // loop_pre_header
                _
              $region209: #{segnet_enc_forward.4} parent=206 // loop_header
                %s613 = sphi 0, %s617
                %p614 = scmp.ge.s32.totalorder %s613, 1
                %s618 = sphi %s583, %s583
                %s619 = sphi %s585, %s585
              $region210: #{segnet_enc_forward.4} parent=206 // loop_header_branch
                %616 = sbr.rel (%p614) target = $region214
              $region211: #{segnet_enc_forward.4} parent=206 // loop_body
                %v620 = vld [vmem:[%s618] sm:$0xff]
                %621 = vst [vmem:[%s619] sm:$0xff] %v620
              $region212: #{segnet_enc_forward.4} parent=206 // loop_footer
                %s617 = sadd.s32 1, %s613
              $region213: #{segnet_enc_forward.4} parent=206 // loop_footer_branch
                %612 = sbr.rel target = $region209
              $region214: #{segnet_enc_forward.4} parent=206 // loop_exit
                _
            $region207: #{segnet_enc_forward.4} parent=191 // pred_fallthru
              _
            %p622 = pneg %p608
            // Predicated region
            $region215: #{segnet_enc_forward.4} parent=191 // pred_check
              _
            $region216: #{segnet_enc_forward.4} parent=191 // pred_check_branch
              %624 = sbr.rel (%p608) target = $region218
            $region217: #{segnet_enc_forward.4} parent=191 // pred_region
              %s625 = sand.u32 8, 7
            $region218: #{segnet_enc_forward.4} parent=191 // pred_fallthru
              _
          $region192: #{segnet_enc_forward.4} parent=187 // pred_fallthru
            _
          // Predicated region
          $region193: #{segnet_enc_forward.4} parent=187 // pred_check
            %p593 = pneg %p589
          $region194: #{segnet_enc_forward.4} parent=187 // pred_check_branch
            %595 = sbr.rel (%p593) target = $region196
          $region195: #{segnet_enc_forward.4} parent=187 // pred_region
            %s596 = sshllo.u32 0, 8
            loop: start=0, step=1, limit=1
            $region197: #{segnet_enc_forward.4} parent=195 // loop_pre_header
              _
            $region198: #{segnet_enc_forward.4} parent=195 // loop_header
              %s598 = sphi 0, %s602
              %p599 = scmp.ge.s32.totalorder %s598, 1
              %s603 = sphi %s583, %s583
              %s604 = sphi %s585, %s585
            $region199: #{segnet_enc_forward.4} parent=195 // loop_header_branch
              %601 = sbr.rel (%p599) target = $region203
            $region200: #{segnet_enc_forward.4} parent=195 // loop_body
              %v605 = vld [vmem:[%s603] sm:%s596]
              %606 = vst [vmem:[%s604] sm:%s596] %v605
            $region201: #{segnet_enc_forward.4} parent=195 // loop_footer
              %s602 = sadd.s32 1, %s598
            $region202: #{segnet_enc_forward.4} parent=195 // loop_footer_branch
              %597 = sbr.rel target = $region198
            $region203: #{segnet_enc_forward.4} parent=195 // loop_exit
              _
          $region196: #{segnet_enc_forward.4} parent=187 // pred_fallthru
            _
          // Predicated region
          $region219: #{segnet_enc_forward.4} parent=187 // pred_check
            _
          $region220: #{segnet_enc_forward.4} parent=187 // pred_check_branch
            %628 = sbr.rel (0) target = $region222
          $region221: #{segnet_enc_forward.4} parent=187 // pred_region
            %629 = vsyncadd %s587, 128
          $region222: #{segnet_enc_forward.4} parent=187 // pred_fallthru
            _
        $region188: #{segnet_enc_forward.4} parent=149 // pred_fallthru
          _
        %p630 = scmp.lt.s32.totalorder %s474, 0
        // Predicated region
        $region223: #{segnet_enc_forward.4} parent=149 // pred_check
          %p631 = pneg %p630
        $region224: #{segnet_enc_forward.4} parent=149 // pred_check_branch
          %633 = sbr.rel (%p631) target = $region226
        $region225: #{segnet_enc_forward.4} parent=149 // pred_region
          %s634 = sadd.s32 %s23, 2
          %s635 = smul.u32 %s634, 16
          %s636 = smul.u32 %s635, 2
          %s637 = sadd.s32 %s636, %s493
          %s638 = smul.addr %s637, 4
          %s639 = scalar_lea.vmem %s0, %s638
          %s640 = sadd.s32 17, %s497
          %s641 = smul.addr %s640, 8
          %s642 = scalar_lea.vmem [#allocation2], %s641
          %s643 = sadd.s32 2, %s501
          %s644 = scalar_lea.sflag [#allocation4], %s643
          %p646 = scmp.lt.u32.totalorder 8, 8
          %p647 = pneg %p646
          // Predicated region
          $region227: #{segnet_enc_forward.4} parent=225 // pred_check
            _
          $region228: #{segnet_enc_forward.4} parent=225 // pred_check_branch
            %649 = sbr.rel (%p646) target = $region230
          $region229: #{segnet_enc_forward.4} parent=225 // pred_region
            %s664 = sand.u32 8, 7
            %p665 = scmp.eq.s32.totalorder %s664, 0
            // Predicated region
            $region242: #{segnet_enc_forward.4} parent=229 // pred_check
              %p666 = pneg %p665
            $region243: #{segnet_enc_forward.4} parent=229 // pred_check_branch
              %668 = sbr.rel (%p666) target = $region245
            $region244: #{segnet_enc_forward.4} parent=229 // pred_region
              loop: start=0, step=1, limit=1
              $region246: #{segnet_enc_forward.4} parent=244 // loop_pre_header
                _
              $region247: #{segnet_enc_forward.4} parent=244 // loop_header
                %s670 = sphi 0, %s674
                %p671 = scmp.ge.s32.totalorder %s670, 1
                %s675 = sphi %s639, %s639
                %s676 = sphi %s642, %s642
              $region248: #{segnet_enc_forward.4} parent=244 // loop_header_branch
                %673 = sbr.rel (%p671) target = $region252
              $region249: #{segnet_enc_forward.4} parent=244 // loop_body
                %v677 = vld [vmem:[%s675] sm:$0xff]
                %678 = vst [vmem:[%s676] sm:$0xff] %v677
              $region250: #{segnet_enc_forward.4} parent=244 // loop_footer
                %s674 = sadd.s32 1, %s670
              $region251: #{segnet_enc_forward.4} parent=244 // loop_footer_branch
                %669 = sbr.rel target = $region247
              $region252: #{segnet_enc_forward.4} parent=244 // loop_exit
                _
            $region245: #{segnet_enc_forward.4} parent=229 // pred_fallthru
              _
            %p679 = pneg %p665
            // Predicated region
            $region253: #{segnet_enc_forward.4} parent=229 // pred_check
              _
            $region254: #{segnet_enc_forward.4} parent=229 // pred_check_branch
              %681 = sbr.rel (%p665) target = $region256
            $region255: #{segnet_enc_forward.4} parent=229 // pred_region
              %s682 = sand.u32 8, 7
            $region256: #{segnet_enc_forward.4} parent=229 // pred_fallthru
              _
          $region230: #{segnet_enc_forward.4} parent=225 // pred_fallthru
            _
          // Predicated region
          $region231: #{segnet_enc_forward.4} parent=225 // pred_check
            %p650 = pneg %p646
          $region232: #{segnet_enc_forward.4} parent=225 // pred_check_branch
            %652 = sbr.rel (%p650) target = $region234
          $region233: #{segnet_enc_forward.4} parent=225 // pred_region
            %s653 = sshllo.u32 0, 8
            loop: start=0, step=1, limit=1
            $region235: #{segnet_enc_forward.4} parent=233 // loop_pre_header
              _
            $region236: #{segnet_enc_forward.4} parent=233 // loop_header
              %s655 = sphi 0, %s659
              %p656 = scmp.ge.s32.totalorder %s655, 1
              %s660 = sphi %s639, %s639
              %s661 = sphi %s642, %s642
            $region237: #{segnet_enc_forward.4} parent=233 // loop_header_branch
              %658 = sbr.rel (%p656) target = $region241
            $region238: #{segnet_enc_forward.4} parent=233 // loop_body
              %v662 = vld [vmem:[%s660] sm:%s653]
              %663 = vst [vmem:[%s661] sm:%s653] %v662
            $region239: #{segnet_enc_forward.4} parent=233 // loop_footer
              %s659 = sadd.s32 1, %s655
            $region240: #{segnet_enc_forward.4} parent=233 // loop_footer_branch
              %654 = sbr.rel target = $region236
            $region241: #{segnet_enc_forward.4} parent=233 // loop_exit
              _
          $region234: #{segnet_enc_forward.4} parent=225 // pred_fallthru
            _
          // Predicated region
          $region257: #{segnet_enc_forward.4} parent=225 // pred_check
            _
          $region258: #{segnet_enc_forward.4} parent=225 // pred_check_branch
            %685 = sbr.rel (0) target = $region260
          $region259: #{segnet_enc_forward.4} parent=225 // pred_region
            %686 = vsyncadd %s644, 128
          $region260: #{segnet_enc_forward.4} parent=225 // pred_fallthru
            _
        $region226: #{segnet_enc_forward.4} parent=149 // pred_fallthru
          _
      $region150: #{segnet_enc_forward.4} parent=31 // pred_fallthru
        _
      %s687 = smul.u32 %s273, 3
      %s688 = scalar_lea.sflag [#allocation4], %s687
      %s689 = smul.u32 4, 16
      %s690 = smul.u32 %s689, 2
      %s691 = smul.u32 %s690, 1
      %s692 = sshll.u32 %s691, 4
      %693 = dma.done %s688, %s692
      %p694 = scmp.gt.s32.totalorder %s23, 0
      // Predicated region
      $region261: #{segnet_enc_forward.4} parent=31 // pred_check
        %p695 = pneg %p694
      $region262: #{segnet_enc_forward.4} parent=31 // pred_check_branch
        %697 = sbr.rel (%p695) target = $region264
      $region263: #{segnet_enc_forward.4} parent=31 // pred_region
        %s698 = sadd.s32 1, %s687
        %s699 = scalar_lea.sflag [#allocation4], %s698
        %s700 = smul.u32 4, 2
        %s701 = smul.u32 %s700, 1
        %s702 = sshll.u32 %s701, 4
        %703 = dma.done %s699, %s702
      $region264: #{segnet_enc_forward.4} parent=31 // pred_fallthru
        _
      %p704 = scmp.lt.s32.totalorder %s23, 0
      // Predicated region
      $region265: #{segnet_enc_forward.4} parent=31 // pred_check
        %p705 = pneg %p704
      $region266: #{segnet_enc_forward.4} parent=31 // pred_check_branch
        %707 = sbr.rel (%p705) target = $region268
      $region267: #{segnet_enc_forward.4} parent=31 // pred_region
        %s708 = sadd.s32 2, %s687
        %s709 = scalar_lea.sflag [#allocation4], %s708
        %s710 = smul.u32 4, 2
        %s711 = smul.u32 %s710, 1
        %s712 = sshll.u32 %s711, 4
        %713 = dma.done %s709, %s712
      $region268: #{segnet_enc_forward.4} parent=31 // pred_fallthru
        _
      %s714 = smul.u32 %s273, 18
      %s715 = smul.addr %s714, 8
      %s716 = scalar_lea.vmem [#allocation2], %s715
      %v717 = vld [vmem:[%s716] sm:$0xff]
      %v718 = vld [vmem:[%s716 + $0x8] sm:$0xff]
      %v719 = vld [vmem:[%s716 + $0x10] sm:$0xff]
      %v720 = vld [vmem:[%s716 + $0x18] sm:$0xff]
      %v721 = vld [vmem:[%s716 + $0x20] sm:$0xff]
      %v722 = vld [vmem:[%s716 + $0x28] sm:$0xff]
      %v723 = vld [vmem:[%s716 + $0x30] sm:$0xff]
      %v724 = vld [vmem:[%s716 + $0x38] sm:$0xff]
      %v725 = vld [vmem:[%s716 + $0x40] sm:$0xff]
      %v726 = vld [vmem:[%s716 + $0x48] sm:$0xff]
      %v727 = vld [vmem:[%s716 + $0x50] sm:$0xff]
      %v728 = vld [vmem:[%s716 + $0x58] sm:$0xff]
      %v729 = vld [vmem:[%s716 + $0x60] sm:$0xff]
      %v730 = vld [vmem:[%s716 + $0x68] sm:$0xff]
      %v731 = vld [vmem:[%s716 + $0x70] sm:$0xff]
      %v732 = vld [vmem:[%s716 + $0x78] sm:$0xff]
      %v733 = vld [vmem:[%s716 + $0x80] sm:$0xff]
      %v734 = vld [vmem:[%s716 + $0x88] sm:$0xff]
      %v753 = vunpack.c.l.b16 %v717
      %v754 = vunpack.c.h.b16 %v717
      %v755 = vunpack.c.l.b16 %v718
      %v756 = vunpack.c.h.b16 %v718
      %v757 = vunpack.c.l.b16 %v719
      %v758 = vunpack.c.h.b16 %v719
      %v759 = vunpack.c.l.b16 %v720
      %v760 = vunpack.c.h.b16 %v720
      %v761 = vunpack.c.l.b16 %v721
      %v762 = vunpack.c.h.b16 %v721
      %v763 = vunpack.c.l.b16 %v722
      %v764 = vunpack.c.h.b16 %v722
      %v765 = vunpack.c.l.b16 %v723
      %v766 = vunpack.c.h.b16 %v723
      %v767 = vunpack.c.l.b16 %v724
      %v768 = vunpack.c.h.b16 %v724
      %v769 = vunpack.c.l.b16 %v725
      %v770 = vunpack.c.h.b16 %v725
      %v771 = vunpack.c.l.b16 %v726
      %v772 = vunpack.c.h.b16 %v726
      %v773 = vunpack.c.l.b16 %v727
      %v774 = vunpack.c.h.b16 %v727
      %v775 = vunpack.c.l.b16 %v728
      %v776 = vunpack.c.h.b16 %v728
      %v777 = vunpack.c.l.b16 %v729
      %v778 = vunpack.c.h.b16 %v729
      %v779 = vunpack.c.l.b16 %v730
      %v780 = vunpack.c.h.b16 %v730
      %v781 = vunpack.c.l.b16 %v731
      %v782 = vunpack.c.h.b16 %v731
      %v783 = vunpack.c.l.b16 %v732
      %v784 = vunpack.c.h.b16 %v732
      %v785 = vunpack.c.l.b16 %v733
      %v786 = vunpack.c.h.b16 %v733
      %v787 = vunpack.c.l.b16 %v734
      %v788 = vunpack.c.h.b16 %v734
      %v789 = vpack.c.b16 %v753, %v753
      %v790 = vpack.c.b16 %v754, %v754
      %v791 = vpack.c.b16 %v755, %v755
      %v792 = vpack.c.b16 %v756, %v756
      %v793 = vpack.c.b16 %v757, %v757
      %v794 = vpack.c.b16 %v758, %v758
      %v795 = vpack.c.b16 %v759, %v759
      %v796 = vpack.c.b16 %v760, %v760
      %v797 = vpack.c.b16 %v761, %v761
      %v798 = vpack.c.b16 %v762, %v762
      %v799 = vpack.c.b16 %v763, %v763
      %v800 = vpack.c.b16 %v764, %v764
      %v801 = vpack.c.b16 %v765, %v765
      %v802 = vpack.c.b16 %v766, %v766
      %v803 = vpack.c.b16 %v767, %v767
      %v804 = vpack.c.b16 %v768, %v768
      %v805 = vpack.c.b16 %v769, %v769
      %v806 = vpack.c.b16 %v770, %v770
      %v807 = vpack.c.b16 %v771, %v771
      %v808 = vpack.c.b16 %v772, %v772
      %v809 = vpack.c.b16 %v773, %v773
      %v810 = vpack.c.b16 %v774, %v774
      %v811 = vpack.c.b16 %v775, %v775
      %v812 = vpack.c.b16 %v776, %v776
      %v813 = vpack.c.b16 %v777, %v777
      %v814 = vpack.c.b16 %v778, %v778
      %v815 = vpack.c.b16 %v779, %v779
      %v816 = vpack.c.b16 %v780, %v780
      %v817 = vpack.c.b16 %v781, %v781
      %v818 = vpack.c.b16 %v782, %v782
      %v819 = vpack.c.b16 %v783, %v783
      %v820 = vpack.c.b16 %v784, %v784
      %v821 = vpack.c.b16 %v785, %v785
      %v822 = vpack.c.b16 %v786, %v786
      %v823 = vpack.c.b16 %v787, %v787
      %v824 = vpack.c.b16 %v788, %v788
      %vm825 = vsmask.f32 256
      %vm826 = vsmask.f32 4368
      %vm827 = vmor %vm825, %vm826
      %v829 = vshrl.u32 %v789, 16
      %v831 = vrot.slane %v829, 7
      %v832 = vshll.u32 %v789, 16
      %v834 = vor.u32 %v831, %v832
      %v835 = vrot.slane %v831, 4
      %v837 = vshrl.u32 %v790, 16
      %v839 = vrot.slane %v837, 7
      %v840 = vshll.u32 %v790, 16
      %v842 = vor.u32 %v839, %v840
      %v843 = vsel %vm827, %v835, %v842
      %v844 = vrot.slane %v839, 4
      %v846 = vshrl.u32 %v791, 16
      %v848 = vrot.slane %v846, 7
      %v849 = vshll.u32 %v791, 16
      %v851 = vor.u32 %v848, %v849
      %v852 = vrot.slane %v848, 4
      %v854 = vshrl.u32 %v792, 16
      %v856 = vrot.slane %v854, 7
      %v857 = vshll.u32 %v792, 16
      %v859 = vor.u32 %v856, %v857
      %v860 = vsel %vm827, %v852, %v859
      %v861 = vrot.slane %v856, 4
      %v863 = vshrl.u32 %v793, 16
      %v865 = vrot.slane %v863, 7
      %v866 = vshll.u32 %v793, 16
      %v868 = vor.u32 %v865, %v866
      %v869 = vrot.slane %v865, 4
      %v871 = vshrl.u32 %v794, 16
      %v873 = vrot.slane %v871, 7
      %v874 = vshll.u32 %v794, 16
      %v876 = vor.u32 %v873, %v874
      %v877 = vsel %vm827, %v869, %v876
      %v878 = vrot.slane %v873, 4
      %v880 = vshrl.u32 %v795, 16
      %v882 = vrot.slane %v880, 7
      %v883 = vshll.u32 %v795, 16
      %v885 = vor.u32 %v882, %v883
      %v886 = vrot.slane %v882, 4
      %v888 = vshrl.u32 %v796, 16
      %v890 = vrot.slane %v888, 7
      %v891 = vshll.u32 %v796, 16
      %v893 = vor.u32 %v890, %v891
      %v894 = vsel %vm827, %v886, %v893
      %v895 = vrot.slane %v890, 4
      %v897 = vshrl.u32 %v797, 16
      %v899 = vrot.slane %v897, 7
      %v900 = vshll.u32 %v797, 16
      %v902 = vor.u32 %v899, %v900
      %v903 = vrot.slane %v899, 4
      %v905 = vshrl.u32 %v798, 16
      %v907 = vrot.slane %v905, 7
      %v908 = vshll.u32 %v798, 16
      %v910 = vor.u32 %v907, %v908
      %v911 = vsel %vm827, %v903, %v910
      %v912 = vrot.slane %v907, 4
      %v914 = vshrl.u32 %v799, 16
      %v916 = vrot.slane %v914, 7
      %v917 = vshll.u32 %v799, 16
      %v919 = vor.u32 %v916, %v917
      %v920 = vrot.slane %v916, 4
      %v922 = vshrl.u32 %v800, 16
      %v924 = vrot.slane %v922, 7
      %v925 = vshll.u32 %v800, 16
      %v927 = vor.u32 %v924, %v925
      %v928 = vsel %vm827, %v920, %v927
      %v929 = vrot.slane %v924, 4
      %v931 = vshrl.u32 %v801, 16
      %v933 = vrot.slane %v931, 7
      %v934 = vshll.u32 %v801, 16
      %v936 = vor.u32 %v933, %v934
      %v937 = vrot.slane %v933, 4
      %v939 = vshrl.u32 %v802, 16
      %v941 = vrot.slane %v939, 7
      %v942 = vshll.u32 %v802, 16
      %v944 = vor.u32 %v941, %v942
      %v945 = vsel %vm827, %v937, %v944
      %v946 = vrot.slane %v941, 4
      %v948 = vshrl.u32 %v803, 16
      %v950 = vrot.slane %v948, 7
      %v951 = vshll.u32 %v803, 16
      %v953 = vor.u32 %v950, %v951
      %v954 = vrot.slane %v950, 4
      %v956 = vshrl.u32 %v804, 16
      %v958 = vrot.slane %v956, 7
      %v959 = vshll.u32 %v804, 16
      %v961 = vor.u32 %v958, %v959
      %v962 = vsel %vm827, %v954, %v961
      %v963 = vrot.slane %v958, 4
      %v965 = vshrl.u32 %v805, 16
      %v967 = vrot.slane %v965, 7
      %v968 = vshll.u32 %v805, 16
      %v970 = vor.u32 %v967, %v968
      %v971 = vrot.slane %v967, 4
      %v973 = vshrl.u32 %v806, 16
      %v975 = vrot.slane %v973, 7
      %v976 = vshll.u32 %v806, 16
      %v978 = vor.u32 %v975, %v976
      %v979 = vsel %vm827, %v971, %v978
      %v980 = vrot.slane %v975, 4
      %v982 = vshrl.u32 %v807, 16
      %v984 = vrot.slane %v982, 7
      %v985 = vshll.u32 %v807, 16
      %v987 = vor.u32 %v984, %v985
      %v988 = vrot.slane %v984, 4
      %v990 = vshrl.u32 %v808, 16
      %v992 = vrot.slane %v990, 7
      %v993 = vshll.u32 %v808, 16
      %v995 = vor.u32 %v992, %v993
      %v996 = vsel %vm827, %v988, %v995
      %v997 = vrot.slane %v992, 4
      %v999 = vshrl.u32 %v809, 16
      %v1001 = vrot.slane %v999, 7
      %v1002 = vshll.u32 %v809, 16
      %v1004 = vor.u32 %v1001, %v1002
      %v1005 = vrot.slane %v1001, 4
      %v1007 = vshrl.u32 %v810, 16
      %v1009 = vrot.slane %v1007, 7
      %v1010 = vshll.u32 %v810, 16
      %v1012 = vor.u32 %v1009, %v1010
      %v1013 = vsel %vm827, %v1005, %v1012
      %v1014 = vrot.slane %v1009, 4
      %v1016 = vshrl.u32 %v811, 16
      %v1018 = vrot.slane %v1016, 7
      %v1019 = vshll.u32 %v811, 16
      %v1021 = vor.u32 %v1018, %v1019
      %v1022 = vrot.slane %v1018, 4
      %v1024 = vshrl.u32 %v812, 16
      %v1026 = vrot.slane %v1024, 7
      %v1027 = vshll.u32 %v812, 16
      %v1029 = vor.u32 %v1026, %v1027
      %v1030 = vsel %vm827, %v1022, %v1029
      %v1031 = vrot.slane %v1026, 4
      %v1033 = vshrl.u32 %v813, 16
      %v1035 = vrot.slane %v1033, 7
      %v1036 = vshll.u32 %v813, 16
      %v1038 = vor.u32 %v1035, %v1036
      %v1039 = vrot.slane %v1035, 4
      %v1041 = vshrl.u32 %v814, 16
      %v1043 = vrot.slane %v1041, 7
      %v1044 = vshll.u32 %v814, 16
      %v1046 = vor.u32 %v1043, %v1044
      %v1047 = vsel %vm827, %v1039, %v1046
      %v1048 = vrot.slane %v1043, 4
      %v1050 = vshrl.u32 %v815, 16
      %v1052 = vrot.slane %v1050, 7
      %v1053 = vshll.u32 %v815, 16
      %v1055 = vor.u32 %v1052, %v1053
      %v1056 = vrot.slane %v1052, 4
      %v1058 = vshrl.u32 %v816, 16
      %v1060 = vrot.slane %v1058, 7
      %v1061 = vshll.u32 %v816, 16
      %v1063 = vor.u32 %v1060, %v1061
      %v1064 = vsel %vm827, %v1056, %v1063
      %v1065 = vrot.slane %v1060, 4
      %v1067 = vshrl.u32 %v817, 16
      %v1069 = vrot.slane %v1067, 7
      %v1070 = vshll.u32 %v817, 16
      %v1072 = vor.u32 %v1069, %v1070
      %v1073 = vrot.slane %v1069, 4
      %v1075 = vshrl.u32 %v818, 16
      %v1077 = vrot.slane %v1075, 7
      %v1078 = vshll.u32 %v818, 16
      %v1080 = vor.u32 %v1077, %v1078
      %v1081 = vsel %vm827, %v1073, %v1080
      %v1082 = vrot.slane %v1077, 4
      %v1084 = vshrl.u32 %v819, 16
      %v1086 = vrot.slane %v1084, 7
      %v1087 = vshll.u32 %v819, 16
      %v1089 = vor.u32 %v1086, %v1087
      %v1090 = vrot.slane %v1086, 4
      %v1092 = vshrl.u32 %v820, 16
      %v1094 = vrot.slane %v1092, 7
      %v1095 = vshll.u32 %v820, 16
      %v1097 = vor.u32 %v1094, %v1095
      %v1098 = vsel %vm827, %v1090, %v1097
      %v1099 = vrot.slane %v1094, 4
      %v1101 = vshrl.u32 %v821, 16
      %v1103 = vrot.slane %v1101, 7
      %v1104 = vshll.u32 %v821, 16
      %v1106 = vor.u32 %v1103, %v1104
      %v1107 = vrot.slane %v1103, 4
      %v1109 = vshrl.u32 %v822, 16
      %v1111 = vrot.slane %v1109, 7
      %v1112 = vshll.u32 %v822, 16
      %v1114 = vor.u32 %v1111, %v1112
      %v1115 = vsel %vm827, %v1107, %v1114
      %v1116 = vrot.slane %v1111, 4
      %v1118 = vshrl.u32 %v823, 16
      %v1120 = vrot.slane %v1118, 7
      %v1121 = vshll.u32 %v823, 16
      %v1123 = vor.u32 %v1120, %v1121
      %v1124 = vrot.slane %v1120, 4
      %v1126 = vshrl.u32 %v824, 16
      %v1128 = vrot.slane %v1126, 7
      %v1129 = vshll.u32 %v824, 16
      %v1131 = vor.u32 %v1128, %v1129
      %v1132 = vsel %vm827, %v1124, %v1131
      %v1133 = vrot.slane %v1128, 4
      %vm1188 = vcmask 1043456
      %vm1189 = vsmask.f32 7938
      %vm1190 = vmand %vm1188, %vm1189
      %v1191 = vld [vmem:[#allocation3] sm:$0xf]
      %v1192 = vsel %vm1190, %v834, %v1191
      %1193 = vst [vmem:[#allocation3] sm:$0xf] %v1192
      %1194 = vst [vmem:[#allocation3 + $0x4] sm:$0xf] %v843
      %vm1195 = vcmask 1040384
      %vm1196 = vmand %vm1195, %vm825
      %v1197 = vld [vmem:[#allocation3 + $0x8] sm:$0x1]
      %v1198 = vsel %vm1196, %v844, %v1197
      %1199 = vst [vmem:[#allocation3 + $0x8] sm:$0x1] %v1198
      %v1200 = vld [vmem:[#allocation3 + $0xc] sm:$0xf]
      %v1201 = vsel %vm1190, %v851, %v1200
      %1202 = vst [vmem:[#allocation3 + $0xc] sm:$0xf] %v1201
      %1203 = vst [vmem:[#allocation3 + $0x10] sm:$0xf] %v860
      %v1204 = vld [vmem:[#allocation3 + $0x14] sm:$0x1]
      %v1205 = vsel %vm1196, %v861, %v1204
      %1206 = vst [vmem:[#allocation3 + $0x14] sm:$0x1] %v1205
      %v1207 = vld [vmem:[#allocation3 + $0x18] sm:$0xf]
      %v1208 = vsel %vm1190, %v868, %v1207
      %1209 = vst [vmem:[#allocation3 + $0x18] sm:$0xf] %v1208
      %1210 = vst [vmem:[#allocation3 + $0x1c] sm:$0xf] %v877
      %v1211 = vld [vmem:[#allocation3 + $0x20] sm:$0x1]
      %v1212 = vsel %vm1196, %v878, %v1211
      %1213 = vst [vmem:[#allocation3 + $0x20] sm:$0x1] %v1212
      %v1214 = vld [vmem:[#allocation3 + $0x24] sm:$0xf]
      %v1215 = vsel %vm1190, %v885, %v1214
      %1216 = vst [vmem:[#allocation3 + $0x24] sm:$0xf] %v1215
      %1217 = vst [vmem:[#allocation3 + $0x28] sm:$0xf] %v894
      %v1218 = vld [vmem:[#allocation3 + $0x2c] sm:$0x1]
      %v1219 = vsel %vm1196, %v895, %v1218
      %1220 = vst [vmem:[#allocation3 + $0x2c] sm:$0x1] %v1219
      %v1221 = vld [vmem:[#allocation3 + $0x30] sm:$0xf]
      %v1222 = vsel %vm1190, %v902, %v1221
      %1223 = vst [vmem:[#allocation3 + $0x30] sm:$0xf] %v1222
      %1224 = vst [vmem:[#allocation3 + $0x34] sm:$0xf] %v911
      %v1225 = vld [vmem:[#allocation3 + $0x38] sm:$0x1]
      %v1226 = vsel %vm1196, %v912, %v1225
      %1227 = vst [vmem:[#allocation3 + $0x38] sm:$0x1] %v1226
      %v1228 = vld [vmem:[#allocation3 + $0x3c] sm:$0xf]
      %v1229 = vsel %vm1190, %v919, %v1228
      %1230 = vst [vmem:[#allocation3 + $0x3c] sm:$0xf] %v1229
      %1231 = vst [vmem:[#allocation3 + $0x40] sm:$0xf] %v928
      %v1232 = vld [vmem:[#allocation3 + $0x44] sm:$0x1]
      %v1233 = vsel %vm1196, %v929, %v1232
      %1234 = vst [vmem:[#allocation3 + $0x44] sm:$0x1] %v1233
      %v1235 = vld [vmem:[#allocation3 + $0x48] sm:$0xf]
      %v1236 = vsel %vm1190, %v936, %v1235
      %1237 = vst [vmem:[#allocation3 + $0x48] sm:$0xf] %v1236
      %1238 = vst [vmem:[#allocation3 + $0x4c] sm:$0xf] %v945
      %v1239 = vld [vmem:[#allocation3 + $0x50] sm:$0x1]
      %v1240 = vsel %vm1196, %v946, %v1239
      %1241 = vst [vmem:[#allocation3 + $0x50] sm:$0x1] %v1240
      %v1242 = vld [vmem:[#allocation3 + $0x54] sm:$0xf]
      %v1243 = vsel %vm1190, %v953, %v1242
      %1244 = vst [vmem:[#allocation3 + $0x54] sm:$0xf] %v1243
      %1245 = vst [vmem:[#allocation3 + $0x58] sm:$0xf] %v962
      %v1246 = vld [vmem:[#allocation3 + $0x5c] sm:$0x1]
      %v1247 = vsel %vm1196, %v963, %v1246
      %1248 = vst [vmem:[#allocation3 + $0x5c] sm:$0x1] %v1247
      %v1249 = vld [vmem:[#allocation3 + $0x60] sm:$0xf]
      %v1250 = vsel %vm1190, %v970, %v1249
      %1251 = vst [vmem:[#allocation3 + $0x60] sm:$0xf] %v1250
      %1252 = vst [vmem:[#allocation3 + $0x64] sm:$0xf] %v979
      %v1253 = vld [vmem:[#allocation3 + $0x68] sm:$0x1]
      %v1254 = vsel %vm1196, %v980, %v1253
      %1255 = vst [vmem:[#allocation3 + $0x68] sm:$0x1] %v1254
      %v1256 = vld [vmem:[#allocation3 + $0x6c] sm:$0xf]
      %v1257 = vsel %vm1190, %v987, %v1256
      %1258 = vst [vmem:[#allocation3 + $0x6c] sm:$0xf] %v1257
      %1259 = vst [vmem:[#allocation3 + $0x70] sm:$0xf] %v996
      %v1260 = vld [vmem:[#allocation3 + $0x74] sm:$0x1]
      %v1261 = vsel %vm1196, %v997, %v1260
      %1262 = vst [vmem:[#allocation3 + $0x74] sm:$0x1] %v1261
      %v1263 = vld [vmem:[#allocation3 + $0x78] sm:$0xf]
      %v1264 = vsel %vm1190, %v1004, %v1263
      %1265 = vst [vmem:[#allocation3 + $0x78] sm:$0xf] %v1264
      %1266 = vst [vmem:[#allocation3 + $0x7c] sm:$0xf] %v1013
      %v1267 = vld [vmem:[#allocation3 + $0x80] sm:$0x1]
      %v1268 = vsel %vm1196, %v1014, %v1267
      %1269 = vst [vmem:[#allocation3 + $0x80] sm:$0x1] %v1268
      %v1270 = vld [vmem:[#allocation3 + $0x84] sm:$0xf]
      %v1271 = vsel %vm1190, %v1021, %v1270
      %1272 = vst [vmem:[#allocation3 + $0x84] sm:$0xf] %v1271
      %1273 = vst [vmem:[#allocation3 + $0x88] sm:$0xf] %v1030
      %v1274 = vld [vmem:[#allocation3 + $0x8c] sm:$0x1]
      %v1275 = vsel %vm1196, %v1031, %v1274
      %1276 = vst [vmem:[#allocation3 + $0x8c] sm:$0x1] %v1275
      %v1277 = vld [vmem:[#allocation3 + $0x90] sm:$0xf]
      %v1278 = vsel %vm1190, %v1038, %v1277
      %1279 = vst [vmem:[#allocation3 + $0x90] sm:$0xf] %v1278
      %1280 = vst [vmem:[#allocation3 + $0x94] sm:$0xf] %v1047
      %v1281 = vld [vmem:[#allocation3 + $0x98] sm:$0x1]
      %v1282 = vsel %vm1196, %v1048, %v1281
      %1283 = vst [vmem:[#allocation3 + $0x98] sm:$0x1] %v1282
      %v1284 = vld [vmem:[#allocation3 + $0x9c] sm:$0xf]
      %v1285 = vsel %vm1190, %v1055, %v1284
      %1286 = vst [vmem:[#allocation3 + $0x9c] sm:$0xf] %v1285
      %1287 = vst [vmem:[#allocation3 + $0xa0] sm:$0xf] %v1064
      %v1288 = vld [vmem:[#allocation3 + $0xa4] sm:$0x1]
      %v1289 = vsel %vm1196, %v1065, %v1288
      %1290 = vst [vmem:[#allocation3 + $0xa4] sm:$0x1] %v1289
      %v1291 = vld [vmem:[#allocation3 + $0xa8] sm:$0xf]
      %v1292 = vsel %vm1190, %v1072, %v1291
      %1293 = vst [vmem:[#allocation3 + $0xa8] sm:$0xf] %v1292
      %1294 = vst [vmem:[#allocation3 + $0xac] sm:$0xf] %v1081
      %v1295 = vld [vmem:[#allocation3 + $0xb0] sm:$0x1]
      %v1296 = vsel %vm1196, %v1082, %v1295
      %1297 = vst [vmem:[#allocation3 + $0xb0] sm:$0x1] %v1296
      %v1298 = vld [vmem:[#allocation3 + $0xb4] sm:$0xf]
      %v1299 = vsel %vm1190, %v1089, %v1298
      %1300 = vst [vmem:[#allocation3 + $0xb4] sm:$0xf] %v1299
      %1301 = vst [vmem:[#allocation3 + $0xb8] sm:$0xf] %v1098
      %v1302 = vld [vmem:[#allocation3 + $0xbc] sm:$0x1]
      %v1303 = vsel %vm1196, %v1099, %v1302
      %1304 = vst [vmem:[#allocation3 + $0xbc] sm:$0x1] %v1303
      %v1305 = vld [vmem:[#allocation3 + $0xc0] sm:$0xf]
      %v1306 = vsel %vm1190, %v1106, %v1305
      %1307 = vst [vmem:[#allocation3 + $0xc0] sm:$0xf] %v1306
      %1308 = vst [vmem:[#allocation3 + $0xc4] sm:$0xf] %v1115
      %v1309 = vld [vmem:[#allocation3 + $0xc8] sm:$0x1]
      %v1310 = vsel %vm1196, %v1116, %v1309
      %1311 = vst [vmem:[#allocation3 + $0xc8] sm:$0x1] %v1310
      %v1312 = vld [vmem:[#allocation3 + $0xcc] sm:$0xf]
      %v1313 = vsel %vm1190, %v1123, %v1312
      %1314 = vst [vmem:[#allocation3 + $0xcc] sm:$0xf] %v1313
      %1315 = vst [vmem:[#allocation3 + $0xd0] sm:$0xf] %v1132
      %v1316 = vld [vmem:[#allocation3 + $0xd4] sm:$0x1]
      %v1317 = vsel %vm1196, %v1133, %v1316
      %1318 = vst [vmem:[#allocation3 + $0xd4] sm:$0x1] %v1317
      %v1319 = vld [vmem:[#allocation3] sm:$0x1]
      %v1320 = vsel %vm1196, 0, %v1319
      %1321 = vst [vmem:[#allocation3] sm:$0x1] %v1320
      %v1322 = vld [vmem:[#allocation3 + $0xc] sm:$0x1]
      %v1323 = vsel %vm1196, 0, %v1322
      %1324 = vst [vmem:[#allocation3 + $0xc] sm:$0x1] %v1323
      %v1325 = vld [vmem:[#allocation3 + $0x18] sm:$0x1]
      %v1326 = vsel %vm1196, 0, %v1325
      %1327 = vst [vmem:[#allocation3 + $0x18] sm:$0x1] %v1326
      %v1328 = vld [vmem:[#allocation3 + $0x24] sm:$0x1]
      %v1329 = vsel %vm1196, 0, %v1328
      %1330 = vst [vmem:[#allocation3 + $0x24] sm:$0x1] %v1329
      %v1331 = vld [vmem:[#allocation3 + $0x30] sm:$0x1]
      %v1332 = vsel %vm1196, 0, %v1331
      %1333 = vst [vmem:[#allocation3 + $0x30] sm:$0x1] %v1332
      %v1334 = vld [vmem:[#allocation3 + $0x3c] sm:$0x1]
      %v1335 = vsel %vm1196, 0, %v1334
      %1336 = vst [vmem:[#allocation3 + $0x3c] sm:$0x1] %v1335
      %v1337 = vld [vmem:[#allocation3 + $0x48] sm:$0x1]
      %v1338 = vsel %vm1196, 0, %v1337
      %1339 = vst [vmem:[#allocation3 + $0x48] sm:$0x1] %v1338
      %v1340 = vld [vmem:[#allocation3 + $0x54] sm:$0x1]
      %v1341 = vsel %vm1196, 0, %v1340
      %1342 = vst [vmem:[#allocation3 + $0x54] sm:$0x1] %v1341
      %v1343 = vld [vmem:[#allocation3 + $0x60] sm:$0x1]
      %v1344 = vsel %vm1196, 0, %v1343
      %1345 = vst [vmem:[#allocation3 + $0x60] sm:$0x1] %v1344
      %v1346 = vld [vmem:[#allocation3 + $0x6c] sm:$0x1]
      %v1347 = vsel %vm1196, 0, %v1346
      %1348 = vst [vmem:[#allocation3 + $0x6c] sm:$0x1] %v1347
      %v1349 = vld [vmem:[#allocation3 + $0x78] sm:$0x1]
      %v1350 = vsel %vm1196, 0, %v1349
      %1351 = vst [vmem:[#allocation3 + $0x78] sm:$0x1] %v1350
      %v1352 = vld [vmem:[#allocation3 + $0x84] sm:$0x1]
      %v1353 = vsel %vm1196, 0, %v1352
      %1354 = vst [vmem:[#allocation3 + $0x84] sm:$0x1] %v1353
      %v1355 = vld [vmem:[#allocation3 + $0x90] sm:$0x1]
      %v1356 = vsel %vm1196, 0, %v1355
      %1357 = vst [vmem:[#allocation3 + $0x90] sm:$0x1] %v1356
      %v1358 = vld [vmem:[#allocation3 + $0x9c] sm:$0x1]
      %v1359 = vsel %vm1196, 0, %v1358
      %1360 = vst [vmem:[#allocation3 + $0x9c] sm:$0x1] %v1359
      %v1361 = vld [vmem:[#allocation3 + $0xa8] sm:$0x1]
      %v1362 = vsel %vm1196, 0, %v1361
      %1363 = vst [vmem:[#allocation3 + $0xa8] sm:$0x1] %v1362
      %v1364 = vld [vmem:[#allocation3 + $0xb4] sm:$0x1]
      %v1365 = vsel %vm1196, 0, %v1364
      %1366 = vst [vmem:[#allocation3 + $0xb4] sm:$0x1] %v1365
      %v1367 = vld [vmem:[#allocation3 + $0xc0] sm:$0x1]
      %v1368 = vsel %vm1196, 0, %v1367
      %1369 = vst [vmem:[#allocation3 + $0xc0] sm:$0x1] %v1368
      %v1370 = vld [vmem:[#allocation3 + $0xcc] sm:$0x1]
      %v1371 = vsel %vm1196, 0, %v1370
      %1372 = vst [vmem:[#allocation3 + $0xcc] sm:$0x1] %v1371
      %vm1373 = vmand %vm1195, %vm1189
      %v1374 = vld [vmem:[#allocation3 + $0x8] sm:$0x1]
      %v1375 = vsel %vm1373, 0, %v1374
      %1376 = vst [vmem:[#allocation3 + $0x8] sm:$0x1] %v1375
      %v1377 = vld [vmem:[#allocation3 + $0x14] sm:$0x1]
      %v1378 = vsel %vm1373, 0, %v1377
      %1379 = vst [vmem:[#allocation3 + $0x14] sm:$0x1] %v1378
      %v1380 = vld [vmem:[#allocation3 + $0x20] sm:$0x1]
      %v1381 = vsel %vm1373, 0, %v1380
      %1382 = vst [vmem:[#allocation3 + $0x20] sm:$0x1] %v1381
      %v1383 = vld [vmem:[#allocation3 + $0x2c] sm:$0x1]
      %v1384 = vsel %vm1373, 0, %v1383
      %1385 = vst [vmem:[#allocation3 + $0x2c] sm:$0x1] %v1384
      %v1386 = vld [vmem:[#allocation3 + $0x38] sm:$0x1]
      %v1387 = vsel %vm1373, 0, %v1386
      %1388 = vst [vmem:[#allocation3 + $0x38] sm:$0x1] %v1387
      %v1389 = vld [vmem:[#allocation3 + $0x44] sm:$0x1]
      %v1390 = vsel %vm1373, 0, %v1389
      %1391 = vst [vmem:[#allocation3 + $0x44] sm:$0x1] %v1390
      %v1392 = vld [vmem:[#allocation3 + $0x50] sm:$0x1]
      %v1393 = vsel %vm1373, 0, %v1392
      %1394 = vst [vmem:[#allocation3 + $0x50] sm:$0x1] %v1393
      %v1395 = vld [vmem:[#allocation3 + $0x5c] sm:$0x1]
      %v1396 = vsel %vm1373, 0, %v1395
      %1397 = vst [vmem:[#allocation3 + $0x5c] sm:$0x1] %v1396
      %v1398 = vld [vmem:[#allocation3 + $0x68] sm:$0x1]
      %v1399 = vsel %vm1373, 0, %v1398
      %1400 = vst [vmem:[#allocation3 + $0x68] sm:$0x1] %v1399
      %v1401 = vld [vmem:[#allocation3 + $0x74] sm:$0x1]
      %v1402 = vsel %vm1373, 0, %v1401
      %1403 = vst [vmem:[#allocation3 + $0x74] sm:$0x1] %v1402
      %v1404 = vld [vmem:[#allocation3 + $0x80] sm:$0x1]
      %v1405 = vsel %vm1373, 0, %v1404
      %1406 = vst [vmem:[#allocation3 + $0x80] sm:$0x1] %v1405
      %v1407 = vld [vmem:[#allocation3 + $0x8c] sm:$0x1]
      %v1408 = vsel %vm1373, 0, %v1407
      %1409 = vst [vmem:[#allocation3 + $0x8c] sm:$0x1] %v1408
      %v1410 = vld [vmem:[#allocation3 + $0x98] sm:$0x1]
      %v1411 = vsel %vm1373, 0, %v1410
      %1412 = vst [vmem:[#allocation3 + $0x98] sm:$0x1] %v1411
      %v1413 = vld [vmem:[#allocation3 + $0xa4] sm:$0x1]
      %v1414 = vsel %vm1373, 0, %v1413
      %1415 = vst [vmem:[#allocation3 + $0xa4] sm:$0x1] %v1414
      %v1416 = vld [vmem:[#allocation3 + $0xb0] sm:$0x1]
      %v1417 = vsel %vm1373, 0, %v1416
      %1418 = vst [vmem:[#allocation3 + $0xb0] sm:$0x1] %v1417
      %v1419 = vld [vmem:[#allocation3 + $0xbc] sm:$0x1]
      %v1420 = vsel %vm1373, 0, %v1419
      %1421 = vst [vmem:[#allocation3 + $0xbc] sm:$0x1] %v1420
      %v1422 = vld [vmem:[#allocation3 + $0xc8] sm:$0x1]
      %v1423 = vsel %vm1373, 0, %v1422
      %1424 = vst [vmem:[#allocation3 + $0xc8] sm:$0x1] %v1423
      %v1425 = vld [vmem:[#allocation3 + $0xd4] sm:$0x1]
      %v1426 = vsel %vm1373, 0, %v1425
      %1427 = vst [vmem:[#allocation3 + $0xd4] sm:$0x1] %v1426
      // Predicated region
      $region269: #{segnet_enc_forward.4} parent=31 // pred_check
        %p1428 = pneg %p274
      $region270: #{segnet_enc_forward.4} parent=31 // pred_check_branch
        %1430 = sbr.rel (%p1428) target = $region272
      $region271: #{segnet_enc_forward.4} parent=31 // pred_region
        %1431 = vst [vmem:[#allocation3] sm:$0xf] 0
        %1432 = vst [vmem:[#allocation3 + $0x4] sm:$0xf] 0
        %1433 = vst [vmem:[#allocation3 + $0x8] sm:$0x1] 0
        %s1434 = scalar_lea.vmem [#allocation3], 204
        %1435 = vst [vmem:[%s1434] sm:$0xf] 0
        %1436 = vst [vmem:[%s1434 + $0x4] sm:$0xf] 0
        %1437 = vst [vmem:[%s1434 + $0x8] sm:$0x1] 0
      $region272: #{segnet_enc_forward.4} parent=31 // pred_fallthru
        _
      %v1438 = vld [vmem:[#allocation3] sm:$0xf]
      %v1439 = vld [vmem:[#allocation3 + $0x4] sm:$0xf]
      %v1440 = vld [vmem:[#allocation3 + $0xc] sm:$0xf]
      %v1441 = vld [vmem:[#allocation3 + $0x10] sm:$0xf]
      %v1442 = vld [vmem:[#allocation3 + $0x18] sm:$0xf]
      %v1443 = vld [vmem:[#allocation3 + $0x1c] sm:$0xf]
      %v1444 = vld [vmem:[#allocation3 + $0x24] sm:$0xf]
      %v1445 = vld [vmem:[#allocation3 + $0x28] sm:$0xf]
      %v1446 = vld [vmem:[#allocation3 + $0x30] sm:$0xf]
      %v1447 = vld [vmem:[#allocation3 + $0x34] sm:$0xf]
      %v1448 = vld [vmem:[#allocation3 + $0x3c] sm:$0xf]
      %v1449 = vld [vmem:[#allocation3 + $0x40] sm:$0xf]
      %v1450 = vld [vmem:[#allocation3 + $0x48] sm:$0xf]
      %v1451 = vld [vmem:[#allocation3 + $0x4c] sm:$0xf]
      %v1452 = vld [vmem:[#allocation3 + $0x54] sm:$0xf]
      %v1453 = vld [vmem:[#allocation3 + $0x58] sm:$0xf]
      %v1454 = vld [vmem:[#allocation3 + $0x60] sm:$0xf]
      %v1455 = vld [vmem:[#allocation3 + $0x64] sm:$0xf]
      %v1456 = vld [vmem:[#allocation3 + $0x6c] sm:$0xf]
      %v1457 = vld [vmem:[#allocation3 + $0x70] sm:$0xf]
      %v1458 = vld [vmem:[#allocation3 + $0x78] sm:$0xf]
      %v1459 = vld [vmem:[#allocation3 + $0x7c] sm:$0xf]
      %v1460 = vld [vmem:[#allocation3 + $0x84] sm:$0xf]
      %v1461 = vld [vmem:[#allocation3 + $0x88] sm:$0xf]
      %v1462 = vld [vmem:[#allocation3 + $0x90] sm:$0xf]
      %v1463 = vld [vmem:[#allocation3 + $0x94] sm:$0xf]
      %v1464 = vld [vmem:[#allocation3 + $0x9c] sm:$0xf]
      %v1465 = vld [vmem:[#allocation3 + $0xa0] sm:$0xf]
      %v1466 = vld [vmem:[#allocation3 + $0xa8] sm:$0xf]
      %v1467 = vld [vmem:[#allocation3 + $0xac] sm:$0xf]
      %v1468 = vld [vmem:[#allocation3 + $0xb4] sm:$0xf]
      %v1469 = vld [vmem:[#allocation3 + $0xb8] sm:$0xf]
      %v1470 = vld [vmem:[#allocation3 + $0x8] sm:$0x1]
      %v1471 = vld [vmem:[#allocation3 + $0x14] sm:$0x1]
      %v1472 = vld [vmem:[#allocation3 + $0x20] sm:$0x1]
      %v1473 = vld [vmem:[#allocation3 + $0x2c] sm:$0x1]
      %v1474 = vld [vmem:[#allocation3 + $0x38] sm:$0x1]
      %v1475 = vld [vmem:[#allocation3 + $0x44] sm:$0x1]
      %v1476 = vld [vmem:[#allocation3 + $0x50] sm:$0x1]
      %v1477 = vld [vmem:[#allocation3 + $0x5c] sm:$0x1]
      %v1478 = vld [vmem:[#allocation3 + $0x68] sm:$0x1]
      %v1479 = vld [vmem:[#allocation3 + $0x74] sm:$0x1]
      %v1480 = vld [vmem:[#allocation3 + $0x80] sm:$0x1]
      %v1481 = vld [vmem:[#allocation3 + $0x8c] sm:$0x1]
      %v1482 = vld [vmem:[#allocation3 + $0x98] sm:$0x1]
      %v1483 = vld [vmem:[#allocation3 + $0xa4] sm:$0x1]
      %v1484 = vld [vmem:[#allocation3 + $0xb0] sm:$0x1]
      %v1485 = vld [vmem:[#allocation3 + $0xbc] sm:$0x1]
      %v1486 = vld [vmem:[#allocation3] sm:$0xe]
      %v1487 = vld [vmem:[#allocation3 + $0xc] sm:$0xe]
      %v1488 = vld [vmem:[#allocation3 + $0x18] sm:$0xe]
      %v1489 = vld [vmem:[#allocation3 + $0x24] sm:$0xe]
      %v1490 = vld [vmem:[#allocation3 + $0x30] sm:$0xe]
      %v1491 = vld [vmem:[#allocation3 + $0x3c] sm:$0xe]
      %v1492 = vld [vmem:[#allocation3 + $0x48] sm:$0xe]
      %v1493 = vld [vmem:[#allocation3 + $0x54] sm:$0xe]
      %v1494 = vld [vmem:[#allocation3 + $0x60] sm:$0xe]
      %v1495 = vld [vmem:[#allocation3 + $0x6c] sm:$0xe]
      %v1496 = vld [vmem:[#allocation3 + $0x78] sm:$0xe]
      %v1497 = vld [vmem:[#allocation3 + $0x84] sm:$0xe]
      %v1498 = vld [vmem:[#allocation3 + $0x90] sm:$0xe]
      %v1499 = vld [vmem:[#allocation3 + $0x9c] sm:$0xe]
      %v1500 = vld [vmem:[#allocation3 + $0xa8] sm:$0xe]
      %v1501 = vld [vmem:[#allocation3 + $0xb4] sm:$0xe]
      %v1534 = vunpack.c.l.b16 %v1438
      %v1535 = vunpack.c.l.b16 %v1439
      %v1536 = vunpack.c.l.b16 %v1440
      %v1537 = vunpack.c.l.b16 %v1441
      %v1538 = vunpack.c.l.b16 %v1442
      %v1539 = vunpack.c.l.b16 %v1443
      %v1540 = vunpack.c.l.b16 %v1444
      %v1541 = vunpack.c.l.b16 %v1445
      %v1542 = vunpack.c.l.b16 %v1446
      %v1543 = vunpack.c.l.b16 %v1447
      %v1544 = vunpack.c.l.b16 %v1448
      %v1545 = vunpack.c.l.b16 %v1449
      %v1546 = vunpack.c.l.b16 %v1450
      %v1547 = vunpack.c.l.b16 %v1451
      %v1548 = vunpack.c.l.b16 %v1452
      %v1549 = vunpack.c.l.b16 %v1453
      %v1550 = vunpack.c.l.b16 %v1454
      %v1551 = vunpack.c.l.b16 %v1455
      %v1552 = vunpack.c.l.b16 %v1456
      %v1553 = vunpack.c.l.b16 %v1457
      %v1554 = vunpack.c.l.b16 %v1458
      %v1555 = vunpack.c.l.b16 %v1459
      %v1556 = vunpack.c.l.b16 %v1460
      %v1557 = vunpack.c.l.b16 %v1461
      %v1558 = vunpack.c.l.b16 %v1462
      %v1559 = vunpack.c.l.b16 %v1463
      %v1560 = vunpack.c.l.b16 %v1464
      %v1561 = vunpack.c.l.b16 %v1465
      %v1562 = vunpack.c.l.b16 %v1466
      %v1563 = vunpack.c.l.b16 %v1467
      %v1564 = vunpack.c.l.b16 %v1468
      %v1565 = vunpack.c.l.b16 %v1469
      %v1566 = vpack.c.b16 %v1535, %v1534
      %v1567 = vpack.c.b16 %v1537, %v1536
      %v1568 = vpack.c.b16 %v1539, %v1538
      %v1569 = vpack.c.b16 %v1541, %v1540
      %v1570 = vpack.c.b16 %v1543, %v1542
      %v1571 = vpack.c.b16 %v1545, %v1544
      %v1572 = vpack.c.b16 %v1547, %v1546
      %v1573 = vpack.c.b16 %v1549, %v1548
      %v1574 = vpack.c.b16 %v1551, %v1550
      %v1575 = vpack.c.b16 %v1553, %v1552
      %v1576 = vpack.c.b16 %v1555, %v1554
      %v1577 = vpack.c.b16 %v1557, %v1556
      %v1578 = vpack.c.b16 %v1559, %v1558
      %v1579 = vpack.c.b16 %v1561, %v1560
      %v1580 = vpack.c.b16 %v1563, %v1562
      %v1581 = vpack.c.b16 %v1565, %v1564
      %v1614 = vunpack.c.l.b16 %v1470
      %v1615 = vunpack.c.l.b16 %v1471
      %v1616 = vunpack.c.l.b16 %v1472
      %v1617 = vunpack.c.l.b16 %v1473
      %v1618 = vunpack.c.l.b16 %v1474
      %v1619 = vunpack.c.l.b16 %v1475
      %v1620 = vunpack.c.l.b16 %v1476
      %v1621 = vunpack.c.l.b16 %v1477
      %v1622 = vunpack.c.l.b16 %v1478
      %v1623 = vunpack.c.l.b16 %v1479
      %v1624 = vunpack.c.l.b16 %v1480
      %v1625 = vunpack.c.l.b16 %v1481
      %v1626 = vunpack.c.l.b16 %v1482
      %v1627 = vunpack.c.l.b16 %v1483
      %v1628 = vunpack.c.l.b16 %v1484
      %v1629 = vunpack.c.l.b16 %v1485
      %v1630 = vpack.c.b16 %v1614, %v1614
      %v1631 = vpack.c.b16 %v1615, %v1615
      %v1632 = vpack.c.b16 %v1616, %v1616
      %v1633 = vpack.c.b16 %v1617, %v1617
      %v1634 = vpack.c.b16 %v1618, %v1618
      %v1635 = vpack.c.b16 %v1619, %v1619
      %v1636 = vpack.c.b16 %v1620, %v1620
      %v1637 = vpack.c.b16 %v1621, %v1621
      %v1638 = vpack.c.b16 %v1622, %v1622
      %v1639 = vpack.c.b16 %v1623, %v1623
      %v1640 = vpack.c.b16 %v1624, %v1624
      %v1641 = vpack.c.b16 %v1625, %v1625
      %v1642 = vpack.c.b16 %v1626, %v1626
      %v1643 = vpack.c.b16 %v1627, %v1627
      %v1644 = vpack.c.b16 %v1628, %v1628
      %v1645 = vpack.c.b16 %v1629, %v1629
      %vm1646 = vsmask.f32 7424
      %v1648 = vshrl.u32 %v1566, 16
      %v1650 = vshll.u32 %v1566, 16
      %v1652 = vrot.slane %v1650, 1
      %v1653 = vor.u32 %v1648, %v1652
      %v1655 = vshll.u32 %v1630, 16
      %v1657 = vrot.slane %v1655, 1
      %v1658 = vsel %vm1646, %v1653, %v1657
      %v1660 = vshrl.u32 %v1567, 16
      %v1662 = vshll.u32 %v1567, 16
      %v1664 = vrot.slane %v1662, 1
      %v1665 = vor.u32 %v1660, %v1664
      %v1667 = vshll.u32 %v1631, 16
      %v1669 = vrot.slane %v1667, 1
      %v1670 = vsel %vm1646, %v1665, %v1669
      %v1672 = vshrl.u32 %v1568, 16
      %v1674 = vshll.u32 %v1568, 16
      %v1676 = vrot.slane %v1674, 1
      %v1677 = vor.u32 %v1672, %v1676
      %v1679 = vshll.u32 %v1632, 16
      %v1681 = vrot.slane %v1679, 1
      %v1682 = vsel %vm1646, %v1677, %v1681
      %v1684 = vshrl.u32 %v1569, 16
      %v1686 = vshll.u32 %v1569, 16
      %v1688 = vrot.slane %v1686, 1
      %v1689 = vor.u32 %v1684, %v1688
      %v1691 = vshll.u32 %v1633, 16
      %v1693 = vrot.slane %v1691, 1
      %v1694 = vsel %vm1646, %v1689, %v1693
      %v1696 = vshrl.u32 %v1570, 16
      %v1698 = vshll.u32 %v1570, 16
      %v1700 = vrot.slane %v1698, 1
      %v1701 = vor.u32 %v1696, %v1700
      %v1703 = vshll.u32 %v1634, 16
      %v1705 = vrot.slane %v1703, 1
      %v1706 = vsel %vm1646, %v1701, %v1705
      %v1708 = vshrl.u32 %v1571, 16
      %v1710 = vshll.u32 %v1571, 16
      %v1712 = vrot.slane %v1710, 1
      %v1713 = vor.u32 %v1708, %v1712
      %v1715 = vshll.u32 %v1635, 16
      %v1717 = vrot.slane %v1715, 1
      %v1718 = vsel %vm1646, %v1713, %v1717
      %v1720 = vshrl.u32 %v1572, 16
      %v1722 = vshll.u32 %v1572, 16
      %v1724 = vrot.slane %v1722, 1
      %v1725 = vor.u32 %v1720, %v1724
      %v1727 = vshll.u32 %v1636, 16
      %v1729 = vrot.slane %v1727, 1
      %v1730 = vsel %vm1646, %v1725, %v1729
      %v1732 = vshrl.u32 %v1573, 16
      %v1734 = vshll.u32 %v1573, 16
      %v1736 = vrot.slane %v1734, 1
      %v1737 = vor.u32 %v1732, %v1736
      %v1739 = vshll.u32 %v1637, 16
      %v1741 = vrot.slane %v1739, 1
      %v1742 = vsel %vm1646, %v1737, %v1741
      %v1744 = vshrl.u32 %v1574, 16
      %v1746 = vshll.u32 %v1574, 16
      %v1748 = vrot.slane %v1746, 1
      %v1749 = vor.u32 %v1744, %v1748
      %v1751 = vshll.u32 %v1638, 16
      %v1753 = vrot.slane %v1751, 1
      %v1754 = vsel %vm1646, %v1749, %v1753
      %v1756 = vshrl.u32 %v1575, 16
      %v1758 = vshll.u32 %v1575, 16
      %v1760 = vrot.slane %v1758, 1
      %v1761 = vor.u32 %v1756, %v1760
      %v1763 = vshll.u32 %v1639, 16
      %v1765 = vrot.slane %v1763, 1
      %v1766 = vsel %vm1646, %v1761, %v1765
      %v1768 = vshrl.u32 %v1576, 16
      %v1770 = vshll.u32 %v1576, 16
      %v1772 = vrot.slane %v1770, 1
      %v1773 = vor.u32 %v1768, %v1772
      %v1775 = vshll.u32 %v1640, 16
      %v1777 = vrot.slane %v1775, 1
      %v1778 = vsel %vm1646, %v1773, %v1777
      %v1780 = vshrl.u32 %v1577, 16
      %v1782 = vshll.u32 %v1577, 16
      %v1784 = vrot.slane %v1782, 1
      %v1785 = vor.u32 %v1780, %v1784
      %v1787 = vshll.u32 %v1641, 16
      %v1789 = vrot.slane %v1787, 1
      %v1790 = vsel %vm1646, %v1785, %v1789
      %v1792 = vshrl.u32 %v1578, 16
      %v1794 = vshll.u32 %v1578, 16
      %v1796 = vrot.slane %v1794, 1
      %v1797 = vor.u32 %v1792, %v1796
      %v1799 = vshll.u32 %v1642, 16
      %v1801 = vrot.slane %v1799, 1
      %v1802 = vsel %vm1646, %v1797, %v1801
      %v1804 = vshrl.u32 %v1579, 16
      %v1806 = vshll.u32 %v1579, 16
      %v1808 = vrot.slane %v1806, 1
      %v1809 = vor.u32 %v1804, %v1808
      %v1811 = vshll.u32 %v1643, 16
      %v1813 = vrot.slane %v1811, 1
      %v1814 = vsel %vm1646, %v1809, %v1813
      %v1816 = vshrl.u32 %v1580, 16
      %v1818 = vshll.u32 %v1580, 16
      %v1820 = vrot.slane %v1818, 1
      %v1821 = vor.u32 %v1816, %v1820
      %v1823 = vshll.u32 %v1644, 16
      %v1825 = vrot.slane %v1823, 1
      %v1826 = vsel %vm1646, %v1821, %v1825
      %v1828 = vshrl.u32 %v1581, 16
      %v1830 = vshll.u32 %v1581, 16
      %v1832 = vrot.slane %v1830, 1
      %v1833 = vor.u32 %v1828, %v1832
      %v1835 = vshll.u32 %v1645, 16
      %v1837 = vrot.slane %v1835, 1
      %v1838 = vsel %vm1646, %v1833, %v1837
      %v1871 = vunpack.c.l.b16 %v1486
      %v1872 = vunpack.c.l.b16 %v1487
      %v1873 = vunpack.c.l.b16 %v1488
      %v1874 = vunpack.c.l.b16 %v1489
      %v1875 = vunpack.c.l.b16 %v1490
      %v1876 = vunpack.c.l.b16 %v1491
      %v1877 = vunpack.c.l.b16 %v1492
      %v1878 = vunpack.c.l.b16 %v1493
      %v1879 = vunpack.c.l.b16 %v1494
      %v1880 = vunpack.c.l.b16 %v1495
      %v1881 = vunpack.c.l.b16 %v1496
      %v1882 = vunpack.c.l.b16 %v1497
      %v1883 = vunpack.c.l.b16 %v1498
      %v1884 = vunpack.c.l.b16 %v1499
      %v1885 = vunpack.c.l.b16 %v1500
      %v1886 = vunpack.c.l.b16 %v1501
      %v1887 = vpack.c.b16 %v1535, %v1871
      %v1888 = vpack.c.b16 %v1537, %v1872
      %v1889 = vpack.c.b16 %v1539, %v1873
      %v1890 = vpack.c.b16 %v1541, %v1874
      %v1891 = vpack.c.b16 %v1543, %v1875
      %v1892 = vpack.c.b16 %v1545, %v1876
      %v1893 = vpack.c.b16 %v1547, %v1877
      %v1894 = vpack.c.b16 %v1549, %v1878
      %v1895 = vpack.c.b16 %v1551, %v1879
      %v1896 = vpack.c.b16 %v1553, %v1880
      %v1897 = vpack.c.b16 %v1555, %v1881
      %v1898 = vpack.c.b16 %v1557, %v1882
      %v1899 = vpack.c.b16 %v1559, %v1883
      %v1900 = vpack.c.b16 %v1561, %v1884
      %v1901 = vpack.c.b16 %v1563, %v1885
      %v1902 = vpack.c.b16 %v1565, %v1886
      %vm1903 = vcmask 1046528
      %v1904 = vrot.slane %v1887, 1
      %v1905 = vrot.slane %v1630, 1
      %v1906 = vsel %vm1903, %v1904, %v1905
      %v1907 = vrot.slane %v1888, 1
      %v1908 = vrot.slane %v1631, 1
      %v1909 = vsel %vm1903, %v1907, %v1908
      %v1910 = vrot.slane %v1889, 1
      %v1911 = vrot.slane %v1632, 1
      %v1912 = vsel %vm1903, %v1910, %v1911
      %v1913 = vrot.slane %v1890, 1
      %v1914 = vrot.slane %v1633, 1
      %v1915 = vsel %vm1903, %v1913, %v1914
      %v1916 = vrot.slane %v1891, 1
      %v1917 = vrot.slane %v1634, 1
      %v1918 = vsel %vm1903, %v1916, %v1917
      %v1919 = vrot.slane %v1892, 1
      %v1920 = vrot.slane %v1635, 1
      %v1921 = vsel %vm1903, %v1919, %v1920
      %v1922 = vrot.slane %v1893, 1
      %v1923 = vrot.slane %v1636, 1
      %v1924 = vsel %vm1903, %v1922, %v1923
      %v1925 = vrot.slane %v1894, 1
      %v1926 = vrot.slane %v1637, 1
      %v1927 = vsel %vm1903, %v1925, %v1926
      %v1928 = vrot.slane %v1895, 1
      %v1929 = vrot.slane %v1638, 1
      %v1930 = vsel %vm1903, %v1928, %v1929
      %v1931 = vrot.slane %v1896, 1
      %v1932 = vrot.slane %v1639, 1
      %v1933 = vsel %vm1903, %v1931, %v1932
      %v1934 = vrot.slane %v1897, 1
      %v1935 = vrot.slane %v1640, 1
      %v1936 = vsel %vm1903, %v1934, %v1935
      %v1937 = vrot.slane %v1898, 1
      %v1938 = vrot.slane %v1641, 1
      %v1939 = vsel %vm1903, %v1937, %v1938
      %v1940 = vrot.slane %v1899, 1
      %v1941 = vrot.slane %v1642, 1
      %v1942 = vsel %vm1903, %v1940, %v1941
      %v1943 = vrot.slane %v1900, 1
      %v1944 = vrot.slane %v1643, 1
      %v1945 = vsel %vm1903, %v1943, %v1944
      %v1946 = vrot.slane %v1901, 1
      %v1947 = vrot.slane %v1644, 1
      %v1948 = vsel %vm1903, %v1946, %v1947
      %v1949 = vrot.slane %v1902, 1
      %v1950 = vrot.slane %v1645, 1
      %v1951 = vsel %vm1903, %v1949, %v1950
      %v1968 = vld [vmem:[%s1] sm:$0xf]
      %v1969 = vld [vmem:[%s1 + $0x4] sm:$0xf]
      %v1970 = vld [vmem:[%s1 + $0x8] sm:$0xf]
      %v1971 = vld [vmem:[%s1 + $0xc] sm:$0xf]
      %v1972 = vld [vmem:[%s1 + $0x10] sm:$0xf]
      %v1973 = vld [vmem:[%s1 + $0x14] sm:$0xf]
      %v1974 = vld [vmem:[%s1 + $0x18] sm:$0xf]
      %v1975 = vld [vmem:[%s1 + $0x1c] sm:$0xf]
      %v1976 = vld [vmem:[%s1 + $0x20] sm:$0xf]
      %v1977 = vld [vmem:[%s1 + $0x24] sm:$0xf]
      %v1978 = vld [vmem:[%s1 + $0x28] sm:$0xf]
      %v1979 = vld [vmem:[%s1 + $0x2c] sm:$0xf]
      %v1980 = vld [vmem:[%s1 + $0x30] sm:$0xf]
      %v1981 = vld [vmem:[%s1 + $0x34] sm:$0xf]
      %v1982 = vld [vmem:[%s1 + $0x38] sm:$0xf]
      %v1983 = vld [vmem:[%s1 + $0x3c] sm:$0xf]
      %v1984 = vld [vmem:[%s1 + $0x40] sm:$0xf]
      %v1985 = vld [vmem:[%s1 + $0x44] sm:$0xf]
      %v1986 = vld [vmem:[%s1 + $0x48] sm:$0xf]
      %v1987 = vld [vmem:[%s1 + $0x4c] sm:$0xf]
      %v1988 = vld [vmem:[%s1 + $0x50] sm:$0xf]
      %v1989 = vld [vmem:[%s1 + $0x54] sm:$0xf]
      %v1990 = vld [vmem:[%s1 + $0x58] sm:$0xf]
      %v1991 = vld [vmem:[%s1 + $0x5c] sm:$0xf]
      %v1992 = vld [vmem:[%s1 + $0x60] sm:$0xf]
      %v1993 = vld [vmem:[%s1 + $0x64] sm:$0xf]
      %v1994 = vld [vmem:[%s1 + $0x68] sm:$0xf]
      %v1995 = vld [vmem:[%s1 + $0x6c] sm:$0xf]
      %v1996 = vld [vmem:[%s1 + $0x70] sm:$0xf]
      %v1997 = vld [vmem:[%s1 + $0x74] sm:$0xf]
      %v1998 = vld [vmem:[%s1 + $0x78] sm:$0xf]
      %v1999 = vld [vmem:[%s1 + $0x7c] sm:$0xf]
      %v2000 = vld [vmem:[%s1 + $0x80] sm:$0xf]
      %v2001 = vld [vmem:[%s1 + $0x84] sm:$0xf]
      %v2002 = vld [vmem:[%s1 + $0x88] sm:$0xf]
      %v2003 = vld [vmem:[%s1 + $0x8c] sm:$0xf]
      %v2004 = vld [vmem:[%s1 + $0x90] sm:$0xf]
      %v2005 = vld [vmem:[%s1 + $0x94] sm:$0xf]
      %v2006 = vld [vmem:[%s1 + $0x98] sm:$0xf]
      %v2007 = vld [vmem:[%s1 + $0x9c] sm:$0xf]
      %v2008 = vld [vmem:[%s1 + $0xa0] sm:$0xf]
      %v2009 = vld [vmem:[%s1 + $0xa4] sm:$0xf]
      %v2010 = vld [vmem:[%s1 + $0xa8] sm:$0xf]
      %v2011 = vld [vmem:[%s1 + $0xac] sm:$0xf]
      %v2012 = vld [vmem:[%s1 + $0xb0] sm:$0xf]
      %v2013 = vld [vmem:[%s1 + $0xb4] sm:$0xf]
      %v2014 = vld [vmem:[%s1 + $0xb8] sm:$0xf]
      %v2015 = vld [vmem:[%s1 + $0xbc] sm:$0xf]
      %s2016 = scalar_lea.vmem [#allocation3], 12
      %v2017 = vld [vmem:[%s2016] sm:$0xf]
      %v2018 = vld [vmem:[%s2016 + $0x4] sm:$0xf]
      %v2019 = vld [vmem:[%s2016 + $0xc] sm:$0xf]
      %v2020 = vld [vmem:[%s2016 + $0x10] sm:$0xf]
      %v2021 = vld [vmem:[%s2016 + $0x18] sm:$0xf]
      %v2022 = vld [vmem:[%s2016 + $0x1c] sm:$0xf]
      %v2023 = vld [vmem:[%s2016 + $0x24] sm:$0xf]
      %v2024 = vld [vmem:[%s2016 + $0x28] sm:$0xf]
      %v2025 = vld [vmem:[%s2016 + $0x30] sm:$0xf]
      %v2026 = vld [vmem:[%s2016 + $0x34] sm:$0xf]
      %v2027 = vld [vmem:[%s2016 + $0x3c] sm:$0xf]
      %v2028 = vld [vmem:[%s2016 + $0x40] sm:$0xf]
      %v2029 = vld [vmem:[%s2016 + $0x48] sm:$0xf]
      %v2030 = vld [vmem:[%s2016 + $0x4c] sm:$0xf]
      %v2031 = vld [vmem:[%s2016 + $0x54] sm:$0xf]
      %v2032 = vld [vmem:[%s2016 + $0x58] sm:$0xf]
      %v2033 = vld [vmem:[%s2016 + $0x60] sm:$0xf]
      %v2034 = vld [vmem:[%s2016 + $0x64] sm:$0xf]
      %v2035 = vld [vmem:[%s2016 + $0x6c] sm:$0xf]
      %v2036 = vld [vmem:[%s2016 + $0x70] sm:$0xf]
      %v2037 = vld [vmem:[%s2016 + $0x78] sm:$0xf]
      %v2038 = vld [vmem:[%s2016 + $0x7c] sm:$0xf]
      %v2039 = vld [vmem:[%s2016 + $0x84] sm:$0xf]
      %v2040 = vld [vmem:[%s2016 + $0x88] sm:$0xf]
      %v2041 = vld [vmem:[%s2016 + $0x90] sm:$0xf]
      %v2042 = vld [vmem:[%s2016 + $0x94] sm:$0xf]
      %v2043 = vld [vmem:[%s2016 + $0x9c] sm:$0xf]
      %v2044 = vld [vmem:[%s2016 + $0xa0] sm:$0xf]
      %v2045 = vld [vmem:[%s2016 + $0xa8] sm:$0xf]
      %v2046 = vld [vmem:[%s2016 + $0xac] sm:$0xf]
      %v2047 = vld [vmem:[%s2016 + $0xb4] sm:$0xf]
      %v2048 = vld [vmem:[%s2016 + $0xb8] sm:$0xf]
      %v2049 = vld [vmem:[%s2016 + $0x8] sm:$0x1]
      %v2050 = vld [vmem:[%s2016 + $0x14] sm:$0x1]
      %v2051 = vld [vmem:[%s2016 + $0x20] sm:$0x1]
      %v2052 = vld [vmem:[%s2016 + $0x2c] sm:$0x1]
      %v2053 = vld [vmem:[%s2016 + $0x38] sm:$0x1]
      %v2054 = vld [vmem:[%s2016 + $0x44] sm:$0x1]
      %v2055 = vld [vmem:[%s2016 + $0x50] sm:$0x1]
      %v2056 = vld [vmem:[%s2016 + $0x5c] sm:$0x1]
      %v2057 = vld [vmem:[%s2016 + $0x68] sm:$0x1]
      %v2058 = vld [vmem:[%s2016 + $0x74] sm:$0x1]
      %v2059 = vld [vmem:[%s2016 + $0x80] sm:$0x1]
      %v2060 = vld [vmem:[%s2016 + $0x8c] sm:$0x1]
      %v2061 = vld [vmem:[%s2016 + $0x98] sm:$0x1]
      %v2062 = vld [vmem:[%s2016 + $0xa4] sm:$0x1]
      %v2063 = vld [vmem:[%s2016 + $0xb0] sm:$0x1]
      %v2064 = vld [vmem:[%s2016 + $0xbc] sm:$0x1]
      %v2065 = vld [vmem:[%s2016] sm:$0xe]
      %v2066 = vld [vmem:[%s2016 + $0xc] sm:$0xe]
      %v2067 = vld [vmem:[%s2016 + $0x18] sm:$0xe]
      %v2068 = vld [vmem:[%s2016 + $0x24] sm:$0xe]
      %v2069 = vld [vmem:[%s2016 + $0x30] sm:$0xe]
      %v2070 = vld [vmem:[%s2016 + $0x3c] sm:$0xe]
      %v2071 = vld [vmem:[%s2016 + $0x48] sm:$0xe]
      %v2072 = vld [vmem:[%s2016 + $0x54] sm:$0xe]
      %v2073 = vld [vmem:[%s2016 + $0x60] sm:$0xe]
      %v2074 = vld [vmem:[%s2016 + $0x6c] sm:$0xe]
      %v2075 = vld [vmem:[%s2016 + $0x78] sm:$0xe]
      %v2076 = vld [vmem:[%s2016 + $0x84] sm:$0xe]
      %v2077 = vld [vmem:[%s2016 + $0x90] sm:$0xe]
      %v2078 = vld [vmem:[%s2016 + $0x9c] sm:$0xe]
      %v2079 = vld [vmem:[%s2016 + $0xa8] sm:$0xe]
      %v2080 = vld [vmem:[%s2016 + $0xb4] sm:$0xe]
      %v2113 = vunpack.c.l.b16 %v2017
      %v2114 = vunpack.c.l.b16 %v2018
      %v2115 = vunpack.c.l.b16 %v2019
      %v2116 = vunpack.c.l.b16 %v2020
      %v2117 = vunpack.c.l.b16 %v2021
      %v2118 = vunpack.c.l.b16 %v2022
      %v2119 = vunpack.c.l.b16 %v2023
      %v2120 = vunpack.c.l.b16 %v2024
      %v2121 = vunpack.c.l.b16 %v2025
      %v2122 = vunpack.c.l.b16 %v2026
      %v2123 = vunpack.c.l.b16 %v2027
      %v2124 = vunpack.c.l.b16 %v2028
      %v2125 = vunpack.c.l.b16 %v2029
      %v2126 = vunpack.c.l.b16 %v2030
      %v2127 = vunpack.c.l.b16 %v2031
      %v2128 = vunpack.c.l.b16 %v2032
      %v2129 = vunpack.c.l.b16 %v2033
      %v2130 = vunpack.c.l.b16 %v2034
      %v2131 = vunpack.c.l.b16 %v2035
      %v2132 = vunpack.c.l.b16 %v2036
      %v2133 = vunpack.c.l.b16 %v2037
      %v2134 = vunpack.c.l.b16 %v2038
      %v2135 = vunpack.c.l.b16 %v2039
      %v2136 = vunpack.c.l.b16 %v2040
      %v2137 = vunpack.c.l.b16 %v2041
      %v2138 = vunpack.c.l.b16 %v2042
      %v2139 = vunpack.c.l.b16 %v2043
      %v2140 = vunpack.c.l.b16 %v2044
      %v2141 = vunpack.c.l.b16 %v2045
      %v2142 = vunpack.c.l.b16 %v2046
      %v2143 = vunpack.c.l.b16 %v2047
      %v2144 = vunpack.c.l.b16 %v2048
      %v2145 = vpack.c.b16 %v2114, %v2113
      %v2146 = vpack.c.b16 %v2116, %v2115
      %v2147 = vpack.c.b16 %v2118, %v2117
      %v2148 = vpack.c.b16 %v2120, %v2119
      %v2149 = vpack.c.b16 %v2122, %v2121
      %v2150 = vpack.c.b16 %v2124, %v2123
      %v2151 = vpack.c.b16 %v2126, %v2125
      %v2152 = vpack.c.b16 %v2128, %v2127
      %v2153 = vpack.c.b16 %v2130, %v2129
      %v2154 = vpack.c.b16 %v2132, %v2131
      %v2155 = vpack.c.b16 %v2134, %v2133
      %v2156 = vpack.c.b16 %v2136, %v2135
      %v2157 = vpack.c.b16 %v2138, %v2137
      %v2158 = vpack.c.b16 %v2140, %v2139
      %v2159 = vpack.c.b16 %v2142, %v2141
      %v2160 = vpack.c.b16 %v2144, %v2143
      %v2193 = vunpack.c.l.b16 %v2049
      %v2194 = vunpack.c.l.b16 %v2050
      %v2195 = vunpack.c.l.b16 %v2051
      %v2196 = vunpack.c.l.b16 %v2052
      %v2197 = vunpack.c.l.b16 %v2053
      %v2198 = vunpack.c.l.b16 %v2054
      %v2199 = vunpack.c.l.b16 %v2055
      %v2200 = vunpack.c.l.b16 %v2056
      %v2201 = vunpack.c.l.b16 %v2057
      %v2202 = vunpack.c.l.b16 %v2058
      %v2203 = vunpack.c.l.b16 %v2059
      %v2204 = vunpack.c.l.b16 %v2060
      %v2205 = vunpack.c.l.b16 %v2061
      %v2206 = vunpack.c.l.b16 %v2062
      %v2207 = vunpack.c.l.b16 %v2063
      %v2208 = vunpack.c.l.b16 %v2064
      %v2209 = vpack.c.b16 %v2193, %v2193
      %v2210 = vpack.c.b16 %v2194, %v2194
      %v2211 = vpack.c.b16 %v2195, %v2195
      %v2212 = vpack.c.b16 %v2196, %v2196
      %v2213 = vpack.c.b16 %v2197, %v2197
      %v2214 = vpack.c.b16 %v2198, %v2198
      %v2215 = vpack.c.b16 %v2199, %v2199
      %v2216 = vpack.c.b16 %v2200, %v2200
      %v2217 = vpack.c.b16 %v2201, %v2201
      %v2218 = vpack.c.b16 %v2202, %v2202
      %v2219 = vpack.c.b16 %v2203, %v2203
      %v2220 = vpack.c.b16 %v2204, %v2204
      %v2221 = vpack.c.b16 %v2205, %v2205
      %v2222 = vpack.c.b16 %v2206, %v2206
      %v2223 = vpack.c.b16 %v2207, %v2207
      %v2224 = vpack.c.b16 %v2208, %v2208
      %v2226 = vshrl.u32 %v2145, 16
      %v2228 = vshll.u32 %v2145, 16
      %v2230 = vrot.slane %v2228, 1
      %v2231 = vor.u32 %v2226, %v2230
      %v2233 = vshll.u32 %v2209, 16
      %v2235 = vrot.slane %v2233, 1
      %v2236 = vsel %vm1646, %v2231, %v2235
      %v2238 = vshrl.u32 %v2146, 16
      %v2240 = vshll.u32 %v2146, 16
      %v2242 = vrot.slane %v2240, 1
      %v2243 = vor.u32 %v2238, %v2242
      %v2245 = vshll.u32 %v2210, 16
      %v2247 = vrot.slane %v2245, 1
      %v2248 = vsel %vm1646, %v2243, %v2247
      %v2250 = vshrl.u32 %v2147, 16
      %v2252 = vshll.u32 %v2147, 16
      %v2254 = vrot.slane %v2252, 1
      %v2255 = vor.u32 %v2250, %v2254
      %v2257 = vshll.u32 %v2211, 16
      %v2259 = vrot.slane %v2257, 1
      %v2260 = vsel %vm1646, %v2255, %v2259
      %v2262 = vshrl.u32 %v2148, 16
      %v2264 = vshll.u32 %v2148, 16
      %v2266 = vrot.slane %v2264, 1
      %v2267 = vor.u32 %v2262, %v2266
      %v2269 = vshll.u32 %v2212, 16
      %v2271 = vrot.slane %v2269, 1
      %v2272 = vsel %vm1646, %v2267, %v2271
      %v2274 = vshrl.u32 %v2149, 16
      %v2276 = vshll.u32 %v2149, 16
      %v2278 = vrot.slane %v2276, 1
      %v2279 = vor.u32 %v2274, %v2278
      %v2281 = vshll.u32 %v2213, 16
      %v2283 = vrot.slane %v2281, 1
      %v2284 = vsel %vm1646, %v2279, %v2283
      %v2286 = vshrl.u32 %v2150, 16
      %v2288 = vshll.u32 %v2150, 16
      %v2290 = vrot.slane %v2288, 1
      %v2291 = vor.u32 %v2286, %v2290
      %v2293 = vshll.u32 %v2214, 16
      %v2295 = vrot.slane %v2293, 1
      %v2296 = vsel %vm1646, %v2291, %v2295
      %v2298 = vshrl.u32 %v2151, 16
      %v2300 = vshll.u32 %v2151, 16
      %v2302 = vrot.slane %v2300, 1
      %v2303 = vor.u32 %v2298, %v2302
      %v2305 = vshll.u32 %v2215, 16
      %v2307 = vrot.slane %v2305, 1
      %v2308 = vsel %vm1646, %v2303, %v2307
      %v2310 = vshrl.u32 %v2152, 16
      %v2312 = vshll.u32 %v2152, 16
      %v2314 = vrot.slane %v2312, 1
      %v2315 = vor.u32 %v2310, %v2314
      %v2317 = vshll.u32 %v2216, 16
      %v2319 = vrot.slane %v2317, 1
      %v2320 = vsel %vm1646, %v2315, %v2319
      %v2322 = vshrl.u32 %v2153, 16
      %v2324 = vshll.u32 %v2153, 16
      %v2326 = vrot.slane %v2324, 1
      %v2327 = vor.u32 %v2322, %v2326
      %v2329 = vshll.u32 %v2217, 16
      %v2331 = vrot.slane %v2329, 1
      %v2332 = vsel %vm1646, %v2327, %v2331
      %v2334 = vshrl.u32 %v2154, 16
      %v2336 = vshll.u32 %v2154, 16
      %v2338 = vrot.slane %v2336, 1
      %v2339 = vor.u32 %v2334, %v2338
      %v2341 = vshll.u32 %v2218, 16
      %v2343 = vrot.slane %v2341, 1
      %v2344 = vsel %vm1646, %v2339, %v2343
      %v2346 = vshrl.u32 %v2155, 16
      %v2348 = vshll.u32 %v2155, 16
      %v2350 = vrot.slane %v2348, 1
      %v2351 = vor.u32 %v2346, %v2350
      %v2353 = vshll.u32 %v2219, 16
      %v2355 = vrot.slane %v2353, 1
      %v2356 = vsel %vm1646, %v2351, %v2355
      %v2358 = vshrl.u32 %v2156, 16
      %v2360 = vshll.u32 %v2156, 16
      %v2362 = vrot.slane %v2360, 1
      %v2363 = vor.u32 %v2358, %v2362
      %v2365 = vshll.u32 %v2220, 16
      %v2367 = vrot.slane %v2365, 1
      %v2368 = vsel %vm1646, %v2363, %v2367
      %v2370 = vshrl.u32 %v2157, 16
      %v2372 = vshll.u32 %v2157, 16
      %v2374 = vrot.slane %v2372, 1
      %v2375 = vor.u32 %v2370, %v2374
      %v2377 = vshll.u32 %v2221, 16
      %v2379 = vrot.slane %v2377, 1
      %v2380 = vsel %vm1646, %v2375, %v2379
      %v2382 = vshrl.u32 %v2158, 16
      %v2384 = vshll.u32 %v2158, 16
      %v2386 = vrot.slane %v2384, 1
      %v2387 = vor.u32 %v2382, %v2386
      %v2389 = vshll.u32 %v2222, 16
      %v2391 = vrot.slane %v2389, 1
      %v2392 = vsel %vm1646, %v2387, %v2391
      %v2394 = vshrl.u32 %v2159, 16
      %v2396 = vshll.u32 %v2159, 16
      %v2398 = vrot.slane %v2396, 1
      %v2399 = vor.u32 %v2394, %v2398
      %v2401 = vshll.u32 %v2223, 16
      %v2403 = vrot.slane %v2401, 1
      %v2404 = vsel %vm1646, %v2399, %v2403
      %v2406 = vshrl.u32 %v2160, 16
      %v2408 = vshll.u32 %v2160, 16
      %v2410 = vrot.slane %v2408, 1
      %v2411 = vor.u32 %v2406, %v2410
      %v2413 = vshll.u32 %v2224, 16
      %v2415 = vrot.slane %v2413, 1
      %v2416 = vsel %vm1646, %v2411, %v2415
      %v2449 = vunpack.c.l.b16 %v2065
      %v2450 = vunpack.c.l.b16 %v2066
      %v2451 = vunpack.c.l.b16 %v2067
      %v2452 = vunpack.c.l.b16 %v2068
      %v2453 = vunpack.c.l.b16 %v2069
      %v2454 = vunpack.c.l.b16 %v2070
      %v2455 = vunpack.c.l.b16 %v2071
      %v2456 = vunpack.c.l.b16 %v2072
      %v2457 = vunpack.c.l.b16 %v2073
      %v2458 = vunpack.c.l.b16 %v2074
      %v2459 = vunpack.c.l.b16 %v2075
      %v2460 = vunpack.c.l.b16 %v2076
      %v2461 = vunpack.c.l.b16 %v2077
      %v2462 = vunpack.c.l.b16 %v2078
      %v2463 = vunpack.c.l.b16 %v2079
      %v2464 = vunpack.c.l.b16 %v2080
      %v2465 = vpack.c.b16 %v2114, %v2449
      %v2466 = vpack.c.b16 %v2116, %v2450
      %v2467 = vpack.c.b16 %v2118, %v2451
      %v2468 = vpack.c.b16 %v2120, %v2452
      %v2469 = vpack.c.b16 %v2122, %v2453
      %v2470 = vpack.c.b16 %v2124, %v2454
      %v2471 = vpack.c.b16 %v2126, %v2455
      %v2472 = vpack.c.b16 %v2128, %v2456
      %v2473 = vpack.c.b16 %v2130, %v2457
      %v2474 = vpack.c.b16 %v2132, %v2458
      %v2475 = vpack.c.b16 %v2134, %v2459
      %v2476 = vpack.c.b16 %v2136, %v2460
      %v2477 = vpack.c.b16 %v2138, %v2461
      %v2478 = vpack.c.b16 %v2140, %v2462
      %v2479 = vpack.c.b16 %v2142, %v2463
      %v2480 = vpack.c.b16 %v2144, %v2464
      %v2481 = vrot.slane %v2465, 1
      %v2482 = vrot.slane %v2209, 1
      %v2483 = vsel %vm1903, %v2481, %v2482
      %v2484 = vrot.slane %v2466, 1
      %v2485 = vrot.slane %v2210, 1
      %v2486 = vsel %vm1903, %v2484, %v2485
      %v2487 = vrot.slane %v2467, 1
      %v2488 = vrot.slane %v2211, 1
      %v2489 = vsel %vm1903, %v2487, %v2488
      %v2490 = vrot.slane %v2468, 1
      %v2491 = vrot.slane %v2212, 1
      %v2492 = vsel %vm1903, %v2490, %v2491
      %v2493 = vrot.slane %v2469, 1
      %v2494 = vrot.slane %v2213, 1
      %v2495 = vsel %vm1903, %v2493, %v2494
      %v2496 = vrot.slane %v2470, 1
      %v2497 = vrot.slane %v2214, 1
      %v2498 = vsel %vm1903, %v2496, %v2497
      %v2499 = vrot.slane %v2471, 1
      %v2500 = vrot.slane %v2215, 1
      %v2501 = vsel %vm1903, %v2499, %v2500
      %v2502 = vrot.slane %v2472, 1
      %v2503 = vrot.slane %v2216, 1
      %v2504 = vsel %vm1903, %v2502, %v2503
      %v2505 = vrot.slane %v2473, 1
      %v2506 = vrot.slane %v2217, 1
      %v2507 = vsel %vm1903, %v2505, %v2506
      %v2508 = vrot.slane %v2474, 1
      %v2509 = vrot.slane %v2218, 1
      %v2510 = vsel %vm1903, %v2508, %v2509
      %v2511 = vrot.slane %v2475, 1
      %v2512 = vrot.slane %v2219, 1
      %v2513 = vsel %vm1903, %v2511, %v2512
      %v2514 = vrot.slane %v2476, 1
      %v2515 = vrot.slane %v2220, 1
      %v2516 = vsel %vm1903, %v2514, %v2515
      %v2517 = vrot.slane %v2477, 1
      %v2518 = vrot.slane %v2221, 1
      %v2519 = vsel %vm1903, %v2517, %v2518
      %v2520 = vrot.slane %v2478, 1
      %v2521 = vrot.slane %v2222, 1
      %v2522 = vsel %vm1903, %v2520, %v2521
      %v2523 = vrot.slane %v2479, 1
      %v2524 = vrot.slane %v2223, 1
      %v2525 = vsel %vm1903, %v2523, %v2524
      %v2526 = vrot.slane %v2480, 1
      %v2527 = vrot.slane %v2224, 1
      %v2528 = vsel %vm1903, %v2526, %v2527
      %s2545 = scalar_lea.vmem %s1, 192
      %v2546 = vld [vmem:[%s2545] sm:$0xf]
      %v2547 = vld [vmem:[%s2545 + $0x4] sm:$0xf]
      %v2548 = vld [vmem:[%s2545 + $0x8] sm:$0xf]
      %v2549 = vld [vmem:[%s2545 + $0xc] sm:$0xf]
      %v2550 = vld [vmem:[%s2545 + $0x10] sm:$0xf]
      %v2551 = vld [vmem:[%s2545 + $0x14] sm:$0xf]
      %v2552 = vld [vmem:[%s2545 + $0x18] sm:$0xf]
      %v2553 = vld [vmem:[%s2545 + $0x1c] sm:$0xf]
      %v2554 = vld [vmem:[%s2545 + $0x20] sm:$0xf]
      %v2555 = vld [vmem:[%s2545 + $0x24] sm:$0xf]
      %v2556 = vld [vmem:[%s2545 + $0x28] sm:$0xf]
      %v2557 = vld [vmem:[%s2545 + $0x2c] sm:$0xf]
      %v2558 = vld [vmem:[%s2545 + $0x30] sm:$0xf]
      %v2559 = vld [vmem:[%s2545 + $0x34] sm:$0xf]
      %v2560 = vld [vmem:[%s2545 + $0x38] sm:$0xf]
      %v2561 = vld [vmem:[%s2545 + $0x3c] sm:$0xf]
      %v2562 = vld [vmem:[%s2545 + $0x40] sm:$0xf]
      %v2563 = vld [vmem:[%s2545 + $0x44] sm:$0xf]
      %v2564 = vld [vmem:[%s2545 + $0x48] sm:$0xf]
      %v2565 = vld [vmem:[%s2545 + $0x4c] sm:$0xf]
      %v2566 = vld [vmem:[%s2545 + $0x50] sm:$0xf]
      %v2567 = vld [vmem:[%s2545 + $0x54] sm:$0xf]
      %v2568 = vld [vmem:[%s2545 + $0x58] sm:$0xf]
      %v2569 = vld [vmem:[%s2545 + $0x5c] sm:$0xf]
      %v2570 = vld [vmem:[%s2545 + $0x60] sm:$0xf]
      %v2571 = vld [vmem:[%s2545 + $0x64] sm:$0xf]
      %v2572 = vld [vmem:[%s2545 + $0x68] sm:$0xf]
      %v2573 = vld [vmem:[%s2545 + $0x6c] sm:$0xf]
      %v2574 = vld [vmem:[%s2545 + $0x70] sm:$0xf]
      %v2575 = vld [vmem:[%s2545 + $0x74] sm:$0xf]
      %v2576 = vld [vmem:[%s2545 + $0x78] sm:$0xf]
      %v2577 = vld [vmem:[%s2545 + $0x7c] sm:$0xf]
      %v2578 = vld [vmem:[%s2545 + $0x80] sm:$0xf]
      %v2579 = vld [vmem:[%s2545 + $0x84] sm:$0xf]
      %v2580 = vld [vmem:[%s2545 + $0x88] sm:$0xf]
      %v2581 = vld [vmem:[%s2545 + $0x8c] sm:$0xf]
      %v2582 = vld [vmem:[%s2545 + $0x90] sm:$0xf]
      %v2583 = vld [vmem:[%s2545 + $0x94] sm:$0xf]
      %v2584 = vld [vmem:[%s2545 + $0x98] sm:$0xf]
      %v2585 = vld [vmem:[%s2545 + $0x9c] sm:$0xf]
      %v2586 = vld [vmem:[%s2545 + $0xa0] sm:$0xf]
      %v2587 = vld [vmem:[%s2545 + $0xa4] sm:$0xf]
      %v2588 = vld [vmem:[%s2545 + $0xa8] sm:$0xf]
      %v2589 = vld [vmem:[%s2545 + $0xac] sm:$0xf]
      %v2590 = vld [vmem:[%s2545 + $0xb0] sm:$0xf]
      %v2591 = vld [vmem:[%s2545 + $0xb4] sm:$0xf]
      %v2592 = vld [vmem:[%s2545 + $0xb8] sm:$0xf]
      %v2593 = vld [vmem:[%s2545 + $0xbc] sm:$0xf]
      %v2642 = vunpack.c.l.b16 %v2546
      %v2643 = vunpack.c.l.b16 %v2547
      %v2644 = vunpack.c.l.b16 %v2548
      %v2645 = vunpack.c.l.b16 %v2549
      %v2646 = vunpack.c.l.b16 %v2550
      %v2647 = vunpack.c.l.b16 %v2551
      %v2648 = vunpack.c.l.b16 %v2552
      %v2649 = vunpack.c.l.b16 %v2553
      %v2650 = vunpack.c.l.b16 %v2554
      %v2651 = vunpack.c.l.b16 %v2555
      %v2652 = vunpack.c.l.b16 %v2556
      %v2653 = vunpack.c.l.b16 %v2557
      %v2654 = vunpack.c.l.b16 %v2558
      %v2655 = vunpack.c.l.b16 %v2559
      %v2656 = vunpack.c.l.b16 %v2560
      %v2657 = vunpack.c.l.b16 %v2561
      %v2658 = vunpack.c.l.b16 %v2562
      %v2659 = vunpack.c.l.b16 %v2563
      %v2660 = vunpack.c.l.b16 %v2564
      %v2661 = vunpack.c.l.b16 %v2565
      %v2662 = vunpack.c.l.b16 %v2566
      %v2663 = vunpack.c.l.b16 %v2567
      %v2664 = vunpack.c.l.b16 %v2568
      %v2665 = vunpack.c.l.b16 %v2569
      %v2666 = vunpack.c.l.b16 %v2570
      %v2667 = vunpack.c.l.b16 %v2571
      %v2668 = vunpack.c.l.b16 %v2572
      %v2669 = vunpack.c.l.b16 %v2573
      %v2670 = vunpack.c.l.b16 %v2574
      %v2671 = vunpack.c.l.b16 %v2575
      %v2672 = vunpack.c.l.b16 %v2576
      %v2673 = vunpack.c.l.b16 %v2577
      %v2674 = vunpack.c.l.b16 %v2578
      %v2675 = vunpack.c.l.b16 %v2579
      %v2676 = vunpack.c.l.b16 %v2580
      %v2677 = vunpack.c.l.b16 %v2581
      %v2678 = vunpack.c.l.b16 %v2582
      %v2679 = vunpack.c.l.b16 %v2583
      %v2680 = vunpack.c.l.b16 %v2584
      %v2681 = vunpack.c.l.b16 %v2585
      %v2682 = vunpack.c.l.b16 %v2586
      %v2683 = vunpack.c.l.b16 %v2587
      %v2684 = vunpack.c.l.b16 %v2588
      %v2685 = vunpack.c.l.b16 %v2589
      %v2686 = vunpack.c.l.b16 %v2590
      %v2687 = vunpack.c.l.b16 %v2591
      %v2688 = vunpack.c.l.b16 %v2592
      %v2689 = vunpack.c.l.b16 %v2593
      %v2690 = vpack.c.b16 %v2643, %v2642
      %v2691 = vpack.c.b16 %v2645, %v2644
      %v2692 = vpack.c.b16 %v2647, %v2646
      %v2693 = vpack.c.b16 %v2649, %v2648
      %v2694 = vpack.c.b16 %v2651, %v2650
      %v2695 = vpack.c.b16 %v2653, %v2652
      %v2696 = vpack.c.b16 %v2655, %v2654
      %v2697 = vpack.c.b16 %v2657, %v2656
      %v2698 = vpack.c.b16 %v2659, %v2658
      %v2699 = vpack.c.b16 %v2661, %v2660
      %v2700 = vpack.c.b16 %v2663, %v2662
      %v2701 = vpack.c.b16 %v2665, %v2664
      %v2702 = vpack.c.b16 %v2667, %v2666
      %v2703 = vpack.c.b16 %v2669, %v2668
      %v2704 = vpack.c.b16 %v2671, %v2670
      %v2705 = vpack.c.b16 %v2673, %v2672
      %v2706 = vpack.c.b16 %v2675, %v2674
      %v2707 = vpack.c.b16 %v2677, %v2676
      %v2708 = vpack.c.b16 %v2679, %v2678
      %v2709 = vpack.c.b16 %v2681, %v2680
      %v2710 = vpack.c.b16 %v2683, %v2682
      %v2711 = vpack.c.b16 %v2685, %v2684
      %v2712 = vpack.c.b16 %v2687, %v2686
      %v2713 = vpack.c.b16 %v2689, %v2688
      %2738 = vmatprep.subr.bf16.mxu0 0
      %2739 = vmatpush1.bf16.msra.mxu0 %v2690
      %2740 = vmatprep.subr.bf16.mxu0 0
      %2741 = vmatpush1.bf16.msra.mxu0 %v2691
      %2742 = vmatprep.subr.bf16.mxu0 0
      %2743 = vmatpush1.bf16.msra.mxu0 %v2692
      %2744 = vmatprep.subr.bf16.mxu0 0
      %2745 = vmatpush1.bf16.msra.mxu0 %v2693
      %2746 = vmatprep.subr.bf16.mxu0 0
      %2747 = vmatpush1.bf16.msra.mxu0 %v2694
      %2748 = vmatprep.subr.bf16.mxu0 0
      %2749 = vmatpush1.bf16.msra.mxu0 %v2695
      %2750 = vmatprep.subr.bf16.mxu0 0
      %2751 = vmatpush1.bf16.msra.mxu0 %v2696
      %2752 = vmatprep.subr.bf16.mxu0 0
      %2753 = vmatpush1.bf16.msra.mxu0 %v2697
      %2754 = vmatprep.subr.bf16.mxu0 0
      %2755 = vmatpush1.bf16.msra.mxu0 %v2698
      %2756 = vmatprep.subr.bf16.mxu0 0
      %2757 = vmatpush1.bf16.msra.mxu0 %v2699
      %2758 = vmatprep.subr.bf16.mxu0 0
      %2759 = vmatpush1.bf16.msra.mxu0 %v2700
      %2760 = vmatprep.subr.bf16.mxu0 0
      %2761 = vmatpush1.bf16.msra.mxu0 %v2701
      %2762 = vmatprep.subr.bf16.mxu0 0
      %2763 = vmatpush1.bf16.msra.mxu0 %v2702
      %2764 = vmatprep.subr.bf16.mxu0 0
      %2765 = vmatpush1.bf16.msra.mxu0 %v2703
      %2766 = vmatprep.subr.bf16.mxu0 0
      %2767 = vmatpush1.bf16.msra.mxu0 %v2704
      %2768 = vmatprep.subr.bf16.mxu0 0
      %2769 = vmatpush1.bf16.msra.mxu0 %v2705
      %2770 = vmatprep.mubr.bf16.mxu0 %v2236
      %2771 = vmatmul.mubr.bf16.gmra.mrb[0].mxu0 %v2145
      %v2772 = vpop.f32.mrb[0].mxu0
      %v2773 = vadd.f32 0.0, %v2772
      %v2774 = vpop.f32.mrb[0].mxu0
      %v2775 = vpop.f32.mrb[0].mxu0
      %v2776 = vadd.f32 0.0, %v2775
      %v2777 = vpop.f32.mrb[0].mxu0
      %2778 = vmatprep.mubr.bf16.mxu0 %v2248
      %2779 = vmatmul.mubr.bf16.gmra.mrb[0].mxu0 %v2146
      %v2780 = vpop.f32.mrb[0].mxu0
      %v2781 = vadd.f32 0.0, %v2780
      %v2782 = vpop.f32.mrb[0].mxu0
      %v2783 = vpop.f32.mrb[0].mxu0
      %v2784 = vadd.f32 0.0, %v2783
      %v2785 = vpop.f32.mrb[0].mxu0
      %2786 = vmatprep.mubr.bf16.mxu0 %v2260
      %2787 = vmatmul.mubr.bf16.gmra.mrb[0].mxu0 %v2147
      %v2788 = vpop.f32.mrb[0].mxu0
      %v2789 = vadd.f32 0.0, %v2788
      %v2790 = vpop.f32.mrb[0].mxu0
      %v2791 = vpop.f32.mrb[0].mxu0
      %v2792 = vadd.f32 0.0, %v2791
      %v2793 = vpop.f32.mrb[0].mxu0
      %2794 = vmatprep.mubr.bf16.mxu0 %v2272
      %2795 = vmatmul.mubr.bf16.gmra.mrb[0].mxu0 %v2148
      %v2796 = vpop.f32.mrb[0].mxu0
      %v2797 = vadd.f32 0.0, %v2796
      %v2798 = vpop.f32.mrb[0].mxu0
      %v2799 = vpop.f32.mrb[0].mxu0
      %v2800 = vadd.f32 0.0, %v2799
      %v2801 = vpop.f32.mrb[0].mxu0
      %2802 = vmatprep.mubr.bf16.mxu0 %v2284
      %2803 = vmatmul.mubr.bf16.gmra.mrb[0].mxu0 %v2149
      %v2804 = vpop.f32.mrb[0].mxu0
      %v2805 = vadd.f32 0.0, %v2804
      %v2806 = vpop.f32.mrb[0].mxu0
      %v2807 = vpop.f32.mrb[0].mxu0
      %v2808 = vadd.f32 0.0, %v2807
      %v2809 = vpop.f32.mrb[0].mxu0
      %2810 = vmatprep.mubr.bf16.mxu0 %v2296
      %2811 = vmatmul.mubr.bf16.gmra.mrb[0].mxu0 %v2150
      %v2812 = vpop.f32.mrb[0].mxu0
      %v2813 = vadd.f32 0.0, %v2812
      %v2814 = vpop.f32.mrb[0].mxu0
      %v2815 = vpop.f32.mrb[0].mxu0
      %v2816 = vadd.f32 0.0, %v2815
      %v2817 = vpop.f32.mrb[0].mxu0
      %2818 = vmatprep.mubr.bf16.mxu0 %v2308
      %2819 = vmatmul.mubr.bf16.gmra.mrb[0].mxu0 %v2151
      %v2820 = vpop.f32.mrb[0].mxu0
      %v2821 = vadd.f32 0.0, %v2820
      %v2822 = vpop.f32.mrb[0].mxu0
      %v2823 = vpop.f32.mrb[0].mxu0
      %v2824 = vadd.f32 0.0, %v2823
      %v2825 = vpop.f32.mrb[0].mxu0
      %2826 = vmatprep.mubr.bf16.mxu0 %v2320
      %2827 = vmatmul.mubr.bf16.gmra.mrb[0].mxu0 %v2152
      %v2828 = vpop.f32.mrb[0].mxu0
      %v2829 = vadd.f32 0.0, %v2828
      %v2830 = vpop.f32.mrb[0].mxu0
      %v2831 = vpop.f32.mrb[0].mxu0
      %v2832 = vadd.f32 0.0, %v2831
      %v2833 = vpop.f32.mrb[0].mxu0
      %2834 = vmatprep.mubr.bf16.mxu0 %v2332
      %2835 = vmatmul.mubr.bf16.gmra.mrb[0].mxu0 %v2153
      %v2836 = vpop.f32.mrb[0].mxu0
      %v2837 = vadd.f32 0.0, %v2836
      %v2838 = vpop.f32.mrb[0].mxu0
      %v2839 = vpop.f32.mrb[0].mxu0
      %v2840 = vadd.f32 0.0, %v2839
      %v2841 = vpop.f32.mrb[0].mxu0
      %2842 = vmatprep.mubr.bf16.mxu0 %v2344
      %2843 = vmatmul.mubr.bf16.gmra.mrb[0].mxu0 %v2154
      %v2844 = vpop.f32.mrb[0].mxu0
      %v2845 = vadd.f32 0.0, %v2844
      %v2846 = vpop.f32.mrb[0].mxu0
      %v2847 = vpop.f32.mrb[0].mxu0
      %v2848 = vadd.f32 0.0, %v2847
      %v2849 = vpop.f32.mrb[0].mxu0
      %2850 = vmatprep.mubr.bf16.mxu0 %v2356
      %2851 = vmatmul.mubr.bf16.gmra.mrb[0].mxu0 %v2155
      %v2852 = vpop.f32.mrb[0].mxu0
      %v2853 = vadd.f32 0.0, %v2852
      %v2854 = vpop.f32.mrb[0].mxu0
      %v2855 = vpop.f32.mrb[0].mxu0
      %v2856 = vadd.f32 0.0, %v2855
      %v2857 = vpop.f32.mrb[0].mxu0
      %2858 = vmatprep.mubr.bf16.mxu0 %v2368
      %2859 = vmatmul.mubr.bf16.gmra.mrb[0].mxu0 %v2156
      %v2860 = vpop.f32.mrb[0].mxu0
      %v2861 = vadd.f32 0.0, %v2860
      %v2862 = vpop.f32.mrb[0].mxu0
      %v2863 = vpop.f32.mrb[0].mxu0
      %v2864 = vadd.f32 0.0, %v2863
      %v2865 = vpop.f32.mrb[0].mxu0
      %2866 = vmatprep.mubr.bf16.mxu0 %v2380
      %2867 = vmatmul.mubr.bf16.gmra.mrb[0].mxu0 %v2157
      %v2868 = vpop.f32.mrb[0].mxu0
      %v2869 = vadd.f32 0.0, %v2868
      %v2870 = vpop.f32.mrb[0].mxu0
      %v2871 = vpop.f32.mrb[0].mxu0
      %v2872 = vadd.f32 0.0, %v2871
      %v2873 = vpop.f32.mrb[0].mxu0
      %2874 = vmatprep.mubr.bf16.mxu0 %v2392
      %2875 = vmatmul.mubr.bf16.gmra.mrb[0].mxu0 %v2158
      %v2876 = vpop.f32.mrb[0].mxu0
      %v2877 = vadd.f32 0.0, %v2876
      %v2878 = vpop.f32.mrb[0].mxu0
      %v2879 = vpop.f32.mrb[0].mxu0
      %v2880 = vadd.f32 0.0, %v2879
      %v2881 = vpop.f32.mrb[0].mxu0
      %2882 = vmatprep.mubr.bf16.mxu0 %v2404
      %2883 = vmatmul.mubr.bf16.gmra.mrb[0].mxu0 %v2159
      %v2884 = vpop.f32.mrb[0].mxu0
      %v2885 = vadd.f32 0.0, %v2884
      %v2886 = vpop.f32.mrb[0].mxu0
      %v2887 = vpop.f32.mrb[0].mxu0
      %v2888 = vadd.f32 0.0, %v2887
      %v2889 = vpop.f32.mrb[0].mxu0
      %2890 = vmatprep.mubr.bf16.mxu0 %v2416
      %2891 = vmatmul.mubr.bf16.gmra.mrb[0].mxu0 %v2160
      %v2892 = vpop.f32.mrb[0].mxu0
      %v2893 = vadd.f32 0.0, %v2892
      %v2894 = vpop.f32.mrb[0].mxu0
      %v2895 = vpop.f32.mrb[0].mxu0
      %v2896 = vadd.f32 0.0, %v2895
      %v2897 = vpop.f32.mrb[0].mxu0
      %2898 = vdwg.mxu0
      %2899 = vmatprep.subr.bf16.mxu0 0
      %2900 = vmatpush1.bf16.msra.mxu0 %v2706
      %2901 = vmatprep.subr.bf16.mxu0 0
      %2902 = vmatpush1.bf16.msra.mxu0 %v2707
      %2903 = vmatprep.subr.bf16.mxu0 0
      %2904 = vmatpush1.bf16.msra.mxu0 %v2708
      %2905 = vmatprep.subr.bf16.mxu0 0
      %2906 = vmatpush1.bf16.msra.mxu0 %v2709
      %2907 = vmatprep.subr.bf16.mxu0 0
      %2908 = vmatpush1.bf16.msra.mxu0 %v2710
      %2909 = vmatprep.subr.bf16.mxu0 0
      %2910 = vmatpush1.bf16.msra.mxu0 %v2711
      %2911 = vmatprep.subr.bf16.mxu0 0
      %2912 = vmatpush1.bf16.msra.mxu0 %v2712
      %2913 = vmatprep.subr.bf16.mxu0 0
      %2914 = vmatpush1.bf16.msra.mxu0 %v2713
      %2915 = vmatprep.subr.bf16.mxu0 0
      %2916 = vmatpush1.bf16.msra.mxu0 0
      %2917 = vmatprep.subr.bf16.mxu0 0
      %2918 = vmatpush1.bf16.msra.mxu0 0
      %2919 = vmatprep.subr.bf16.mxu0 0
      %2920 = vmatpush1.bf16.msra.mxu0 0
      %2921 = vmatprep.subr.bf16.mxu0 0
      %2922 = vmatpush1.bf16.msra.mxu0 0
      %2923 = vmatprep.subr.bf16.mxu0 0
      %2924 = vmatpush1.bf16.msra.mxu0 0
      %2925 = vmatprep.subr.bf16.mxu0 0
      %2926 = vmatpush1.bf16.msra.mxu0 0
      %2927 = vmatprep.subr.bf16.mxu0 0
      %2928 = vmatpush1.bf16.msra.mxu0 0
      %2929 = vmatprep.subr.bf16.mxu0 0
      %2930 = vmatpush1.bf16.msra.mxu0 0
      %2931 = vmatprep.mubr.bf16.mxu0 0
      %2932 = vmatmul.mubr.bf16.gmra.mrb[0].mxu0 %v2483
      %v2933 = vpop.f32.mrb[0].mxu0
      %v2934 = vadd.f32 %v2773, %v2933
      %v2935 = vpop.f32.mrb[0].mxu0
      %v2936 = vpop.f32.mrb[0].mxu0
      %v2937 = vadd.f32 %v2776, %v2936
      %v2938 = vpop.f32.mrb[0].mxu0
      %2939 = vmatprep.mubr.bf16.mxu0 0
      %2940 = vmatmul.mubr.bf16.gmra.mrb[0].mxu0 %v2486
      %v2941 = vpop.f32.mrb[0].mxu0
      %v2942 = vadd.f32 %v2781, %v2941
      %v2943 = vpop.f32.mrb[0].mxu0
      %v2944 = vpop.f32.mrb[0].mxu0
      %v2945 = vadd.f32 %v2784, %v2944
      %v2946 = vpop.f32.mrb[0].mxu0
      %2947 = vmatprep.mubr.bf16.mxu0 0
      %2948 = vmatmul.mubr.bf16.gmra.mrb[0].mxu0 %v2489
      %v2949 = vpop.f32.mrb[0].mxu0
      %v2950 = vadd.f32 %v2789, %v2949
      %v2951 = vpop.f32.mrb[0].mxu0
      %v2952 = vpop.f32.mrb[0].mxu0
      %v2953 = vadd.f32 %v2792, %v2952
      %v2954 = vpop.f32.mrb[0].mxu0
      %2955 = vmatprep.mubr.bf16.mxu0 0
      %2956 = vmatmul.mubr.bf16.gmra.mrb[0].mxu0 %v2492
      %v2957 = vpop.f32.mrb[0].mxu0
      %v2958 = vadd.f32 %v2797, %v2957
      %v2959 = vpop.f32.mrb[0].mxu0
      %v2960 = vpop.f32.mrb[0].mxu0
      %v2961 = vadd.f32 %v2800, %v2960
      %v2962 = vpop.f32.mrb[0].mxu0
      %2963 = vmatprep.mubr.bf16.mxu0 0
      %2964 = vmatmul.mubr.bf16.gmra.mrb[0].mxu0 %v2495
      %v2965 = vpop.f32.mrb[0].mxu0
      %v2966 = vadd.f32 %v2805, %v2965
      %v2967 = vpop.f32.mrb[0].mxu0
      %v2968 = vpop.f32.mrb[0].mxu0
      %v2969 = vadd.f32 %v2808, %v2968
      %v2970 = vpop.f32.mrb[0].mxu0
      %2971 = vmatprep.mubr.bf16.mxu0 0
      %2972 = vmatmul.mubr.bf16.gmra.mrb[0].mxu0 %v2498
      %v2973 = vpop.f32.mrb[0].mxu0
      %v2974 = vadd.f32 %v2813, %v2973
      %v2975 = vpop.f32.mrb[0].mxu0
      %v2976 = vpop.f32.mrb[0].mxu0
      %v2977 = vadd.f32 %v2816, %v2976
      %v2978 = vpop.f32.mrb[0].mxu0
      %2979 = vmatprep.mubr.bf16.mxu0 0
      %2980 = vmatmul.mubr.bf16.gmra.mrb[0].mxu0 %v2501
      %v2981 = vpop.f32.mrb[0].mxu0
      %v2982 = vadd.f32 %v2821, %v2981
      %v2983 = vpop.f32.mrb[0].mxu0
      %v2984 = vpop.f32.mrb[0].mxu0
      %v2985 = vadd.f32 %v2824, %v2984
      %v2986 = vpop.f32.mrb[0].mxu0
      %2987 = vmatprep.mubr.bf16.mxu0 0
      %2988 = vmatmul.mubr.bf16.gmra.mrb[0].mxu0 %v2504
      %v2989 = vpop.f32.mrb[0].mxu0
      %v2990 = vadd.f32 %v2829, %v2989
      %v2991 = vpop.f32.mrb[0].mxu0
      %v2992 = vpop.f32.mrb[0].mxu0
      %v2993 = vadd.f32 %v2832, %v2992
      %v2994 = vpop.f32.mrb[0].mxu0
      %2995 = vmatprep.mubr.bf16.mxu0 0
      %2996 = vmatmul.mubr.bf16.gmra.mrb[0].mxu0 %v2507
      %v2997 = vpop.f32.mrb[0].mxu0
      %v2998 = vadd.f32 %v2837, %v2997
      %v2999 = vpop.f32.mrb[0].mxu0
      %v3000 = vpop.f32.mrb[0].mxu0
      %v3001 = vadd.f32 %v2840, %v3000
      %v3002 = vpop.f32.mrb[0].mxu0
      %3003 = vmatprep.mubr.bf16.mxu0 0
      %3004 = vmatmul.mubr.bf16.gmra.mrb[0].mxu0 %v2510
      %v3005 = vpop.f32.mrb[0].mxu0
      %v3006 = vadd.f32 %v2845, %v3005
      %v3007 = vpop.f32.mrb[0].mxu0
      %v3008 = vpop.f32.mrb[0].mxu0
      %v3009 = vadd.f32 %v2848, %v3008
      %v3010 = vpop.f32.mrb[0].mxu0
      %3011 = vmatprep.mubr.bf16.mxu0 0
      %3012 = vmatmul.mubr.bf16.gmra.mrb[0].mxu0 %v2513
      %v3013 = vpop.f32.mrb[0].mxu0
      %v3014 = vadd.f32 %v2853, %v3013
      %v3015 = vpop.f32.mrb[0].mxu0
      %v3016 = vpop.f32.mrb[0].mxu0
      %v3017 = vadd.f32 %v2856, %v3016
      %v3018 = vpop.f32.mrb[0].mxu0
      %3019 = vmatprep.mubr.bf16.mxu0 0
      %3020 = vmatmul.mubr.bf16.gmra.mrb[0].mxu0 %v2516
      %v3021 = vpop.f32.mrb[0].mxu0
      %v3022 = vadd.f32 %v2861, %v3021
      %v3023 = vpop.f32.mrb[0].mxu0
      %v3024 = vpop.f32.mrb[0].mxu0
      %v3025 = vadd.f32 %v2864, %v3024
      %v3026 = vpop.f32.mrb[0].mxu0
      %3027 = vmatprep.mubr.bf16.mxu0 0
      %3028 = vmatmul.mubr.bf16.gmra.mrb[0].mxu0 %v2519
      %v3029 = vpop.f32.mrb[0].mxu0
      %v3030 = vadd.f32 %v2869, %v3029
      %v3031 = vpop.f32.mrb[0].mxu0
      %v3032 = vpop.f32.mrb[0].mxu0
      %v3033 = vadd.f32 %v2872, %v3032
      %v3034 = vpop.f32.mrb[0].mxu0
      %3035 = vmatprep.mubr.bf16.mxu0 0
      %3036 = vmatmul.mubr.bf16.gmra.mrb[0].mxu0 %v2522
      %v3037 = vpop.f32.mrb[0].mxu0
      %v3038 = vadd.f32 %v2877, %v3037
      %v3039 = vpop.f32.mrb[0].mxu0
      %v3040 = vpop.f32.mrb[0].mxu0
      %v3041 = vadd.f32 %v2880, %v3040
      %v3042 = vpop.f32.mrb[0].mxu0
      %3043 = vmatprep.mubr.bf16.mxu0 0
      %3044 = vmatmul.mubr.bf16.gmra.mrb[0].mxu0 %v2525
      %v3045 = vpop.f32.mrb[0].mxu0
      %v3046 = vadd.f32 %v2885, %v3045
      %v3047 = vpop.f32.mrb[0].mxu0
      %v3048 = vpop.f32.mrb[0].mxu0
      %v3049 = vadd.f32 %v2888, %v3048
      %v3050 = vpop.f32.mrb[0].mxu0
      %3051 = vmatprep.mubr.bf16.mxu0 0
      %3052 = vmatmul.mubr.bf16.gmra.mrb[0].mxu0 %v2528
      %v3053 = vpop.f32.mrb[0].mxu0
      %v3054 = vadd.f32 %v2893, %v3053
      %v3055 = vpop.f32.mrb[0].mxu0
      %v3056 = vpop.f32.mrb[0].mxu0
      %v3057 = vadd.f32 %v2896, %v3056
      %v3058 = vpop.f32.mrb[0].mxu0
      %3059 = vdwg.mxu0
      %v3108 = vunpack.c.l.b16 %v1968
      %v3109 = vunpack.c.l.b16 %v1969
      %v3110 = vunpack.c.l.b16 %v1970
      %v3111 = vunpack.c.l.b16 %v1971
      %v3112 = vunpack.c.l.b16 %v1972
      %v3113 = vunpack.c.l.b16 %v1973
      %v3114 = vunpack.c.l.b16 %v1974
      %v3115 = vunpack.c.l.b16 %v1975
      %v3116 = vunpack.c.l.b16 %v1976
      %v3117 = vunpack.c.l.b16 %v1977
      %v3118 = vunpack.c.l.b16 %v1978
      %v3119 = vunpack.c.l.b16 %v1979
      %v3120 = vunpack.c.l.b16 %v1980
      %v3121 = vunpack.c.l.b16 %v1981
      %v3122 = vunpack.c.l.b16 %v1982
      %v3123 = vunpack.c.l.b16 %v1983
      %v3124 = vunpack.c.l.b16 %v1984
      %v3125 = vunpack.c.l.b16 %v1985
      %v3126 = vunpack.c.l.b16 %v1986
      %v3127 = vunpack.c.l.b16 %v1987
      %v3128 = vunpack.c.l.b16 %v1988
      %v3129 = vunpack.c.l.b16 %v1989
      %v3130 = vunpack.c.l.b16 %v1990
      %v3131 = vunpack.c.l.b16 %v1991
      %v3132 = vunpack.c.l.b16 %v1992
      %v3133 = vunpack.c.l.b16 %v1993
      %v3134 = vunpack.c.l.b16 %v1994
      %v3135 = vunpack.c.l.b16 %v1995
      %v3136 = vunpack.c.l.b16 %v1996
      %v3137 = vunpack.c.l.b16 %v1997
      %v3138 = vunpack.c.l.b16 %v1998
      %v3139 = vunpack.c.l.b16 %v1999
      %v3140 = vunpack.c.l.b16 %v2000
      %v3141 = vunpack.c.l.b16 %v2001
      %v3142 = vunpack.c.l.b16 %v2002
      %v3143 = vunpack.c.l.b16 %v2003
      %v3144 = vunpack.c.l.b16 %v2004
      %v3145 = vunpack.c.l.b16 %v2005
      %v3146 = vunpack.c.l.b16 %v2006
      %v3147 = vunpack.c.l.b16 %v2007
      %v3148 = vunpack.c.l.b16 %v2008
      %v3149 = vunpack.c.l.b16 %v2009
      %v3150 = vunpack.c.l.b16 %v2010
      %v3151 = vunpack.c.l.b16 %v2011
      %v3152 = vunpack.c.l.b16 %v2012
      %v3153 = vunpack.c.l.b16 %v2013
      %v3154 = vunpack.c.l.b16 %v2014
      %v3155 = vunpack.c.l.b16 %v2015
      %v3156 = vpack.c.b16 %v3109, %v3108
      %v3157 = vpack.c.b16 %v3111, %v3110
      %v3158 = vpack.c.b16 %v3113, %v3112
      %v3159 = vpack.c.b16 %v3115, %v3114
      %v3160 = vpack.c.b16 %v3117, %v3116
      %v3161 = vpack.c.b16 %v3119, %v3118
      %v3162 = vpack.c.b16 %v3121, %v3120
      %v3163 = vpack.c.b16 %v3123, %v3122
      %v3164 = vpack.c.b16 %v3125, %v3124
      %v3165 = vpack.c.b16 %v3127, %v3126
      %v3166 = vpack.c.b16 %v3129, %v3128
      %v3167 = vpack.c.b16 %v3131, %v3130
      %v3168 = vpack.c.b16 %v3133, %v3132
      %v3169 = vpack.c.b16 %v3135, %v3134
      %v3170 = vpack.c.b16 %v3137, %v3136
      %v3171 = vpack.c.b16 %v3139, %v3138
      %v3172 = vpack.c.b16 %v3141, %v3140
      %v3173 = vpack.c.b16 %v3143, %v3142
      %v3174 = vpack.c.b16 %v3145, %v3144
      %v3175 = vpack.c.b16 %v3147, %v3146
      %v3176 = vpack.c.b16 %v3149, %v3148
      %v3177 = vpack.c.b16 %v3151, %v3150
      %v3178 = vpack.c.b16 %v3153, %v3152
      %v3179 = vpack.c.b16 %v3155, %v3154
      %3204 = vmatprep.subr.bf16.mxu0 0
      %3205 = vmatpush1.bf16.msra.mxu0 %v3156
      %3206 = vmatprep.subr.bf16.mxu0 0
      %3207 = vmatpush1.bf16.msra.mxu0 %v3157
      %3208 = vmatprep.subr.bf16.mxu0 0
      %3209 = vmatpush1.bf16.msra.mxu0 %v3158
      %3210 = vmatprep.subr.bf16.mxu0 0
      %3211 = vmatpush1.bf16.msra.mxu0 %v3159
      %3212 = vmatprep.subr.bf16.mxu0 0
      %3213 = vmatpush1.bf16.msra.mxu0 %v3160
      %3214 = vmatprep.subr.bf16.mxu0 0
      %3215 = vmatpush1.bf16.msra.mxu0 %v3161
      %3216 = vmatprep.subr.bf16.mxu0 0
      %3217 = vmatpush1.bf16.msra.mxu0 %v3162
      %3218 = vmatprep.subr.bf16.mxu0 0
      %3219 = vmatpush1.bf16.msra.mxu0 %v3163
      %3220 = vmatprep.subr.bf16.mxu0 0
      %3221 = vmatpush1.bf16.msra.mxu0 %v3164
      %3222 = vmatprep.subr.bf16.mxu0 0
      %3223 = vmatpush1.bf16.msra.mxu0 %v3165
      %3224 = vmatprep.subr.bf16.mxu0 0
      %3225 = vmatpush1.bf16.msra.mxu0 %v3166
      %3226 = vmatprep.subr.bf16.mxu0 0
      %3227 = vmatpush1.bf16.msra.mxu0 %v3167
      %3228 = vmatprep.subr.bf16.mxu0 0
      %3229 = vmatpush1.bf16.msra.mxu0 %v3168
      %3230 = vmatprep.subr.bf16.mxu0 0
      %3231 = vmatpush1.bf16.msra.mxu0 %v3169
      %3232 = vmatprep.subr.bf16.mxu0 0
      %3233 = vmatpush1.bf16.msra.mxu0 %v3170
      %3234 = vmatprep.subr.bf16.mxu0 0
      %3235 = vmatpush1.bf16.msra.mxu0 %v3171
      %3236 = vmatprep.mubr.bf16.mxu0 %v1658
      %3237 = vmatmul.mubr.bf16.gmra.mrb[0].mxu0 %v1566
      %v3238 = vpop.f32.mrb[0].mxu0
      %v3239 = vadd.f32 %v2934, %v3238
      %v3240 = vpop.f32.mrb[0].mxu0
      %v3241 = vpop.f32.mrb[0].mxu0
      %v3242 = vadd.f32 %v2937, %v3241
      %v3243 = vpop.f32.mrb[0].mxu0
      %3244 = vmatprep.mubr.bf16.mxu0 %v1670
      %3245 = vmatmul.mubr.bf16.gmra.mrb[0].mxu0 %v1567
      %v3246 = vpop.f32.mrb[0].mxu0
      %v3247 = vadd.f32 %v2942, %v3246
      %v3248 = vpop.f32.mrb[0].mxu0
      %v3249 = vpop.f32.mrb[0].mxu0
      %v3250 = vadd.f32 %v2945, %v3249
      %v3251 = vpop.f32.mrb[0].mxu0
      %3252 = vmatprep.mubr.bf16.mxu0 %v1682
      %3253 = vmatmul.mubr.bf16.gmra.mrb[0].mxu0 %v1568
      %v3254 = vpop.f32.mrb[0].mxu0
      %v3255 = vadd.f32 %v2950, %v3254
      %v3256 = vpop.f32.mrb[0].mxu0
      %v3257 = vpop.f32.mrb[0].mxu0
      %v3258 = vadd.f32 %v2953, %v3257
      %v3259 = vpop.f32.mrb[0].mxu0
      %3260 = vmatprep.mubr.bf16.mxu0 %v1694
      %3261 = vmatmul.mubr.bf16.gmra.mrb[0].mxu0 %v1569
      %v3262 = vpop.f32.mrb[0].mxu0
      %v3263 = vadd.f32 %v2958, %v3262
      %v3264 = vpop.f32.mrb[0].mxu0
      %v3265 = vpop.f32.mrb[0].mxu0
      %v3266 = vadd.f32 %v2961, %v3265
      %v3267 = vpop.f32.mrb[0].mxu0
      %3268 = vmatprep.mubr.bf16.mxu0 %v1706
      %3269 = vmatmul.mubr.bf16.gmra.mrb[0].mxu0 %v1570
      %v3270 = vpop.f32.mrb[0].mxu0
      %v3271 = vadd.f32 %v2966, %v3270
      %v3272 = vpop.f32.mrb[0].mxu0
      %v3273 = vpop.f32.mrb[0].mxu0
      %v3274 = vadd.f32 %v2969, %v3273
      %v3275 = vpop.f32.mrb[0].mxu0
      %3276 = vmatprep.mubr.bf16.mxu0 %v1718
      %3277 = vmatmul.mubr.bf16.gmra.mrb[0].mxu0 %v1571
      %v3278 = vpop.f32.mrb[0].mxu0
      %v3279 = vadd.f32 %v2974, %v3278
      %v3280 = vpop.f32.mrb[0].mxu0
      %v3281 = vpop.f32.mrb[0].mxu0
      %v3282 = vadd.f32 %v2977, %v3281
      %v3283 = vpop.f32.mrb[0].mxu0
      %3284 = vmatprep.mubr.bf16.mxu0 %v1730
      %3285 = vmatmul.mubr.bf16.gmra.mrb[0].mxu0 %v1572
      %v3286 = vpop.f32.mrb[0].mxu0
      %v3287 = vadd.f32 %v2982, %v3286
      %v3288 = vpop.f32.mrb[0].mxu0
      %v3289 = vpop.f32.mrb[0].mxu0
      %v3290 = vadd.f32 %v2985, %v3289
      %v3291 = vpop.f32.mrb[0].mxu0
      %3292 = vmatprep.mubr.bf16.mxu0 %v1742
      %3293 = vmatmul.mubr.bf16.gmra.mrb[0].mxu0 %v1573
      %v3294 = vpop.f32.mrb[0].mxu0
      %v3295 = vadd.f32 %v2990, %v3294
      %v3296 = vpop.f32.mrb[0].mxu0
      %v3297 = vpop.f32.mrb[0].mxu0
      %v3298 = vadd.f32 %v2993, %v3297
      %v3299 = vpop.f32.mrb[0].mxu0
      %3300 = vmatprep.mubr.bf16.mxu0 %v1754
      %3301 = vmatmul.mubr.bf16.gmra.mrb[0].mxu0 %v1574
      %v3302 = vpop.f32.mrb[0].mxu0
      %v3303 = vadd.f32 %v2998, %v3302
      %v3304 = vpop.f32.mrb[0].mxu0
      %v3305 = vpop.f32.mrb[0].mxu0
      %v3306 = vadd.f32 %v3001, %v3305
      %v3307 = vpop.f32.mrb[0].mxu0
      %3308 = vmatprep.mubr.bf16.mxu0 %v1766
      %3309 = vmatmul.mubr.bf16.gmra.mrb[0].mxu0 %v1575
      %v3310 = vpop.f32.mrb[0].mxu0
      %v3311 = vadd.f32 %v3006, %v3310
      %v3312 = vpop.f32.mrb[0].mxu0
      %v3313 = vpop.f32.mrb[0].mxu0
      %v3314 = vadd.f32 %v3009, %v3313
      %v3315 = vpop.f32.mrb[0].mxu0
      %3316 = vmatprep.mubr.bf16.mxu0 %v1778
      %3317 = vmatmul.mubr.bf16.gmra.mrb[0].mxu0 %v1576
      %v3318 = vpop.f32.mrb[0].mxu0
      %v3319 = vadd.f32 %v3014, %v3318
      %v3320 = vpop.f32.mrb[0].mxu0
      %v3321 = vpop.f32.mrb[0].mxu0
      %v3322 = vadd.f32 %v3017, %v3321
      %v3323 = vpop.f32.mrb[0].mxu0
      %3324 = vmatprep.mubr.bf16.mxu0 %v1790
      %3325 = vmatmul.mubr.bf16.gmra.mrb[0].mxu0 %v1577
      %v3326 = vpop.f32.mrb[0].mxu0
      %v3327 = vadd.f32 %v3022, %v3326
      %v3328 = vpop.f32.mrb[0].mxu0
      %v3329 = vpop.f32.mrb[0].mxu0
      %v3330 = vadd.f32 %v3025, %v3329
      %v3331 = vpop.f32.mrb[0].mxu0
      %3332 = vmatprep.mubr.bf16.mxu0 %v1802
      %3333 = vmatmul.mubr.bf16.gmra.mrb[0].mxu0 %v1578
      %v3334 = vpop.f32.mrb[0].mxu0
      %v3335 = vadd.f32 %v3030, %v3334
      %v3336 = vpop.f32.mrb[0].mxu0
      %v3337 = vpop.f32.mrb[0].mxu0
      %v3338 = vadd.f32 %v3033, %v3337
      %v3339 = vpop.f32.mrb[0].mxu0
      %3340 = vmatprep.mubr.bf16.mxu0 %v1814
      %3341 = vmatmul.mubr.bf16.gmra.mrb[0].mxu0 %v1579
      %v3342 = vpop.f32.mrb[0].mxu0
      %v3343 = vadd.f32 %v3038, %v3342
      %v3344 = vpop.f32.mrb[0].mxu0
      %v3345 = vpop.f32.mrb[0].mxu0
      %v3346 = vadd.f32 %v3041, %v3345
      %v3347 = vpop.f32.mrb[0].mxu0
      %3348 = vmatprep.mubr.bf16.mxu0 %v1826
      %3349 = vmatmul.mubr.bf16.gmra.mrb[0].mxu0 %v1580
      %v3350 = vpop.f32.mrb[0].mxu0
      %v3351 = vadd.f32 %v3046, %v3350
      %v3352 = vpop.f32.mrb[0].mxu0
      %v3353 = vpop.f32.mrb[0].mxu0
      %v3354 = vadd.f32 %v3049, %v3353
      %v3355 = vpop.f32.mrb[0].mxu0
      %3356 = vmatprep.mubr.bf16.mxu0 %v1838
      %3357 = vmatmul.mubr.bf16.gmra.mrb[0].mxu0 %v1581
      %v3358 = vpop.f32.mrb[0].mxu0
      %v3359 = vadd.f32 %v3054, %v3358
      %v3360 = vpop.f32.mrb[0].mxu0
      %v3361 = vpop.f32.mrb[0].mxu0
      %v3362 = vadd.f32 %v3057, %v3361
      %v3363 = vpop.f32.mrb[0].mxu0
      %3364 = vdwg.mxu0
      %3365 = vmatprep.subr.bf16.mxu0 0
      %3366 = vmatpush1.bf16.msra.mxu0 %v3172
      %3367 = vmatprep.subr.bf16.mxu0 0
      %3368 = vmatpush1.bf16.msra.mxu0 %v3173
      %3369 = vmatprep.subr.bf16.mxu0 0
      %3370 = vmatpush1.bf16.msra.mxu0 %v3174
      %3371 = vmatprep.subr.bf16.mxu0 0
      %3372 = vmatpush1.bf16.msra.mxu0 %v3175
      %3373 = vmatprep.subr.bf16.mxu0 0
      %3374 = vmatpush1.bf16.msra.mxu0 %v3176
      %3375 = vmatprep.subr.bf16.mxu0 0
      %3376 = vmatpush1.bf16.msra.mxu0 %v3177
      %3377 = vmatprep.subr.bf16.mxu0 0
      %3378 = vmatpush1.bf16.msra.mxu0 %v3178
      %3379 = vmatprep.subr.bf16.mxu0 0
      %3380 = vmatpush1.bf16.msra.mxu0 %v3179
      %3381 = vmatprep.subr.bf16.mxu0 0
      %3382 = vmatpush1.bf16.msra.mxu0 0
      %3383 = vmatprep.subr.bf16.mxu0 0
      %3384 = vmatpush1.bf16.msra.mxu0 0
      %3385 = vmatprep.subr.bf16.mxu0 0
      %3386 = vmatpush1.bf16.msra.mxu0 0
      %3387 = vmatprep.subr.bf16.mxu0 0
      %3388 = vmatpush1.bf16.msra.mxu0 0
      %3389 = vmatprep.subr.bf16.mxu0 0
      %3390 = vmatpush1.bf16.msra.mxu0 0
      %3391 = vmatprep.subr.bf16.mxu0 0
      %3392 = vmatpush1.bf16.msra.mxu0 0
      %3393 = vmatprep.subr.bf16.mxu0 0
      %3394 = vmatpush1.bf16.msra.mxu0 0
      %3395 = vmatprep.subr.bf16.mxu0 0
      %3396 = vmatpush1.bf16.msra.mxu0 0
      %3397 = vmatprep.mubr.bf16.mxu0 0
      %3398 = vmatmul.mubr.bf16.gmra.mrb[0].mxu0 %v1906
      %v3399 = vpop.f32.mrb[0].mxu0
      %v3400 = vadd.f32 %v3239, %v3399
      %v3401 = vpop.f32.mrb[0].mxu0
      %v3402 = vpop.f32.mrb[0].mxu0
      %v3403 = vadd.f32 %v3242, %v3402
      %v3404 = vpop.f32.mrb[0].mxu0
      %3405 = vmatprep.mubr.bf16.mxu0 0
      %3406 = vmatmul.mubr.bf16.gmra.mrb[0].mxu0 %v1909
      %v3407 = vpop.f32.mrb[0].mxu0
      %v3408 = vadd.f32 %v3247, %v3407
      %v3409 = vpop.f32.mrb[0].mxu0
      %v3410 = vpop.f32.mrb[0].mxu0
      %v3411 = vadd.f32 %v3250, %v3410
      %v3412 = vpop.f32.mrb[0].mxu0
      %3413 = vmatprep.mubr.bf16.mxu0 0
      %3414 = vmatmul.mubr.bf16.gmra.mrb[0].mxu0 %v1912
      %v3415 = vpop.f32.mrb[0].mxu0
      %v3416 = vadd.f32 %v3255, %v3415
      %v3417 = vpop.f32.mrb[0].mxu0
      %v3418 = vpop.f32.mrb[0].mxu0
      %v3419 = vadd.f32 %v3258, %v3418
      %v3420 = vpop.f32.mrb[0].mxu0
      %3421 = vmatprep.mubr.bf16.mxu0 0
      %3422 = vmatmul.mubr.bf16.gmra.mrb[0].mxu0 %v1915
      %v3423 = vpop.f32.mrb[0].mxu0
      %v3424 = vadd.f32 %v3263, %v3423
      %v3425 = vpop.f32.mrb[0].mxu0
      %v3426 = vpop.f32.mrb[0].mxu0
      %v3427 = vadd.f32 %v3266, %v3426
      %v3428 = vpop.f32.mrb[0].mxu0
      %3429 = vmatprep.mubr.bf16.mxu0 0
      %3430 = vmatmul.mubr.bf16.gmra.mrb[0].mxu0 %v1918
      %v3431 = vpop.f32.mrb[0].mxu0
      %v3432 = vadd.f32 %v3271, %v3431
      %v3433 = vpop.f32.mrb[0].mxu0
      %v3434 = vpop.f32.mrb[0].mxu0
      %v3435 = vadd.f32 %v3274, %v3434
      %v3436 = vpop.f32.mrb[0].mxu0
      %3437 = vmatprep.mubr.bf16.mxu0 0
      %3438 = vmatmul.mubr.bf16.gmra.mrb[0].mxu0 %v1921
      %v3439 = vpop.f32.mrb[0].mxu0
      %v3440 = vadd.f32 %v3279, %v3439
      %v3441 = vpop.f32.mrb[0].mxu0
      %v3442 = vpop.f32.mrb[0].mxu0
      %v3443 = vadd.f32 %v3282, %v3442
      %v3444 = vpop.f32.mrb[0].mxu0
      %3445 = vmatprep.mubr.bf16.mxu0 0
      %3446 = vmatmul.mubr.bf16.gmra.mrb[0].mxu0 %v1924
      %v3447 = vpop.f32.mrb[0].mxu0
      %v3448 = vadd.f32 %v3287, %v3447
      %v3449 = vpop.f32.mrb[0].mxu0
      %v3450 = vpop.f32.mrb[0].mxu0
      %v3451 = vadd.f32 %v3290, %v3450
      %v3452 = vpop.f32.mrb[0].mxu0
      %3453 = vmatprep.mubr.bf16.mxu0 0
      %3454 = vmatmul.mubr.bf16.gmra.mrb[0].mxu0 %v1927
      %v3455 = vpop.f32.mrb[0].mxu0
      %v3456 = vadd.f32 %v3295, %v3455
      %v3457 = vpop.f32.mrb[0].mxu0
      %v3458 = vpop.f32.mrb[0].mxu0
      %v3459 = vadd.f32 %v3298, %v3458
      %v3460 = vpop.f32.mrb[0].mxu0
      %3461 = vmatprep.mubr.bf16.mxu0 0
      %3462 = vmatmul.mubr.bf16.gmra.mrb[0].mxu0 %v1930
      %v3463 = vpop.f32.mrb[0].mxu0
      %v3464 = vadd.f32 %v3303, %v3463
      %v3465 = vpop.f32.mrb[0].mxu0
      %v3466 = vpop.f32.mrb[0].mxu0
      %v3467 = vadd.f32 %v3306, %v3466
      %v3468 = vpop.f32.mrb[0].mxu0
      %3469 = vmatprep.mubr.bf16.mxu0 0
      %3470 = vmatmul.mubr.bf16.gmra.mrb[0].mxu0 %v1933
      %v3471 = vpop.f32.mrb[0].mxu0
      %v3472 = vadd.f32 %v3311, %v3471
      %v3473 = vpop.f32.mrb[0].mxu0
      %v3474 = vpop.f32.mrb[0].mxu0
      %v3475 = vadd.f32 %v3314, %v3474
      %v3476 = vpop.f32.mrb[0].mxu0
      %3477 = vmatprep.mubr.bf16.mxu0 0
      %3478 = vmatmul.mubr.bf16.gmra.mrb[0].mxu0 %v1936
      %v3479 = vpop.f32.mrb[0].mxu0
      %v3480 = vadd.f32 %v3319, %v3479
      %v3481 = vpop.f32.mrb[0].mxu0
      %v3482 = vpop.f32.mrb[0].mxu0
      %v3483 = vadd.f32 %v3322, %v3482
      %v3484 = vpop.f32.mrb[0].mxu0
      %3485 = vmatprep.mubr.bf16.mxu0 0
      %3486 = vmatmul.mubr.bf16.gmra.mrb[0].mxu0 %v1939
      %v3487 = vpop.f32.mrb[0].mxu0
      %v3488 = vadd.f32 %v3327, %v3487
      %v3489 = vpop.f32.mrb[0].mxu0
      %v3490 = vpop.f32.mrb[0].mxu0
      %v3491 = vadd.f32 %v3330, %v3490
      %v3492 = vpop.f32.mrb[0].mxu0
      %3493 = vmatprep.mubr.bf16.mxu0 0
      %3494 = vmatmul.mubr.bf16.gmra.mrb[0].mxu0 %v1942
      %v3495 = vpop.f32.mrb[0].mxu0
      %v3496 = vadd.f32 %v3335, %v3495
      %v3497 = vpop.f32.mrb[0].mxu0
      %v3498 = vpop.f32.mrb[0].mxu0
      %v3499 = vadd.f32 %v3338, %v3498
      %v3500 = vpop.f32.mrb[0].mxu0
      %3501 = vmatprep.mubr.bf16.mxu0 0
      %3502 = vmatmul.mubr.bf16.gmra.mrb[0].mxu0 %v1945
      %v3503 = vpop.f32.mrb[0].mxu0
      %v3504 = vadd.f32 %v3343, %v3503
      %v3505 = vpop.f32.mrb[0].mxu0
      %v3506 = vpop.f32.mrb[0].mxu0
      %v3507 = vadd.f32 %v3346, %v3506
      %v3508 = vpop.f32.mrb[0].mxu0
      %3509 = vmatprep.mubr.bf16.mxu0 0
      %3510 = vmatmul.mubr.bf16.gmra.mrb[0].mxu0 %v1948
      %v3511 = vpop.f32.mrb[0].mxu0
      %v3512 = vadd.f32 %v3351, %v3511
      %v3513 = vpop.f32.mrb[0].mxu0
      %v3514 = vpop.f32.mrb[0].mxu0
      %v3515 = vadd.f32 %v3354, %v3514
      %v3516 = vpop.f32.mrb[0].mxu0
      %3517 = vmatprep.mubr.bf16.mxu0 0
      %3518 = vmatmul.mubr.bf16.gmra.mrb[0].mxu0 %v1951
      %v3519 = vpop.f32.mrb[0].mxu0
      %v3520 = vadd.f32 %v3359, %v3519
      %v3521 = vpop.f32.mrb[0].mxu0
      %v3522 = vpop.f32.mrb[0].mxu0
      %v3523 = vadd.f32 %v3362, %v3522
      %v3524 = vpop.f32.mrb[0].mxu0
      %3525 = vdwg.mxu0
      %s3526 = scalar_lea.vmem [#allocation3], 24
      %v3527 = vld [vmem:[%s3526] sm:$0xf]
      %v3528 = vld [vmem:[%s3526 + $0x4] sm:$0xf]
      %v3529 = vld [vmem:[%s3526 + $0xc] sm:$0xf]
      %v3530 = vld [vmem:[%s3526 + $0x10] sm:$0xf]
      %v3531 = vld [vmem:[%s3526 + $0x18] sm:$0xf]
      %v3532 = vld [vmem:[%s3526 + $0x1c] sm:$0xf]
      %v3533 = vld [vmem:[%s3526 + $0x24] sm:$0xf]
      %v3534 = vld [vmem:[%s3526 + $0x28] sm:$0xf]
      %v3535 = vld [vmem:[%s3526 + $0x30] sm:$0xf]
      %v3536 = vld [vmem:[%s3526 + $0x34] sm:$0xf]
      %v3537 = vld [vmem:[%s3526 + $0x3c] sm:$0xf]
      %v3538 = vld [vmem:[%s3526 + $0x40] sm:$0xf]
      %v3539 = vld [vmem:[%s3526 + $0x48] sm:$0xf]
      %v3540 = vld [vmem:[%s3526 + $0x4c] sm:$0xf]
      %v3541 = vld [vmem:[%s3526 + $0x54] sm:$0xf]
      %v3542 = vld [vmem:[%s3526 + $0x58] sm:$0xf]
      %v3543 = vld [vmem:[%s3526 + $0x60] sm:$0xf]
      %v3544 = vld [vmem:[%s3526 + $0x64] sm:$0xf]
      %v3545 = vld [vmem:[%s3526 + $0x6c] sm:$0xf]
      %v3546 = vld [vmem:[%s3526 + $0x70] sm:$0xf]
      %v3547 = vld [vmem:[%s3526 + $0x78] sm:$0xf]
      %v3548 = vld [vmem:[%s3526 + $0x7c] sm:$0xf]
      %v3549 = vld [vmem:[%s3526 + $0x84] sm:$0xf]
      %v3550 = vld [vmem:[%s3526 + $0x88] sm:$0xf]
      %v3551 = vld [vmem:[%s3526 + $0x90] sm:$0xf]
      %v3552 = vld [vmem:[%s3526 + $0x94] sm:$0xf]
      %v3553 = vld [vmem:[%s3526 + $0x9c] sm:$0xf]
      %v3554 = vld [vmem:[%s3526 + $0xa0] sm:$0xf]
      %v3555 = vld [vmem:[%s3526 + $0xa8] sm:$0xf]
      %v3556 = vld [vmem:[%s3526 + $0xac] sm:$0xf]
      %v3557 = vld [vmem:[%s3526 + $0xb4] sm:$0xf]
      %v3558 = vld [vmem:[%s3526 + $0xb8] sm:$0xf]
      %v3559 = vld [vmem:[%s3526 + $0x8] sm:$0x1]
      %v3560 = vld [vmem:[%s3526 + $0x14] sm:$0x1]
      %v3561 = vld [vmem:[%s3526 + $0x20] sm:$0x1]
      %v3562 = vld [vmem:[%s3526 + $0x2c] sm:$0x1]
      %v3563 = vld [vmem:[%s3526 + $0x38] sm:$0x1]
      %v3564 = vld [vmem:[%s3526 + $0x44] sm:$0x1]
      %v3565 = vld [vmem:[%s3526 + $0x50] sm:$0x1]
      %v3566 = vld [vmem:[%s3526 + $0x5c] sm:$0x1]
      %v3567 = vld [vmem:[%s3526 + $0x68] sm:$0x1]
      %v3568 = vld [vmem:[%s3526 + $0x74] sm:$0x1]
      %v3569 = vld [vmem:[%s3526 + $0x80] sm:$0x1]
      %v3570 = vld [vmem:[%s3526 + $0x8c] sm:$0x1]
      %v3571 = vld [vmem:[%s3526 + $0x98] sm:$0x1]
      %v3572 = vld [vmem:[%s3526 + $0xa4] sm:$0x1]
      %v3573 = vld [vmem:[%s3526 + $0xb0] sm:$0x1]
      %v3574 = vld [vmem:[%s3526 + $0xbc] sm:$0x1]
      %v3575 = vld [vmem:[%s3526] sm:$0xe]
      %v3576 = vld [vmem:[%s3526 + $0xc] sm:$0xe]
      %v3577 = vld [vmem:[%s3526 + $0x18] sm:$0xe]
      %v3578 = vld [vmem:[%s3526 + $0x24] sm:$0xe]
      %v3579 = vld [vmem:[%s3526 + $0x30] sm:$0xe]
      %v3580 = vld [vmem:[%s3526 + $0x3c] sm:$0xe]
      %v3581 = vld [vmem:[%s3526 + $0x48] sm:$0xe]
      %v3582 = vld [vmem:[%s3526 + $0x54] sm:$0xe]
      %v3583 = vld [vmem:[%s3526 + $0x60] sm:$0xe]
      %v3584 = vld [vmem:[%s3526 + $0x6c] sm:$0xe]
      %v3585 = vld [vmem:[%s3526 + $0x78] sm:$0xe]
      %v3586 = vld [vmem:[%s3526 + $0x84] sm:$0xe]
      %v3587 = vld [vmem:[%s3526 + $0x90] sm:$0xe]
      %v3588 = vld [vmem:[%s3526 + $0x9c] sm:$0xe]
      %v3589 = vld [vmem:[%s3526 + $0xa8] sm:$0xe]
      %v3590 = vld [vmem:[%s3526 + $0xb4] sm:$0xe]
      %v3623 = vunpack.c.l.b16 %v3527
      %v3624 = vunpack.c.l.b16 %v3528
      %v3625 = vunpack.c.l.b16 %v3529
      %v3626 = vunpack.c.l.b16 %v3530
      %v3627 = vunpack.c.l.b16 %v3531
      %v3628 = vunpack.c.l.b16 %v3532
      %v3629 = vunpack.c.l.b16 %v3533
      %v3630 = vunpack.c.l.b16 %v3534
      %v3631 = vunpack.c.l.b16 %v3535
      %v3632 = vunpack.c.l.b16 %v3536
      %v3633 = vunpack.c.l.b16 %v3537
      %v3634 = vunpack.c.l.b16 %v3538
      %v3635 = vunpack.c.l.b16 %v3539
      %v3636 = vunpack.c.l.b16 %v3540
      %v3637 = vunpack.c.l.b16 %v3541
      %v3638 = vunpack.c.l.b16 %v3542
      %v3639 = vunpack.c.l.b16 %v3543
      %v3640 = vunpack.c.l.b16 %v3544
      %v3641 = vunpack.c.l.b16 %v3545
      %v3642 = vunpack.c.l.b16 %v3546
      %v3643 = vunpack.c.l.b16 %v3547
      %v3644 = vunpack.c.l.b16 %v3548
      %v3645 = vunpack.c.l.b16 %v3549
      %v3646 = vunpack.c.l.b16 %v3550
      %v3647 = vunpack.c.l.b16 %v3551
      %v3648 = vunpack.c.l.b16 %v3552
      %v3649 = vunpack.c.l.b16 %v3553
      %v3650 = vunpack.c.l.b16 %v3554
      %v3651 = vunpack.c.l.b16 %v3555
      %v3652 = vunpack.c.l.b16 %v3556
      %v3653 = vunpack.c.l.b16 %v3557
      %v3654 = vunpack.c.l.b16 %v3558
      %v3655 = vpack.c.b16 %v3624, %v3623
      %v3656 = vpack.c.b16 %v3626, %v3625
      %v3657 = vpack.c.b16 %v3628, %v3627
      %v3658 = vpack.c.b16 %v3630, %v3629
      %v3659 = vpack.c.b16 %v3632, %v3631
      %v3660 = vpack.c.b16 %v3634, %v3633
      %v3661 = vpack.c.b16 %v3636, %v3635
      %v3662 = vpack.c.b16 %v3638, %v3637
      %v3663 = vpack.c.b16 %v3640, %v3639
      %v3664 = vpack.c.b16 %v3642, %v3641
      %v3665 = vpack.c.b16 %v3644, %v3643
      %v3666 = vpack.c.b16 %v3646, %v3645
      %v3667 = vpack.c.b16 %v3648, %v3647
      %v3668 = vpack.c.b16 %v3650, %v3649
      %v3669 = vpack.c.b16 %v3652, %v3651
      %v3670 = vpack.c.b16 %v3654, %v3653
      %v3703 = vunpack.c.l.b16 %v3559
      %v3704 = vunpack.c.l.b16 %v3560
      %v3705 = vunpack.c.l.b16 %v3561
      %v3706 = vunpack.c.l.b16 %v3562
      %v3707 = vunpack.c.l.b16 %v3563
      %v3708 = vunpack.c.l.b16 %v3564
      %v3709 = vunpack.c.l.b16 %v3565
      %v3710 = vunpack.c.l.b16 %v3566
      %v3711 = vunpack.c.l.b16 %v3567
      %v3712 = vunpack.c.l.b16 %v3568
      %v3713 = vunpack.c.l.b16 %v3569
      %v3714 = vunpack.c.l.b16 %v3570
      %v3715 = vunpack.c.l.b16 %v3571
      %v3716 = vunpack.c.l.b16 %v3572
      %v3717 = vunpack.c.l.b16 %v3573
      %v3718 = vunpack.c.l.b16 %v3574
      %v3719 = vpack.c.b16 %v3703, %v3703
      %v3720 = vpack.c.b16 %v3704, %v3704
      %v3721 = vpack.c.b16 %v3705, %v3705
      %v3722 = vpack.c.b16 %v3706, %v3706
      %v3723 = vpack.c.b16 %v3707, %v3707
      %v3724 = vpack.c.b16 %v3708, %v3708
      %v3725 = vpack.c.b16 %v3709, %v3709
      %v3726 = vpack.c.b16 %v3710, %v3710
      %v3727 = vpack.c.b16 %v3711, %v3711
      %v3728 = vpack.c.b16 %v3712, %v3712
      %v3729 = vpack.c.b16 %v3713, %v3713
      %v3730 = vpack.c.b16 %v3714, %v3714
      %v3731 = vpack.c.b16 %v3715, %v3715
      %v3732 = vpack.c.b16 %v3716, %v3716
      %v3733 = vpack.c.b16 %v3717, %v3717
      %v3734 = vpack.c.b16 %v3718, %v3718
      %v3736 = vshrl.u32 %v3655, 16
      %v3738 = vshll.u32 %v3655, 16
      %v3740 = vrot.slane %v3738, 1
      %v3741 = vor.u32 %v3736, %v3740
      %v3743 = vshll.u32 %v3719, 16
      %v3745 = vrot.slane %v3743, 1
      %v3746 = vsel %vm1646, %v3741, %v3745
      %v3748 = vshrl.u32 %v3656, 16
      %v3750 = vshll.u32 %v3656, 16
      %v3752 = vrot.slane %v3750, 1
      %v3753 = vor.u32 %v3748, %v3752
      %v3755 = vshll.u32 %v3720, 16
      %v3757 = vrot.slane %v3755, 1
      %v3758 = vsel %vm1646, %v3753, %v3757
      %v3760 = vshrl.u32 %v3657, 16
      %v3762 = vshll.u32 %v3657, 16
      %v3764 = vrot.slane %v3762, 1
      %v3765 = vor.u32 %v3760, %v3764
      %v3767 = vshll.u32 %v3721, 16
      %v3769 = vrot.slane %v3767, 1
      %v3770 = vsel %vm1646, %v3765, %v3769
      %v3772 = vshrl.u32 %v3658, 16
      %v3774 = vshll.u32 %v3658, 16
      %v3776 = vrot.slane %v3774, 1
      %v3777 = vor.u32 %v3772, %v3776
      %v3779 = vshll.u32 %v3722, 16
      %v3781 = vrot.slane %v3779, 1
      %v3782 = vsel %vm1646, %v3777, %v3781
      %v3784 = vshrl.u32 %v3659, 16
      %v3786 = vshll.u32 %v3659, 16
      %v3788 = vrot.slane %v3786, 1
      %v3789 = vor.u32 %v3784, %v3788
      %v3791 = vshll.u32 %v3723, 16
      %v3793 = vrot.slane %v3791, 1
      %v3794 = vsel %vm1646, %v3789, %v3793
      %v3796 = vshrl.u32 %v3660, 16
      %v3798 = vshll.u32 %v3660, 16
      %v3800 = vrot.slane %v3798, 1
      %v3801 = vor.u32 %v3796, %v3800
      %v3803 = vshll.u32 %v3724, 16
      %v3805 = vrot.slane %v3803, 1
      %v3806 = vsel %vm1646, %v3801, %v3805
      %v3808 = vshrl.u32 %v3661, 16
      %v3810 = vshll.u32 %v3661, 16
      %v3812 = vrot.slane %v3810, 1
      %v3813 = vor.u32 %v3808, %v3812
      %v3815 = vshll.u32 %v3725, 16
      %v3817 = vrot.slane %v3815, 1
      %v3818 = vsel %vm1646, %v3813, %v3817
      %v3820 = vshrl.u32 %v3662, 16
      %v3822 = vshll.u32 %v3662, 16
      %v3824 = vrot.slane %v3822, 1
      %v3825 = vor.u32 %v3820, %v3824
      %v3827 = vshll.u32 %v3726, 16
      %v3829 = vrot.slane %v3827, 1
      %v3830 = vsel %vm1646, %v3825, %v3829
      %v3832 = vshrl.u32 %v3663, 16
      %v3834 = vshll.u32 %v3663, 16
      %v3836 = vrot.slane %v3834, 1
      %v3837 = vor.u32 %v3832, %v3836
      %v3839 = vshll.u32 %v3727, 16
      %v3841 = vrot.slane %v3839, 1
      %v3842 = vsel %vm1646, %v3837, %v3841
      %v3844 = vshrl.u32 %v3664, 16
      %v3846 = vshll.u32 %v3664, 16
      %v3848 = vrot.slane %v3846, 1
      %v3849 = vor.u32 %v3844, %v3848
      %v3851 = vshll.u32 %v3728, 16
      %v3853 = vrot.slane %v3851, 1
      %v3854 = vsel %vm1646, %v3849, %v3853
      %v3856 = vshrl.u32 %v3665, 16
      %v3858 = vshll.u32 %v3665, 16
      %v3860 = vrot.slane %v3858, 1
      %v3861 = vor.u32 %v3856, %v3860
      %v3863 = vshll.u32 %v3729, 16
      %v3865 = vrot.slane %v3863, 1
      %v3866 = vsel %vm1646, %v3861, %v3865
      %v3868 = vshrl.u32 %v3666, 16
      %v3870 = vshll.u32 %v3666, 16
      %v3872 = vrot.slane %v3870, 1
      %v3873 = vor.u32 %v3868, %v3872
      %v3875 = vshll.u32 %v3730, 16
      %v3877 = vrot.slane %v3875, 1
      %v3878 = vsel %vm1646, %v3873, %v3877
      %v3880 = vshrl.u32 %v3667, 16
      %v3882 = vshll.u32 %v3667, 16
      %v3884 = vrot.slane %v3882, 1
      %v3885 = vor.u32 %v3880, %v3884
      %v3887 = vshll.u32 %v3731, 16
      %v3889 = vrot.slane %v3887, 1
      %v3890 = vsel %vm1646, %v3885, %v3889
      %v3892 = vshrl.u32 %v3668, 16
      %v3894 = vshll.u32 %v3668, 16
      %v3896 = vrot.slane %v3894, 1
      %v3897 = vor.u32 %v3892, %v3896
      %v3899 = vshll.u32 %v3732, 16
      %v3901 = vrot.slane %v3899, 1
      %v3902 = vsel %vm1646, %v3897, %v3901
      %v3904 = vshrl.u32 %v3669, 16
      %v3906 = vshll.u32 %v3669, 16
      %v3908 = vrot.slane %v3906, 1
      %v3909 = vor.u32 %v3904, %v3908
      %v3911 = vshll.u32 %v3733, 16
      %v3913 = vrot.slane %v3911, 1
      %v3914 = vsel %vm1646, %v3909, %v3913
      %v3916 = vshrl.u32 %v3670, 16
      %v3918 = vshll.u32 %v3670, 16
      %v3920 = vrot.slane %v3918, 1
      %v3921 = vor.u32 %v3916, %v3920
      %v3923 = vshll.u32 %v3734, 16
      %v3925 = vrot.slane %v3923, 1
      %v3926 = vsel %vm1646, %v3921, %v3925
      %v3959 = vunpack.c.l.b16 %v3575
      %v3960 = vunpack.c.l.b16 %v3576
      %v3961 = vunpack.c.l.b16 %v3577
      %v3962 = vunpack.c.l.b16 %v3578
      %v3963 = vunpack.c.l.b16 %v3579
      %v3964 = vunpack.c.l.b16 %v3580
      %v3965 = vunpack.c.l.b16 %v3581
      %v3966 = vunpack.c.l.b16 %v3582
      %v3967 = vunpack.c.l.b16 %v3583
      %v3968 = vunpack.c.l.b16 %v3584
      %v3969 = vunpack.c.l.b16 %v3585
      %v3970 = vunpack.c.l.b16 %v3586
      %v3971 = vunpack.c.l.b16 %v3587
      %v3972 = vunpack.c.l.b16 %v3588
      %v3973 = vunpack.c.l.b16 %v3589
      %v3974 = vunpack.c.l.b16 %v3590
      %v3975 = vpack.c.b16 %v3624, %v3959
      %v3976 = vpack.c.b16 %v3626, %v3960
      %v3977 = vpack.c.b16 %v3628, %v3961
      %v3978 = vpack.c.b16 %v3630, %v3962
      %v3979 = vpack.c.b16 %v3632, %v3963
      %v3980 = vpack.c.b16 %v3634, %v3964
      %v3981 = vpack.c.b16 %v3636, %v3965
      %v3982 = vpack.c.b16 %v3638, %v3966
      %v3983 = vpack.c.b16 %v3640, %v3967
      %v3984 = vpack.c.b16 %v3642, %v3968
      %v3985 = vpack.c.b16 %v3644, %v3969
      %v3986 = vpack.c.b16 %v3646, %v3970
      %v3987 = vpack.c.b16 %v3648, %v3971
      %v3988 = vpack.c.b16 %v3650, %v3972
      %v3989 = vpack.c.b16 %v3652, %v3973
      %v3990 = vpack.c.b16 %v3654, %v3974
      %v3991 = vrot.slane %v3975, 1
      %v3992 = vrot.slane %v3719, 1
      %v3993 = vsel %vm1903, %v3991, %v3992
      %v3994 = vrot.slane %v3976, 1
      %v3995 = vrot.slane %v3720, 1
      %v3996 = vsel %vm1903, %v3994, %v3995
      %v3997 = vrot.slane %v3977, 1
      %v3998 = vrot.slane %v3721, 1
      %v3999 = vsel %vm1903, %v3997, %v3998
      %v4000 = vrot.slane %v3978, 1
      %v4001 = vrot.slane %v3722, 1
      %v4002 = vsel %vm1903, %v4000, %v4001
      %v4003 = vrot.slane %v3979, 1
      %v4004 = vrot.slane %v3723, 1
      %v4005 = vsel %vm1903, %v4003, %v4004
      %v4006 = vrot.slane %v3980, 1
      %v4007 = vrot.slane %v3724, 1
      %v4008 = vsel %vm1903, %v4006, %v4007
      %v4009 = vrot.slane %v3981, 1
      %v4010 = vrot.slane %v3725, 1
      %v4011 = vsel %vm1903, %v4009, %v4010
      %v4012 = vrot.slane %v3982, 1
      %v4013 = vrot.slane %v3726, 1
      %v4014 = vsel %vm1903, %v4012, %v4013
      %v4015 = vrot.slane %v3983, 1
      %v4016 = vrot.slane %v3727, 1
      %v4017 = vsel %vm1903, %v4015, %v4016
      %v4018 = vrot.slane %v3984, 1
      %v4019 = vrot.slane %v3728, 1
      %v4020 = vsel %vm1903, %v4018, %v4019
      %v4021 = vrot.slane %v3985, 1
      %v4022 = vrot.slane %v3729, 1
      %v4023 = vsel %vm1903, %v4021, %v4022
      %v4024 = vrot.slane %v3986, 1
      %v4025 = vrot.slane %v3730, 1
      %v4026 = vsel %vm1903, %v4024, %v4025
      %v4027 = vrot.slane %v3987, 1
      %v4028 = vrot.slane %v3731, 1
      %v4029 = vsel %vm1903, %v4027, %v4028
      %v4030 = vrot.slane %v3988, 1
      %v4031 = vrot.slane %v3732, 1
      %v4032 = vsel %vm1903, %v4030, %v4031
      %v4033 = vrot.slane %v3989, 1
      %v4034 = vrot.slane %v3733, 1
      %v4035 = vsel %vm1903, %v4033, %v4034
      %v4036 = vrot.slane %v3990, 1
      %v4037 = vrot.slane %v3734, 1
      %v4038 = vsel %vm1903, %v4036, %v4037
      %s4055 = scalar_lea.vmem %s1, 384
      %v4056 = vld [vmem:[%s4055] sm:$0xf]
      %v4057 = vld [vmem:[%s4055 + $0x4] sm:$0xf]
      %v4058 = vld [vmem:[%s4055 + $0x8] sm:$0xf]
      %v4059 = vld [vmem:[%s4055 + $0xc] sm:$0xf]
      %v4060 = vld [vmem:[%s4055 + $0x10] sm:$0xf]
      %v4061 = vld [vmem:[%s4055 + $0x14] sm:$0xf]
      %v4062 = vld [vmem:[%s4055 + $0x18] sm:$0xf]
      %v4063 = vld [vmem:[%s4055 + $0x1c] sm:$0xf]
      %v4064 = vld [vmem:[%s4055 + $0x20] sm:$0xf]
      %v4065 = vld [vmem:[%s4055 + $0x24] sm:$0xf]
      %v4066 = vld [vmem:[%s4055 + $0x28] sm:$0xf]
      %v4067 = vld [vmem:[%s4055 + $0x2c] sm:$0xf]
      %v4068 = vld [vmem:[%s4055 + $0x30] sm:$0xf]
      %v4069 = vld [vmem:[%s4055 + $0x34] sm:$0xf]
      %v4070 = vld [vmem:[%s4055 + $0x38] sm:$0xf]
      %v4071 = vld [vmem:[%s4055 + $0x3c] sm:$0xf]
      %v4072 = vld [vmem:[%s4055 + $0x40] sm:$0xf]
      %v4073 = vld [vmem:[%s4055 + $0x44] sm:$0xf]
      %v4074 = vld [vmem:[%s4055 + $0x48] sm:$0xf]
      %v4075 = vld [vmem:[%s4055 + $0x4c] sm:$0xf]
      %v4076 = vld [vmem:[%s4055 + $0x50] sm:$0xf]
      %v4077 = vld [vmem:[%s4055 + $0x54] sm:$0xf]
      %v4078 = vld [vmem:[%s4055 + $0x58] sm:$0xf]
      %v4079 = vld [vmem:[%s4055 + $0x5c] sm:$0xf]
      %v4080 = vld [vmem:[%s4055 + $0x60] sm:$0xf]
      %v4081 = vld [vmem:[%s4055 + $0x64] sm:$0xf]
      %v4082 = vld [vmem:[%s4055 + $0x68] sm:$0xf]
      %v4083 = vld [vmem:[%s4055 + $0x6c] sm:$0xf]
      %v4084 = vld [vmem:[%s4055 + $0x70] sm:$0xf]
      %v4085 = vld [vmem:[%s4055 + $0x74] sm:$0xf]
      %v4086 = vld [vmem:[%s4055 + $0x78] sm:$0xf]
      %v4087 = vld [vmem:[%s4055 + $0x7c] sm:$0xf]
      %v4088 = vld [vmem:[%s4055 + $0x80] sm:$0xf]
      %v4089 = vld [vmem:[%s4055 + $0x84] sm:$0xf]
      %v4090 = vld [vmem:[%s4055 + $0x88] sm:$0xf]
      %v4091 = vld [vmem:[%s4055 + $0x8c] sm:$0xf]
      %v4092 = vld [vmem:[%s4055 + $0x90] sm:$0xf]
      %v4093 = vld [vmem:[%s4055 + $0x94] sm:$0xf]
      %v4094 = vld [vmem:[%s4055 + $0x98] sm:$0xf]
      %v4095 = vld [vmem:[%s4055 + $0x9c] sm:$0xf]
      %v4096 = vld [vmem:[%s4055 + $0xa0] sm:$0xf]
      %v4097 = vld [vmem:[%s4055 + $0xa4] sm:$0xf]
      %v4098 = vld [vmem:[%s4055 + $0xa8] sm:$0xf]
      %v4099 = vld [vmem:[%s4055 + $0xac] sm:$0xf]
      %v4100 = vld [vmem:[%s4055 + $0xb0] sm:$0xf]
      %v4101 = vld [vmem:[%s4055 + $0xb4] sm:$0xf]
      %v4102 = vld [vmem:[%s4055 + $0xb8] sm:$0xf]
      %v4103 = vld [vmem:[%s4055 + $0xbc] sm:$0xf]
      %v4152 = vunpack.c.l.b16 %v4056
      %v4153 = vunpack.c.l.b16 %v4057
      %v4154 = vunpack.c.l.b16 %v4058
      %v4155 = vunpack.c.l.b16 %v4059
      %v4156 = vunpack.c.l.b16 %v4060
      %v4157 = vunpack.c.l.b16 %v4061
      %v4158 = vunpack.c.l.b16 %v4062
      %v4159 = vunpack.c.l.b16 %v4063
      %v4160 = vunpack.c.l.b16 %v4064
      %v4161 = vunpack.c.l.b16 %v4065
      %v4162 = vunpack.c.l.b16 %v4066
      %v4163 = vunpack.c.l.b16 %v4067
      %v4164 = vunpack.c.l.b16 %v4068
      %v4165 = vunpack.c.l.b16 %v4069
      %v4166 = vunpack.c.l.b16 %v4070
      %v4167 = vunpack.c.l.b16 %v4071
      %v4168 = vunpack.c.l.b16 %v4072
      %v4169 = vunpack.c.l.b16 %v4073
      %v4170 = vunpack.c.l.b16 %v4074
      %v4171 = vunpack.c.l.b16 %v4075
      %v4172 = vunpack.c.l.b16 %v4076
      %v4173 = vunpack.c.l.b16 %v4077
      %v4174 = vunpack.c.l.b16 %v4078
      %v4175 = vunpack.c.l.b16 %v4079
      %v4176 = vunpack.c.l.b16 %v4080
      %v4177 = vunpack.c.l.b16 %v4081
      %v4178 = vunpack.c.l.b16 %v4082
      %v4179 = vunpack.c.l.b16 %v4083
      %v4180 = vunpack.c.l.b16 %v4084
      %v4181 = vunpack.c.l.b16 %v4085
      %v4182 = vunpack.c.l.b16 %v4086
      %v4183 = vunpack.c.l.b16 %v4087
      %v4184 = vunpack.c.l.b16 %v4088
      %v4185 = vunpack.c.l.b16 %v4089
      %v4186 = vunpack.c.l.b16 %v4090
      %v4187 = vunpack.c.l.b16 %v4091
      %v4188 = vunpack.c.l.b16 %v4092
      %v4189 = vunpack.c.l.b16 %v4093
      %v4190 = vunpack.c.l.b16 %v4094
      %v4191 = vunpack.c.l.b16 %v4095
      %v4192 = vunpack.c.l.b16 %v4096
      %v4193 = vunpack.c.l.b16 %v4097
      %v4194 = vunpack.c.l.b16 %v4098
      %v4195 = vunpack.c.l.b16 %v4099
      %v4196 = vunpack.c.l.b16 %v4100
      %v4197 = vunpack.c.l.b16 %v4101
      %v4198 = vunpack.c.l.b16 %v4102
      %v4199 = vunpack.c.l.b16 %v4103
      %v4200 = vpack.c.b16 %v4153, %v4152
      %v4201 = vpack.c.b16 %v4155, %v4154
      %v4202 = vpack.c.b16 %v4157, %v4156
      %v4203 = vpack.c.b16 %v4159, %v4158
      %v4204 = vpack.c.b16 %v4161, %v4160
      %v4205 = vpack.c.b16 %v4163, %v4162
      %v4206 = vpack.c.b16 %v4165, %v4164
      %v4207 = vpack.c.b16 %v4167, %v4166
      %v4208 = vpack.c.b16 %v4169, %v4168
      %v4209 = vpack.c.b16 %v4171, %v4170
      %v4210 = vpack.c.b16 %v4173, %v4172
      %v4211 = vpack.c.b16 %v4175, %v4174
      %v4212 = vpack.c.b16 %v4177, %v4176
      %v4213 = vpack.c.b16 %v4179, %v4178
      %v4214 = vpack.c.b16 %v4181, %v4180
      %v4215 = vpack.c.b16 %v4183, %v4182
      %v4216 = vpack.c.b16 %v4185, %v4184
      %v4217 = vpack.c.b16 %v4187, %v4186
      %v4218 = vpack.c.b16 %v4189, %v4188
      %v4219 = vpack.c.b16 %v4191, %v4190
      %v4220 = vpack.c.b16 %v4193, %v4192
      %v4221 = vpack.c.b16 %v4195, %v4194
      %v4222 = vpack.c.b16 %v4197, %v4196
      %v4223 = vpack.c.b16 %v4199, %v4198
      %4248 = vmatprep.subr.bf16.mxu0 0
      %4249 = vmatpush1.bf16.msra.mxu0 %v4200
      %4250 = vmatprep.subr.bf16.mxu0 0
      %4251 = vmatpush1.bf16.msra.mxu0 %v4201
      %4252 = vmatprep.subr.bf16.mxu0 0
      %4253 = vmatpush1.bf16.msra.mxu0 %v4202
      %4254 = vmatprep.subr.bf16.mxu0 0
      %4255 = vmatpush1.bf16.msra.mxu0 %v4203
      %4256 = vmatprep.subr.bf16.mxu0 0
      %4257 = vmatpush1.bf16.msra.mxu0 %v4204
      %4258 = vmatprep.subr.bf16.mxu0 0
      %4259 = vmatpush1.bf16.msra.mxu0 %v4205
      %4260 = vmatprep.subr.bf16.mxu0 0
      %4261 = vmatpush1.bf16.msra.mxu0 %v4206
      %4262 = vmatprep.subr.bf16.mxu0 0
      %4263 = vmatpush1.bf16.msra.mxu0 %v4207
      %4264 = vmatprep.subr.bf16.mxu0 0
      %4265 = vmatpush1.bf16.msra.mxu0 %v4208
      %4266 = vmatprep.subr.bf16.mxu0 0
      %4267 = vmatpush1.bf16.msra.mxu0 %v4209
      %4268 = vmatprep.subr.bf16.mxu0 0
      %4269 = vmatpush1.bf16.msra.mxu0 %v4210
      %4270 = vmatprep.subr.bf16.mxu0 0
      %4271 = vmatpush1.bf16.msra.mxu0 %v4211
      %4272 = vmatprep.subr.bf16.mxu0 0
      %4273 = vmatpush1.bf16.msra.mxu0 %v4212
      %4274 = vmatprep.subr.bf16.mxu0 0
      %4275 = vmatpush1.bf16.msra.mxu0 %v4213
      %4276 = vmatprep.subr.bf16.mxu0 0
      %4277 = vmatpush1.bf16.msra.mxu0 %v4214
      %4278 = vmatprep.subr.bf16.mxu0 0
      %4279 = vmatpush1.bf16.msra.mxu0 %v4215
      %4280 = vmatprep.mubr.bf16.mxu0 %v3746
      %4281 = vmatmul.mubr.bf16.gmra.mrb[0].mxu0 %v3655
      %v4282 = vpop.f32.mrb[0].mxu0
      %v4283 = vadd.f32 0.0, %v4282
      %v4284 = vpop.f32.mrb[0].mxu0
      %v4285 = vpop.f32.mrb[0].mxu0
      %v4286 = vadd.f32 0.0, %v4285
      %v4287 = vpop.f32.mrb[0].mxu0
      %4288 = vmatprep.mubr.bf16.mxu0 %v3758
      %4289 = vmatmul.mubr.bf16.gmra.mrb[0].mxu0 %v3656
      %v4290 = vpop.f32.mrb[0].mxu0
      %v4291 = vadd.f32 0.0, %v4290
      %v4292 = vpop.f32.mrb[0].mxu0
      %v4293 = vpop.f32.mrb[0].mxu0
      %v4294 = vadd.f32 0.0, %v4293
      %v4295 = vpop.f32.mrb[0].mxu0
      %4296 = vmatprep.mubr.bf16.mxu0 %v3770
      %4297 = vmatmul.mubr.bf16.gmra.mrb[0].mxu0 %v3657
      %v4298 = vpop.f32.mrb[0].mxu0
      %v4299 = vadd.f32 0.0, %v4298
      %v4300 = vpop.f32.mrb[0].mxu0
      %v4301 = vpop.f32.mrb[0].mxu0
      %v4302 = vadd.f32 0.0, %v4301
      %v4303 = vpop.f32.mrb[0].mxu0
      %4304 = vmatprep.mubr.bf16.mxu0 %v3782
      %4305 = vmatmul.mubr.bf16.gmra.mrb[0].mxu0 %v3658
      %v4306 = vpop.f32.mrb[0].mxu0
      %v4307 = vadd.f32 0.0, %v4306
      %v4308 = vpop.f32.mrb[0].mxu0
      %v4309 = vpop.f32.mrb[0].mxu0
      %v4310 = vadd.f32 0.0, %v4309
      %v4311 = vpop.f32.mrb[0].mxu0
      %4312 = vmatprep.mubr.bf16.mxu0 %v3794
      %4313 = vmatmul.mubr.bf16.gmra.mrb[0].mxu0 %v3659
      %v4314 = vpop.f32.mrb[0].mxu0
      %v4315 = vadd.f32 0.0, %v4314
      %v4316 = vpop.f32.mrb[0].mxu0
      %v4317 = vpop.f32.mrb[0].mxu0
      %v4318 = vadd.f32 0.0, %v4317
      %v4319 = vpop.f32.mrb[0].mxu0
      %4320 = vmatprep.mubr.bf16.mxu0 %v3806
      %4321 = vmatmul.mubr.bf16.gmra.mrb[0].mxu0 %v3660
      %v4322 = vpop.f32.mrb[0].mxu0
      %v4323 = vadd.f32 0.0, %v4322
      %v4324 = vpop.f32.mrb[0].mxu0
      %v4325 = vpop.f32.mrb[0].mxu0
      %v4326 = vadd.f32 0.0, %v4325
      %v4327 = vpop.f32.mrb[0].mxu0
      %4328 = vmatprep.mubr.bf16.mxu0 %v3818
      %4329 = vmatmul.mubr.bf16.gmra.mrb[0].mxu0 %v3661
      %v4330 = vpop.f32.mrb[0].mxu0
      %v4331 = vadd.f32 0.0, %v4330
      %v4332 = vpop.f32.mrb[0].mxu0
      %v4333 = vpop.f32.mrb[0].mxu0
      %v4334 = vadd.f32 0.0, %v4333
      %v4335 = vpop.f32.mrb[0].mxu0
      %4336 = vmatprep.mubr.bf16.mxu0 %v3830
      %4337 = vmatmul.mubr.bf16.gmra.mrb[0].mxu0 %v3662
      %v4338 = vpop.f32.mrb[0].mxu0
      %v4339 = vadd.f32 0.0, %v4338
      %v4340 = vpop.f32.mrb[0].mxu0
      %v4341 = vpop.f32.mrb[0].mxu0
      %v4342 = vadd.f32 0.0, %v4341
      %v4343 = vpop.f32.mrb[0].mxu0
      %4344 = vmatprep.mubr.bf16.mxu0 %v3842
      %4345 = vmatmul.mubr.bf16.gmra.mrb[0].mxu0 %v3663
      %v4346 = vpop.f32.mrb[0].mxu0
      %v4347 = vadd.f32 0.0, %v4346
      %v4348 = vpop.f32.mrb[0].mxu0
      %v4349 = vpop.f32.mrb[0].mxu0
      %v4350 = vadd.f32 0.0, %v4349
      %v4351 = vpop.f32.mrb[0].mxu0
      %4352 = vmatprep.mubr.bf16.mxu0 %v3854
      %4353 = vmatmul.mubr.bf16.gmra.mrb[0].mxu0 %v3664
      %v4354 = vpop.f32.mrb[0].mxu0
      %v4355 = vadd.f32 0.0, %v4354
      %v4356 = vpop.f32.mrb[0].mxu0
      %v4357 = vpop.f32.mrb[0].mxu0
      %v4358 = vadd.f32 0.0, %v4357
      %v4359 = vpop.f32.mrb[0].mxu0
      %4360 = vmatprep.mubr.bf16.mxu0 %v3866
      %4361 = vmatmul.mubr.bf16.gmra.mrb[0].mxu0 %v3665
      %v4362 = vpop.f32.mrb[0].mxu0
      %v4363 = vadd.f32 0.0, %v4362
      %v4364 = vpop.f32.mrb[0].mxu0
      %v4365 = vpop.f32.mrb[0].mxu0
      %v4366 = vadd.f32 0.0, %v4365
      %v4367 = vpop.f32.mrb[0].mxu0
      %4368 = vmatprep.mubr.bf16.mxu0 %v3878
      %4369 = vmatmul.mubr.bf16.gmra.mrb[0].mxu0 %v3666
      %v4370 = vpop.f32.mrb[0].mxu0
      %v4371 = vadd.f32 0.0, %v4370
      %v4372 = vpop.f32.mrb[0].mxu0
      %v4373 = vpop.f32.mrb[0].mxu0
      %v4374 = vadd.f32 0.0, %v4373
      %v4375 = vpop.f32.mrb[0].mxu0
      %4376 = vmatprep.mubr.bf16.mxu0 %v3890
      %4377 = vmatmul.mubr.bf16.gmra.mrb[0].mxu0 %v3667
      %v4378 = vpop.f32.mrb[0].mxu0
      %v4379 = vadd.f32 0.0, %v4378
      %v4380 = vpop.f32.mrb[0].mxu0
      %v4381 = vpop.f32.mrb[0].mxu0
      %v4382 = vadd.f32 0.0, %v4381
      %v4383 = vpop.f32.mrb[0].mxu0
      %4384 = vmatprep.mubr.bf16.mxu0 %v3902
      %4385 = vmatmul.mubr.bf16.gmra.mrb[0].mxu0 %v3668
      %v4386 = vpop.f32.mrb[0].mxu0
      %v4387 = vadd.f32 0.0, %v4386
      %v4388 = vpop.f32.mrb[0].mxu0
      %v4389 = vpop.f32.mrb[0].mxu0
      %v4390 = vadd.f32 0.0, %v4389
      %v4391 = vpop.f32.mrb[0].mxu0
      %4392 = vmatprep.mubr.bf16.mxu0 %v3914
      %4393 = vmatmul.mubr.bf16.gmra.mrb[0].mxu0 %v3669
      %v4394 = vpop.f32.mrb[0].mxu0
      %v4395 = vadd.f32 0.0, %v4394
      %v4396 = vpop.f32.mrb[0].mxu0
      %v4397 = vpop.f32.mrb[0].mxu0
      %v4398 = vadd.f32 0.0, %v4397
      %v4399 = vpop.f32.mrb[0].mxu0
      %4400 = vmatprep.mubr.bf16.mxu0 %v3926
      %4401 = vmatmul.mubr.bf16.gmra.mrb[0].mxu0 %v3670
      %v4402 = vpop.f32.mrb[0].mxu0
      %v4403 = vadd.f32 0.0, %v4402
      %v4404 = vpop.f32.mrb[0].mxu0
      %v4405 = vpop.f32.mrb[0].mxu0
      %v4406 = vadd.f32 0.0, %v4405
      %v4407 = vpop.f32.mrb[0].mxu0
      %4408 = vdwg.mxu0
      %4409 = vmatprep.subr.bf16.mxu0 0
      %4410 = vmatpush1.bf16.msra.mxu0 %v4216
      %4411 = vmatprep.subr.bf16.mxu0 0
      %4412 = vmatpush1.bf16.msra.mxu0 %v4217
      %4413 = vmatprep.subr.bf16.mxu0 0
      %4414 = vmatpush1.bf16.msra.mxu0 %v4218
      %4415 = vmatprep.subr.bf16.mxu0 0
      %4416 = vmatpush1.bf16.msra.mxu0 %v4219
      %4417 = vmatprep.subr.bf16.mxu0 0
      %4418 = vmatpush1.bf16.msra.mxu0 %v4220
      %4419 = vmatprep.subr.bf16.mxu0 0
      %4420 = vmatpush1.bf16.msra.mxu0 %v4221
      %4421 = vmatprep.subr.bf16.mxu0 0
      %4422 = vmatpush1.bf16.msra.mxu0 %v4222
      %4423 = vmatprep.subr.bf16.mxu0 0
      %4424 = vmatpush1.bf16.msra.mxu0 %v4223
      %4425 = vmatprep.subr.bf16.mxu0 0
      %4426 = vmatpush1.bf16.msra.mxu0 0
      %4427 = vmatprep.subr.bf16.mxu0 0
      %4428 = vmatpush1.bf16.msra.mxu0 0
      %4429 = vmatprep.subr.bf16.mxu0 0
      %4430 = vmatpush1.bf16.msra.mxu0 0
      %4431 = vmatprep.subr.bf16.mxu0 0
      %4432 = vmatpush1.bf16.msra.mxu0 0
      %4433 = vmatprep.subr.bf16.mxu0 0
      %4434 = vmatpush1.bf16.msra.mxu0 0
      %4435 = vmatprep.subr.bf16.mxu0 0
      %4436 = vmatpush1.bf16.msra.mxu0 0
      %4437 = vmatprep.subr.bf16.mxu0 0
      %4438 = vmatpush1.bf16.msra.mxu0 0
      %4439 = vmatprep.subr.bf16.mxu0 0
      %4440 = vmatpush1.bf16.msra.mxu0 0
      %4441 = vmatprep.mubr.bf16.mxu0 0
      %4442 = vmatmul.mubr.bf16.gmra.mrb[0].mxu0 %v3993
      %v4443 = vpop.f32.mrb[0].mxu0
      %v4444 = vadd.f32 %v4283, %v4443
      %v4445 = vpop.f32.mrb[0].mxu0
      %v4446 = vpop.f32.mrb[0].mxu0
      %v4447 = vadd.f32 %v4286, %v4446
      %v4448 = vpop.f32.mrb[0].mxu0
      %4449 = vmatprep.mubr.bf16.mxu0 0
      %4450 = vmatmul.mubr.bf16.gmra.mrb[0].mxu0 %v3996
      %v4451 = vpop.f32.mrb[0].mxu0
      %v4452 = vadd.f32 %v4291, %v4451
      %v4453 = vpop.f32.mrb[0].mxu0
      %v4454 = vpop.f32.mrb[0].mxu0
      %v4455 = vadd.f32 %v4294, %v4454
      %v4456 = vpop.f32.mrb[0].mxu0
      %4457 = vmatprep.mubr.bf16.mxu0 0
      %4458 = vmatmul.mubr.bf16.gmra.mrb[0].mxu0 %v3999
      %v4459 = vpop.f32.mrb[0].mxu0
      %v4460 = vadd.f32 %v4299, %v4459
      %v4461 = vpop.f32.mrb[0].mxu0
      %v4462 = vpop.f32.mrb[0].mxu0
      %v4463 = vadd.f32 %v4302, %v4462
      %v4464 = vpop.f32.mrb[0].mxu0
      %4465 = vmatprep.mubr.bf16.mxu0 0
      %4466 = vmatmul.mubr.bf16.gmra.mrb[0].mxu0 %v4002
      %v4467 = vpop.f32.mrb[0].mxu0
      %v4468 = vadd.f32 %v4307, %v4467
      %v4469 = vpop.f32.mrb[0].mxu0
      %v4470 = vpop.f32.mrb[0].mxu0
      %v4471 = vadd.f32 %v4310, %v4470
      %v4472 = vpop.f32.mrb[0].mxu0
      %4473 = vmatprep.mubr.bf16.mxu0 0
      %4474 = vmatmul.mubr.bf16.gmra.mrb[0].mxu0 %v4005
      %v4475 = vpop.f32.mrb[0].mxu0
      %v4476 = vadd.f32 %v4315, %v4475
      %v4477 = vpop.f32.mrb[0].mxu0
      %v4478 = vpop.f32.mrb[0].mxu0
      %v4479 = vadd.f32 %v4318, %v4478
      %v4480 = vpop.f32.mrb[0].mxu0
      %4481 = vmatprep.mubr.bf16.mxu0 0
      %4482 = vmatmul.mubr.bf16.gmra.mrb[0].mxu0 %v4008
      %v4483 = vpop.f32.mrb[0].mxu0
      %v4484 = vadd.f32 %v4323, %v4483
      %v4485 = vpop.f32.mrb[0].mxu0
      %v4486 = vpop.f32.mrb[0].mxu0
      %v4487 = vadd.f32 %v4326, %v4486
      %v4488 = vpop.f32.mrb[0].mxu0
      %4489 = vmatprep.mubr.bf16.mxu0 0
      %4490 = vmatmul.mubr.bf16.gmra.mrb[0].mxu0 %v4011
      %v4491 = vpop.f32.mrb[0].mxu0
      %v4492 = vadd.f32 %v4331, %v4491
      %v4493 = vpop.f32.mrb[0].mxu0
      %v4494 = vpop.f32.mrb[0].mxu0
      %v4495 = vadd.f32 %v4334, %v4494
      %v4496 = vpop.f32.mrb[0].mxu0
      %4497 = vmatprep.mubr.bf16.mxu0 0
      %4498 = vmatmul.mubr.bf16.gmra.mrb[0].mxu0 %v4014
      %v4499 = vpop.f32.mrb[0].mxu0
      %v4500 = vadd.f32 %v4339, %v4499
      %v4501 = vpop.f32.mrb[0].mxu0
      %v4502 = vpop.f32.mrb[0].mxu0
      %v4503 = vadd.f32 %v4342, %v4502
      %v4504 = vpop.f32.mrb[0].mxu0
      %4505 = vmatprep.mubr.bf16.mxu0 0
      %4506 = vmatmul.mubr.bf16.gmra.mrb[0].mxu0 %v4017
      %v4507 = vpop.f32.mrb[0].mxu0
      %v4508 = vadd.f32 %v4347, %v4507
      %v4509 = vpop.f32.mrb[0].mxu0
      %v4510 = vpop.f32.mrb[0].mxu0
      %v4511 = vadd.f32 %v4350, %v4510
      %v4512 = vpop.f32.mrb[0].mxu0
      %4513 = vmatprep.mubr.bf16.mxu0 0
      %4514 = vmatmul.mubr.bf16.gmra.mrb[0].mxu0 %v4020
      %v4515 = vpop.f32.mrb[0].mxu0
      %v4516 = vadd.f32 %v4355, %v4515
      %v4517 = vpop.f32.mrb[0].mxu0
      %v4518 = vpop.f32.mrb[0].mxu0
      %v4519 = vadd.f32 %v4358, %v4518
      %v4520 = vpop.f32.mrb[0].mxu0
      %4521 = vmatprep.mubr.bf16.mxu0 0
      %4522 = vmatmul.mubr.bf16.gmra.mrb[0].mxu0 %v4023
      %v4523 = vpop.f32.mrb[0].mxu0
      %v4524 = vadd.f32 %v4363, %v4523
      %v4525 = vpop.f32.mrb[0].mxu0
      %v4526 = vpop.f32.mrb[0].mxu0
      %v4527 = vadd.f32 %v4366, %v4526
      %v4528 = vpop.f32.mrb[0].mxu0
      %4529 = vmatprep.mubr.bf16.mxu0 0
      %4530 = vmatmul.mubr.bf16.gmra.mrb[0].mxu0 %v4026
      %v4531 = vpop.f32.mrb[0].mxu0
      %v4532 = vadd.f32 %v4371, %v4531
      %v4533 = vpop.f32.mrb[0].mxu0
      %v4534 = vpop.f32.mrb[0].mxu0
      %v4535 = vadd.f32 %v4374, %v4534
      %v4536 = vpop.f32.mrb[0].mxu0
      %4537 = vmatprep.mubr.bf16.mxu0 0
      %4538 = vmatmul.mubr.bf16.gmra.mrb[0].mxu0 %v4029
      %v4539 = vpop.f32.mrb[0].mxu0
      %v4540 = vadd.f32 %v4379, %v4539
      %v4541 = vpop.f32.mrb[0].mxu0
      %v4542 = vpop.f32.mrb[0].mxu0
      %v4543 = vadd.f32 %v4382, %v4542
      %v4544 = vpop.f32.mrb[0].mxu0
      %4545 = vmatprep.mubr.bf16.mxu0 0
      %4546 = vmatmul.mubr.bf16.gmra.mrb[0].mxu0 %v4032
      %v4547 = vpop.f32.mrb[0].mxu0
      %v4548 = vadd.f32 %v4387, %v4547
      %v4549 = vpop.f32.mrb[0].mxu0
      %v4550 = vpop.f32.mrb[0].mxu0
      %v4551 = vadd.f32 %v4390, %v4550
      %v4552 = vpop.f32.mrb[0].mxu0
      %4553 = vmatprep.mubr.bf16.mxu0 0
      %4554 = vmatmul.mubr.bf16.gmra.mrb[0].mxu0 %v4035
      %v4555 = vpop.f32.mrb[0].mxu0
      %v4556 = vadd.f32 %v4395, %v4555
      %v4557 = vpop.f32.mrb[0].mxu0
      %v4558 = vpop.f32.mrb[0].mxu0
      %v4559 = vadd.f32 %v4398, %v4558
      %v4560 = vpop.f32.mrb[0].mxu0
      %4561 = vmatprep.mubr.bf16.mxu0 0
      %4562 = vmatmul.mubr.bf16.gmra.mrb[0].mxu0 %v4038
      %v4563 = vpop.f32.mrb[0].mxu0
      %v4564 = vadd.f32 %v4403, %v4563
      %v4565 = vpop.f32.mrb[0].mxu0
      %v4566 = vpop.f32.mrb[0].mxu0
      %v4567 = vadd.f32 %v4406, %v4566
      %v4568 = vpop.f32.mrb[0].mxu0
      %4569 = vdwg.mxu0
      %v4570 = vadd.f32 %v3400, %v4444
      %v4571 = vadd.f32 %v3403, %v4447
      %v4572 = vadd.f32 %v3408, %v4452
      %v4573 = vadd.f32 %v3411, %v4455
      %v4574 = vadd.f32 %v3416, %v4460
      %v4575 = vadd.f32 %v3419, %v4463
      %v4576 = vadd.f32 %v3424, %v4468
      %v4577 = vadd.f32 %v3427, %v4471
      %v4578 = vadd.f32 %v3432, %v4476
      %v4579 = vadd.f32 %v3435, %v4479
      %v4580 = vadd.f32 %v3440, %v4484
      %v4581 = vadd.f32 %v3443, %v4487
      %v4582 = vadd.f32 %v3448, %v4492
      %v4583 = vadd.f32 %v3451, %v4495
      %v4584 = vadd.f32 %v3456, %v4500
      %v4585 = vadd.f32 %v3459, %v4503
      %v4586 = vadd.f32 %v3464, %v4508
      %v4587 = vadd.f32 %v3467, %v4511
      %v4588 = vadd.f32 %v3472, %v4516
      %v4589 = vadd.f32 %v3475, %v4519
      %v4590 = vadd.f32 %v3480, %v4524
      %v4591 = vadd.f32 %v3483, %v4527
      %v4592 = vadd.f32 %v3488, %v4532
      %v4593 = vadd.f32 %v3491, %v4535
      %v4594 = vadd.f32 %v3496, %v4540
      %v4595 = vadd.f32 %v3499, %v4543
      %v4596 = vadd.f32 %v3504, %v4548
      %v4597 = vadd.f32 %v3507, %v4551
      %v4598 = vadd.f32 %v3512, %v4556
      %v4599 = vadd.f32 %v3515, %v4559
      %v4600 = vadd.f32 %v3520, %v4564
      %v4601 = vadd.f32 %v3523, %v4567
      %v4602 = vpack.c.bf16 %v4571, %v4570
      %v4603 = vpack.c.bf16 %v4573, %v4572
      %v4604 = vpack.c.bf16 %v4575, %v4574
      %v4605 = vpack.c.bf16 %v4577, %v4576
      %v4606 = vpack.c.bf16 %v4579, %v4578
      %v4607 = vpack.c.bf16 %v4581, %v4580
      %v4608 = vpack.c.bf16 %v4583, %v4582
      %v4609 = vpack.c.bf16 %v4585, %v4584
      %v4610 = vpack.c.bf16 %v4587, %v4586
      %v4611 = vpack.c.bf16 %v4589, %v4588
      %v4612 = vpack.c.bf16 %v4591, %v4590
      %v4613 = vpack.c.bf16 %v4593, %v4592
      %v4614 = vpack.c.bf16 %v4595, %v4594
      %v4615 = vpack.c.bf16 %v4597, %v4596
      %v4616 = vpack.c.bf16 %v4599, %v4598
      %v4617 = vpack.c.bf16 %v4601, %v4600
      %v4634 = vunpack.c.l.b16 %v4602
      %v4635 = vunpack.c.h.b16 %v4602
      %v4636 = vunpack.c.l.b16 %v4603
      %v4637 = vunpack.c.h.b16 %v4603
      %v4638 = vunpack.c.l.b16 %v4604
      %v4639 = vunpack.c.h.b16 %v4604
      %v4640 = vunpack.c.l.b16 %v4605
      %v4641 = vunpack.c.h.b16 %v4605
      %v4642 = vunpack.c.l.b16 %v4606
      %v4643 = vunpack.c.h.b16 %v4606
      %v4644 = vunpack.c.l.b16 %v4607
      %v4645 = vunpack.c.h.b16 %v4607
      %v4646 = vunpack.c.l.b16 %v4608
      %v4647 = vunpack.c.h.b16 %v4608
      %v4648 = vunpack.c.l.b16 %v4609
      %v4649 = vunpack.c.h.b16 %v4609
      %v4650 = vunpack.c.l.b16 %v4610
      %v4651 = vunpack.c.h.b16 %v4610
      %v4652 = vunpack.c.l.b16 %v4611
      %v4653 = vunpack.c.h.b16 %v4611
      %v4654 = vunpack.c.l.b16 %v4612
      %v4655 = vunpack.c.h.b16 %v4612
      %v4656 = vunpack.c.l.b16 %v4613
      %v4657 = vunpack.c.h.b16 %v4613
      %v4658 = vunpack.c.l.b16 %v4614
      %v4659 = vunpack.c.h.b16 %v4614
      %v4660 = vunpack.c.l.b16 %v4615
      %v4661 = vunpack.c.h.b16 %v4615
      %v4662 = vunpack.c.l.b16 %v4616
      %v4663 = vunpack.c.h.b16 %v4616
      %v4664 = vunpack.c.l.b16 %v4617
      %v4665 = vunpack.c.h.b16 %v4617
      %v4666 = vpack.c.b16 %v4634, %v4634
      %v4667 = vpack.c.b16 %v4635, %v4635
      %v4668 = vpack.c.b16 %v4636, %v4636
      %v4669 = vpack.c.b16 %v4637, %v4637
      %v4670 = vpack.c.b16 %v4638, %v4638
      %v4671 = vpack.c.b16 %v4639, %v4639
      %v4672 = vpack.c.b16 %v4640, %v4640
      %v4673 = vpack.c.b16 %v4641, %v4641
      %v4674 = vpack.c.b16 %v4642, %v4642
      %v4675 = vpack.c.b16 %v4643, %v4643
      %v4676 = vpack.c.b16 %v4644, %v4644
      %v4677 = vpack.c.b16 %v4645, %v4645
      %v4678 = vpack.c.b16 %v4646, %v4646
      %v4679 = vpack.c.b16 %v4647, %v4647
      %v4680 = vpack.c.b16 %v4648, %v4648
      %v4681 = vpack.c.b16 %v4649, %v4649
      %v4682 = vpack.c.b16 %v4650, %v4650
      %v4683 = vpack.c.b16 %v4651, %v4651
      %v4684 = vpack.c.b16 %v4652, %v4652
      %v4685 = vpack.c.b16 %v4653, %v4653
      %v4686 = vpack.c.b16 %v4654, %v4654
      %v4687 = vpack.c.b16 %v4655, %v4655
      %v4688 = vpack.c.b16 %v4656, %v4656
      %v4689 = vpack.c.b16 %v4657, %v4657
      %v4690 = vpack.c.b16 %v4658, %v4658
      %v4691 = vpack.c.b16 %v4659, %v4659
      %v4692 = vpack.c.b16 %v4660, %v4660
      %v4693 = vpack.c.b16 %v4661, %v4661
      %v4694 = vpack.c.b16 %v4662, %v4662
      %v4695 = vpack.c.b16 %v4663, %v4663
      %v4696 = vpack.c.b16 %v4664, %v4664
      %v4697 = vpack.c.b16 %v4665, %v4665
      %4730 = vst [vmem:[%s248] sm:$0xf] %v4666
      %4731 = vst [vmem:[%s248 + $0x4] sm:$0xf] %v4667
      %4732 = vst [vmem:[%s248 + $0x8] sm:$0xf] %v4668
      %4733 = vst [vmem:[%s248 + $0xc] sm:$0xf] %v4669
      %4734 = vst [vmem:[%s248 + $0x10] sm:$0xf] %v4670
      %4735 = vst [vmem:[%s248 + $0x14] sm:$0xf] %v4671
      %4736 = vst [vmem:[%s248 + $0x18] sm:$0xf] %v4672
      %4737 = vst [vmem:[%s248 + $0x1c] sm:$0xf] %v4673
      %4738 = vst [vmem:[%s248 + $0x20] sm:$0xf] %v4674
      %4739 = vst [vmem:[%s248 + $0x24] sm:$0xf] %v4675
      %4740 = vst [vmem:[%s248 + $0x28] sm:$0xf] %v4676
      %4741 = vst [vmem:[%s248 + $0x2c] sm:$0xf] %v4677
      %4742 = vst [vmem:[%s248 + $0x30] sm:$0xf] %v4678
      %4743 = vst [vmem:[%s248 + $0x34] sm:$0xf] %v4679
      %4744 = vst [vmem:[%s248 + $0x38] sm:$0xf] %v4680
      %4745 = vst [vmem:[%s248 + $0x3c] sm:$0xf] %v4681
      %4746 = vst [vmem:[%s248 + $0x40] sm:$0xf] %v4682
      %4747 = vst [vmem:[%s248 + $0x44] sm:$0xf] %v4683
      %4748 = vst [vmem:[%s248 + $0x48] sm:$0xf] %v4684
      %4749 = vst [vmem:[%s248 + $0x4c] sm:$0xf] %v4685
      %4750 = vst [vmem:[%s248 + $0x50] sm:$0xf] %v4686
      %4751 = vst [vmem:[%s248 + $0x54] sm:$0xf] %v4687
      %4752 = vst [vmem:[%s248 + $0x58] sm:$0xf] %v4688
      %4753 = vst [vmem:[%s248 + $0x5c] sm:$0xf] %v4689
      %4754 = vst [vmem:[%s248 + $0x60] sm:$0xf] %v4690
      %4755 = vst [vmem:[%s248 + $0x64] sm:$0xf] %v4691
      %4756 = vst [vmem:[%s248 + $0x68] sm:$0xf] %v4692
      %4757 = vst [vmem:[%s248 + $0x6c] sm:$0xf] %v4693
      %4758 = vst [vmem:[%s248 + $0x70] sm:$0xf] %v4694
      %4759 = vst [vmem:[%s248 + $0x74] sm:$0xf] %v4695
      %4760 = vst [vmem:[%s248 + $0x78] sm:$0xf] %v4696
      %4761 = vst [vmem:[%s248 + $0x7c] sm:$0xf] %v4697
      %v4762 = vadd.f32 %v4570, %v4571
      %v4763 = vadd.f32 %v4762, %v4572
      %v4764 = vadd.f32 %v4763, %v4573
      %v4765 = vadd.f32 %v4764, %v4574
      %v4766 = vadd.f32 %v4765, %v4575
      %v4767 = vadd.f32 %v4766, %v4576
      %v4768 = vadd.f32 %v4767, %v4577
      %v4769 = vadd.f32 %v4768, %v4578
      %v4770 = vadd.f32 %v4769, %v4579
      %v4771 = vadd.f32 %v4770, %v4580
      %v4772 = vadd.f32 %v4771, %v4581
      %v4773 = vadd.f32 %v4772, %v4582
      %v4774 = vadd.f32 %v4773, %v4583
      %v4775 = vadd.f32 %v4774, %v4584
      %v4776 = vadd.f32 %v4775, %v4585
      %v4777 = vadd.f32 %v4776, %v4586
      %v4778 = vadd.f32 %v4777, %v4587
      %v4779 = vadd.f32 %v4778, %v4588
      %v4780 = vadd.f32 %v4779, %v4589
      %v4781 = vadd.f32 %v4780, %v4590
      %v4782 = vadd.f32 %v4781, %v4591
      %v4783 = vadd.f32 %v4782, %v4592
      %v4784 = vadd.f32 %v4783, %v4593
      %v4785 = vadd.f32 %v4784, %v4594
      %v4786 = vadd.f32 %v4785, %v4595
      %v4787 = vadd.f32 %v4786, %v4596
      %v4788 = vadd.f32 %v4787, %v4597
      %v4789 = vadd.f32 %v4788, %v4598
      %v4790 = vadd.f32 %v4789, %v4599
      %v4791 = vadd.f32 %v4790, %v4600
      %v4792 = vadd.f32 %v4791, %v4601
      %v4793 = vrot.slane %v4792, 4
      %v4794 = vadd.f32 %v4792, %v4793
      %v4795 = vrot.slane %v4794, 2
      %v4796 = vadd.f32 %v4794, %v4795
      %v4797 = vrot.slane %v4796, 1
      %v4798 = vadd.f32 %v4796, %v4797
      %4799 = vst [vmem:[%s254] sm:$0x1] %v4798
      %v4800 = vmul.f32 %v4570, %v4570
      %v4801 = vmul.f32 %v4571, %v4571
      %v4802 = vmul.f32 %v4572, %v4572
      %v4803 = vmul.f32 %v4573, %v4573
      %v4804 = vmul.f32 %v4574, %v4574
      %v4805 = vmul.f32 %v4575, %v4575
      %v4806 = vmul.f32 %v4576, %v4576
      %v4807 = vmul.f32 %v4577, %v4577
      %v4808 = vmul.f32 %v4578, %v4578
      %v4809 = vmul.f32 %v4579, %v4579
      %v4810 = vmul.f32 %v4580, %v4580
      %v4811 = vmul.f32 %v4581, %v4581
      %v4812 = vmul.f32 %v4582, %v4582
      %v4813 = vmul.f32 %v4583, %v4583
      %v4814 = vmul.f32 %v4584, %v4584
      %v4815 = vmul.f32 %v4585, %v4585
      %v4816 = vmul.f32 %v4586, %v4586
      %v4817 = vmul.f32 %v4587, %v4587
      %v4818 = vmul.f32 %v4588, %v4588
      %v4819 = vmul.f32 %v4589, %v4589
      %v4820 = vmul.f32 %v4590, %v4590
      %v4821 = vmul.f32 %v4591, %v4591
      %v4822 = vmul.f32 %v4592, %v4592
      %v4823 = vmul.f32 %v4593, %v4593
      %v4824 = vmul.f32 %v4594, %v4594
      %v4825 = vmul.f32 %v4595, %v4595
      %v4826 = vmul.f32 %v4596, %v4596
      %v4827 = vmul.f32 %v4597, %v4597
      %v4828 = vmul.f32 %v4598, %v4598
      %v4829 = vmul.f32 %v4599, %v4599
      %v4830 = vmul.f32 %v4600, %v4600
      %v4831 = vmul.f32 %v4601, %v4601
      %v4832 = vadd.f32 %v4800, %v4801
      %v4833 = vadd.f32 %v4832, %v4802
      %v4834 = vadd.f32 %v4833, %v4803
      %v4835 = vadd.f32 %v4834, %v4804
      %v4836 = vadd.f32 %v4835, %v4805
      %v4837 = vadd.f32 %v4836, %v4806
      %v4838 = vadd.f32 %v4837, %v4807
      %v4839 = vadd.f32 %v4838, %v4808
      %v4840 = vadd.f32 %v4839, %v4809
      %v4841 = vadd.f32 %v4840, %v4810
      %v4842 = vadd.f32 %v4841, %v4811
      %v4843 = vadd.f32 %v4842, %v4812
      %v4844 = vadd.f32 %v4843, %v4813
      %v4845 = vadd.f32 %v4844, %v4814
      %v4846 = vadd.f32 %v4845, %v4815
      %v4847 = vadd.f32 %v4846, %v4816
      %v4848 = vadd.f32 %v4847, %v4817
      %v4849 = vadd.f32 %v4848, %v4818
      %v4850 = vadd.f32 %v4849, %v4819
      %v4851 = vadd.f32 %v4850, %v4820
      %v4852 = vadd.f32 %v4851, %v4821
      %v4853 = vadd.f32 %v4852, %v4822
      %v4854 = vadd.f32 %v4853, %v4823
      %v4855 = vadd.f32 %v4854, %v4824
      %v4856 = vadd.f32 %v4855, %v4825
      %v4857 = vadd.f32 %v4856, %v4826
      %v4858 = vadd.f32 %v4857, %v4827
      %v4859 = vadd.f32 %v4858, %v4828
      %v4860 = vadd.f32 %v4859, %v4829
      %v4861 = vadd.f32 %v4860, %v4830
      %v4862 = vadd.f32 %v4861, %v4831
      %v4863 = vrot.slane %v4862, 4
      %v4864 = vadd.f32 %v4862, %v4863
      %v4865 = vrot.slane %v4864, 2
      %v4866 = vadd.f32 %v4864, %v4865
      %v4867 = vrot.slane %v4866, 1
      %v4868 = vadd.f32 %v4866, %v4867
      %4869 = vst [vmem:[%s260] sm:$0x1] %v4868
      %p4870 = scmp.lt.s32.totalorder %s22, 1
      %s4871 = scalar_select %p4870, %s22, 1
      %p4872 = scmp.lt.s32.totalorder %s23, 0
      %s4873 = scalar_select %p4872, %s23, 0
      %s4874 = smul.addr %s4873, 32
      %s4875 = smul.addr %s4871, 32
      %s4876 = sadd.s32 %s4874, %s4875
      %s4877 = smul.addr %s4876, 4
      %s4878 = scalar_lea.vmem %s4, %s4877
      %p4879 = scmp.lt.s32.totalorder %s22, 1
      %s4880 = scalar_select %p4879, %s22, 1
      %p4881 = scmp.lt.s32.totalorder %s23, 0
      %s4882 = scalar_select %p4881, %s23, 0
      %s4883 = sadd.s32 %s4882, %s4880
      %s4884 = scalar_lea.vmem %s5, %s4883
      %p4885 = scmp.lt.s32.totalorder %s22, 1
      %s4886 = scalar_select %p4885, %s22, 1
      %p4887 = scmp.lt.s32.totalorder %s23, 0
      %s4888 = scalar_select %p4887, %s23, 0
      %s4889 = sadd.s32 %s4888, %s4886
      %s4890 = scalar_lea.vmem %s6, %s4889
      // Predicated region
      $region273: #{segnet_enc_forward.4} parent=31 // pred_check
        %p4891 = pneg %p113
      $region274: #{segnet_enc_forward.4} parent=31 // pred_check_branch
        %4893 = sbr.rel (%p4891) target = $region276
      $region275: #{segnet_enc_forward.4} parent=31 // pred_region
        _
      $region276: #{segnet_enc_forward.4} parent=31 // pred_fallthru
        _
      // Predicated region
      $region277: #{segnet_enc_forward.4} parent=31 // pred_check
        %p4894 = pneg %p141
      $region278: #{segnet_enc_forward.4} parent=31 // pred_check_branch
        %4896 = sbr.rel (%p4894) target = $region280
      $region279: #{segnet_enc_forward.4} parent=31 // pred_region
        _
      $region280: #{segnet_enc_forward.4} parent=31 // pred_fallthru
        _
      // Predicated region
      $region281: #{segnet_enc_forward.4} parent=31 // pred_check
        %p4897 = pneg %p169
      $region282: #{segnet_enc_forward.4} parent=31 // pred_check_branch
        %4899 = sbr.rel (%p4897) target = $region284
      $region283: #{segnet_enc_forward.4} parent=31 // pred_region
        _
      $region284: #{segnet_enc_forward.4} parent=31 // pred_fallthru
        _
    $region32: #{segnet_enc_forward.4} parent=5 // pred_fallthru
      _
    %p4900 = scmp.le.s32.totalorder 2, %s13
    // Predicated region
    $region285: #{segnet_enc_forward.4} parent=5 // pred_check
      %p4901 = pneg %p4900
    $region286: #{segnet_enc_forward.4} parent=5 // pred_check_branch
      %4903 = sbr.rel (%p4901) target = $region288
    $region287: #{segnet_enc_forward.4} parent=5 // pred_region
      %s4904 = ssub.s32 %s13, 2
      // Predicated region
      $region289: #{segnet_enc_forward.4} parent=287 // pred_check
        %p4905 = pneg %p119
      $region290: #{segnet_enc_forward.4} parent=287 // pred_check_branch
        %4907 = sbr.rel (%p4905) target = $region292
      $region291: #{segnet_enc_forward.4} parent=287 // pred_region
        %p4908 = scmp.lt.s32.totalorder %s24, 1
        %s4909 = scalar_select %p4908, %s24, 1
        %p4910 = scmp.lt.s32.totalorder %s25, 0
        %s4911 = scalar_select %p4910, %s25, 0
        %s4912 = smul.addr %s4911, 32
        %s4913 = smul.addr %s4909, 32
        %s4914 = sadd.s32 %s4912, %s4913
        %s4915 = smul.addr %s4914, 4
        %s4916 = scalar_lea.vmem %s4, %s4915
      $region292: #{segnet_enc_forward.4} parent=287 // pred_fallthru
        _
      // Predicated region
      $region293: #{segnet_enc_forward.4} parent=287 // pred_check
        %p4917 = pneg %p147
      $region294: #{segnet_enc_forward.4} parent=287 // pred_check_branch
        %4919 = sbr.rel (%p4917) target = $region296
      $region295: #{segnet_enc_forward.4} parent=287 // pred_region
        %p4920 = scmp.lt.s32.totalorder %s24, 1
        %s4921 = scalar_select %p4920, %s24, 1
        %p4922 = scmp.lt.s32.totalorder %s25, 0
        %s4923 = scalar_select %p4922, %s25, 0
        %s4924 = sadd.s32 %s4923, %s4921
        %s4925 = scalar_lea.vmem %s5, %s4924
      $region296: #{segnet_enc_forward.4} parent=287 // pred_fallthru
        _
      // Predicated region
      $region297: #{segnet_enc_forward.4} parent=287 // pred_check
        %p4926 = pneg %p175
      $region298: #{segnet_enc_forward.4} parent=287 // pred_check_branch
        %4928 = sbr.rel (%p4926) target = $region300
      $region299: #{segnet_enc_forward.4} parent=287 // pred_region
        %p4929 = scmp.lt.s32.totalorder %s24, 1
        %s4930 = scalar_select %p4929, %s24, 1
        %p4931 = scmp.lt.s32.totalorder %s25, 0
        %s4932 = scalar_select %p4931, %s25, 0
        %s4933 = sadd.s32 %s4932, %s4930
        %s4934 = scalar_lea.vmem %s6, %s4933
      $region300: #{segnet_enc_forward.4} parent=287 // pred_fallthru
        _
    $region288: #{segnet_enc_forward.4} parent=5 // pred_fallthru
      _
  $region6: #{segnet_enc_forward.4} parent=0 // loop_footer
    %s17 = sadd.s32 1, %s13
  $region7: #{segnet_enc_forward.4} parent=0 // loop_footer_branch
    %12 = sbr.rel target = $region3
  $region8: #{segnet_enc_forward.4} parent=0 // loop_exit
    _
  %4935 = vsyncmov [#allocation4]
  %s4936 = vpop.sfrf %4935
  %p4937 = scmp.eq.s32.totalorder %s4936, 0
  %p4938 = pneg %p4937
  %4940 = shalt.err (%p4938)
  %s4941 = scalar_lea.sflag [#allocation4], 1
  %4942 = vsyncmov %s4941
  %s4943 = vpop.sfrf %4942
  %p4944 = scmp.eq.s32.totalorder %s4943, 0
  %p4945 = pneg %p4944
  %4947 = shalt.err (%p4945)
  %s4948 = scalar_lea.sflag [#allocation4], 2
  %4949 = vsyncmov %s4948
  %s4950 = vpop.sfrf %4949
  %p4951 = scmp.eq.s32.totalorder %s4950, 0
  %p4952 = pneg %p4951
  %4954 = shalt.err (%p4952)
  %s4955 = scalar_lea.sflag [#allocation4], 3
  %4956 = vsyncmov %s4955
  %s4957 = vpop.sfrf %4956
  %p4958 = scmp.eq.s32.totalorder %s4957, 0
  %p4959 = pneg %p4958
  %4961 = shalt.err (%p4959)
  %s4962 = scalar_lea.sflag [#allocation4], 4
  %4963 = vsyncmov %s4962
  %s4964 = vpop.sfrf %4963
  %p4965 = scmp.eq.s32.totalorder %s4964, 0
  %p4966 = pneg %p4965
  %4968 = shalt.err (%p4966)
  %s4969 = scalar_lea.sflag [#allocation4], 5
  %4970 = vsyncmov %s4969
  %s4971 = vpop.sfrf %4970
  %p4972 = scmp.eq.s32.totalorder %s4971, 0
  %p4973 = pneg %p4972
  %4975 = shalt.err (%p4973)

// kernel: segnet_enc_forward.5
$region0: #{segnet_enc_forward.5}
  #allocation0 [shape = 'u32[]', space=smem, size = 0x4, offset = 0x4, fixed_abs, tag = 'smem constant byte address 0x4 - core index']
  #allocation1 [shape = 'u32[144,128]{1,0:T(1,128)}', space=vmem, size = 0x12000, scoped, tag = 'internal scratch']
  #allocation2 [shape = 'bf16[2,18,16,128]{3,2,1,0:T(16,128)(2,1)}', space=vmem, size = 0x24000, scoped, tag = 'scratch operand']
  #allocation3 [shape = 'bf16[18,18,128]{2,1,0:T(8,128)(2,1)}', space=vmem, size = 0x1b000, scoped, tag = 'scratch operand']
  #allocation4 [shape = 's32[6]{0}', space=sflag, size = 0x18, scoped, tag = 'scratch operand']
  #allocation5 [shape = 's32[]', space=sflag, size = 0x4, offset = 0, fixed_abs, tag = 'sflag constant byte address 0x0 - dummy sync flag']
  #allocation6 [shape = 's32[]', space=sflag, size = 0x4, offset = 0, fixed_abs, tag = 'sflag constant byte address 0x0 - dummy sync flag']
  #allocation7 [shape = 's32[]', space=sflag, size = 0x4, offset = 0, fixed_abs, tag = 'sflag constant byte address 0x0 - dummy sync flag']
  #allocation8 [shape = 's32[]', space=sflag, size = 0x4, offset = 0, fixed_abs, tag = 'sflag constant byte address 0x0 - dummy sync flag']
  #allocation9 [shape = 's32[]', space=sflag, size = 0x4, offset = 0, fixed_abs, tag = 'sflag constant byte address 0x0 - dummy sync flag']
  #allocation10 [shape = 's32[]', space=sflag, size = 0x4, offset = 0, fixed_abs, tag = 'sflag constant byte address 0x0 - dummy sync flag']
  %s0 = inlined_call_operand.vmem [shape: bf16[2,16,16,128], index: 0, kind: input, shape index: {}]
  %s1 = inlined_call_operand.vmem [shape: bf16[3,384,128], index: 1, kind: input, shape index: {}]
  %s2 = inlined_call_operand.vmem [shape: f32[1,128], index: 2, kind: input, shape index: {}]
  %s3 = inlined_call_operand.vmem [shape: f32[1,128], index: 3, kind: input, shape index: {}]
  %s4 = inlined_call_operand.vmem [shape: bf16[2,1,256,128], index: 4, kind: output, shape index: {0}]
  %s5 = inlined_call_operand.vmem [shape: f32[2,1,1,128], index: 5, kind: output, shape index: {1}]
  %s6 = inlined_call_operand.vmem [shape: f32[2,1,1,128], index: 6, kind: output, shape index: {2}]
  %7 = xla_tuple %s4, %s5, %s6
  %s8 = sld [smem:[#allocation0]]
  $region301: #{segnet_enc_forward.5} parent=0
    _
  %s10 = ssub.s32 1, %s8
  %s11 = scalar_select 0, %s10, %s8
  loop: start=0, step=1, limit=4
  $region2: #{segnet_enc_forward.5} parent=0 // loop_pre_header
    _
  $region3: #{segnet_enc_forward.5} parent=0 // loop_header
    %s13 = sphi 0, %s17
    %p14 = scmp.ge.s32.totalorder %s13, 4
    %s20 = sphi 0, %s32
    %s21 = sphi 0, %s28
    %s22 = sphi 0, %s20
    %s23 = sphi 0, %s21
    %s24 = sphi 0, %s22
    %s25 = sphi 0, %s23
    %s33 = sphi 0, %s33
    %s35 = sphi 0, %s33
    %s36 = sphi 0, %s35
    %s50 = sphi 0, %s36
    %s54 = sphi 0, %s54
    %s56 = sphi 0, %s54
    %s57 = sphi 0, %s56
    %s71 = sphi 0, %s57
    %s75 = sphi 0, %s75
    %s77 = sphi 0, %s75
    %s78 = sphi 0, %s77
    %s92 = sphi 0, %s78
    %s100 = sphi 0, %s102
    %s103 = sphi 0, %s100
    %s104 = sphi 0, %s103
    %s120 = sphi 0, %s104
    %s128 = sphi 0, %s130
    %s131 = sphi 0, %s128
    %s132 = sphi 0, %s131
    %s148 = sphi 0, %s132
    %s156 = sphi 0, %s158
    %s159 = sphi 0, %s156
    %s160 = sphi 0, %s159
    %s176 = sphi 0, %s160
  $region4: #{segnet_enc_forward.5} parent=0 // loop_header_branch
    %16 = sbr.rel (%p14) target = $region8
  $region5: #{segnet_enc_forward.5} parent=0 // loop_body
    %s18 = ssub.s32 %s13, 1
    %s19 = ssub.s32 %s13, 2
    %s26 = sadd.s32 1, %s21
    %p27 = scmp.ge.s32.totalorder %s26, 1
    %s28 = scalar_select %p27, 0, %s26
    %s29 = sadd.s32 1, %s20
    %s30 = scalar_select %p27, %s29, %s20
    %p31 = scmp.ge.s32.totalorder %s30, 2
    %s32 = scalar_select %p31, 0, %s30
    %s34 = sadd.s32 %s33, 1
    %p37 = scmp.eq.s32.totalorder %s13, 1
    %p38 = scmp.ne.s32.totalorder %s33, %s35
    %p39 = scmp.eq.s32.totalorder %s13, 0
    %p40 = por %p38, %p39
    %p41 = scmp.ne.s32.totalorder %s33, %s35
    %p42 = scmp.eq.s32.totalorder %s18, 1
    %p43 = por %p41, %p42
    %p44 = scmp.ne.s32.totalorder %s35, %s36
    %p45 = scmp.eq.s32.totalorder %s18, 0
    %p46 = por %p44, %p45
    %p47 = scmp.ne.s32.totalorder %s35, %s36
    %p48 = scmp.eq.s32.totalorder %s19, 1
    %p49 = por %p47, %p48
    %p51 = scmp.ne.s32.totalorder %s36, %s50
    %p52 = scmp.eq.s32.totalorder %s19, 0
    %p53 = por %p51, %p52
    %s55 = sadd.s32 %s54, 1
    %p58 = scmp.eq.s32.totalorder %s13, 1
    %p59 = scmp.ne.s32.totalorder %s54, %s56
    %p60 = scmp.eq.s32.totalorder %s13, 0
    %p61 = por %p59, %p60
    %p62 = scmp.ne.s32.totalorder %s54, %s56
    %p63 = scmp.eq.s32.totalorder %s18, 1
    %p64 = por %p62, %p63
    %p65 = scmp.ne.s32.totalorder %s56, %s57
    %p66 = scmp.eq.s32.totalorder %s18, 0
    %p67 = por %p65, %p66
    %p68 = scmp.ne.s32.totalorder %s56, %s57
    %p69 = scmp.eq.s32.totalorder %s19, 1
    %p70 = por %p68, %p69
    %p72 = scmp.ne.s32.totalorder %s57, %s71
    %p73 = scmp.eq.s32.totalorder %s19, 0
    %p74 = por %p72, %p73
    %s76 = sadd.s32 %s75, 1
    %p79 = scmp.eq.s32.totalorder %s13, 1
    %p80 = scmp.ne.s32.totalorder %s75, %s77
    %p81 = scmp.eq.s32.totalorder %s13, 0
    %p82 = por %p80, %p81
    %p83 = scmp.ne.s32.totalorder %s75, %s77
    %p84 = scmp.eq.s32.totalorder %s18, 1
    %p85 = por %p83, %p84
    %p86 = scmp.ne.s32.totalorder %s77, %s78
    %p87 = scmp.eq.s32.totalorder %s18, 0
    %p88 = por %p86, %p87
    %p89 = scmp.ne.s32.totalorder %s77, %s78
    %p90 = scmp.eq.s32.totalorder %s19, 1
    %p91 = por %p89, %p90
    %p93 = scmp.ne.s32.totalorder %s78, %s92
    %p94 = scmp.eq.s32.totalorder %s19, 0
    %p95 = por %p93, %p94
    %s96 = ssub.s32 %s20, %s32
    %s97 = ssub.s32 %s21, %s28
    %s98 = sor.u32 %s96, %s97
    %p99 = scmp.eq.s32.totalorder %s98, 0
    %s101 = sadd.s32 %s100, 1
    %s102 = scalar_select %p99, %s100, %s101
    %p105 = pneg %p99
    %p106 = scmp.eq.s32.totalorder %s13, 1
    %p107 = por %p105, %p106
    %p108 = scmp.ne.s32.totalorder %s100, %s103
    %p109 = scmp.eq.s32.totalorder %s13, 0
    %p110 = por %p108, %p109
    %p111 = scmp.ne.s32.totalorder %s100, %s103
    %p112 = scmp.eq.s32.totalorder %s18, 1
    %p113 = por %p111, %p112
    %p114 = scmp.ne.s32.totalorder %s103, %s104
    %p115 = scmp.eq.s32.totalorder %s18, 0
    %p116 = por %p114, %p115
    %p117 = scmp.ne.s32.totalorder %s103, %s104
    %p118 = scmp.eq.s32.totalorder %s19, 1
    %p119 = por %p117, %p118
    %p121 = scmp.ne.s32.totalorder %s104, %s120
    %p122 = scmp.eq.s32.totalorder %s19, 0
    %p123 = por %p121, %p122
    %s124 = ssub.s32 %s20, %s32
    %s125 = ssub.s32 %s21, %s28
    %s126 = sor.u32 %s124, %s125
    %p127 = scmp.eq.s32.totalorder %s126, 0
    %s129 = sadd.s32 %s128, 1
    %s130 = scalar_select %p127, %s128, %s129
    %p133 = pneg %p127
    %p134 = scmp.eq.s32.totalorder %s13, 1
    %p135 = por %p133, %p134
    %p136 = scmp.ne.s32.totalorder %s128, %s131
    %p137 = scmp.eq.s32.totalorder %s13, 0
    %p138 = por %p136, %p137
    %p139 = scmp.ne.s32.totalorder %s128, %s131
    %p140 = scmp.eq.s32.totalorder %s18, 1
    %p141 = por %p139, %p140
    %p142 = scmp.ne.s32.totalorder %s131, %s132
    %p143 = scmp.eq.s32.totalorder %s18, 0
    %p144 = por %p142, %p143
    %p145 = scmp.ne.s32.totalorder %s131, %s132
    %p146 = scmp.eq.s32.totalorder %s19, 1
    %p147 = por %p145, %p146
    %p149 = scmp.ne.s32.totalorder %s132, %s148
    %p150 = scmp.eq.s32.totalorder %s19, 0
    %p151 = por %p149, %p150
    %s152 = ssub.s32 %s20, %s32
    %s153 = ssub.s32 %s21, %s28
    %s154 = sor.u32 %s152, %s153
    %p155 = scmp.eq.s32.totalorder %s154, 0
    %s157 = sadd.s32 %s156, 1
    %s158 = scalar_select %p155, %s156, %s157
    %p161 = pneg %p155
    %p162 = scmp.eq.s32.totalorder %s13, 1
    %p163 = por %p161, %p162
    %p164 = scmp.ne.s32.totalorder %s156, %s159
    %p165 = scmp.eq.s32.totalorder %s13, 0
    %p166 = por %p164, %p165
    %p167 = scmp.ne.s32.totalorder %s156, %s159
    %p168 = scmp.eq.s32.totalorder %s18, 1
    %p169 = por %p167, %p168
    %p170 = scmp.ne.s32.totalorder %s159, %s160
    %p171 = scmp.eq.s32.totalorder %s18, 0
    %p172 = por %p170, %p171
    %p173 = scmp.ne.s32.totalorder %s159, %s160
    %p174 = scmp.eq.s32.totalorder %s19, 1
    %p175 = por %p173, %p174
    %p177 = scmp.ne.s32.totalorder %s160, %s176
    %p178 = scmp.eq.s32.totalorder %s19, 0
    %p179 = por %p177, %p178
    %p180 = scmp.le.s32.totalorder 1, %s13
    %p181 = scmp.lt.s32.totalorder %s13, 3
    %p182 = pnand %p180, %p181
    %p183 = pneg %p182
    // Predicated region
    $region9: #{segnet_enc_forward.5} parent=5 // pred_check
      _
    $region10: #{segnet_enc_forward.5} parent=5 // pred_check_branch
      %185 = sbr.rel (%p182) target = $region12
    $region11: #{segnet_enc_forward.5} parent=5 // pred_region
      %s186 = ssub.s32 %s13, 1
      // Predicated region
      $region13: #{segnet_enc_forward.5} parent=11 // pred_check
        %p187 = pneg %p46
      $region14: #{segnet_enc_forward.5} parent=11 // pred_check_branch
        %189 = sbr.rel (%p187) target = $region16
      $region15: #{segnet_enc_forward.5} parent=11 // pred_region
        _
      $region16: #{segnet_enc_forward.5} parent=11 // pred_fallthru
        _
      // Predicated region
      $region17: #{segnet_enc_forward.5} parent=11 // pred_check
        %p190 = pneg %p67
      $region18: #{segnet_enc_forward.5} parent=11 // pred_check_branch
        %192 = sbr.rel (%p190) target = $region20
      $region19: #{segnet_enc_forward.5} parent=11 // pred_region
        _
      $region20: #{segnet_enc_forward.5} parent=11 // pred_fallthru
        _
      // Predicated region
      $region21: #{segnet_enc_forward.5} parent=11 // pred_check
        %p193 = pneg %p88
      $region22: #{segnet_enc_forward.5} parent=11 // pred_check_branch
        %195 = sbr.rel (%p193) target = $region24
      $region23: #{segnet_enc_forward.5} parent=11 // pred_region
        _
      $region24: #{segnet_enc_forward.5} parent=11 // pred_fallthru
        _
    $region12: #{segnet_enc_forward.5} parent=5 // pred_fallthru
      _
    %p196 = scmp.lt.s32.totalorder %s13, 2
    // Predicated region
    $region25: #{segnet_enc_forward.5} parent=5 // pred_check
      %p197 = pneg %p196
    $region26: #{segnet_enc_forward.5} parent=5 // pred_check_branch
      %199 = sbr.rel (%p197) target = $region28
    $region27: #{segnet_enc_forward.5} parent=5 // pred_region
      _
    $region28: #{segnet_enc_forward.5} parent=5 // pred_fallthru
      _
    %p200 = scmp.le.s32.totalorder 1, %s13
    %p201 = scmp.lt.s32.totalorder %s13, 3
    %p202 = pnand %p200, %p201
    %p203 = pneg %p202
    // Predicated region
    $region29: #{segnet_enc_forward.5} parent=5 // pred_check
      _
    $region30: #{segnet_enc_forward.5} parent=5 // pred_check_branch
      %205 = sbr.rel (%p202) target = $region32
    $region31: #{segnet_enc_forward.5} parent=5 // pred_region
      %s206 = ssub.s32 %s13, 1
      %p207 = pneg %p46
      %p208 = pneg %p43
      %p209 = pneg %p67
      %p210 = pneg %p64
      %p211 = pneg %p88
      %p212 = pneg %p85
      %p213 = pneg %p116
      %p214 = pneg %p113
      %p215 = scmp.lt.s32.totalorder %s22, 1
      %s216 = scalar_select %p215, %s22, 1
      %p217 = scmp.lt.s32.totalorder %s23, 0
      %s218 = scalar_select %p217, %s23, 0
      %s219 = smul.addr %s218, 32
      %s220 = smul.addr %s216, 32
      %s221 = sadd.s32 %s219, %s220
      %s222 = smul.addr %s221, 4
      %s223 = scalar_lea.vmem %s4, %s222
      %p224 = pneg %p144
      %p225 = pneg %p141
      %p226 = scmp.lt.s32.totalorder %s22, 1
      %s227 = scalar_select %p226, %s22, 1
      %p228 = scmp.lt.s32.totalorder %s23, 0
      %s229 = scalar_select %p228, %s23, 0
      %s230 = sadd.s32 %s229, %s227
      %s231 = scalar_lea.vmem %s5, %s230
      %p232 = pneg %p172
      %p233 = pneg %p169
      %p234 = scmp.lt.s32.totalorder %s22, 1
      %s235 = scalar_select %p234, %s22, 1
      %p236 = scmp.lt.s32.totalorder %s23, 0
      %s237 = scalar_select %p236, %s23, 0
      %s238 = sadd.s32 %s237, %s235
      %s239 = scalar_lea.vmem %s6, %s238
      %p240 = scmp.lt.s32.totalorder %s22, 1
      %s241 = scalar_select %p240, %s22, 1
      %p242 = scmp.lt.s32.totalorder %s23, 0
      %s243 = scalar_select %p242, %s23, 0
      %s244 = smul.addr %s243, 32
      %s245 = smul.addr %s241, 32
      %s246 = sadd.s32 %s244, %s245
      %s247 = smul.addr %s246, 4
      %s248 = scalar_lea.vmem %s4, %s247
      %p249 = scmp.lt.s32.totalorder %s22, 1
      %s250 = scalar_select %p249, %s22, 1
      %p251 = scmp.lt.s32.totalorder %s23, 0
      %s252 = scalar_select %p251, %s23, 0
      %s253 = sadd.s32 %s252, %s250
      %s254 = scalar_lea.vmem %s5, %s253
      %p255 = scmp.lt.s32.totalorder %s22, 1
      %s256 = scalar_select %p255, %s22, 1
      %p257 = scmp.lt.s32.totalorder %s23, 0
      %s258 = scalar_select %p257, %s23, 0
      %s259 = sadd.s32 %s258, %s256
      %s260 = scalar_lea.vmem %s6, %s259
      %p262 = scmp.lt.s32.totalorder %s23, 0
      %s263 = ssub.s32 0, %s23
      %s264 = scalar_select %p262, %s263, %s23
      %s265 = sand.u32 %s264, 1
      %s266 = ssub.s32 0, %s265
      %s267 = scalar_select %p262, %s266, %s265
      %p268 = scmp.ne.s32.totalorder %s267, 0
      %p269 = scmp.lt.s32.totalorder %s267, 0
      %p270 = pnand %p269, %p268
      %p271 = pneg %p270
      %s272 = sadd.s32 %s267, 2
      %s273 = scalar_select %p271, %s272, %s267
      %p274 = scmp.eq.s32.totalorder %s23, 0
      // Predicated region
      $region33: #{segnet_enc_forward.5} parent=31 // pred_check
        %p275 = pneg %p274
      $region34: #{segnet_enc_forward.5} parent=31 // pred_check_branch
        %277 = sbr.rel (%p275) target = $region36
      $region35: #{segnet_enc_forward.5} parent=31 // pred_region
        %s278 = smul.u32 %s23, 16
        %s279 = smul.u32 %s278, 2
        %s280 = smul.u32 %s22, 32
        %s281 = sadd.s32 %s279, %s280
        %s282 = smul.addr %s281, 4
        %s283 = scalar_lea.vmem %s0, %s282
        %s284 = smul.u32 %s273, 18
        %s285 = sadd.s32 1, %s284
        %s286 = smul.addr %s285, 8
        %s287 = scalar_lea.vmem [#allocation2], %s286
        %s288 = smul.u32 %s273, 3
        %s289 = scalar_lea.sflag [#allocation4], %s288
        %p291 = scmp.lt.u32.totalorder 128, 8
        %p292 = pneg %p291
        // Predicated region
        $region37: #{segnet_enc_forward.5} parent=35 // pred_check
          _
        $region38: #{segnet_enc_forward.5} parent=35 // pred_check_branch
          %294 = sbr.rel (%p291) target = $region40
        $region39: #{segnet_enc_forward.5} parent=35 // pred_region
          %s309 = sand.u32 128, 7
          %p310 = scmp.eq.s32.totalorder %s309, 0
          // Predicated region
          $region52: #{segnet_enc_forward.5} parent=39 // pred_check
            %p311 = pneg %p310
          $region53: #{segnet_enc_forward.5} parent=39 // pred_check_branch
            %313 = sbr.rel (%p311) target = $region55
          $region54: #{segnet_enc_forward.5} parent=39 // pred_region
            loop: start=0, step=1, limit=1
            $region56: #{segnet_enc_forward.5} parent=54 // loop_pre_header
              _
            $region57: #{segnet_enc_forward.5} parent=54 // loop_header
              %s315 = sphi 0, %s319
              %p316 = scmp.ge.s32.totalorder %s315, 1
              %s320 = sphi %s283, %s283
              %s321 = sphi %s287, %s287
            $region58: #{segnet_enc_forward.5} parent=54 // loop_header_branch
              %318 = sbr.rel (%p316) target = $region62
            $region59: #{segnet_enc_forward.5} parent=54 // loop_body
              %v322 = vld [vmem:[%s320] sm:$0xff]
              %323 = vst [vmem:[%s321] sm:$0xff] %v322
              %v324 = vld [vmem:[%s320 + $0x8] sm:$0xff]
              %325 = vst [vmem:[%s321 + $0x8] sm:$0xff] %v324
              %v326 = vld [vmem:[%s320 + $0x10] sm:$0xff]
              %327 = vst [vmem:[%s321 + $0x10] sm:$0xff] %v326
              %v328 = vld [vmem:[%s320 + $0x18] sm:$0xff]
              %329 = vst [vmem:[%s321 + $0x18] sm:$0xff] %v328
              %v330 = vld [vmem:[%s320 + $0x20] sm:$0xff]
              %331 = vst [vmem:[%s321 + $0x20] sm:$0xff] %v330
              %v332 = vld [vmem:[%s320 + $0x28] sm:$0xff]
              %333 = vst [vmem:[%s321 + $0x28] sm:$0xff] %v332
              %v334 = vld [vmem:[%s320 + $0x30] sm:$0xff]
              %335 = vst [vmem:[%s321 + $0x30] sm:$0xff] %v334
              %v336 = vld [vmem:[%s320 + $0x38] sm:$0xff]
              %337 = vst [vmem:[%s321 + $0x38] sm:$0xff] %v336
              %v338 = vld [vmem:[%s320 + $0x40] sm:$0xff]
              %339 = vst [vmem:[%s321 + $0x40] sm:$0xff] %v338
              %v340 = vld [vmem:[%s320 + $0x48] sm:$0xff]
              %341 = vst [vmem:[%s321 + $0x48] sm:$0xff] %v340
              %v342 = vld [vmem:[%s320 + $0x50] sm:$0xff]
              %343 = vst [vmem:[%s321 + $0x50] sm:$0xff] %v342
              %v344 = vld [vmem:[%s320 + $0x58] sm:$0xff]
              %345 = vst [vmem:[%s321 + $0x58] sm:$0xff] %v344
              %v346 = vld [vmem:[%s320 + $0x60] sm:$0xff]
              %347 = vst [vmem:[%s321 + $0x60] sm:$0xff] %v346
              %v348 = vld [vmem:[%s320 + $0x68] sm:$0xff]
              %349 = vst [vmem:[%s321 + $0x68] sm:$0xff] %v348
              %v350 = vld [vmem:[%s320 + $0x70] sm:$0xff]
              %351 = vst [vmem:[%s321 + $0x70] sm:$0xff] %v350
              %v352 = vld [vmem:[%s320 + $0x78] sm:$0xff]
              %353 = vst [vmem:[%s321 + $0x78] sm:$0xff] %v352
            $region60: #{segnet_enc_forward.5} parent=54 // loop_footer
              %s319 = sadd.s32 1, %s315
            $region61: #{segnet_enc_forward.5} parent=54 // loop_footer_branch
              %314 = sbr.rel target = $region57
            $region62: #{segnet_enc_forward.5} parent=54 // loop_exit
              _
          $region55: #{segnet_enc_forward.5} parent=39 // pred_fallthru
            _
          %p354 = pneg %p310
          // Predicated region
          $region63: #{segnet_enc_forward.5} parent=39 // pred_check
            _
          $region64: #{segnet_enc_forward.5} parent=39 // pred_check_branch
            %356 = sbr.rel (%p310) target = $region66
          $region65: #{segnet_enc_forward.5} parent=39 // pred_region
            %s357 = sand.u32 128, 7
          $region66: #{segnet_enc_forward.5} parent=39 // pred_fallthru
            _
        $region40: #{segnet_enc_forward.5} parent=35 // pred_fallthru
          _
        // Predicated region
        $region41: #{segnet_enc_forward.5} parent=35 // pred_check
          %p295 = pneg %p291
        $region42: #{segnet_enc_forward.5} parent=35 // pred_check_branch
          %297 = sbr.rel (%p295) target = $region44
        $region43: #{segnet_enc_forward.5} parent=35 // pred_region
          %s298 = sshllo.u32 0, 128
          loop: start=0, step=1, limit=1
          $region45: #{segnet_enc_forward.5} parent=43 // loop_pre_header
            _
          $region46: #{segnet_enc_forward.5} parent=43 // loop_header
            %s300 = sphi 0, %s304
            %p301 = scmp.ge.s32.totalorder %s300, 1
            %s305 = sphi %s283, %s283
            %s306 = sphi %s287, %s287
          $region47: #{segnet_enc_forward.5} parent=43 // loop_header_branch
            %303 = sbr.rel (%p301) target = $region51
          $region48: #{segnet_enc_forward.5} parent=43 // loop_body
            %v307 = vld [vmem:[%s305] sm:%s298]
            %308 = vst [vmem:[%s306] sm:%s298] %v307
          $region49: #{segnet_enc_forward.5} parent=43 // loop_footer
            %s304 = sadd.s32 1, %s300
          $region50: #{segnet_enc_forward.5} parent=43 // loop_footer_branch
            %299 = sbr.rel target = $region46
          $region51: #{segnet_enc_forward.5} parent=43 // loop_exit
            _
        $region44: #{segnet_enc_forward.5} parent=35 // pred_fallthru
          _
        // Predicated region
        $region67: #{segnet_enc_forward.5} parent=35 // pred_check
          _
        $region68: #{segnet_enc_forward.5} parent=35 // pred_check_branch
          %360 = sbr.rel (0) target = $region70
        $region69: #{segnet_enc_forward.5} parent=35 // pred_region
          %361 = vsyncadd %s289, 2048
        $region70: #{segnet_enc_forward.5} parent=35 // pred_fallthru
          _
        %p362 = scmp.gt.s32.totalorder %s23, 0
        // Predicated region
        $region71: #{segnet_enc_forward.5} parent=35 // pred_check
          %p363 = pneg %p362
        $region72: #{segnet_enc_forward.5} parent=35 // pred_check_branch
          %365 = sbr.rel (%p363) target = $region74
        $region73: #{segnet_enc_forward.5} parent=35 // pred_region
          %s366 = ssub.s32 %s278, 1
          %s367 = smul.u32 %s366, 2
          %s368 = sadd.s32 %s367, %s280
          %s369 = smul.addr %s368, 4
          %s370 = scalar_lea.vmem %s0, %s369
          %s371 = smul.addr %s284, 8
          %s372 = scalar_lea.vmem [#allocation2], %s371
          %s373 = sadd.s32 1, %s288
          %s374 = scalar_lea.sflag [#allocation4], %s373
          %p376 = scmp.lt.u32.totalorder 8, 8
          %p377 = pneg %p376
          // Predicated region
          $region75: #{segnet_enc_forward.5} parent=73 // pred_check
            _
          $region76: #{segnet_enc_forward.5} parent=73 // pred_check_branch
            %379 = sbr.rel (%p376) target = $region78
          $region77: #{segnet_enc_forward.5} parent=73 // pred_region
            %s394 = sand.u32 8, 7
            %p395 = scmp.eq.s32.totalorder %s394, 0
            // Predicated region
            $region90: #{segnet_enc_forward.5} parent=77 // pred_check
              %p396 = pneg %p395
            $region91: #{segnet_enc_forward.5} parent=77 // pred_check_branch
              %398 = sbr.rel (%p396) target = $region93
            $region92: #{segnet_enc_forward.5} parent=77 // pred_region
              loop: start=0, step=1, limit=1
              $region94: #{segnet_enc_forward.5} parent=92 // loop_pre_header
                _
              $region95: #{segnet_enc_forward.5} parent=92 // loop_header
                %s400 = sphi 0, %s404
                %p401 = scmp.ge.s32.totalorder %s400, 1
                %s405 = sphi %s370, %s370
                %s406 = sphi %s372, %s372
              $region96: #{segnet_enc_forward.5} parent=92 // loop_header_branch
                %403 = sbr.rel (%p401) target = $region100
              $region97: #{segnet_enc_forward.5} parent=92 // loop_body
                %v407 = vld [vmem:[%s405] sm:$0xff]
                %408 = vst [vmem:[%s406] sm:$0xff] %v407
              $region98: #{segnet_enc_forward.5} parent=92 // loop_footer
                %s404 = sadd.s32 1, %s400
              $region99: #{segnet_enc_forward.5} parent=92 // loop_footer_branch
                %399 = sbr.rel target = $region95
              $region100: #{segnet_enc_forward.5} parent=92 // loop_exit
                _
            $region93: #{segnet_enc_forward.5} parent=77 // pred_fallthru
              _
            %p409 = pneg %p395
            // Predicated region
            $region101: #{segnet_enc_forward.5} parent=77 // pred_check
              _
            $region102: #{segnet_enc_forward.5} parent=77 // pred_check_branch
              %411 = sbr.rel (%p395) target = $region104
            $region103: #{segnet_enc_forward.5} parent=77 // pred_region
              %s412 = sand.u32 8, 7
            $region104: #{segnet_enc_forward.5} parent=77 // pred_fallthru
              _
          $region78: #{segnet_enc_forward.5} parent=73 // pred_fallthru
            _
          // Predicated region
          $region79: #{segnet_enc_forward.5} parent=73 // pred_check
            %p380 = pneg %p376
          $region80: #{segnet_enc_forward.5} parent=73 // pred_check_branch
            %382 = sbr.rel (%p380) target = $region82
          $region81: #{segnet_enc_forward.5} parent=73 // pred_region
            %s383 = sshllo.u32 0, 8
            loop: start=0, step=1, limit=1
            $region83: #{segnet_enc_forward.5} parent=81 // loop_pre_header
              _
            $region84: #{segnet_enc_forward.5} parent=81 // loop_header
              %s385 = sphi 0, %s389
              %p386 = scmp.ge.s32.totalorder %s385, 1
              %s390 = sphi %s370, %s370
              %s391 = sphi %s372, %s372
            $region85: #{segnet_enc_forward.5} parent=81 // loop_header_branch
              %388 = sbr.rel (%p386) target = $region89
            $region86: #{segnet_enc_forward.5} parent=81 // loop_body
              %v392 = vld [vmem:[%s390] sm:%s383]
              %393 = vst [vmem:[%s391] sm:%s383] %v392
            $region87: #{segnet_enc_forward.5} parent=81 // loop_footer
              %s389 = sadd.s32 1, %s385
            $region88: #{segnet_enc_forward.5} parent=81 // loop_footer_branch
              %384 = sbr.rel target = $region84
            $region89: #{segnet_enc_forward.5} parent=81 // loop_exit
              _
          $region82: #{segnet_enc_forward.5} parent=73 // pred_fallthru
            _
          // Predicated region
          $region105: #{segnet_enc_forward.5} parent=73 // pred_check
            _
          $region106: #{segnet_enc_forward.5} parent=73 // pred_check_branch
            %415 = sbr.rel (0) target = $region108
          $region107: #{segnet_enc_forward.5} parent=73 // pred_region
            %416 = vsyncadd %s374, 128
          $region108: #{segnet_enc_forward.5} parent=73 // pred_fallthru
            _
        $region74: #{segnet_enc_forward.5} parent=35 // pred_fallthru
          _
        %p417 = scmp.lt.s32.totalorder %s23, 0
        // Predicated region
        $region109: #{segnet_enc_forward.5} parent=35 // pred_check
          %p418 = pneg %p417
        $region110: #{segnet_enc_forward.5} parent=35 // pred_check_branch
          %420 = sbr.rel (%p418) target = $region112
        $region111: #{segnet_enc_forward.5} parent=35 // pred_region
          %s421 = sadd.s32 %s23, 1
          %s422 = smul.u32 %s421, 16
          %s423 = smul.u32 %s422, 2
          %s424 = sadd.s32 %s423, %s280
          %s425 = smul.addr %s424, 4
          %s426 = scalar_lea.vmem %s0, %s425
          %s427 = sadd.s32 17, %s284
          %s428 = smul.addr %s427, 8
          %s429 = scalar_lea.vmem [#allocation2], %s428
          %s430 = sadd.s32 2, %s288
          %s431 = scalar_lea.sflag [#allocation4], %s430
          %p433 = scmp.lt.u32.totalorder 8, 8
          %p434 = pneg %p433
          // Predicated region
          $region113: #{segnet_enc_forward.5} parent=111 // pred_check
            _
          $region114: #{segnet_enc_forward.5} parent=111 // pred_check_branch
            %436 = sbr.rel (%p433) target = $region116
          $region115: #{segnet_enc_forward.5} parent=111 // pred_region
            %s451 = sand.u32 8, 7
            %p452 = scmp.eq.s32.totalorder %s451, 0
            // Predicated region
            $region128: #{segnet_enc_forward.5} parent=115 // pred_check
              %p453 = pneg %p452
            $region129: #{segnet_enc_forward.5} parent=115 // pred_check_branch
              %455 = sbr.rel (%p453) target = $region131
            $region130: #{segnet_enc_forward.5} parent=115 // pred_region
              loop: start=0, step=1, limit=1
              $region132: #{segnet_enc_forward.5} parent=130 // loop_pre_header
                _
              $region133: #{segnet_enc_forward.5} parent=130 // loop_header
                %s457 = sphi 0, %s461
                %p458 = scmp.ge.s32.totalorder %s457, 1
                %s462 = sphi %s426, %s426
                %s463 = sphi %s429, %s429
              $region134: #{segnet_enc_forward.5} parent=130 // loop_header_branch
                %460 = sbr.rel (%p458) target = $region138
              $region135: #{segnet_enc_forward.5} parent=130 // loop_body
                %v464 = vld [vmem:[%s462] sm:$0xff]
                %465 = vst [vmem:[%s463] sm:$0xff] %v464
              $region136: #{segnet_enc_forward.5} parent=130 // loop_footer
                %s461 = sadd.s32 1, %s457
              $region137: #{segnet_enc_forward.5} parent=130 // loop_footer_branch
                %456 = sbr.rel target = $region133
              $region138: #{segnet_enc_forward.5} parent=130 // loop_exit
                _
            $region131: #{segnet_enc_forward.5} parent=115 // pred_fallthru
              _
            %p466 = pneg %p452
            // Predicated region
            $region139: #{segnet_enc_forward.5} parent=115 // pred_check
              _
            $region140: #{segnet_enc_forward.5} parent=115 // pred_check_branch
              %468 = sbr.rel (%p452) target = $region142
            $region141: #{segnet_enc_forward.5} parent=115 // pred_region
              %s469 = sand.u32 8, 7
            $region142: #{segnet_enc_forward.5} parent=115 // pred_fallthru
              _
          $region116: #{segnet_enc_forward.5} parent=111 // pred_fallthru
            _
          // Predicated region
          $region117: #{segnet_enc_forward.5} parent=111 // pred_check
            %p437 = pneg %p433
          $region118: #{segnet_enc_forward.5} parent=111 // pred_check_branch
            %439 = sbr.rel (%p437) target = $region120
          $region119: #{segnet_enc_forward.5} parent=111 // pred_region
            %s440 = sshllo.u32 0, 8
            loop: start=0, step=1, limit=1
            $region121: #{segnet_enc_forward.5} parent=119 // loop_pre_header
              _
            $region122: #{segnet_enc_forward.5} parent=119 // loop_header
              %s442 = sphi 0, %s446
              %p443 = scmp.ge.s32.totalorder %s442, 1
              %s447 = sphi %s426, %s426
              %s448 = sphi %s429, %s429
            $region123: #{segnet_enc_forward.5} parent=119 // loop_header_branch
              %445 = sbr.rel (%p443) target = $region127
            $region124: #{segnet_enc_forward.5} parent=119 // loop_body
              %v449 = vld [vmem:[%s447] sm:%s440]
              %450 = vst [vmem:[%s448] sm:%s440] %v449
            $region125: #{segnet_enc_forward.5} parent=119 // loop_footer
              %s446 = sadd.s32 1, %s442
            $region126: #{segnet_enc_forward.5} parent=119 // loop_footer_branch
              %441 = sbr.rel target = $region122
            $region127: #{segnet_enc_forward.5} parent=119 // loop_exit
              _
          $region120: #{segnet_enc_forward.5} parent=111 // pred_fallthru
            _
          // Predicated region
          $region143: #{segnet_enc_forward.5} parent=111 // pred_check
            _
          $region144: #{segnet_enc_forward.5} parent=111 // pred_check_branch
            %472 = sbr.rel (0) target = $region146
          $region145: #{segnet_enc_forward.5} parent=111 // pred_region
            %473 = vsyncadd %s431, 128
          $region146: #{segnet_enc_forward.5} parent=111 // pred_fallthru
            _
        $region112: #{segnet_enc_forward.5} parent=35 // pred_fallthru
          _
      $region36: #{segnet_enc_forward.5} parent=31 // pred_fallthru
        _
      %s474 = sadd.s32 %s23, 1
      %p475 = scmp.lt.s32.totalorder %s474, 1
      // Predicated region
      $region147: #{segnet_enc_forward.5} parent=31 // pred_check
        %p476 = pneg %p475
      $region148: #{segnet_enc_forward.5} parent=31 // pred_check_branch
        %478 = sbr.rel (%p476) target = $region150
      $region149: #{segnet_enc_forward.5} parent=31 // pred_region
        %p479 = scmp.lt.s32.totalorder %s474, 0
        %s480 = ssub.s32 0, %s474
        %s481 = scalar_select %p479, %s480, %s474
        %s482 = sand.u32 %s481, 1
        %s483 = ssub.s32 0, %s482
        %s484 = scalar_select %p479, %s483, %s482
        %p485 = scmp.ne.s32.totalorder %s484, 0
        %p486 = scmp.lt.s32.totalorder %s484, 0
        %p487 = pnand %p486, %p485
        %p488 = pneg %p487
        %s489 = sadd.s32 %s484, 2
        %s490 = scalar_select %p488, %s489, %s484
        %s491 = smul.u32 %s474, 16
        %s492 = smul.u32 %s491, 2
        %s493 = smul.u32 %s22, 32
        %s494 = sadd.s32 %s492, %s493
        %s495 = smul.addr %s494, 4
        %s496 = scalar_lea.vmem %s0, %s495
        %s497 = smul.u32 %s490, 18
        %s498 = sadd.s32 1, %s497
        %s499 = smul.addr %s498, 8
        %s500 = scalar_lea.vmem [#allocation2], %s499
        %s501 = smul.u32 %s490, 3
        %s502 = scalar_lea.sflag [#allocation4], %s501
        %p504 = scmp.lt.u32.totalorder 128, 8
        %p505 = pneg %p504
        // Predicated region
        $region151: #{segnet_enc_forward.5} parent=149 // pred_check
          _
        $region152: #{segnet_enc_forward.5} parent=149 // pred_check_branch
          %507 = sbr.rel (%p504) target = $region154
        $region153: #{segnet_enc_forward.5} parent=149 // pred_region
          %s522 = sand.u32 128, 7
          %p523 = scmp.eq.s32.totalorder %s522, 0
          // Predicated region
          $region166: #{segnet_enc_forward.5} parent=153 // pred_check
            %p524 = pneg %p523
          $region167: #{segnet_enc_forward.5} parent=153 // pred_check_branch
            %526 = sbr.rel (%p524) target = $region169
          $region168: #{segnet_enc_forward.5} parent=153 // pred_region
            loop: start=0, step=1, limit=1
            $region170: #{segnet_enc_forward.5} parent=168 // loop_pre_header
              _
            $region171: #{segnet_enc_forward.5} parent=168 // loop_header
              %s528 = sphi 0, %s532
              %p529 = scmp.ge.s32.totalorder %s528, 1
              %s533 = sphi %s496, %s496
              %s534 = sphi %s500, %s500
            $region172: #{segnet_enc_forward.5} parent=168 // loop_header_branch
              %531 = sbr.rel (%p529) target = $region176
            $region173: #{segnet_enc_forward.5} parent=168 // loop_body
              %v535 = vld [vmem:[%s533] sm:$0xff]
              %536 = vst [vmem:[%s534] sm:$0xff] %v535
              %v537 = vld [vmem:[%s533 + $0x8] sm:$0xff]
              %538 = vst [vmem:[%s534 + $0x8] sm:$0xff] %v537
              %v539 = vld [vmem:[%s533 + $0x10] sm:$0xff]
              %540 = vst [vmem:[%s534 + $0x10] sm:$0xff] %v539
              %v541 = vld [vmem:[%s533 + $0x18] sm:$0xff]
              %542 = vst [vmem:[%s534 + $0x18] sm:$0xff] %v541
              %v543 = vld [vmem:[%s533 + $0x20] sm:$0xff]
              %544 = vst [vmem:[%s534 + $0x20] sm:$0xff] %v543
              %v545 = vld [vmem:[%s533 + $0x28] sm:$0xff]
              %546 = vst [vmem:[%s534 + $0x28] sm:$0xff] %v545
              %v547 = vld [vmem:[%s533 + $0x30] sm:$0xff]
              %548 = vst [vmem:[%s534 + $0x30] sm:$0xff] %v547
              %v549 = vld [vmem:[%s533 + $0x38] sm:$0xff]
              %550 = vst [vmem:[%s534 + $0x38] sm:$0xff] %v549
              %v551 = vld [vmem:[%s533 + $0x40] sm:$0xff]
              %552 = vst [vmem:[%s534 + $0x40] sm:$0xff] %v551
              %v553 = vld [vmem:[%s533 + $0x48] sm:$0xff]
              %554 = vst [vmem:[%s534 + $0x48] sm:$0xff] %v553
              %v555 = vld [vmem:[%s533 + $0x50] sm:$0xff]
              %556 = vst [vmem:[%s534 + $0x50] sm:$0xff] %v555
              %v557 = vld [vmem:[%s533 + $0x58] sm:$0xff]
              %558 = vst [vmem:[%s534 + $0x58] sm:$0xff] %v557
              %v559 = vld [vmem:[%s533 + $0x60] sm:$0xff]
              %560 = vst [vmem:[%s534 + $0x60] sm:$0xff] %v559
              %v561 = vld [vmem:[%s533 + $0x68] sm:$0xff]
              %562 = vst [vmem:[%s534 + $0x68] sm:$0xff] %v561
              %v563 = vld [vmem:[%s533 + $0x70] sm:$0xff]
              %564 = vst [vmem:[%s534 + $0x70] sm:$0xff] %v563
              %v565 = vld [vmem:[%s533 + $0x78] sm:$0xff]
              %566 = vst [vmem:[%s534 + $0x78] sm:$0xff] %v565
            $region174: #{segnet_enc_forward.5} parent=168 // loop_footer
              %s532 = sadd.s32 1, %s528
            $region175: #{segnet_enc_forward.5} parent=168 // loop_footer_branch
              %527 = sbr.rel target = $region171
            $region176: #{segnet_enc_forward.5} parent=168 // loop_exit
              _
          $region169: #{segnet_enc_forward.5} parent=153 // pred_fallthru
            _
          %p567 = pneg %p523
          // Predicated region
          $region177: #{segnet_enc_forward.5} parent=153 // pred_check
            _
          $region178: #{segnet_enc_forward.5} parent=153 // pred_check_branch
            %569 = sbr.rel (%p523) target = $region180
          $region179: #{segnet_enc_forward.5} parent=153 // pred_region
            %s570 = sand.u32 128, 7
          $region180: #{segnet_enc_forward.5} parent=153 // pred_fallthru
            _
        $region154: #{segnet_enc_forward.5} parent=149 // pred_fallthru
          _
        // Predicated region
        $region155: #{segnet_enc_forward.5} parent=149 // pred_check
          %p508 = pneg %p504
        $region156: #{segnet_enc_forward.5} parent=149 // pred_check_branch
          %510 = sbr.rel (%p508) target = $region158
        $region157: #{segnet_enc_forward.5} parent=149 // pred_region
          %s511 = sshllo.u32 0, 128
          loop: start=0, step=1, limit=1
          $region159: #{segnet_enc_forward.5} parent=157 // loop_pre_header
            _
          $region160: #{segnet_enc_forward.5} parent=157 // loop_header
            %s513 = sphi 0, %s517
            %p514 = scmp.ge.s32.totalorder %s513, 1
            %s518 = sphi %s496, %s496
            %s519 = sphi %s500, %s500
          $region161: #{segnet_enc_forward.5} parent=157 // loop_header_branch
            %516 = sbr.rel (%p514) target = $region165
          $region162: #{segnet_enc_forward.5} parent=157 // loop_body
            %v520 = vld [vmem:[%s518] sm:%s511]
            %521 = vst [vmem:[%s519] sm:%s511] %v520
          $region163: #{segnet_enc_forward.5} parent=157 // loop_footer
            %s517 = sadd.s32 1, %s513
          $region164: #{segnet_enc_forward.5} parent=157 // loop_footer_branch
            %512 = sbr.rel target = $region160
          $region165: #{segnet_enc_forward.5} parent=157 // loop_exit
            _
        $region158: #{segnet_enc_forward.5} parent=149 // pred_fallthru
          _
        // Predicated region
        $region181: #{segnet_enc_forward.5} parent=149 // pred_check
          _
        $region182: #{segnet_enc_forward.5} parent=149 // pred_check_branch
          %573 = sbr.rel (0) target = $region184
        $region183: #{segnet_enc_forward.5} parent=149 // pred_region
          %574 = vsyncadd %s502, 2048
        $region184: #{segnet_enc_forward.5} parent=149 // pred_fallthru
          _
        %p575 = scmp.gt.s32.totalorder %s474, 0
        // Predicated region
        $region185: #{segnet_enc_forward.5} parent=149 // pred_check
          %p576 = pneg %p575
        $region186: #{segnet_enc_forward.5} parent=149 // pred_check_branch
          %578 = sbr.rel (%p576) target = $region188
        $region187: #{segnet_enc_forward.5} parent=149 // pred_region
          %s579 = ssub.s32 %s491, 1
          %s580 = smul.u32 %s579, 2
          %s581 = sadd.s32 %s580, %s493
          %s582 = smul.addr %s581, 4
          %s583 = scalar_lea.vmem %s0, %s582
          %s584 = smul.addr %s497, 8
          %s585 = scalar_lea.vmem [#allocation2], %s584
          %s586 = sadd.s32 1, %s501
          %s587 = scalar_lea.sflag [#allocation4], %s586
          %p589 = scmp.lt.u32.totalorder 8, 8
          %p590 = pneg %p589
          // Predicated region
          $region189: #{segnet_enc_forward.5} parent=187 // pred_check
            _
          $region190: #{segnet_enc_forward.5} parent=187 // pred_check_branch
            %592 = sbr.rel (%p589) target = $region192
          $region191: #{segnet_enc_forward.5} parent=187 // pred_region
            %s607 = sand.u32 8, 7
            %p608 = scmp.eq.s32.totalorder %s607, 0
            // Predicated region
            $region204: #{segnet_enc_forward.5} parent=191 // pred_check
              %p609 = pneg %p608
            $region205: #{segnet_enc_forward.5} parent=191 // pred_check_branch
              %611 = sbr.rel (%p609) target = $region207
            $region206: #{segnet_enc_forward.5} parent=191 // pred_region
              loop: start=0, step=1, limit=1
              $region208: #{segnet_enc_forward.5} parent=206 // loop_pre_header
                _
              $region209: #{segnet_enc_forward.5} parent=206 // loop_header
                %s613 = sphi 0, %s617
                %p614 = scmp.ge.s32.totalorder %s613, 1
                %s618 = sphi %s583, %s583
                %s619 = sphi %s585, %s585
              $region210: #{segnet_enc_forward.5} parent=206 // loop_header_branch
                %616 = sbr.rel (%p614) target = $region214
              $region211: #{segnet_enc_forward.5} parent=206 // loop_body
                %v620 = vld [vmem:[%s618] sm:$0xff]
                %621 = vst [vmem:[%s619] sm:$0xff] %v620
              $region212: #{segnet_enc_forward.5} parent=206 // loop_footer
                %s617 = sadd.s32 1, %s613
              $region213: #{segnet_enc_forward.5} parent=206 // loop_footer_branch
                %612 = sbr.rel target = $region209
              $region214: #{segnet_enc_forward.5} parent=206 // loop_exit
                _
            $region207: #{segnet_enc_forward.5} parent=191 // pred_fallthru
              _
            %p622 = pneg %p608
            // Predicated region
            $region215: #{segnet_enc_forward.5} parent=191 // pred_check
              _
            $region216: #{segnet_enc_forward.5} parent=191 // pred_check_branch
              %624 = sbr.rel (%p608) target = $region218
            $region217: #{segnet_enc_forward.5} parent=191 // pred_region
              %s625 = sand.u32 8, 7
            $region218: #{segnet_enc_forward.5} parent=191 // pred_fallthru
              _
          $region192: #{segnet_enc_forward.5} parent=187 // pred_fallthru
            _
          // Predicated region
          $region193: #{segnet_enc_forward.5} parent=187 // pred_check
            %p593 = pneg %p589
          $region194: #{segnet_enc_forward.5} parent=187 // pred_check_branch
            %595 = sbr.rel (%p593) target = $region196
          $region195: #{segnet_enc_forward.5} parent=187 // pred_region
            %s596 = sshllo.u32 0, 8
            loop: start=0, step=1, limit=1
            $region197: #{segnet_enc_forward.5} parent=195 // loop_pre_header
              _
            $region198: #{segnet_enc_forward.5} parent=195 // loop_header
              %s598 = sphi 0, %s602
              %p599 = scmp.ge.s32.totalorder %s598, 1
              %s603 = sphi %s583, %s583
              %s604 = sphi %s585, %s585
            $region199: #{segnet_enc_forward.5} parent=195 // loop_header_branch
              %601 = sbr.rel (%p599) target = $region203
            $region200: #{segnet_enc_forward.5} parent=195 // loop_body
              %v605 = vld [vmem:[%s603] sm:%s596]
              %606 = vst [vmem:[%s604] sm:%s596] %v605
            $region201: #{segnet_enc_forward.5} parent=195 // loop_footer
              %s602 = sadd.s32 1, %s598
            $region202: #{segnet_enc_forward.5} parent=195 // loop_footer_branch
              %597 = sbr.rel target = $region198
            $region203: #{segnet_enc_forward.5} parent=195 // loop_exit
              _
          $region196: #{segnet_enc_forward.5} parent=187 // pred_fallthru
            _
          // Predicated region
          $region219: #{segnet_enc_forward.5} parent=187 // pred_check
            _
          $region220: #{segnet_enc_forward.5} parent=187 // pred_check_branch
            %628 = sbr.rel (0) target = $region222
          $region221: #{segnet_enc_forward.5} parent=187 // pred_region
            %629 = vsyncadd %s587, 128
          $region222: #{segnet_enc_forward.5} parent=187 // pred_fallthru
            _
        $region188: #{segnet_enc_forward.5} parent=149 // pred_fallthru
          _
        %p630 = scmp.lt.s32.totalorder %s474, 0
        // Predicated region
        $region223: #{segnet_enc_forward.5} parent=149 // pred_check
          %p631 = pneg %p630
        $region224: #{segnet_enc_forward.5} parent=149 // pred_check_branch
          %633 = sbr.rel (%p631) target = $region226
        $region225: #{segnet_enc_forward.5} parent=149 // pred_region
          %s634 = sadd.s32 %s23, 2
          %s635 = smul.u32 %s634, 16
          %s636 = smul.u32 %s635, 2
          %s637 = sadd.s32 %s636, %s493
          %s638 = smul.addr %s637, 4
          %s639 = scalar_lea.vmem %s0, %s638
          %s640 = sadd.s32 17, %s497
          %s641 = smul.addr %s640, 8
          %s642 = scalar_lea.vmem [#allocation2], %s641
          %s643 = sadd.s32 2, %s501
          %s644 = scalar_lea.sflag [#allocation4], %s643
          %p646 = scmp.lt.u32.totalorder 8, 8
          %p647 = pneg %p646
          // Predicated region
          $region227: #{segnet_enc_forward.5} parent=225 // pred_check
            _
          $region228: #{segnet_enc_forward.5} parent=225 // pred_check_branch
            %649 = sbr.rel (%p646) target = $region230
          $region229: #{segnet_enc_forward.5} parent=225 // pred_region
            %s664 = sand.u32 8, 7
            %p665 = scmp.eq.s32.totalorder %s664, 0
            // Predicated region
            $region242: #{segnet_enc_forward.5} parent=229 // pred_check
              %p666 = pneg %p665
            $region243: #{segnet_enc_forward.5} parent=229 // pred_check_branch
              %668 = sbr.rel (%p666) target = $region245
            $region244: #{segnet_enc_forward.5} parent=229 // pred_region
              loop: start=0, step=1, limit=1
              $region246: #{segnet_enc_forward.5} parent=244 // loop_pre_header
                _
              $region247: #{segnet_enc_forward.5} parent=244 // loop_header
                %s670 = sphi 0, %s674
                %p671 = scmp.ge.s32.totalorder %s670, 1
                %s675 = sphi %s639, %s639
                %s676 = sphi %s642, %s642
              $region248: #{segnet_enc_forward.5} parent=244 // loop_header_branch
                %673 = sbr.rel (%p671) target = $region252
              $region249: #{segnet_enc_forward.5} parent=244 // loop_body
                %v677 = vld [vmem:[%s675] sm:$0xff]
                %678 = vst [vmem:[%s676] sm:$0xff] %v677
              $region250: #{segnet_enc_forward.5} parent=244 // loop_footer
                %s674 = sadd.s32 1, %s670
              $region251: #{segnet_enc_forward.5} parent=244 // loop_footer_branch
                %669 = sbr.rel target = $region247
              $region252: #{segnet_enc_forward.5} parent=244 // loop_exit
                _
            $region245: #{segnet_enc_forward.5} parent=229 // pred_fallthru
              _
            %p679 = pneg %p665
            // Predicated region
            $region253: #{segnet_enc_forward.5} parent=229 // pred_check
              _
            $region254: #{segnet_enc_forward.5} parent=229 // pred_check_branch
              %681 = sbr.rel (%p665) target = $region256
            $region255: #{segnet_enc_forward.5} parent=229 // pred_region
              %s682 = sand.u32 8, 7
            $region256: #{segnet_enc_forward.5} parent=229 // pred_fallthru
              _
          $region230: #{segnet_enc_forward.5} parent=225 // pred_fallthru
            _
          // Predicated region
          $region231: #{segnet_enc_forward.5} parent=225 // pred_check
            %p650 = pneg %p646
          $region232: #{segnet_enc_forward.5} parent=225 // pred_check_branch
            %652 = sbr.rel (%p650) target = $region234
          $region233: #{segnet_enc_forward.5} parent=225 // pred_region
            %s653 = sshllo.u32 0, 8
            loop: start=0, step=1, limit=1
            $region235: #{segnet_enc_forward.5} parent=233 // loop_pre_header
              _
            $region236: #{segnet_enc_forward.5} parent=233 // loop_header
              %s655 = sphi 0, %s659
              %p656 = scmp.ge.s32.totalorder %s655, 1
              %s660 = sphi %s639, %s639
              %s661 = sphi %s642, %s642
            $region237: #{segnet_enc_forward.5} parent=233 // loop_header_branch
              %658 = sbr.rel (%p656) target = $region241
            $region238: #{segnet_enc_forward.5} parent=233 // loop_body
              %v662 = vld [vmem:[%s660] sm:%s653]
              %663 = vst [vmem:[%s661] sm:%s653] %v662
            $region239: #{segnet_enc_forward.5} parent=233 // loop_footer
              %s659 = sadd.s32 1, %s655
            $region240: #{segnet_enc_forward.5} parent=233 // loop_footer_branch
              %654 = sbr.rel target = $region236
            $region241: #{segnet_enc_forward.5} parent=233 // loop_exit
              _
          $region234: #{segnet_enc_forward.5} parent=225 // pred_fallthru
            _
          // Predicated region
          $region257: #{segnet_enc_forward.5} parent=225 // pred_check
            _
          $region258: #{segnet_enc_forward.5} parent=225 // pred_check_branch
            %685 = sbr.rel (0) target = $region260
          $region259: #{segnet_enc_forward.5} parent=225 // pred_region
            %686 = vsyncadd %s644, 128
          $region260: #{segnet_enc_forward.5} parent=225 // pred_fallthru
            _
        $region226: #{segnet_enc_forward.5} parent=149 // pred_fallthru
          _
      $region150: #{segnet_enc_forward.5} parent=31 // pred_fallthru
        _
      %s687 = smul.u32 %s273, 3
      %s688 = scalar_lea.sflag [#allocation4], %s687
      %s689 = smul.u32 4, 16
      %s690 = smul.u32 %s689, 2
      %s691 = smul.u32 %s690, 1
      %s692 = sshll.u32 %s691, 4
      %693 = dma.done %s688, %s692
      %p694 = scmp.gt.s32.totalorder %s23, 0
      // Predicated region
      $region261: #{segnet_enc_forward.5} parent=31 // pred_check
        %p695 = pneg %p694
      $region262: #{segnet_enc_forward.5} parent=31 // pred_check_branch
        %697 = sbr.rel (%p695) target = $region264
      $region263: #{segnet_enc_forward.5} parent=31 // pred_region
        %s698 = sadd.s32 1, %s687
        %s699 = scalar_lea.sflag [#allocation4], %s698
        %s700 = smul.u32 4, 2
        %s701 = smul.u32 %s700, 1
        %s702 = sshll.u32 %s701, 4
        %703 = dma.done %s699, %s702
      $region264: #{segnet_enc_forward.5} parent=31 // pred_fallthru
        _
      %p704 = scmp.lt.s32.totalorder %s23, 0
      // Predicated region
      $region265: #{segnet_enc_forward.5} parent=31 // pred_check
        %p705 = pneg %p704
      $region266: #{segnet_enc_forward.5} parent=31 // pred_check_branch
        %707 = sbr.rel (%p705) target = $region268
      $region267: #{segnet_enc_forward.5} parent=31 // pred_region
        %s708 = sadd.s32 2, %s687
        %s709 = scalar_lea.sflag [#allocation4], %s708
        %s710 = smul.u32 4, 2
        %s711 = smul.u32 %s710, 1
        %s712 = sshll.u32 %s711, 4
        %713 = dma.done %s709, %s712
      $region268: #{segnet_enc_forward.5} parent=31 // pred_fallthru
        _
      %s714 = smul.u32 %s273, 18
      %s715 = smul.addr %s714, 8
      %s716 = scalar_lea.vmem [#allocation2], %s715
      %v717 = vld [vmem:[%s716] sm:$0xff]
      %v718 = vld [vmem:[%s716 + $0x8] sm:$0xff]
      %v719 = vld [vmem:[%s716 + $0x10] sm:$0xff]
      %v720 = vld [vmem:[%s716 + $0x18] sm:$0xff]
      %v721 = vld [vmem:[%s716 + $0x20] sm:$0xff]
      %v722 = vld [vmem:[%s716 + $0x28] sm:$0xff]
      %v723 = vld [vmem:[%s716 + $0x30] sm:$0xff]
      %v724 = vld [vmem:[%s716 + $0x38] sm:$0xff]
      %v725 = vld [vmem:[%s716 + $0x40] sm:$0xff]
      %v726 = vld [vmem:[%s716 + $0x48] sm:$0xff]
      %v727 = vld [vmem:[%s716 + $0x50] sm:$0xff]
      %v728 = vld [vmem:[%s716 + $0x58] sm:$0xff]
      %v729 = vld [vmem:[%s716 + $0x60] sm:$0xff]
      %v730 = vld [vmem:[%s716 + $0x68] sm:$0xff]
      %v731 = vld [vmem:[%s716 + $0x70] sm:$0xff]
      %v732 = vld [vmem:[%s716 + $0x78] sm:$0xff]
      %v733 = vld [vmem:[%s716 + $0x80] sm:$0xff]
      %v734 = vld [vmem:[%s716 + $0x88] sm:$0xff]
      %v735 = vunpack.c.l.bf16 %v717
      %v736 = vunpack.c.h.bf16 %v717
      %v737 = vunpack.c.l.bf16 %v718
      %v738 = vunpack.c.h.bf16 %v718
      %v739 = vunpack.c.l.bf16 %v719
      %v740 = vunpack.c.h.bf16 %v719
      %v741 = vunpack.c.l.bf16 %v720
      %v742 = vunpack.c.h.bf16 %v720
      %v743 = vunpack.c.l.bf16 %v721
      %v744 = vunpack.c.h.bf16 %v721
      %v745 = vunpack.c.l.bf16 %v722
      %v746 = vunpack.c.h.bf16 %v722
      %v747 = vunpack.c.l.bf16 %v723
      %v748 = vunpack.c.h.bf16 %v723
      %v749 = vunpack.c.l.bf16 %v724
      %v750 = vunpack.c.h.bf16 %v724
      %v751 = vunpack.c.l.bf16 %v725
      %v752 = vunpack.c.h.bf16 %v725
      %v753 = vunpack.c.l.bf16 %v726
      %v754 = vunpack.c.h.bf16 %v726
      %v755 = vunpack.c.l.bf16 %v727
      %v756 = vunpack.c.h.bf16 %v727
      %v757 = vunpack.c.l.bf16 %v728
      %v758 = vunpack.c.h.bf16 %v728
      %v759 = vunpack.c.l.bf16 %v729
      %v760 = vunpack.c.h.bf16 %v729
      %v761 = vunpack.c.l.bf16 %v730
      %v762 = vunpack.c.h.bf16 %v730
      %v763 = vunpack.c.l.bf16 %v731
      %v764 = vunpack.c.h.bf16 %v731
      %v765 = vunpack.c.l.bf16 %v732
      %v766 = vunpack.c.h.bf16 %v732
      %v767 = vunpack.c.l.bf16 %v733
      %v768 = vunpack.c.h.bf16 %v733
      %v769 = vunpack.c.l.bf16 %v734
      %v770 = vunpack.c.h.bf16 %v734
      %v771 = vld [vmem:[%s2] sm:$0x1]
      %v773 = vlaneseq
      %v774 = vshrl.u32 %v773, 7
      %v775 = vsub.s32 0, %v774
      %v776 = vrot.slane %v771, %v775
      %v778 = vmul.f32 %v735, %v776
      %v779 = vmul.f32 %v736, %v776
      %v780 = vmul.f32 %v737, %v776
      %v781 = vmul.f32 %v738, %v776
      %v782 = vmul.f32 %v739, %v776
      %v783 = vmul.f32 %v740, %v776
      %v784 = vmul.f32 %v741, %v776
      %v785 = vmul.f32 %v742, %v776
      %v786 = vmul.f32 %v743, %v776
      %v787 = vmul.f32 %v744, %v776
      %v788 = vmul.f32 %v745, %v776
      %v789 = vmul.f32 %v746, %v776
      %v790 = vmul.f32 %v747, %v776
      %v791 = vmul.f32 %v748, %v776
      %v792 = vmul.f32 %v749, %v776
      %v793 = vmul.f32 %v750, %v776
      %v794 = vmul.f32 %v751, %v776
      %v795 = vmul.f32 %v752, %v776
      %v796 = vmul.f32 %v753, %v776
      %v797 = vmul.f32 %v754, %v776
      %v798 = vmul.f32 %v755, %v776
      %v799 = vmul.f32 %v756, %v776
      %v800 = vmul.f32 %v757, %v776
      %v801 = vmul.f32 %v758, %v776
      %v802 = vmul.f32 %v759, %v776
      %v803 = vmul.f32 %v760, %v776
      %v804 = vmul.f32 %v761, %v776
      %v805 = vmul.f32 %v762, %v776
      %v806 = vmul.f32 %v763, %v776
      %v807 = vmul.f32 %v764, %v776
      %v808 = vmul.f32 %v765, %v776
      %v809 = vmul.f32 %v766, %v776
      %v810 = vmul.f32 %v767, %v776
      %v811 = vmul.f32 %v768, %v776
      %v812 = vmul.f32 %v769, %v776
      %v813 = vmul.f32 %v770, %v776
      %v814 = vld [vmem:[%s3] sm:$0x1]
      %v816 = vlaneseq
      %v817 = vshrl.u32 %v816, 7
      %v818 = vsub.s32 0, %v817
      %v819 = vrot.slane %v814, %v818
      %v821 = vadd.f32 %v778, %v819
      %v822 = vadd.f32 %v779, %v819
      %v823 = vadd.f32 %v780, %v819
      %v824 = vadd.f32 %v781, %v819
      %v825 = vadd.f32 %v782, %v819
      %v826 = vadd.f32 %v783, %v819
      %v827 = vadd.f32 %v784, %v819
      %v828 = vadd.f32 %v785, %v819
      %v829 = vadd.f32 %v786, %v819
      %v830 = vadd.f32 %v787, %v819
      %v831 = vadd.f32 %v788, %v819
      %v832 = vadd.f32 %v789, %v819
      %v833 = vadd.f32 %v790, %v819
      %v834 = vadd.f32 %v791, %v819
      %v835 = vadd.f32 %v792, %v819
      %v836 = vadd.f32 %v793, %v819
      %v837 = vadd.f32 %v794, %v819
      %v838 = vadd.f32 %v795, %v819
      %v839 = vadd.f32 %v796, %v819
      %v840 = vadd.f32 %v797, %v819
      %v841 = vadd.f32 %v798, %v819
      %v842 = vadd.f32 %v799, %v819
      %v843 = vadd.f32 %v800, %v819
      %v844 = vadd.f32 %v801, %v819
      %v845 = vadd.f32 %v802, %v819
      %v846 = vadd.f32 %v803, %v819
      %v847 = vadd.f32 %v804, %v819
      %v848 = vadd.f32 %v805, %v819
      %v849 = vadd.f32 %v806, %v819
      %v850 = vadd.f32 %v807, %v819
      %v851 = vadd.f32 %v808, %v819
      %v852 = vadd.f32 %v809, %v819
      %v853 = vadd.f32 %v810, %v819
      %v854 = vadd.f32 %v811, %v819
      %v855 = vadd.f32 %v812, %v819
      %v856 = vadd.f32 %v813, %v819
      %v857 = vmax.f32 %v821, 0.0
      %v858 = vmax.f32 %v822, 0.0
      %v859 = vmax.f32 %v823, 0.0
      %v860 = vmax.f32 %v824, 0.0
      %v861 = vmax.f32 %v825, 0.0
      %v862 = vmax.f32 %v826, 0.0
      %v863 = vmax.f32 %v827, 0.0
      %v864 = vmax.f32 %v828, 0.0
      %v865 = vmax.f32 %v829, 0.0
      %v866 = vmax.f32 %v830, 0.0
      %v867 = vmax.f32 %v831, 0.0
      %v868 = vmax.f32 %v832, 0.0
      %v869 = vmax.f32 %v833, 0.0
      %v870 = vmax.f32 %v834, 0.0
      %v871 = vmax.f32 %v835, 0.0
      %v872 = vmax.f32 %v836, 0.0
      %v873 = vmax.f32 %v837, 0.0
      %v874 = vmax.f32 %v838, 0.0
      %v875 = vmax.f32 %v839, 0.0
      %v876 = vmax.f32 %v840, 0.0
      %v877 = vmax.f32 %v841, 0.0
      %v878 = vmax.f32 %v842, 0.0
      %v879 = vmax.f32 %v843, 0.0
      %v880 = vmax.f32 %v844, 0.0
      %v881 = vmax.f32 %v845, 0.0
      %v882 = vmax.f32 %v846, 0.0
      %v883 = vmax.f32 %v847, 0.0
      %v884 = vmax.f32 %v848, 0.0
      %v885 = vmax.f32 %v849, 0.0
      %v886 = vmax.f32 %v850, 0.0
      %v887 = vmax.f32 %v851, 0.0
      %v888 = vmax.f32 %v852, 0.0
      %v889 = vmax.f32 %v853, 0.0
      %v890 = vmax.f32 %v854, 0.0
      %v891 = vmax.f32 %v855, 0.0
      %v892 = vmax.f32 %v856, 0.0
      %v893 = vpack.c.bf16 %v858, %v857
      %v894 = vpack.c.bf16 %v860, %v859
      %v895 = vpack.c.bf16 %v862, %v861
      %v896 = vpack.c.bf16 %v864, %v863
      %v897 = vpack.c.bf16 %v866, %v865
      %v898 = vpack.c.bf16 %v868, %v867
      %v899 = vpack.c.bf16 %v870, %v869
      %v900 = vpack.c.bf16 %v872, %v871
      %v901 = vpack.c.bf16 %v874, %v873
      %v902 = vpack.c.bf16 %v876, %v875
      %v903 = vpack.c.bf16 %v878, %v877
      %v904 = vpack.c.bf16 %v880, %v879
      %v905 = vpack.c.bf16 %v882, %v881
      %v906 = vpack.c.bf16 %v884, %v883
      %v907 = vpack.c.bf16 %v886, %v885
      %v908 = vpack.c.bf16 %v888, %v887
      %v909 = vpack.c.bf16 %v890, %v889
      %v910 = vpack.c.bf16 %v892, %v891
      %v929 = vunpack.c.l.b16 %v893
      %v930 = vunpack.c.h.b16 %v893
      %v931 = vunpack.c.l.b16 %v894
      %v932 = vunpack.c.h.b16 %v894
      %v933 = vunpack.c.l.b16 %v895
      %v934 = vunpack.c.h.b16 %v895
      %v935 = vunpack.c.l.b16 %v896
      %v936 = vunpack.c.h.b16 %v896
      %v937 = vunpack.c.l.b16 %v897
      %v938 = vunpack.c.h.b16 %v897
      %v939 = vunpack.c.l.b16 %v898
      %v940 = vunpack.c.h.b16 %v898
      %v941 = vunpack.c.l.b16 %v899
      %v942 = vunpack.c.h.b16 %v899
      %v943 = vunpack.c.l.b16 %v900
      %v944 = vunpack.c.h.b16 %v900
      %v945 = vunpack.c.l.b16 %v901
      %v946 = vunpack.c.h.b16 %v901
      %v947 = vunpack.c.l.b16 %v902
      %v948 = vunpack.c.h.b16 %v902
      %v949 = vunpack.c.l.b16 %v903
      %v950 = vunpack.c.h.b16 %v903
      %v951 = vunpack.c.l.b16 %v904
      %v952 = vunpack.c.h.b16 %v904
      %v953 = vunpack.c.l.b16 %v905
      %v954 = vunpack.c.h.b16 %v905
      %v955 = vunpack.c.l.b16 %v906
      %v956 = vunpack.c.h.b16 %v906
      %v957 = vunpack.c.l.b16 %v907
      %v958 = vunpack.c.h.b16 %v907
      %v959 = vunpack.c.l.b16 %v908
      %v960 = vunpack.c.h.b16 %v908
      %v961 = vunpack.c.l.b16 %v909
      %v962 = vunpack.c.h.b16 %v909
      %v963 = vunpack.c.l.b16 %v910
      %v964 = vunpack.c.h.b16 %v910
      %v965 = vpack.c.b16 %v929, %v929
      %v966 = vpack.c.b16 %v930, %v930
      %v967 = vpack.c.b16 %v931, %v931
      %v968 = vpack.c.b16 %v932, %v932
      %v969 = vpack.c.b16 %v933, %v933
      %v970 = vpack.c.b16 %v934, %v934
      %v971 = vpack.c.b16 %v935, %v935
      %v972 = vpack.c.b16 %v936, %v936
      %v973 = vpack.c.b16 %v937, %v937
      %v974 = vpack.c.b16 %v938, %v938
      %v975 = vpack.c.b16 %v939, %v939
      %v976 = vpack.c.b16 %v940, %v940
      %v977 = vpack.c.b16 %v941, %v941
      %v978 = vpack.c.b16 %v942, %v942
      %v979 = vpack.c.b16 %v943, %v943
      %v980 = vpack.c.b16 %v944, %v944
      %v981 = vpack.c.b16 %v945, %v945
      %v982 = vpack.c.b16 %v946, %v946
      %v983 = vpack.c.b16 %v947, %v947
      %v984 = vpack.c.b16 %v948, %v948
      %v985 = vpack.c.b16 %v949, %v949
      %v986 = vpack.c.b16 %v950, %v950
      %v987 = vpack.c.b16 %v951, %v951
      %v988 = vpack.c.b16 %v952, %v952
      %v989 = vpack.c.b16 %v953, %v953
      %v990 = vpack.c.b16 %v954, %v954
      %v991 = vpack.c.b16 %v955, %v955
      %v992 = vpack.c.b16 %v956, %v956
      %v993 = vpack.c.b16 %v957, %v957
      %v994 = vpack.c.b16 %v958, %v958
      %v995 = vpack.c.b16 %v959, %v959
      %v996 = vpack.c.b16 %v960, %v960
      %v997 = vpack.c.b16 %v961, %v961
      %v998 = vpack.c.b16 %v962, %v962
      %v999 = vpack.c.b16 %v963, %v963
      %v1000 = vpack.c.b16 %v964, %v964
      %vm1001 = vsmask.f32 256
      %vm1002 = vsmask.f32 4368
      %vm1003 = vmor %vm1001, %vm1002
      %v1005 = vshrl.u32 %v965, 16
      %v1007 = vrot.slane %v1005, 7
      %v1008 = vshll.u32 %v965, 16
      %v1010 = vor.u32 %v1007, %v1008
      %v1011 = vrot.slane %v1007, 4
      %v1013 = vshrl.u32 %v966, 16
      %v1015 = vrot.slane %v1013, 7
      %v1016 = vshll.u32 %v966, 16
      %v1018 = vor.u32 %v1015, %v1016
      %v1019 = vsel %vm1003, %v1011, %v1018
      %v1020 = vrot.slane %v1015, 4
      %v1022 = vshrl.u32 %v967, 16
      %v1024 = vrot.slane %v1022, 7
      %v1025 = vshll.u32 %v967, 16
      %v1027 = vor.u32 %v1024, %v1025
      %v1028 = vrot.slane %v1024, 4
      %v1030 = vshrl.u32 %v968, 16
      %v1032 = vrot.slane %v1030, 7
      %v1033 = vshll.u32 %v968, 16
      %v1035 = vor.u32 %v1032, %v1033
      %v1036 = vsel %vm1003, %v1028, %v1035
      %v1037 = vrot.slane %v1032, 4
      %v1039 = vshrl.u32 %v969, 16
      %v1041 = vrot.slane %v1039, 7
      %v1042 = vshll.u32 %v969, 16
      %v1044 = vor.u32 %v1041, %v1042
      %v1045 = vrot.slane %v1041, 4
      %v1047 = vshrl.u32 %v970, 16
      %v1049 = vrot.slane %v1047, 7
      %v1050 = vshll.u32 %v970, 16
      %v1052 = vor.u32 %v1049, %v1050
      %v1053 = vsel %vm1003, %v1045, %v1052
      %v1054 = vrot.slane %v1049, 4
      %v1056 = vshrl.u32 %v971, 16
      %v1058 = vrot.slane %v1056, 7
      %v1059 = vshll.u32 %v971, 16
      %v1061 = vor.u32 %v1058, %v1059
      %v1062 = vrot.slane %v1058, 4
      %v1064 = vshrl.u32 %v972, 16
      %v1066 = vrot.slane %v1064, 7
      %v1067 = vshll.u32 %v972, 16
      %v1069 = vor.u32 %v1066, %v1067
      %v1070 = vsel %vm1003, %v1062, %v1069
      %v1071 = vrot.slane %v1066, 4
      %v1073 = vshrl.u32 %v973, 16
      %v1075 = vrot.slane %v1073, 7
      %v1076 = vshll.u32 %v973, 16
      %v1078 = vor.u32 %v1075, %v1076
      %v1079 = vrot.slane %v1075, 4
      %v1081 = vshrl.u32 %v974, 16
      %v1083 = vrot.slane %v1081, 7
      %v1084 = vshll.u32 %v974, 16
      %v1086 = vor.u32 %v1083, %v1084
      %v1087 = vsel %vm1003, %v1079, %v1086
      %v1088 = vrot.slane %v1083, 4
      %v1090 = vshrl.u32 %v975, 16
      %v1092 = vrot.slane %v1090, 7
      %v1093 = vshll.u32 %v975, 16
      %v1095 = vor.u32 %v1092, %v1093
      %v1096 = vrot.slane %v1092, 4
      %v1098 = vshrl.u32 %v976, 16
      %v1100 = vrot.slane %v1098, 7
      %v1101 = vshll.u32 %v976, 16
      %v1103 = vor.u32 %v1100, %v1101
      %v1104 = vsel %vm1003, %v1096, %v1103
      %v1105 = vrot.slane %v1100, 4
      %v1107 = vshrl.u32 %v977, 16
      %v1109 = vrot.slane %v1107, 7
      %v1110 = vshll.u32 %v977, 16
      %v1112 = vor.u32 %v1109, %v1110
      %v1113 = vrot.slane %v1109, 4
      %v1115 = vshrl.u32 %v978, 16
      %v1117 = vrot.slane %v1115, 7
      %v1118 = vshll.u32 %v978, 16
      %v1120 = vor.u32 %v1117, %v1118
      %v1121 = vsel %vm1003, %v1113, %v1120
      %v1122 = vrot.slane %v1117, 4
      %v1124 = vshrl.u32 %v979, 16
      %v1126 = vrot.slane %v1124, 7
      %v1127 = vshll.u32 %v979, 16
      %v1129 = vor.u32 %v1126, %v1127
      %v1130 = vrot.slane %v1126, 4
      %v1132 = vshrl.u32 %v980, 16
      %v1134 = vrot.slane %v1132, 7
      %v1135 = vshll.u32 %v980, 16
      %v1137 = vor.u32 %v1134, %v1135
      %v1138 = vsel %vm1003, %v1130, %v1137
      %v1139 = vrot.slane %v1134, 4
      %v1141 = vshrl.u32 %v981, 16
      %v1143 = vrot.slane %v1141, 7
      %v1144 = vshll.u32 %v981, 16
      %v1146 = vor.u32 %v1143, %v1144
      %v1147 = vrot.slane %v1143, 4
      %v1149 = vshrl.u32 %v982, 16
      %v1151 = vrot.slane %v1149, 7
      %v1152 = vshll.u32 %v982, 16
      %v1154 = vor.u32 %v1151, %v1152
      %v1155 = vsel %vm1003, %v1147, %v1154
      %v1156 = vrot.slane %v1151, 4
      %v1158 = vshrl.u32 %v983, 16
      %v1160 = vrot.slane %v1158, 7
      %v1161 = vshll.u32 %v983, 16
      %v1163 = vor.u32 %v1160, %v1161
      %v1164 = vrot.slane %v1160, 4
      %v1166 = vshrl.u32 %v984, 16
      %v1168 = vrot.slane %v1166, 7
      %v1169 = vshll.u32 %v984, 16
      %v1171 = vor.u32 %v1168, %v1169
      %v1172 = vsel %vm1003, %v1164, %v1171
      %v1173 = vrot.slane %v1168, 4
      %v1175 = vshrl.u32 %v985, 16
      %v1177 = vrot.slane %v1175, 7
      %v1178 = vshll.u32 %v985, 16
      %v1180 = vor.u32 %v1177, %v1178
      %v1181 = vrot.slane %v1177, 4
      %v1183 = vshrl.u32 %v986, 16
      %v1185 = vrot.slane %v1183, 7
      %v1186 = vshll.u32 %v986, 16
      %v1188 = vor.u32 %v1185, %v1186
      %v1189 = vsel %vm1003, %v1181, %v1188
      %v1190 = vrot.slane %v1185, 4
      %v1192 = vshrl.u32 %v987, 16
      %v1194 = vrot.slane %v1192, 7
      %v1195 = vshll.u32 %v987, 16
      %v1197 = vor.u32 %v1194, %v1195
      %v1198 = vrot.slane %v1194, 4
      %v1200 = vshrl.u32 %v988, 16
      %v1202 = vrot.slane %v1200, 7
      %v1203 = vshll.u32 %v988, 16
      %v1205 = vor.u32 %v1202, %v1203
      %v1206 = vsel %vm1003, %v1198, %v1205
      %v1207 = vrot.slane %v1202, 4
      %v1209 = vshrl.u32 %v989, 16
      %v1211 = vrot.slane %v1209, 7
      %v1212 = vshll.u32 %v989, 16
      %v1214 = vor.u32 %v1211, %v1212
      %v1215 = vrot.slane %v1211, 4
      %v1217 = vshrl.u32 %v990, 16
      %v1219 = vrot.slane %v1217, 7
      %v1220 = vshll.u32 %v990, 16
      %v1222 = vor.u32 %v1219, %v1220
      %v1223 = vsel %vm1003, %v1215, %v1222
      %v1224 = vrot.slane %v1219, 4
      %v1226 = vshrl.u32 %v991, 16
      %v1228 = vrot.slane %v1226, 7
      %v1229 = vshll.u32 %v991, 16
      %v1231 = vor.u32 %v1228, %v1229
      %v1232 = vrot.slane %v1228, 4
      %v1234 = vshrl.u32 %v992, 16
      %v1236 = vrot.slane %v1234, 7
      %v1237 = vshll.u32 %v992, 16
      %v1239 = vor.u32 %v1236, %v1237
      %v1240 = vsel %vm1003, %v1232, %v1239
      %v1241 = vrot.slane %v1236, 4
      %v1243 = vshrl.u32 %v993, 16
      %v1245 = vrot.slane %v1243, 7
      %v1246 = vshll.u32 %v993, 16
      %v1248 = vor.u32 %v1245, %v1246
      %v1249 = vrot.slane %v1245, 4
      %v1251 = vshrl.u32 %v994, 16
      %v1253 = vrot.slane %v1251, 7
      %v1254 = vshll.u32 %v994, 16
      %v1256 = vor.u32 %v1253, %v1254
      %v1257 = vsel %vm1003, %v1249, %v1256
      %v1258 = vrot.slane %v1253, 4
      %v1260 = vshrl.u32 %v995, 16
      %v1262 = vrot.slane %v1260, 7
      %v1263 = vshll.u32 %v995, 16
      %v1265 = vor.u32 %v1262, %v1263
      %v1266 = vrot.slane %v1262, 4
      %v1268 = vshrl.u32 %v996, 16
      %v1270 = vrot.slane %v1268, 7
      %v1271 = vshll.u32 %v996, 16
      %v1273 = vor.u32 %v1270, %v1271
      %v1274 = vsel %vm1003, %v1266, %v1273
      %v1275 = vrot.slane %v1270, 4
      %v1277 = vshrl.u32 %v997, 16
      %v1279 = vrot.slane %v1277, 7
      %v1280 = vshll.u32 %v997, 16
      %v1282 = vor.u32 %v1279, %v1280
      %v1283 = vrot.slane %v1279, 4
      %v1285 = vshrl.u32 %v998, 16
      %v1287 = vrot.slane %v1285, 7
      %v1288 = vshll.u32 %v998, 16
      %v1290 = vor.u32 %v1287, %v1288
      %v1291 = vsel %vm1003, %v1283, %v1290
      %v1292 = vrot.slane %v1287, 4
      %v1294 = vshrl.u32 %v999, 16
      %v1296 = vrot.slane %v1294, 7
      %v1297 = vshll.u32 %v999, 16
      %v1299 = vor.u32 %v1296, %v1297
      %v1300 = vrot.slane %v1296, 4
      %v1302 = vshrl.u32 %v1000, 16
      %v1304 = vrot.slane %v1302, 7
      %v1305 = vshll.u32 %v1000, 16
      %v1307 = vor.u32 %v1304, %v1305
      %v1308 = vsel %vm1003, %v1300, %v1307
      %v1309 = vrot.slane %v1304, 4
      %vm1364 = vcmask 1043456
      %vm1365 = vsmask.f32 7938
      %vm1366 = vmand %vm1364, %vm1365
      %v1367 = vld [vmem:[#allocation3] sm:$0xf]
      %v1368 = vsel %vm1366, %v1010, %v1367
      %1369 = vst [vmem:[#allocation3] sm:$0xf] %v1368
      %1370 = vst [vmem:[#allocation3 + $0x4] sm:$0xf] %v1019
      %vm1371 = vcmask 1040384
      %vm1372 = vmand %vm1371, %vm1001
      %v1373 = vld [vmem:[#allocation3 + $0x8] sm:$0x1]
      %v1374 = vsel %vm1372, %v1020, %v1373
      %1375 = vst [vmem:[#allocation3 + $0x8] sm:$0x1] %v1374
      %v1376 = vld [vmem:[#allocation3 + $0xc] sm:$0xf]
      %v1377 = vsel %vm1366, %v1027, %v1376
      %1378 = vst [vmem:[#allocation3 + $0xc] sm:$0xf] %v1377
      %1379 = vst [vmem:[#allocation3 + $0x10] sm:$0xf] %v1036
      %v1380 = vld [vmem:[#allocation3 + $0x14] sm:$0x1]
      %v1381 = vsel %vm1372, %v1037, %v1380
      %1382 = vst [vmem:[#allocation3 + $0x14] sm:$0x1] %v1381
      %v1383 = vld [vmem:[#allocation3 + $0x18] sm:$0xf]
      %v1384 = vsel %vm1366, %v1044, %v1383
      %1385 = vst [vmem:[#allocation3 + $0x18] sm:$0xf] %v1384
      %1386 = vst [vmem:[#allocation3 + $0x1c] sm:$0xf] %v1053
      %v1387 = vld [vmem:[#allocation3 + $0x20] sm:$0x1]
      %v1388 = vsel %vm1372, %v1054, %v1387
      %1389 = vst [vmem:[#allocation3 + $0x20] sm:$0x1] %v1388
      %v1390 = vld [vmem:[#allocation3 + $0x24] sm:$0xf]
      %v1391 = vsel %vm1366, %v1061, %v1390
      %1392 = vst [vmem:[#allocation3 + $0x24] sm:$0xf] %v1391
      %1393 = vst [vmem:[#allocation3 + $0x28] sm:$0xf] %v1070
      %v1394 = vld [vmem:[#allocation3 + $0x2c] sm:$0x1]
      %v1395 = vsel %vm1372, %v1071, %v1394
      %1396 = vst [vmem:[#allocation3 + $0x2c] sm:$0x1] %v1395
      %v1397 = vld [vmem:[#allocation3 + $0x30] sm:$0xf]
      %v1398 = vsel %vm1366, %v1078, %v1397
      %1399 = vst [vmem:[#allocation3 + $0x30] sm:$0xf] %v1398
      %1400 = vst [vmem:[#allocation3 + $0x34] sm:$0xf] %v1087
      %v1401 = vld [vmem:[#allocation3 + $0x38] sm:$0x1]
      %v1402 = vsel %vm1372, %v1088, %v1401
      %1403 = vst [vmem:[#allocation3 + $0x38] sm:$0x1] %v1402
      %v1404 = vld [vmem:[#allocation3 + $0x3c] sm:$0xf]
      %v1405 = vsel %vm1366, %v1095, %v1404
      %1406 = vst [vmem:[#allocation3 + $0x3c] sm:$0xf] %v1405
      %1407 = vst [vmem:[#allocation3 + $0x40] sm:$0xf] %v1104
      %v1408 = vld [vmem:[#allocation3 + $0x44] sm:$0x1]
      %v1409 = vsel %vm1372, %v1105, %v1408
      %1410 = vst [vmem:[#allocation3 + $0x44] sm:$0x1] %v1409
      %v1411 = vld [vmem:[#allocation3 + $0x48] sm:$0xf]
      %v1412 = vsel %vm1366, %v1112, %v1411
      %1413 = vst [vmem:[#allocation3 + $0x48] sm:$0xf] %v1412
      %1414 = vst [vmem:[#allocation3 + $0x4c] sm:$0xf] %v1121
      %v1415 = vld [vmem:[#allocation3 + $0x50] sm:$0x1]
      %v1416 = vsel %vm1372, %v1122, %v1415
      %1417 = vst [vmem:[#allocation3 + $0x50] sm:$0x1] %v1416
      %v1418 = vld [vmem:[#allocation3 + $0x54] sm:$0xf]
      %v1419 = vsel %vm1366, %v1129, %v1418
      %1420 = vst [vmem:[#allocation3 + $0x54] sm:$0xf] %v1419
      %1421 = vst [vmem:[#allocation3 + $0x58] sm:$0xf] %v1138
      %v1422 = vld [vmem:[#allocation3 + $0x5c] sm:$0x1]
      %v1423 = vsel %vm1372, %v1139, %v1422
      %1424 = vst [vmem:[#allocation3 + $0x5c] sm:$0x1] %v1423
      %v1425 = vld [vmem:[#allocation3 + $0x60] sm:$0xf]
      %v1426 = vsel %vm1366, %v1146, %v1425
      %1427 = vst [vmem:[#allocation3 + $0x60] sm:$0xf] %v1426
      %1428 = vst [vmem:[#allocation3 + $0x64] sm:$0xf] %v1155
      %v1429 = vld [vmem:[#allocation3 + $0x68] sm:$0x1]
      %v1430 = vsel %vm1372, %v1156, %v1429
      %1431 = vst [vmem:[#allocation3 + $0x68] sm:$0x1] %v1430
      %v1432 = vld [vmem:[#allocation3 + $0x6c] sm:$0xf]
      %v1433 = vsel %vm1366, %v1163, %v1432
      %1434 = vst [vmem:[#allocation3 + $0x6c] sm:$0xf] %v1433
      %1435 = vst [vmem:[#allocation3 + $0x70] sm:$0xf] %v1172
      %v1436 = vld [vmem:[#allocation3 + $0x74] sm:$0x1]
      %v1437 = vsel %vm1372, %v1173, %v1436
      %1438 = vst [vmem:[#allocation3 + $0x74] sm:$0x1] %v1437
      %v1439 = vld [vmem:[#allocation3 + $0x78] sm:$0xf]
      %v1440 = vsel %vm1366, %v1180, %v1439
      %1441 = vst [vmem:[#allocation3 + $0x78] sm:$0xf] %v1440
      %1442 = vst [vmem:[#allocation3 + $0x7c] sm:$0xf] %v1189
      %v1443 = vld [vmem:[#allocation3 + $0x80] sm:$0x1]
      %v1444 = vsel %vm1372, %v1190, %v1443
      %1445 = vst [vmem:[#allocation3 + $0x80] sm:$0x1] %v1444
      %v1446 = vld [vmem:[#allocation3 + $0x84] sm:$0xf]
      %v1447 = vsel %vm1366, %v1197, %v1446
      %1448 = vst [vmem:[#allocation3 + $0x84] sm:$0xf] %v1447
      %1449 = vst [vmem:[#allocation3 + $0x88] sm:$0xf] %v1206
      %v1450 = vld [vmem:[#allocation3 + $0x8c] sm:$0x1]
      %v1451 = vsel %vm1372, %v1207, %v1450
      %1452 = vst [vmem:[#allocation3 + $0x8c] sm:$0x1] %v1451
      %v1453 = vld [vmem:[#allocation3 + $0x90] sm:$0xf]
      %v1454 = vsel %vm1366, %v1214, %v1453
      %1455 = vst [vmem:[#allocation3 + $0x90] sm:$0xf] %v1454
      %1456 = vst [vmem:[#allocation3 + $0x94] sm:$0xf] %v1223
      %v1457 = vld [vmem:[#allocation3 + $0x98] sm:$0x1]
      %v1458 = vsel %vm1372, %v1224, %v1457
      %1459 = vst [vmem:[#allocation3 + $0x98] sm:$0x1] %v1458
      %v1460 = vld [vmem:[#allocation3 + $0x9c] sm:$0xf]
      %v1461 = vsel %vm1366, %v1231, %v1460
      %1462 = vst [vmem:[#allocation3 + $0x9c] sm:$0xf] %v1461
      %1463 = vst [vmem:[#allocation3 + $0xa0] sm:$0xf] %v1240
      %v1464 = vld [vmem:[#allocation3 + $0xa4] sm:$0x1]
      %v1465 = vsel %vm1372, %v1241, %v1464
      %1466 = vst [vmem:[#allocation3 + $0xa4] sm:$0x1] %v1465
      %v1467 = vld [vmem:[#allocation3 + $0xa8] sm:$0xf]
      %v1468 = vsel %vm1366, %v1248, %v1467
      %1469 = vst [vmem:[#allocation3 + $0xa8] sm:$0xf] %v1468
      %1470 = vst [vmem:[#allocation3 + $0xac] sm:$0xf] %v1257
      %v1471 = vld [vmem:[#allocation3 + $0xb0] sm:$0x1]
      %v1472 = vsel %vm1372, %v1258, %v1471
      %1473 = vst [vmem:[#allocation3 + $0xb0] sm:$0x1] %v1472
      %v1474 = vld [vmem:[#allocation3 + $0xb4] sm:$0xf]
      %v1475 = vsel %vm1366, %v1265, %v1474
      %1476 = vst [vmem:[#allocation3 + $0xb4] sm:$0xf] %v1475
      %1477 = vst [vmem:[#allocation3 + $0xb8] sm:$0xf] %v1274
      %v1478 = vld [vmem:[#allocation3 + $0xbc] sm:$0x1]
      %v1479 = vsel %vm1372, %v1275, %v1478
      %1480 = vst [vmem:[#allocation3 + $0xbc] sm:$0x1] %v1479
      %v1481 = vld [vmem:[#allocation3 + $0xc0] sm:$0xf]
      %v1482 = vsel %vm1366, %v1282, %v1481
      %1483 = vst [vmem:[#allocation3 + $0xc0] sm:$0xf] %v1482
      %1484 = vst [vmem:[#allocation3 + $0xc4] sm:$0xf] %v1291
      %v1485 = vld [vmem:[#allocation3 + $0xc8] sm:$0x1]
      %v1486 = vsel %vm1372, %v1292, %v1485
      %1487 = vst [vmem:[#allocation3 + $0xc8] sm:$0x1] %v1486
      %v1488 = vld [vmem:[#allocation3 + $0xcc] sm:$0xf]
      %v1489 = vsel %vm1366, %v1299, %v1488
      %1490 = vst [vmem:[#allocation3 + $0xcc] sm:$0xf] %v1489
      %1491 = vst [vmem:[#allocation3 + $0xd0] sm:$0xf] %v1308
      %v1492 = vld [vmem:[#allocation3 + $0xd4] sm:$0x1]
      %v1493 = vsel %vm1372, %v1309, %v1492
      %1494 = vst [vmem:[#allocation3 + $0xd4] sm:$0x1] %v1493
      %v1495 = vld [vmem:[#allocation3] sm:$0x1]
      %v1496 = vsel %vm1372, 0, %v1495
      %1497 = vst [vmem:[#allocation3] sm:$0x1] %v1496
      %v1498 = vld [vmem:[#allocation3 + $0xc] sm:$0x1]
      %v1499 = vsel %vm1372, 0, %v1498
      %1500 = vst [vmem:[#allocation3 + $0xc] sm:$0x1] %v1499
      %v1501 = vld [vmem:[#allocation3 + $0x18] sm:$0x1]
      %v1502 = vsel %vm1372, 0, %v1501
      %1503 = vst [vmem:[#allocation3 + $0x18] sm:$0x1] %v1502
      %v1504 = vld [vmem:[#allocation3 + $0x24] sm:$0x1]
      %v1505 = vsel %vm1372, 0, %v1504
      %1506 = vst [vmem:[#allocation3 + $0x24] sm:$0x1] %v1505
      %v1507 = vld [vmem:[#allocation3 + $0x30] sm:$0x1]
      %v1508 = vsel %vm1372, 0, %v1507
      %1509 = vst [vmem:[#allocation3 + $0x30] sm:$0x1] %v1508
      %v1510 = vld [vmem:[#allocation3 + $0x3c] sm:$0x1]
      %v1511 = vsel %vm1372, 0, %v1510
      %1512 = vst [vmem:[#allocation3 + $0x3c] sm:$0x1] %v1511
      %v1513 = vld [vmem:[#allocation3 + $0x48] sm:$0x1]
      %v1514 = vsel %vm1372, 0, %v1513
      %1515 = vst [vmem:[#allocation3 + $0x48] sm:$0x1] %v1514
      %v1516 = vld [vmem:[#allocation3 + $0x54] sm:$0x1]
      %v1517 = vsel %vm1372, 0, %v1516
      %1518 = vst [vmem:[#allocation3 + $0x54] sm:$0x1] %v1517
      %v1519 = vld [vmem:[#allocation3 + $0x60] sm:$0x1]
      %v1520 = vsel %vm1372, 0, %v1519
      %1521 = vst [vmem:[#allocation3 + $0x60] sm:$0x1] %v1520
      %v1522 = vld [vmem:[#allocation3 + $0x6c] sm:$0x1]
      %v1523 = vsel %vm1372, 0, %v1522
      %1524 = vst [vmem:[#allocation3 + $0x6c] sm:$0x1] %v1523
      %v1525 = vld [vmem:[#allocation3 + $0x78] sm:$0x1]
      %v1526 = vsel %vm1372, 0, %v1525
      %1527 = vst [vmem:[#allocation3 + $0x78] sm:$0x1] %v1526
      %v1528 = vld [vmem:[#allocation3 + $0x84] sm:$0x1]
      %v1529 = vsel %vm1372, 0, %v1528
      %1530 = vst [vmem:[#allocation3 + $0x84] sm:$0x1] %v1529
      %v1531 = vld [vmem:[#allocation3 + $0x90] sm:$0x1]
      %v1532 = vsel %vm1372, 0, %v1531
      %1533 = vst [vmem:[#allocation3 + $0x90] sm:$0x1] %v1532
      %v1534 = vld [vmem:[#allocation3 + $0x9c] sm:$0x1]
      %v1535 = vsel %vm1372, 0, %v1534
      %1536 = vst [vmem:[#allocation3 + $0x9c] sm:$0x1] %v1535
      %v1537 = vld [vmem:[#allocation3 + $0xa8] sm:$0x1]
      %v1538 = vsel %vm1372, 0, %v1537
      %1539 = vst [vmem:[#allocation3 + $0xa8] sm:$0x1] %v1538
      %v1540 = vld [vmem:[#allocation3 + $0xb4] sm:$0x1]
      %v1541 = vsel %vm1372, 0, %v1540
      %1542 = vst [vmem:[#allocation3 + $0xb4] sm:$0x1] %v1541
      %v1543 = vld [vmem:[#allocation3 + $0xc0] sm:$0x1]
      %v1544 = vsel %vm1372, 0, %v1543
      %1545 = vst [vmem:[#allocation3 + $0xc0] sm:$0x1] %v1544
      %v1546 = vld [vmem:[#allocation3 + $0xcc] sm:$0x1]
      %v1547 = vsel %vm1372, 0, %v1546
      %1548 = vst [vmem:[#allocation3 + $0xcc] sm:$0x1] %v1547
      %vm1549 = vmand %vm1371, %vm1365
      %v1550 = vld [vmem:[#allocation3 + $0x8] sm:$0x1]
      %v1551 = vsel %vm1549, 0, %v1550
      %1552 = vst [vmem:[#allocation3 + $0x8] sm:$0x1] %v1551
      %v1553 = vld [vmem:[#allocation3 + $0x14] sm:$0x1]
      %v1554 = vsel %vm1549, 0, %v1553
      %1555 = vst [vmem:[#allocation3 + $0x14] sm:$0x1] %v1554
      %v1556 = vld [vmem:[#allocation3 + $0x20] sm:$0x1]
      %v1557 = vsel %vm1549, 0, %v1556
      %1558 = vst [vmem:[#allocation3 + $0x20] sm:$0x1] %v1557
      %v1559 = vld [vmem:[#allocation3 + $0x2c] sm:$0x1]
      %v1560 = vsel %vm1549, 0, %v1559
      %1561 = vst [vmem:[#allocation3 + $0x2c] sm:$0x1] %v1560
      %v1562 = vld [vmem:[#allocation3 + $0x38] sm:$0x1]
      %v1563 = vsel %vm1549, 0, %v1562
      %1564 = vst [vmem:[#allocation3 + $0x38] sm:$0x1] %v1563
      %v1565 = vld [vmem:[#allocation3 + $0x44] sm:$0x1]
      %v1566 = vsel %vm1549, 0, %v1565
      %1567 = vst [vmem:[#allocation3 + $0x44] sm:$0x1] %v1566
      %v1568 = vld [vmem:[#allocation3 + $0x50] sm:$0x1]
      %v1569 = vsel %vm1549, 0, %v1568
      %1570 = vst [vmem:[#allocation3 + $0x50] sm:$0x1] %v1569
      %v1571 = vld [vmem:[#allocation3 + $0x5c] sm:$0x1]
      %v1572 = vsel %vm1549, 0, %v1571
      %1573 = vst [vmem:[#allocation3 + $0x5c] sm:$0x1] %v1572
      %v1574 = vld [vmem:[#allocation3 + $0x68] sm:$0x1]
      %v1575 = vsel %vm1549, 0, %v1574
      %1576 = vst [vmem:[#allocation3 + $0x68] sm:$0x1] %v1575
      %v1577 = vld [vmem:[#allocation3 + $0x74] sm:$0x1]
      %v1578 = vsel %vm1549, 0, %v1577
      %1579 = vst [vmem:[#allocation3 + $0x74] sm:$0x1] %v1578
      %v1580 = vld [vmem:[#allocation3 + $0x80] sm:$0x1]
      %v1581 = vsel %vm1549, 0, %v1580
      %1582 = vst [vmem:[#allocation3 + $0x80] sm:$0x1] %v1581
      %v1583 = vld [vmem:[#allocation3 + $0x8c] sm:$0x1]
      %v1584 = vsel %vm1549, 0, %v1583
      %1585 = vst [vmem:[#allocation3 + $0x8c] sm:$0x1] %v1584
      %v1586 = vld [vmem:[#allocation3 + $0x98] sm:$0x1]
      %v1587 = vsel %vm1549, 0, %v1586
      %1588 = vst [vmem:[#allocation3 + $0x98] sm:$0x1] %v1587
      %v1589 = vld [vmem:[#allocation3 + $0xa4] sm:$0x1]
      %v1590 = vsel %vm1549, 0, %v1589
      %1591 = vst [vmem:[#allocation3 + $0xa4] sm:$0x1] %v1590
      %v1592 = vld [vmem:[#allocation3 + $0xb0] sm:$0x1]
      %v1593 = vsel %vm1549, 0, %v1592
      %1594 = vst [vmem:[#allocation3 + $0xb0] sm:$0x1] %v1593
      %v1595 = vld [vmem:[#allocation3 + $0xbc] sm:$0x1]
      %v1596 = vsel %vm1549, 0, %v1595
      %1597 = vst [vmem:[#allocation3 + $0xbc] sm:$0x1] %v1596
      %v1598 = vld [vmem:[#allocation3 + $0xc8] sm:$0x1]
      %v1599 = vsel %vm1549, 0, %v1598
      %1600 = vst [vmem:[#allocation3 + $0xc8] sm:$0x1] %v1599
      %v1601 = vld [vmem:[#allocation3 + $0xd4] sm:$0x1]
      %v1602 = vsel %vm1549, 0, %v1601
      %1603 = vst [vmem:[#allocation3 + $0xd4] sm:$0x1] %v1602
      // Predicated region
      $region269: #{segnet_enc_forward.5} parent=31 // pred_check
        %p1604 = pneg %p274
      $region270: #{segnet_enc_forward.5} parent=31 // pred_check_branch
        %1606 = sbr.rel (%p1604) target = $region272
      $region271: #{segnet_enc_forward.5} parent=31 // pred_region
        %1607 = vst [vmem:[#allocation3] sm:$0xf] 0
        %1608 = vst [vmem:[#allocation3 + $0x4] sm:$0xf] 0
        %1609 = vst [vmem:[#allocation3 + $0x8] sm:$0x1] 0
        %s1610 = scalar_lea.vmem [#allocation3], 204
        %1611 = vst [vmem:[%s1610] sm:$0xf] 0
        %1612 = vst [vmem:[%s1610 + $0x4] sm:$0xf] 0
        %1613 = vst [vmem:[%s1610 + $0x8] sm:$0x1] 0
      $region272: #{segnet_enc_forward.5} parent=31 // pred_fallthru
        _
      %v1614 = vld [vmem:[#allocation3] sm:$0xf]
      %v1615 = vld [vmem:[#allocation3 + $0x4] sm:$0xf]
      %v1616 = vld [vmem:[#allocation3 + $0xc] sm:$0xf]
      %v1617 = vld [vmem:[#allocation3 + $0x10] sm:$0xf]
      %v1618 = vld [vmem:[#allocation3 + $0x18] sm:$0xf]
      %v1619 = vld [vmem:[#allocation3 + $0x1c] sm:$0xf]
      %v1620 = vld [vmem:[#allocation3 + $0x24] sm:$0xf]
      %v1621 = vld [vmem:[#allocation3 + $0x28] sm:$0xf]
      %v1622 = vld [vmem:[#allocation3 + $0x30] sm:$0xf]
      %v1623 = vld [vmem:[#allocation3 + $0x34] sm:$0xf]
      %v1624 = vld [vmem:[#allocation3 + $0x3c] sm:$0xf]
      %v1625 = vld [vmem:[#allocation3 + $0x40] sm:$0xf]
      %v1626 = vld [vmem:[#allocation3 + $0x48] sm:$0xf]
      %v1627 = vld [vmem:[#allocation3 + $0x4c] sm:$0xf]
      %v1628 = vld [vmem:[#allocation3 + $0x54] sm:$0xf]
      %v1629 = vld [vmem:[#allocation3 + $0x58] sm:$0xf]
      %v1630 = vld [vmem:[#allocation3 + $0x60] sm:$0xf]
      %v1631 = vld [vmem:[#allocation3 + $0x64] sm:$0xf]
      %v1632 = vld [vmem:[#allocation3 + $0x6c] sm:$0xf]
      %v1633 = vld [vmem:[#allocation3 + $0x70] sm:$0xf]
      %v1634 = vld [vmem:[#allocation3 + $0x78] sm:$0xf]
      %v1635 = vld [vmem:[#allocation3 + $0x7c] sm:$0xf]
      %v1636 = vld [vmem:[#allocation3 + $0x84] sm:$0xf]
      %v1637 = vld [vmem:[#allocation3 + $0x88] sm:$0xf]
      %v1638 = vld [vmem:[#allocation3 + $0x90] sm:$0xf]
      %v1639 = vld [vmem:[#allocation3 + $0x94] sm:$0xf]
      %v1640 = vld [vmem:[#allocation3 + $0x9c] sm:$0xf]
      %v1641 = vld [vmem:[#allocation3 + $0xa0] sm:$0xf]
      %v1642 = vld [vmem:[#allocation3 + $0xa8] sm:$0xf]
      %v1643 = vld [vmem:[#allocation3 + $0xac] sm:$0xf]
      %v1644 = vld [vmem:[#allocation3 + $0xb4] sm:$0xf]
      %v1645 = vld [vmem:[#allocation3 + $0xb8] sm:$0xf]
      %v1646 = vld [vmem:[#allocation3 + $0x8] sm:$0x1]
      %v1647 = vld [vmem:[#allocation3 + $0x14] sm:$0x1]
      %v1648 = vld [vmem:[#allocation3 + $0x20] sm:$0x1]
      %v1649 = vld [vmem:[#allocation3 + $0x2c] sm:$0x1]
      %v1650 = vld [vmem:[#allocation3 + $0x38] sm:$0x1]
      %v1651 = vld [vmem:[#allocation3 + $0x44] sm:$0x1]
      %v1652 = vld [vmem:[#allocation3 + $0x50] sm:$0x1]
      %v1653 = vld [vmem:[#allocation3 + $0x5c] sm:$0x1]
      %v1654 = vld [vmem:[#allocation3 + $0x68] sm:$0x1]
      %v1655 = vld [vmem:[#allocation3 + $0x74] sm:$0x1]
      %v1656 = vld [vmem:[#allocation3 + $0x80] sm:$0x1]
      %v1657 = vld [vmem:[#allocation3 + $0x8c] sm:$0x1]
      %v1658 = vld [vmem:[#allocation3 + $0x98] sm:$0x1]
      %v1659 = vld [vmem:[#allocation3 + $0xa4] sm:$0x1]
      %v1660 = vld [vmem:[#allocation3 + $0xb0] sm:$0x1]
      %v1661 = vld [vmem:[#allocation3 + $0xbc] sm:$0x1]
      %v1662 = vld [vmem:[#allocation3] sm:$0xe]
      %v1663 = vld [vmem:[#allocation3 + $0xc] sm:$0xe]
      %v1664 = vld [vmem:[#allocation3 + $0x18] sm:$0xe]
      %v1665 = vld [vmem:[#allocation3 + $0x24] sm:$0xe]
      %v1666 = vld [vmem:[#allocation3 + $0x30] sm:$0xe]
      %v1667 = vld [vmem:[#allocation3 + $0x3c] sm:$0xe]
      %v1668 = vld [vmem:[#allocation3 + $0x48] sm:$0xe]
      %v1669 = vld [vmem:[#allocation3 + $0x54] sm:$0xe]
      %v1670 = vld [vmem:[#allocation3 + $0x60] sm:$0xe]
      %v1671 = vld [vmem:[#allocation3 + $0x6c] sm:$0xe]
      %v1672 = vld [vmem:[#allocation3 + $0x78] sm:$0xe]
      %v1673 = vld [vmem:[#allocation3 + $0x84] sm:$0xe]
      %v1674 = vld [vmem:[#allocation3 + $0x90] sm:$0xe]
      %v1675 = vld [vmem:[#allocation3 + $0x9c] sm:$0xe]
      %v1676 = vld [vmem:[#allocation3 + $0xa8] sm:$0xe]
      %v1677 = vld [vmem:[#allocation3 + $0xb4] sm:$0xe]
      %v1710 = vunpack.c.l.b16 %v1614
      %v1711 = vunpack.c.l.b16 %v1615
      %v1712 = vunpack.c.l.b16 %v1616
      %v1713 = vunpack.c.l.b16 %v1617
      %v1714 = vunpack.c.l.b16 %v1618
      %v1715 = vunpack.c.l.b16 %v1619
      %v1716 = vunpack.c.l.b16 %v1620
      %v1717 = vunpack.c.l.b16 %v1621
      %v1718 = vunpack.c.l.b16 %v1622
      %v1719 = vunpack.c.l.b16 %v1623
      %v1720 = vunpack.c.l.b16 %v1624
      %v1721 = vunpack.c.l.b16 %v1625
      %v1722 = vunpack.c.l.b16 %v1626
      %v1723 = vunpack.c.l.b16 %v1627
      %v1724 = vunpack.c.l.b16 %v1628
      %v1725 = vunpack.c.l.b16 %v1629
      %v1726 = vunpack.c.l.b16 %v1630
      %v1727 = vunpack.c.l.b16 %v1631
      %v1728 = vunpack.c.l.b16 %v1632
      %v1729 = vunpack.c.l.b16 %v1633
      %v1730 = vunpack.c.l.b16 %v1634
      %v1731 = vunpack.c.l.b16 %v1635
      %v1732 = vunpack.c.l.b16 %v1636
      %v1733 = vunpack.c.l.b16 %v1637
      %v1734 = vunpack.c.l.b16 %v1638
      %v1735 = vunpack.c.l.b16 %v1639
      %v1736 = vunpack.c.l.b16 %v1640
      %v1737 = vunpack.c.l.b16 %v1641
      %v1738 = vunpack.c.l.b16 %v1642
      %v1739 = vunpack.c.l.b16 %v1643
      %v1740 = vunpack.c.l.b16 %v1644
      %v1741 = vunpack.c.l.b16 %v1645
      %v1742 = vpack.c.b16 %v1711, %v1710
      %v1743 = vpack.c.b16 %v1713, %v1712
      %v1744 = vpack.c.b16 %v1715, %v1714
      %v1745 = vpack.c.b16 %v1717, %v1716
      %v1746 = vpack.c.b16 %v1719, %v1718
      %v1747 = vpack.c.b16 %v1721, %v1720
      %v1748 = vpack.c.b16 %v1723, %v1722
      %v1749 = vpack.c.b16 %v1725, %v1724
      %v1750 = vpack.c.b16 %v1727, %v1726
      %v1751 = vpack.c.b16 %v1729, %v1728
      %v1752 = vpack.c.b16 %v1731, %v1730
      %v1753 = vpack.c.b16 %v1733, %v1732
      %v1754 = vpack.c.b16 %v1735, %v1734
      %v1755 = vpack.c.b16 %v1737, %v1736
      %v1756 = vpack.c.b16 %v1739, %v1738
      %v1757 = vpack.c.b16 %v1741, %v1740
      %v1790 = vunpack.c.l.b16 %v1646
      %v1791 = vunpack.c.l.b16 %v1647
      %v1792 = vunpack.c.l.b16 %v1648
      %v1793 = vunpack.c.l.b16 %v1649
      %v1794 = vunpack.c.l.b16 %v1650
      %v1795 = vunpack.c.l.b16 %v1651
      %v1796 = vunpack.c.l.b16 %v1652
      %v1797 = vunpack.c.l.b16 %v1653
      %v1798 = vunpack.c.l.b16 %v1654
      %v1799 = vunpack.c.l.b16 %v1655
      %v1800 = vunpack.c.l.b16 %v1656
      %v1801 = vunpack.c.l.b16 %v1657
      %v1802 = vunpack.c.l.b16 %v1658
      %v1803 = vunpack.c.l.b16 %v1659
      %v1804 = vunpack.c.l.b16 %v1660
      %v1805 = vunpack.c.l.b16 %v1661
      %v1806 = vpack.c.b16 %v1790, %v1790
      %v1807 = vpack.c.b16 %v1791, %v1791
      %v1808 = vpack.c.b16 %v1792, %v1792
      %v1809 = vpack.c.b16 %v1793, %v1793
      %v1810 = vpack.c.b16 %v1794, %v1794
      %v1811 = vpack.c.b16 %v1795, %v1795
      %v1812 = vpack.c.b16 %v1796, %v1796
      %v1813 = vpack.c.b16 %v1797, %v1797
      %v1814 = vpack.c.b16 %v1798, %v1798
      %v1815 = vpack.c.b16 %v1799, %v1799
      %v1816 = vpack.c.b16 %v1800, %v1800
      %v1817 = vpack.c.b16 %v1801, %v1801
      %v1818 = vpack.c.b16 %v1802, %v1802
      %v1819 = vpack.c.b16 %v1803, %v1803
      %v1820 = vpack.c.b16 %v1804, %v1804
      %v1821 = vpack.c.b16 %v1805, %v1805
      %vm1822 = vsmask.f32 7424
      %v1824 = vshrl.u32 %v1742, 16
      %v1826 = vshll.u32 %v1742, 16
      %v1828 = vrot.slane %v1826, 1
      %v1829 = vor.u32 %v1824, %v1828
      %v1831 = vshll.u32 %v1806, 16
      %v1833 = vrot.slane %v1831, 1
      %v1834 = vsel %vm1822, %v1829, %v1833
      %v1836 = vshrl.u32 %v1743, 16
      %v1838 = vshll.u32 %v1743, 16
      %v1840 = vrot.slane %v1838, 1
      %v1841 = vor.u32 %v1836, %v1840
      %v1843 = vshll.u32 %v1807, 16
      %v1845 = vrot.slane %v1843, 1
      %v1846 = vsel %vm1822, %v1841, %v1845
      %v1848 = vshrl.u32 %v1744, 16
      %v1850 = vshll.u32 %v1744, 16
      %v1852 = vrot.slane %v1850, 1
      %v1853 = vor.u32 %v1848, %v1852
      %v1855 = vshll.u32 %v1808, 16
      %v1857 = vrot.slane %v1855, 1
      %v1858 = vsel %vm1822, %v1853, %v1857
      %v1860 = vshrl.u32 %v1745, 16
      %v1862 = vshll.u32 %v1745, 16
      %v1864 = vrot.slane %v1862, 1
      %v1865 = vor.u32 %v1860, %v1864
      %v1867 = vshll.u32 %v1809, 16
      %v1869 = vrot.slane %v1867, 1
      %v1870 = vsel %vm1822, %v1865, %v1869
      %v1872 = vshrl.u32 %v1746, 16
      %v1874 = vshll.u32 %v1746, 16
      %v1876 = vrot.slane %v1874, 1
      %v1877 = vor.u32 %v1872, %v1876
      %v1879 = vshll.u32 %v1810, 16
      %v1881 = vrot.slane %v1879, 1
      %v1882 = vsel %vm1822, %v1877, %v1881
      %v1884 = vshrl.u32 %v1747, 16
      %v1886 = vshll.u32 %v1747, 16
      %v1888 = vrot.slane %v1886, 1
      %v1889 = vor.u32 %v1884, %v1888
      %v1891 = vshll.u32 %v1811, 16
      %v1893 = vrot.slane %v1891, 1
      %v1894 = vsel %vm1822, %v1889, %v1893
      %v1896 = vshrl.u32 %v1748, 16
      %v1898 = vshll.u32 %v1748, 16
      %v1900 = vrot.slane %v1898, 1
      %v1901 = vor.u32 %v1896, %v1900
      %v1903 = vshll.u32 %v1812, 16
      %v1905 = vrot.slane %v1903, 1
      %v1906 = vsel %vm1822, %v1901, %v1905
      %v1908 = vshrl.u32 %v1749, 16
      %v1910 = vshll.u32 %v1749, 16
      %v1912 = vrot.slane %v1910, 1
      %v1913 = vor.u32 %v1908, %v1912
      %v1915 = vshll.u32 %v1813, 16
      %v1917 = vrot.slane %v1915, 1
      %v1918 = vsel %vm1822, %v1913, %v1917
      %v1920 = vshrl.u32 %v1750, 16
      %v1922 = vshll.u32 %v1750, 16
      %v1924 = vrot.slane %v1922, 1
      %v1925 = vor.u32 %v1920, %v1924
      %v1927 = vshll.u32 %v1814, 16
      %v1929 = vrot.slane %v1927, 1
      %v1930 = vsel %vm1822, %v1925, %v1929
      %v1932 = vshrl.u32 %v1751, 16
      %v1934 = vshll.u32 %v1751, 16
      %v1936 = vrot.slane %v1934, 1
      %v1937 = vor.u32 %v1932, %v1936
      %v1939 = vshll.u32 %v1815, 16
      %v1941 = vrot.slane %v1939, 1
      %v1942 = vsel %vm1822, %v1937, %v1941
      %v1944 = vshrl.u32 %v1752, 16
      %v1946 = vshll.u32 %v1752, 16
      %v1948 = vrot.slane %v1946, 1
      %v1949 = vor.u32 %v1944, %v1948
      %v1951 = vshll.u32 %v1816, 16
      %v1953 = vrot.slane %v1951, 1
      %v1954 = vsel %vm1822, %v1949, %v1953
      %v1956 = vshrl.u32 %v1753, 16
      %v1958 = vshll.u32 %v1753, 16
      %v1960 = vrot.slane %v1958, 1
      %v1961 = vor.u32 %v1956, %v1960
      %v1963 = vshll.u32 %v1817, 16
      %v1965 = vrot.slane %v1963, 1
      %v1966 = vsel %vm1822, %v1961, %v1965
      %v1968 = vshrl.u32 %v1754, 16
      %v1970 = vshll.u32 %v1754, 16
      %v1972 = vrot.slane %v1970, 1
      %v1973 = vor.u32 %v1968, %v1972
      %v1975 = vshll.u32 %v1818, 16
      %v1977 = vrot.slane %v1975, 1
      %v1978 = vsel %vm1822, %v1973, %v1977
      %v1980 = vshrl.u32 %v1755, 16
      %v1982 = vshll.u32 %v1755, 16
      %v1984 = vrot.slane %v1982, 1
      %v1985 = vor.u32 %v1980, %v1984
      %v1987 = vshll.u32 %v1819, 16
      %v1989 = vrot.slane %v1987, 1
      %v1990 = vsel %vm1822, %v1985, %v1989
      %v1992 = vshrl.u32 %v1756, 16
      %v1994 = vshll.u32 %v1756, 16
      %v1996 = vrot.slane %v1994, 1
      %v1997 = vor.u32 %v1992, %v1996
      %v1999 = vshll.u32 %v1820, 16
      %v2001 = vrot.slane %v1999, 1
      %v2002 = vsel %vm1822, %v1997, %v2001
      %v2004 = vshrl.u32 %v1757, 16
      %v2006 = vshll.u32 %v1757, 16
      %v2008 = vrot.slane %v2006, 1
      %v2009 = vor.u32 %v2004, %v2008
      %v2011 = vshll.u32 %v1821, 16
      %v2013 = vrot.slane %v2011, 1
      %v2014 = vsel %vm1822, %v2009, %v2013
      %v2047 = vunpack.c.l.b16 %v1662
      %v2048 = vunpack.c.l.b16 %v1663
      %v2049 = vunpack.c.l.b16 %v1664
      %v2050 = vunpack.c.l.b16 %v1665
      %v2051 = vunpack.c.l.b16 %v1666
      %v2052 = vunpack.c.l.b16 %v1667
      %v2053 = vunpack.c.l.b16 %v1668
      %v2054 = vunpack.c.l.b16 %v1669
      %v2055 = vunpack.c.l.b16 %v1670
      %v2056 = vunpack.c.l.b16 %v1671
      %v2057 = vunpack.c.l.b16 %v1672
      %v2058 = vunpack.c.l.b16 %v1673
      %v2059 = vunpack.c.l.b16 %v1674
      %v2060 = vunpack.c.l.b16 %v1675
      %v2061 = vunpack.c.l.b16 %v1676
      %v2062 = vunpack.c.l.b16 %v1677
      %v2063 = vpack.c.b16 %v1711, %v2047
      %v2064 = vpack.c.b16 %v1713, %v2048
      %v2065 = vpack.c.b16 %v1715, %v2049
      %v2066 = vpack.c.b16 %v1717, %v2050
      %v2067 = vpack.c.b16 %v1719, %v2051
      %v2068 = vpack.c.b16 %v1721, %v2052
      %v2069 = vpack.c.b16 %v1723, %v2053
      %v2070 = vpack.c.b16 %v1725, %v2054
      %v2071 = vpack.c.b16 %v1727, %v2055
      %v2072 = vpack.c.b16 %v1729, %v2056
      %v2073 = vpack.c.b16 %v1731, %v2057
      %v2074 = vpack.c.b16 %v1733, %v2058
      %v2075 = vpack.c.b16 %v1735, %v2059
      %v2076 = vpack.c.b16 %v1737, %v2060
      %v2077 = vpack.c.b16 %v1739, %v2061
      %v2078 = vpack.c.b16 %v1741, %v2062
      %vm2079 = vcmask 1046528
      %v2080 = vrot.slane %v2063, 1
      %v2081 = vrot.slane %v1806, 1
      %v2082 = vsel %vm2079, %v2080, %v2081
      %v2083 = vrot.slane %v2064, 1
      %v2084 = vrot.slane %v1807, 1
      %v2085 = vsel %vm2079, %v2083, %v2084
      %v2086 = vrot.slane %v2065, 1
      %v2087 = vrot.slane %v1808, 1
      %v2088 = vsel %vm2079, %v2086, %v2087
      %v2089 = vrot.slane %v2066, 1
      %v2090 = vrot.slane %v1809, 1
      %v2091 = vsel %vm2079, %v2089, %v2090
      %v2092 = vrot.slane %v2067, 1
      %v2093 = vrot.slane %v1810, 1
      %v2094 = vsel %vm2079, %v2092, %v2093
      %v2095 = vrot.slane %v2068, 1
      %v2096 = vrot.slane %v1811, 1
      %v2097 = vsel %vm2079, %v2095, %v2096
      %v2098 = vrot.slane %v2069, 1
      %v2099 = vrot.slane %v1812, 1
      %v2100 = vsel %vm2079, %v2098, %v2099
      %v2101 = vrot.slane %v2070, 1
      %v2102 = vrot.slane %v1813, 1
      %v2103 = vsel %vm2079, %v2101, %v2102
      %v2104 = vrot.slane %v2071, 1
      %v2105 = vrot.slane %v1814, 1
      %v2106 = vsel %vm2079, %v2104, %v2105
      %v2107 = vrot.slane %v2072, 1
      %v2108 = vrot.slane %v1815, 1
      %v2109 = vsel %vm2079, %v2107, %v2108
      %v2110 = vrot.slane %v2073, 1
      %v2111 = vrot.slane %v1816, 1
      %v2112 = vsel %vm2079, %v2110, %v2111
      %v2113 = vrot.slane %v2074, 1
      %v2114 = vrot.slane %v1817, 1
      %v2115 = vsel %vm2079, %v2113, %v2114
      %v2116 = vrot.slane %v2075, 1
      %v2117 = vrot.slane %v1818, 1
      %v2118 = vsel %vm2079, %v2116, %v2117
      %v2119 = vrot.slane %v2076, 1
      %v2120 = vrot.slane %v1819, 1
      %v2121 = vsel %vm2079, %v2119, %v2120
      %v2122 = vrot.slane %v2077, 1
      %v2123 = vrot.slane %v1820, 1
      %v2124 = vsel %vm2079, %v2122, %v2123
      %v2125 = vrot.slane %v2078, 1
      %v2126 = vrot.slane %v1821, 1
      %v2127 = vsel %vm2079, %v2125, %v2126
      %v2144 = vld [vmem:[%s1] sm:$0xf]
      %v2145 = vld [vmem:[%s1 + $0x4] sm:$0xf]
      %v2146 = vld [vmem:[%s1 + $0x8] sm:$0xf]
      %v2147 = vld [vmem:[%s1 + $0xc] sm:$0xf]
      %v2148 = vld [vmem:[%s1 + $0x10] sm:$0xf]
      %v2149 = vld [vmem:[%s1 + $0x14] sm:$0xf]
      %v2150 = vld [vmem:[%s1 + $0x18] sm:$0xf]
      %v2151 = vld [vmem:[%s1 + $0x1c] sm:$0xf]
      %v2152 = vld [vmem:[%s1 + $0x20] sm:$0xf]
      %v2153 = vld [vmem:[%s1 + $0x24] sm:$0xf]
      %v2154 = vld [vmem:[%s1 + $0x28] sm:$0xf]
      %v2155 = vld [vmem:[%s1 + $0x2c] sm:$0xf]
      %v2156 = vld [vmem:[%s1 + $0x30] sm:$0xf]
      %v2157 = vld [vmem:[%s1 + $0x34] sm:$0xf]
      %v2158 = vld [vmem:[%s1 + $0x38] sm:$0xf]
      %v2159 = vld [vmem:[%s1 + $0x3c] sm:$0xf]
      %v2160 = vld [vmem:[%s1 + $0x40] sm:$0xf]
      %v2161 = vld [vmem:[%s1 + $0x44] sm:$0xf]
      %v2162 = vld [vmem:[%s1 + $0x48] sm:$0xf]
      %v2163 = vld [vmem:[%s1 + $0x4c] sm:$0xf]
      %v2164 = vld [vmem:[%s1 + $0x50] sm:$0xf]
      %v2165 = vld [vmem:[%s1 + $0x54] sm:$0xf]
      %v2166 = vld [vmem:[%s1 + $0x58] sm:$0xf]
      %v2167 = vld [vmem:[%s1 + $0x5c] sm:$0xf]
      %v2168 = vld [vmem:[%s1 + $0x60] sm:$0xf]
      %v2169 = vld [vmem:[%s1 + $0x64] sm:$0xf]
      %v2170 = vld [vmem:[%s1 + $0x68] sm:$0xf]
      %v2171 = vld [vmem:[%s1 + $0x6c] sm:$0xf]
      %v2172 = vld [vmem:[%s1 + $0x70] sm:$0xf]
      %v2173 = vld [vmem:[%s1 + $0x74] sm:$0xf]
      %v2174 = vld [vmem:[%s1 + $0x78] sm:$0xf]
      %v2175 = vld [vmem:[%s1 + $0x7c] sm:$0xf]
      %v2176 = vld [vmem:[%s1 + $0x80] sm:$0xf]
      %v2177 = vld [vmem:[%s1 + $0x84] sm:$0xf]
      %v2178 = vld [vmem:[%s1 + $0x88] sm:$0xf]
      %v2179 = vld [vmem:[%s1 + $0x8c] sm:$0xf]
      %v2180 = vld [vmem:[%s1 + $0x90] sm:$0xf]
      %v2181 = vld [vmem:[%s1 + $0x94] sm:$0xf]
      %v2182 = vld [vmem:[%s1 + $0x98] sm:$0xf]
      %v2183 = vld [vmem:[%s1 + $0x9c] sm:$0xf]
      %v2184 = vld [vmem:[%s1 + $0xa0] sm:$0xf]
      %v2185 = vld [vmem:[%s1 + $0xa4] sm:$0xf]
      %v2186 = vld [vmem:[%s1 + $0xa8] sm:$0xf]
      %v2187 = vld [vmem:[%s1 + $0xac] sm:$0xf]
      %v2188 = vld [vmem:[%s1 + $0xb0] sm:$0xf]
      %v2189 = vld [vmem:[%s1 + $0xb4] sm:$0xf]
      %v2190 = vld [vmem:[%s1 + $0xb8] sm:$0xf]
      %v2191 = vld [vmem:[%s1 + $0xbc] sm:$0xf]
      %s2192 = scalar_lea.vmem [#allocation3], 12
      %v2193 = vld [vmem:[%s2192] sm:$0xf]
      %v2194 = vld [vmem:[%s2192 + $0x4] sm:$0xf]
      %v2195 = vld [vmem:[%s2192 + $0xc] sm:$0xf]
      %v2196 = vld [vmem:[%s2192 + $0x10] sm:$0xf]
      %v2197 = vld [vmem:[%s2192 + $0x18] sm:$0xf]
      %v2198 = vld [vmem:[%s2192 + $0x1c] sm:$0xf]
      %v2199 = vld [vmem:[%s2192 + $0x24] sm:$0xf]
      %v2200 = vld [vmem:[%s2192 + $0x28] sm:$0xf]
      %v2201 = vld [vmem:[%s2192 + $0x30] sm:$0xf]
      %v2202 = vld [vmem:[%s2192 + $0x34] sm:$0xf]
      %v2203 = vld [vmem:[%s2192 + $0x3c] sm:$0xf]
      %v2204 = vld [vmem:[%s2192 + $0x40] sm:$0xf]
      %v2205 = vld [vmem:[%s2192 + $0x48] sm:$0xf]
      %v2206 = vld [vmem:[%s2192 + $0x4c] sm:$0xf]
      %v2207 = vld [vmem:[%s2192 + $0x54] sm:$0xf]
      %v2208 = vld [vmem:[%s2192 + $0x58] sm:$0xf]
      %v2209 = vld [vmem:[%s2192 + $0x60] sm:$0xf]
      %v2210 = vld [vmem:[%s2192 + $0x64] sm:$0xf]
      %v2211 = vld [vmem:[%s2192 + $0x6c] sm:$0xf]
      %v2212 = vld [vmem:[%s2192 + $0x70] sm:$0xf]
      %v2213 = vld [vmem:[%s2192 + $0x78] sm:$0xf]
      %v2214 = vld [vmem:[%s2192 + $0x7c] sm:$0xf]
      %v2215 = vld [vmem:[%s2192 + $0x84] sm:$0xf]
      %v2216 = vld [vmem:[%s2192 + $0x88] sm:$0xf]
      %v2217 = vld [vmem:[%s2192 + $0x90] sm:$0xf]
      %v2218 = vld [vmem:[%s2192 + $0x94] sm:$0xf]
      %v2219 = vld [vmem:[%s2192 + $0x9c] sm:$0xf]
      %v2220 = vld [vmem:[%s2192 + $0xa0] sm:$0xf]
      %v2221 = vld [vmem:[%s2192 + $0xa8] sm:$0xf]
      %v2222 = vld [vmem:[%s2192 + $0xac] sm:$0xf]
      %v2223 = vld [vmem:[%s2192 + $0xb4] sm:$0xf]
      %v2224 = vld [vmem:[%s2192 + $0xb8] sm:$0xf]
      %v2225 = vld [vmem:[%s2192 + $0x8] sm:$0x1]
      %v2226 = vld [vmem:[%s2192 + $0x14] sm:$0x1]
      %v2227 = vld [vmem:[%s2192 + $0x20] sm:$0x1]
      %v2228 = vld [vmem:[%s2192 + $0x2c] sm:$0x1]
      %v2229 = vld [vmem:[%s2192 + $0x38] sm:$0x1]
      %v2230 = vld [vmem:[%s2192 + $0x44] sm:$0x1]
      %v2231 = vld [vmem:[%s2192 + $0x50] sm:$0x1]
      %v2232 = vld [vmem:[%s2192 + $0x5c] sm:$0x1]
      %v2233 = vld [vmem:[%s2192 + $0x68] sm:$0x1]
      %v2234 = vld [vmem:[%s2192 + $0x74] sm:$0x1]
      %v2235 = vld [vmem:[%s2192 + $0x80] sm:$0x1]
      %v2236 = vld [vmem:[%s2192 + $0x8c] sm:$0x1]
      %v2237 = vld [vmem:[%s2192 + $0x98] sm:$0x1]
      %v2238 = vld [vmem:[%s2192 + $0xa4] sm:$0x1]
      %v2239 = vld [vmem:[%s2192 + $0xb0] sm:$0x1]
      %v2240 = vld [vmem:[%s2192 + $0xbc] sm:$0x1]
      %v2241 = vld [vmem:[%s2192] sm:$0xe]
      %v2242 = vld [vmem:[%s2192 + $0xc] sm:$0xe]
      %v2243 = vld [vmem:[%s2192 + $0x18] sm:$0xe]
      %v2244 = vld [vmem:[%s2192 + $0x24] sm:$0xe]
      %v2245 = vld [vmem:[%s2192 + $0x30] sm:$0xe]
      %v2246 = vld [vmem:[%s2192 + $0x3c] sm:$0xe]
      %v2247 = vld [vmem:[%s2192 + $0x48] sm:$0xe]
      %v2248 = vld [vmem:[%s2192 + $0x54] sm:$0xe]
      %v2249 = vld [vmem:[%s2192 + $0x60] sm:$0xe]
      %v2250 = vld [vmem:[%s2192 + $0x6c] sm:$0xe]
      %v2251 = vld [vmem:[%s2192 + $0x78] sm:$0xe]
      %v2252 = vld [vmem:[%s2192 + $0x84] sm:$0xe]
      %v2253 = vld [vmem:[%s2192 + $0x90] sm:$0xe]
      %v2254 = vld [vmem:[%s2192 + $0x9c] sm:$0xe]
      %v2255 = vld [vmem:[%s2192 + $0xa8] sm:$0xe]
      %v2256 = vld [vmem:[%s2192 + $0xb4] sm:$0xe]
      %v2289 = vunpack.c.l.b16 %v2193
      %v2290 = vunpack.c.l.b16 %v2194
      %v2291 = vunpack.c.l.b16 %v2195
      %v2292 = vunpack.c.l.b16 %v2196
      %v2293 = vunpack.c.l.b16 %v2197
      %v2294 = vunpack.c.l.b16 %v2198
      %v2295 = vunpack.c.l.b16 %v2199
      %v2296 = vunpack.c.l.b16 %v2200
      %v2297 = vunpack.c.l.b16 %v2201
      %v2298 = vunpack.c.l.b16 %v2202
      %v2299 = vunpack.c.l.b16 %v2203
      %v2300 = vunpack.c.l.b16 %v2204
      %v2301 = vunpack.c.l.b16 %v2205
      %v2302 = vunpack.c.l.b16 %v2206
      %v2303 = vunpack.c.l.b16 %v2207
      %v2304 = vunpack.c.l.b16 %v2208
      %v2305 = vunpack.c.l.b16 %v2209
      %v2306 = vunpack.c.l.b16 %v2210
      %v2307 = vunpack.c.l.b16 %v2211
      %v2308 = vunpack.c.l.b16 %v2212
      %v2309 = vunpack.c.l.b16 %v2213
      %v2310 = vunpack.c.l.b16 %v2214
      %v2311 = vunpack.c.l.b16 %v2215
      %v2312 = vunpack.c.l.b16 %v2216
      %v2313 = vunpack.c.l.b16 %v2217
      %v2314 = vunpack.c.l.b16 %v2218
      %v2315 = vunpack.c.l.b16 %v2219
      %v2316 = vunpack.c.l.b16 %v2220
      %v2317 = vunpack.c.l.b16 %v2221
      %v2318 = vunpack.c.l.b16 %v2222
      %v2319 = vunpack.c.l.b16 %v2223
      %v2320 = vunpack.c.l.b16 %v2224
      %v2321 = vpack.c.b16 %v2290, %v2289
      %v2322 = vpack.c.b16 %v2292, %v2291
      %v2323 = vpack.c.b16 %v2294, %v2293
      %v2324 = vpack.c.b16 %v2296, %v2295
      %v2325 = vpack.c.b16 %v2298, %v2297
      %v2326 = vpack.c.b16 %v2300, %v2299
      %v2327 = vpack.c.b16 %v2302, %v2301
      %v2328 = vpack.c.b16 %v2304, %v2303
      %v2329 = vpack.c.b16 %v2306, %v2305
      %v2330 = vpack.c.b16 %v2308, %v2307
      %v2331 = vpack.c.b16 %v2310, %v2309
      %v2332 = vpack.c.b16 %v2312, %v2311
      %v2333 = vpack.c.b16 %v2314, %v2313
      %v2334 = vpack.c.b16 %v2316, %v2315
      %v2335 = vpack.c.b16 %v2318, %v2317
      %v2336 = vpack.c.b16 %v2320, %v2319
      %v2369 = vunpack.c.l.b16 %v2225
      %v2370 = vunpack.c.l.b16 %v2226
      %v2371 = vunpack.c.l.b16 %v2227
      %v2372 = vunpack.c.l.b16 %v2228
      %v2373 = vunpack.c.l.b16 %v2229
      %v2374 = vunpack.c.l.b16 %v2230
      %v2375 = vunpack.c.l.b16 %v2231
      %v2376 = vunpack.c.l.b16 %v2232
      %v2377 = vunpack.c.l.b16 %v2233
      %v2378 = vunpack.c.l.b16 %v2234
      %v2379 = vunpack.c.l.b16 %v2235
      %v2380 = vunpack.c.l.b16 %v2236
      %v2381 = vunpack.c.l.b16 %v2237
      %v2382 = vunpack.c.l.b16 %v2238
      %v2383 = vunpack.c.l.b16 %v2239
      %v2384 = vunpack.c.l.b16 %v2240
      %v2385 = vpack.c.b16 %v2369, %v2369
      %v2386 = vpack.c.b16 %v2370, %v2370
      %v2387 = vpack.c.b16 %v2371, %v2371
      %v2388 = vpack.c.b16 %v2372, %v2372
      %v2389 = vpack.c.b16 %v2373, %v2373
      %v2390 = vpack.c.b16 %v2374, %v2374
      %v2391 = vpack.c.b16 %v2375, %v2375
      %v2392 = vpack.c.b16 %v2376, %v2376
      %v2393 = vpack.c.b16 %v2377, %v2377
      %v2394 = vpack.c.b16 %v2378, %v2378
      %v2395 = vpack.c.b16 %v2379, %v2379
      %v2396 = vpack.c.b16 %v2380, %v2380
      %v2397 = vpack.c.b16 %v2381, %v2381
      %v2398 = vpack.c.b16 %v2382, %v2382
      %v2399 = vpack.c.b16 %v2383, %v2383
      %v2400 = vpack.c.b16 %v2384, %v2384
      %v2402 = vshrl.u32 %v2321, 16
      %v2404 = vshll.u32 %v2321, 16
      %v2406 = vrot.slane %v2404, 1
      %v2407 = vor.u32 %v2402, %v2406
      %v2409 = vshll.u32 %v2385, 16
      %v2411 = vrot.slane %v2409, 1
      %v2412 = vsel %vm1822, %v2407, %v2411
      %v2414 = vshrl.u32 %v2322, 16
      %v2416 = vshll.u32 %v2322, 16
      %v2418 = vrot.slane %v2416, 1
      %v2419 = vor.u32 %v2414, %v2418
      %v2421 = vshll.u32 %v2386, 16
      %v2423 = vrot.slane %v2421, 1
      %v2424 = vsel %vm1822, %v2419, %v2423
      %v2426 = vshrl.u32 %v2323, 16
      %v2428 = vshll.u32 %v2323, 16
      %v2430 = vrot.slane %v2428, 1
      %v2431 = vor.u32 %v2426, %v2430
      %v2433 = vshll.u32 %v2387, 16
      %v2435 = vrot.slane %v2433, 1
      %v2436 = vsel %vm1822, %v2431, %v2435
      %v2438 = vshrl.u32 %v2324, 16
      %v2440 = vshll.u32 %v2324, 16
      %v2442 = vrot.slane %v2440, 1
      %v2443 = vor.u32 %v2438, %v2442
      %v2445 = vshll.u32 %v2388, 16
      %v2447 = vrot.slane %v2445, 1
      %v2448 = vsel %vm1822, %v2443, %v2447
      %v2450 = vshrl.u32 %v2325, 16
      %v2452 = vshll.u32 %v2325, 16
      %v2454 = vrot.slane %v2452, 1
      %v2455 = vor.u32 %v2450, %v2454
      %v2457 = vshll.u32 %v2389, 16
      %v2459 = vrot.slane %v2457, 1
      %v2460 = vsel %vm1822, %v2455, %v2459
      %v2462 = vshrl.u32 %v2326, 16
      %v2464 = vshll.u32 %v2326, 16
      %v2466 = vrot.slane %v2464, 1
      %v2467 = vor.u32 %v2462, %v2466
      %v2469 = vshll.u32 %v2390, 16
      %v2471 = vrot.slane %v2469, 1
      %v2472 = vsel %vm1822, %v2467, %v2471
      %v2474 = vshrl.u32 %v2327, 16
      %v2476 = vshll.u32 %v2327, 16
      %v2478 = vrot.slane %v2476, 1
      %v2479 = vor.u32 %v2474, %v2478
      %v2481 = vshll.u32 %v2391, 16
      %v2483 = vrot.slane %v2481, 1
      %v2484 = vsel %vm1822, %v2479, %v2483
      %v2486 = vshrl.u32 %v2328, 16
      %v2488 = vshll.u32 %v2328, 16
      %v2490 = vrot.slane %v2488, 1
      %v2491 = vor.u32 %v2486, %v2490
      %v2493 = vshll.u32 %v2392, 16
      %v2495 = vrot.slane %v2493, 1
      %v2496 = vsel %vm1822, %v2491, %v2495
      %v2498 = vshrl.u32 %v2329, 16
      %v2500 = vshll.u32 %v2329, 16
      %v2502 = vrot.slane %v2500, 1
      %v2503 = vor.u32 %v2498, %v2502
      %v2505 = vshll.u32 %v2393, 16
      %v2507 = vrot.slane %v2505, 1
      %v2508 = vsel %vm1822, %v2503, %v2507
      %v2510 = vshrl.u32 %v2330, 16
      %v2512 = vshll.u32 %v2330, 16
      %v2514 = vrot.slane %v2512, 1
      %v2515 = vor.u32 %v2510, %v2514
      %v2517 = vshll.u32 %v2394, 16
      %v2519 = vrot.slane %v2517, 1
      %v2520 = vsel %vm1822, %v2515, %v2519
      %v2522 = vshrl.u32 %v2331, 16
      %v2524 = vshll.u32 %v2331, 16
      %v2526 = vrot.slane %v2524, 1
      %v2527 = vor.u32 %v2522, %v2526
      %v2529 = vshll.u32 %v2395, 16
      %v2531 = vrot.slane %v2529, 1
      %v2532 = vsel %vm1822, %v2527, %v2531
      %v2534 = vshrl.u32 %v2332, 16
      %v2536 = vshll.u32 %v2332, 16
      %v2538 = vrot.slane %v2536, 1
      %v2539 = vor.u32 %v2534, %v2538
      %v2541 = vshll.u32 %v2396, 16
      %v2543 = vrot.slane %v2541, 1
      %v2544 = vsel %vm1822, %v2539, %v2543
      %v2546 = vshrl.u32 %v2333, 16
      %v2548 = vshll.u32 %v2333, 16
      %v2550 = vrot.slane %v2548, 1
      %v2551 = vor.u32 %v2546, %v2550
      %v2553 = vshll.u32 %v2397, 16
      %v2555 = vrot.slane %v2553, 1
      %v2556 = vsel %vm1822, %v2551, %v2555
      %v2558 = vshrl.u32 %v2334, 16
      %v2560 = vshll.u32 %v2334, 16
      %v2562 = vrot.slane %v2560, 1
      %v2563 = vor.u32 %v2558, %v2562
      %v2565 = vshll.u32 %v2398, 16
      %v2567 = vrot.slane %v2565, 1
      %v2568 = vsel %vm1822, %v2563, %v2567
      %v2570 = vshrl.u32 %v2335, 16
      %v2572 = vshll.u32 %v2335, 16
      %v2574 = vrot.slane %v2572, 1
      %v2575 = vor.u32 %v2570, %v2574
      %v2577 = vshll.u32 %v2399, 16
      %v2579 = vrot.slane %v2577, 1
      %v2580 = vsel %vm1822, %v2575, %v2579
      %v2582 = vshrl.u32 %v2336, 16
      %v2584 = vshll.u32 %v2336, 16
      %v2586 = vrot.slane %v2584, 1
      %v2587 = vor.u32 %v2582, %v2586
      %v2589 = vshll.u32 %v2400, 16
      %v2591 = vrot.slane %v2589, 1
      %v2592 = vsel %vm1822, %v2587, %v2591
      %v2625 = vunpack.c.l.b16 %v2241
      %v2626 = vunpack.c.l.b16 %v2242
      %v2627 = vunpack.c.l.b16 %v2243
      %v2628 = vunpack.c.l.b16 %v2244
      %v2629 = vunpack.c.l.b16 %v2245
      %v2630 = vunpack.c.l.b16 %v2246
      %v2631 = vunpack.c.l.b16 %v2247
      %v2632 = vunpack.c.l.b16 %v2248
      %v2633 = vunpack.c.l.b16 %v2249
      %v2634 = vunpack.c.l.b16 %v2250
      %v2635 = vunpack.c.l.b16 %v2251
      %v2636 = vunpack.c.l.b16 %v2252
      %v2637 = vunpack.c.l.b16 %v2253
      %v2638 = vunpack.c.l.b16 %v2254
      %v2639 = vunpack.c.l.b16 %v2255
      %v2640 = vunpack.c.l.b16 %v2256
      %v2641 = vpack.c.b16 %v2290, %v2625
      %v2642 = vpack.c.b16 %v2292, %v2626
      %v2643 = vpack.c.b16 %v2294, %v2627
      %v2644 = vpack.c.b16 %v2296, %v2628
      %v2645 = vpack.c.b16 %v2298, %v2629
      %v2646 = vpack.c.b16 %v2300, %v2630
      %v2647 = vpack.c.b16 %v2302, %v2631
      %v2648 = vpack.c.b16 %v2304, %v2632
      %v2649 = vpack.c.b16 %v2306, %v2633
      %v2650 = vpack.c.b16 %v2308, %v2634
      %v2651 = vpack.c.b16 %v2310, %v2635
      %v2652 = vpack.c.b16 %v2312, %v2636
      %v2653 = vpack.c.b16 %v2314, %v2637
      %v2654 = vpack.c.b16 %v2316, %v2638
      %v2655 = vpack.c.b16 %v2318, %v2639
      %v2656 = vpack.c.b16 %v2320, %v2640
      %v2657 = vrot.slane %v2641, 1
      %v2658 = vrot.slane %v2385, 1
      %v2659 = vsel %vm2079, %v2657, %v2658
      %v2660 = vrot.slane %v2642, 1
      %v2661 = vrot.slane %v2386, 1
      %v2662 = vsel %vm2079, %v2660, %v2661
      %v2663 = vrot.slane %v2643, 1
      %v2664 = vrot.slane %v2387, 1
      %v2665 = vsel %vm2079, %v2663, %v2664
      %v2666 = vrot.slane %v2644, 1
      %v2667 = vrot.slane %v2388, 1
      %v2668 = vsel %vm2079, %v2666, %v2667
      %v2669 = vrot.slane %v2645, 1
      %v2670 = vrot.slane %v2389, 1
      %v2671 = vsel %vm2079, %v2669, %v2670
      %v2672 = vrot.slane %v2646, 1
      %v2673 = vrot.slane %v2390, 1
      %v2674 = vsel %vm2079, %v2672, %v2673
      %v2675 = vrot.slane %v2647, 1
      %v2676 = vrot.slane %v2391, 1
      %v2677 = vsel %vm2079, %v2675, %v2676
      %v2678 = vrot.slane %v2648, 1
      %v2679 = vrot.slane %v2392, 1
      %v2680 = vsel %vm2079, %v2678, %v2679
      %v2681 = vrot.slane %v2649, 1
      %v2682 = vrot.slane %v2393, 1
      %v2683 = vsel %vm2079, %v2681, %v2682
      %v2684 = vrot.slane %v2650, 1
      %v2685 = vrot.slane %v2394, 1
      %v2686 = vsel %vm2079, %v2684, %v2685
      %v2687 = vrot.slane %v2651, 1
      %v2688 = vrot.slane %v2395, 1
      %v2689 = vsel %vm2079, %v2687, %v2688
      %v2690 = vrot.slane %v2652, 1
      %v2691 = vrot.slane %v2396, 1
      %v2692 = vsel %vm2079, %v2690, %v2691
      %v2693 = vrot.slane %v2653, 1
      %v2694 = vrot.slane %v2397, 1
      %v2695 = vsel %vm2079, %v2693, %v2694
      %v2696 = vrot.slane %v2654, 1
      %v2697 = vrot.slane %v2398, 1
      %v2698 = vsel %vm2079, %v2696, %v2697
      %v2699 = vrot.slane %v2655, 1
      %v2700 = vrot.slane %v2399, 1
      %v2701 = vsel %vm2079, %v2699, %v2700
      %v2702 = vrot.slane %v2656, 1
      %v2703 = vrot.slane %v2400, 1
      %v2704 = vsel %vm2079, %v2702, %v2703
      %s2721 = scalar_lea.vmem %s1, 192
      %v2722 = vld [vmem:[%s2721] sm:$0xf]
      %v2723 = vld [vmem:[%s2721 + $0x4] sm:$0xf]
      %v2724 = vld [vmem:[%s2721 + $0x8] sm:$0xf]
      %v2725 = vld [vmem:[%s2721 + $0xc] sm:$0xf]
      %v2726 = vld [vmem:[%s2721 + $0x10] sm:$0xf]
      %v2727 = vld [vmem:[%s2721 + $0x14] sm:$0xf]
      %v2728 = vld [vmem:[%s2721 + $0x18] sm:$0xf]
      %v2729 = vld [vmem:[%s2721 + $0x1c] sm:$0xf]
      %v2730 = vld [vmem:[%s2721 + $0x20] sm:$0xf]
      %v2731 = vld [vmem:[%s2721 + $0x24] sm:$0xf]
      %v2732 = vld [vmem:[%s2721 + $0x28] sm:$0xf]
      %v2733 = vld [vmem:[%s2721 + $0x2c] sm:$0xf]
      %v2734 = vld [vmem:[%s2721 + $0x30] sm:$0xf]
      %v2735 = vld [vmem:[%s2721 + $0x34] sm:$0xf]
      %v2736 = vld [vmem:[%s2721 + $0x38] sm:$0xf]
      %v2737 = vld [vmem:[%s2721 + $0x3c] sm:$0xf]
      %v2738 = vld [vmem:[%s2721 + $0x40] sm:$0xf]
      %v2739 = vld [vmem:[%s2721 + $0x44] sm:$0xf]
      %v2740 = vld [vmem:[%s2721 + $0x48] sm:$0xf]
      %v2741 = vld [vmem:[%s2721 + $0x4c] sm:$0xf]
      %v2742 = vld [vmem:[%s2721 + $0x50] sm:$0xf]
      %v2743 = vld [vmem:[%s2721 + $0x54] sm:$0xf]
      %v2744 = vld [vmem:[%s2721 + $0x58] sm:$0xf]
      %v2745 = vld [vmem:[%s2721 + $0x5c] sm:$0xf]
      %v2746 = vld [vmem:[%s2721 + $0x60] sm:$0xf]
      %v2747 = vld [vmem:[%s2721 + $0x64] sm:$0xf]
      %v2748 = vld [vmem:[%s2721 + $0x68] sm:$0xf]
      %v2749 = vld [vmem:[%s2721 + $0x6c] sm:$0xf]
      %v2750 = vld [vmem:[%s2721 + $0x70] sm:$0xf]
      %v2751 = vld [vmem:[%s2721 + $0x74] sm:$0xf]
      %v2752 = vld [vmem:[%s2721 + $0x78] sm:$0xf]
      %v2753 = vld [vmem:[%s2721 + $0x7c] sm:$0xf]
      %v2754 = vld [vmem:[%s2721 + $0x80] sm:$0xf]
      %v2755 = vld [vmem:[%s2721 + $0x84] sm:$0xf]
      %v2756 = vld [vmem:[%s2721 + $0x88] sm:$0xf]
      %v2757 = vld [vmem:[%s2721 + $0x8c] sm:$0xf]
      %v2758 = vld [vmem:[%s2721 + $0x90] sm:$0xf]
      %v2759 = vld [vmem:[%s2721 + $0x94] sm:$0xf]
      %v2760 = vld [vmem:[%s2721 + $0x98] sm:$0xf]
      %v2761 = vld [vmem:[%s2721 + $0x9c] sm:$0xf]
      %v2762 = vld [vmem:[%s2721 + $0xa0] sm:$0xf]
      %v2763 = vld [vmem:[%s2721 + $0xa4] sm:$0xf]
      %v2764 = vld [vmem:[%s2721 + $0xa8] sm:$0xf]
      %v2765 = vld [vmem:[%s2721 + $0xac] sm:$0xf]
      %v2766 = vld [vmem:[%s2721 + $0xb0] sm:$0xf]
      %v2767 = vld [vmem:[%s2721 + $0xb4] sm:$0xf]
      %v2768 = vld [vmem:[%s2721 + $0xb8] sm:$0xf]
      %v2769 = vld [vmem:[%s2721 + $0xbc] sm:$0xf]
      %v2818 = vunpack.c.l.b16 %v2722
      %v2819 = vunpack.c.l.b16 %v2723
      %v2820 = vunpack.c.l.b16 %v2724
      %v2821 = vunpack.c.l.b16 %v2725
      %v2822 = vunpack.c.l.b16 %v2726
      %v2823 = vunpack.c.l.b16 %v2727
      %v2824 = vunpack.c.l.b16 %v2728
      %v2825 = vunpack.c.l.b16 %v2729
      %v2826 = vunpack.c.l.b16 %v2730
      %v2827 = vunpack.c.l.b16 %v2731
      %v2828 = vunpack.c.l.b16 %v2732
      %v2829 = vunpack.c.l.b16 %v2733
      %v2830 = vunpack.c.l.b16 %v2734
      %v2831 = vunpack.c.l.b16 %v2735
      %v2832 = vunpack.c.l.b16 %v2736
      %v2833 = vunpack.c.l.b16 %v2737
      %v2834 = vunpack.c.l.b16 %v2738
      %v2835 = vunpack.c.l.b16 %v2739
      %v2836 = vunpack.c.l.b16 %v2740
      %v2837 = vunpack.c.l.b16 %v2741
      %v2838 = vunpack.c.l.b16 %v2742
      %v2839 = vunpack.c.l.b16 %v2743
      %v2840 = vunpack.c.l.b16 %v2744
      %v2841 = vunpack.c.l.b16 %v2745
      %v2842 = vunpack.c.l.b16 %v2746
      %v2843 = vunpack.c.l.b16 %v2747
      %v2844 = vunpack.c.l.b16 %v2748
      %v2845 = vunpack.c.l.b16 %v2749
      %v2846 = vunpack.c.l.b16 %v2750
      %v2847 = vunpack.c.l.b16 %v2751
      %v2848 = vunpack.c.l.b16 %v2752
      %v2849 = vunpack.c.l.b16 %v2753
      %v2850 = vunpack.c.l.b16 %v2754
      %v2851 = vunpack.c.l.b16 %v2755
      %v2852 = vunpack.c.l.b16 %v2756
      %v2853 = vunpack.c.l.b16 %v2757
      %v2854 = vunpack.c.l.b16 %v2758
      %v2855 = vunpack.c.l.b16 %v2759
      %v2856 = vunpack.c.l.b16 %v2760
      %v2857 = vunpack.c.l.b16 %v2761
      %v2858 = vunpack.c.l.b16 %v2762
      %v2859 = vunpack.c.l.b16 %v2763
      %v2860 = vunpack.c.l.b16 %v2764
      %v2861 = vunpack.c.l.b16 %v2765
      %v2862 = vunpack.c.l.b16 %v2766
      %v2863 = vunpack.c.l.b16 %v2767
      %v2864 = vunpack.c.l.b16 %v2768
      %v2865 = vunpack.c.l.b16 %v2769
      %v2866 = vpack.c.b16 %v2819, %v2818
      %v2867 = vpack.c.b16 %v2821, %v2820
      %v2868 = vpack.c.b16 %v2823, %v2822
      %v2869 = vpack.c.b16 %v2825, %v2824
      %v2870 = vpack.c.b16 %v2827, %v2826
      %v2871 = vpack.c.b16 %v2829, %v2828
      %v2872 = vpack.c.b16 %v2831, %v2830
      %v2873 = vpack.c.b16 %v2833, %v2832
      %v2874 = vpack.c.b16 %v2835, %v2834
      %v2875 = vpack.c.b16 %v2837, %v2836
      %v2876 = vpack.c.b16 %v2839, %v2838
      %v2877 = vpack.c.b16 %v2841, %v2840
      %v2878 = vpack.c.b16 %v2843, %v2842
      %v2879 = vpack.c.b16 %v2845, %v2844
      %v2880 = vpack.c.b16 %v2847, %v2846
      %v2881 = vpack.c.b16 %v2849, %v2848
      %v2882 = vpack.c.b16 %v2851, %v2850
      %v2883 = vpack.c.b16 %v2853, %v2852
      %v2884 = vpack.c.b16 %v2855, %v2854
      %v2885 = vpack.c.b16 %v2857, %v2856
      %v2886 = vpack.c.b16 %v2859, %v2858
      %v2887 = vpack.c.b16 %v2861, %v2860
      %v2888 = vpack.c.b16 %v2863, %v2862
      %v2889 = vpack.c.b16 %v2865, %v2864
      %2914 = vmatprep.subr.bf16.mxu0 0
      %2915 = vmatpush1.bf16.msra.mxu0 %v2866
      %2916 = vmatprep.subr.bf16.mxu0 0
      %2917 = vmatpush1.bf16.msra.mxu0 %v2867
      %2918 = vmatprep.subr.bf16.mxu0 0
      %2919 = vmatpush1.bf16.msra.mxu0 %v2868
      %2920 = vmatprep.subr.bf16.mxu0 0
      %2921 = vmatpush1.bf16.msra.mxu0 %v2869
      %2922 = vmatprep.subr.bf16.mxu0 0
      %2923 = vmatpush1.bf16.msra.mxu0 %v2870
      %2924 = vmatprep.subr.bf16.mxu0 0
      %2925 = vmatpush1.bf16.msra.mxu0 %v2871
      %2926 = vmatprep.subr.bf16.mxu0 0
      %2927 = vmatpush1.bf16.msra.mxu0 %v2872
      %2928 = vmatprep.subr.bf16.mxu0 0
      %2929 = vmatpush1.bf16.msra.mxu0 %v2873
      %2930 = vmatprep.subr.bf16.mxu0 0
      %2931 = vmatpush1.bf16.msra.mxu0 %v2874
      %2932 = vmatprep.subr.bf16.mxu0 0
      %2933 = vmatpush1.bf16.msra.mxu0 %v2875
      %2934 = vmatprep.subr.bf16.mxu0 0
      %2935 = vmatpush1.bf16.msra.mxu0 %v2876
      %2936 = vmatprep.subr.bf16.mxu0 0
      %2937 = vmatpush1.bf16.msra.mxu0 %v2877
      %2938 = vmatprep.subr.bf16.mxu0 0
      %2939 = vmatpush1.bf16.msra.mxu0 %v2878
      %2940 = vmatprep.subr.bf16.mxu0 0
      %2941 = vmatpush1.bf16.msra.mxu0 %v2879
      %2942 = vmatprep.subr.bf16.mxu0 0
      %2943 = vmatpush1.bf16.msra.mxu0 %v2880
      %2944 = vmatprep.subr.bf16.mxu0 0
      %2945 = vmatpush1.bf16.msra.mxu0 %v2881
      %2946 = vmatprep.mubr.bf16.mxu0 %v2412
      %2947 = vmatmul.mubr.bf16.gmra.mrb[0].mxu0 %v2321
      %v2948 = vpop.f32.mrb[0].mxu0
      %v2949 = vadd.f32 0.0, %v2948
      %v2950 = vpop.f32.mrb[0].mxu0
      %v2951 = vpop.f32.mrb[0].mxu0
      %v2952 = vadd.f32 0.0, %v2951
      %v2953 = vpop.f32.mrb[0].mxu0
      %2954 = vmatprep.mubr.bf16.mxu0 %v2424
      %2955 = vmatmul.mubr.bf16.gmra.mrb[0].mxu0 %v2322
      %v2956 = vpop.f32.mrb[0].mxu0
      %v2957 = vadd.f32 0.0, %v2956
      %v2958 = vpop.f32.mrb[0].mxu0
      %v2959 = vpop.f32.mrb[0].mxu0
      %v2960 = vadd.f32 0.0, %v2959
      %v2961 = vpop.f32.mrb[0].mxu0
      %2962 = vmatprep.mubr.bf16.mxu0 %v2436
      %2963 = vmatmul.mubr.bf16.gmra.mrb[0].mxu0 %v2323
      %v2964 = vpop.f32.mrb[0].mxu0
      %v2965 = vadd.f32 0.0, %v2964
      %v2966 = vpop.f32.mrb[0].mxu0
      %v2967 = vpop.f32.mrb[0].mxu0
      %v2968 = vadd.f32 0.0, %v2967
      %v2969 = vpop.f32.mrb[0].mxu0
      %2970 = vmatprep.mubr.bf16.mxu0 %v2448
      %2971 = vmatmul.mubr.bf16.gmra.mrb[0].mxu0 %v2324
      %v2972 = vpop.f32.mrb[0].mxu0
      %v2973 = vadd.f32 0.0, %v2972
      %v2974 = vpop.f32.mrb[0].mxu0
      %v2975 = vpop.f32.mrb[0].mxu0
      %v2976 = vadd.f32 0.0, %v2975
      %v2977 = vpop.f32.mrb[0].mxu0
      %2978 = vmatprep.mubr.bf16.mxu0 %v2460
      %2979 = vmatmul.mubr.bf16.gmra.mrb[0].mxu0 %v2325
      %v2980 = vpop.f32.mrb[0].mxu0
      %v2981 = vadd.f32 0.0, %v2980
      %v2982 = vpop.f32.mrb[0].mxu0
      %v2983 = vpop.f32.mrb[0].mxu0
      %v2984 = vadd.f32 0.0, %v2983
      %v2985 = vpop.f32.mrb[0].mxu0
      %2986 = vmatprep.mubr.bf16.mxu0 %v2472
      %2987 = vmatmul.mubr.bf16.gmra.mrb[0].mxu0 %v2326
      %v2988 = vpop.f32.mrb[0].mxu0
      %v2989 = vadd.f32 0.0, %v2988
      %v2990 = vpop.f32.mrb[0].mxu0
      %v2991 = vpop.f32.mrb[0].mxu0
      %v2992 = vadd.f32 0.0, %v2991
      %v2993 = vpop.f32.mrb[0].mxu0
      %2994 = vmatprep.mubr.bf16.mxu0 %v2484
      %2995 = vmatmul.mubr.bf16.gmra.mrb[0].mxu0 %v2327
      %v2996 = vpop.f32.mrb[0].mxu0
      %v2997 = vadd.f32 0.0, %v2996
      %v2998 = vpop.f32.mrb[0].mxu0
      %v2999 = vpop.f32.mrb[0].mxu0
      %v3000 = vadd.f32 0.0, %v2999
      %v3001 = vpop.f32.mrb[0].mxu0
      %3002 = vmatprep.mubr.bf16.mxu0 %v2496
      %3003 = vmatmul.mubr.bf16.gmra.mrb[0].mxu0 %v2328
      %v3004 = vpop.f32.mrb[0].mxu0
      %v3005 = vadd.f32 0.0, %v3004
      %v3006 = vpop.f32.mrb[0].mxu0
      %v3007 = vpop.f32.mrb[0].mxu0
      %v3008 = vadd.f32 0.0, %v3007
      %v3009 = vpop.f32.mrb[0].mxu0
      %3010 = vmatprep.mubr.bf16.mxu0 %v2508
      %3011 = vmatmul.mubr.bf16.gmra.mrb[0].mxu0 %v2329
      %v3012 = vpop.f32.mrb[0].mxu0
      %v3013 = vadd.f32 0.0, %v3012
      %v3014 = vpop.f32.mrb[0].mxu0
      %v3015 = vpop.f32.mrb[0].mxu0
      %v3016 = vadd.f32 0.0, %v3015
      %v3017 = vpop.f32.mrb[0].mxu0
      %3018 = vmatprep.mubr.bf16.mxu0 %v2520
      %3019 = vmatmul.mubr.bf16.gmra.mrb[0].mxu0 %v2330
      %v3020 = vpop.f32.mrb[0].mxu0
      %v3021 = vadd.f32 0.0, %v3020
      %v3022 = vpop.f32.mrb[0].mxu0
      %v3023 = vpop.f32.mrb[0].mxu0
      %v3024 = vadd.f32 0.0, %v3023
      %v3025 = vpop.f32.mrb[0].mxu0
      %3026 = vmatprep.mubr.bf16.mxu0 %v2532
      %3027 = vmatmul.mubr.bf16.gmra.mrb[0].mxu0 %v2331
      %v3028 = vpop.f32.mrb[0].mxu0
      %v3029 = vadd.f32 0.0, %v3028
      %v3030 = vpop.f32.mrb[0].mxu0
      %v3031 = vpop.f32.mrb[0].mxu0
      %v3032 = vadd.f32 0.0, %v3031
      %v3033 = vpop.f32.mrb[0].mxu0
      %3034 = vmatprep.mubr.bf16.mxu0 %v2544
      %3035 = vmatmul.mubr.bf16.gmra.mrb[0].mxu0 %v2332
      %v3036 = vpop.f32.mrb[0].mxu0
      %v3037 = vadd.f32 0.0, %v3036
      %v3038 = vpop.f32.mrb[0].mxu0
      %v3039 = vpop.f32.mrb[0].mxu0
      %v3040 = vadd.f32 0.0, %v3039
      %v3041 = vpop.f32.mrb[0].mxu0
      %3042 = vmatprep.mubr.bf16.mxu0 %v2556
      %3043 = vmatmul.mubr.bf16.gmra.mrb[0].mxu0 %v2333
      %v3044 = vpop.f32.mrb[0].mxu0
      %v3045 = vadd.f32 0.0, %v3044
      %v3046 = vpop.f32.mrb[0].mxu0
      %v3047 = vpop.f32.mrb[0].mxu0
      %v3048 = vadd.f32 0.0, %v3047
      %v3049 = vpop.f32.mrb[0].mxu0
      %3050 = vmatprep.mubr.bf16.mxu0 %v2568
      %3051 = vmatmul.mubr.bf16.gmra.mrb[0].mxu0 %v2334
      %v3052 = vpop.f32.mrb[0].mxu0
      %v3053 = vadd.f32 0.0, %v3052
      %v3054 = vpop.f32.mrb[0].mxu0
      %v3055 = vpop.f32.mrb[0].mxu0
      %v3056 = vadd.f32 0.0, %v3055
      %v3057 = vpop.f32.mrb[0].mxu0
      %3058 = vmatprep.mubr.bf16.mxu0 %v2580
      %3059 = vmatmul.mubr.bf16.gmra.mrb[0].mxu0 %v2335
      %v3060 = vpop.f32.mrb[0].mxu0
      %v3061 = vadd.f32 0.0, %v3060
      %v3062 = vpop.f32.mrb[0].mxu0
      %v3063 = vpop.f32.mrb[0].mxu0
      %v3064 = vadd.f32 0.0, %v3063
      %v3065 = vpop.f32.mrb[0].mxu0
      %3066 = vmatprep.mubr.bf16.mxu0 %v2592
      %3067 = vmatmul.mubr.bf16.gmra.mrb[0].mxu0 %v2336
      %v3068 = vpop.f32.mrb[0].mxu0
      %v3069 = vadd.f32 0.0, %v3068
      %v3070 = vpop.f32.mrb[0].mxu0
      %v3071 = vpop.f32.mrb[0].mxu0
      %v3072 = vadd.f32 0.0, %v3071
      %v3073 = vpop.f32.mrb[0].mxu0
      %3074 = vdwg.mxu0
      %3075 = vmatprep.subr.bf16.mxu0 0
      %3076 = vmatpush1.bf16.msra.mxu0 %v2882
      %3077 = vmatprep.subr.bf16.mxu0 0
      %3078 = vmatpush1.bf16.msra.mxu0 %v2883
      %3079 = vmatprep.subr.bf16.mxu0 0
      %3080 = vmatpush1.bf16.msra.mxu0 %v2884
      %3081 = vmatprep.subr.bf16.mxu0 0
      %3082 = vmatpush1.bf16.msra.mxu0 %v2885
      %3083 = vmatprep.subr.bf16.mxu0 0
      %3084 = vmatpush1.bf16.msra.mxu0 %v2886
      %3085 = vmatprep.subr.bf16.mxu0 0
      %3086 = vmatpush1.bf16.msra.mxu0 %v2887
      %3087 = vmatprep.subr.bf16.mxu0 0
      %3088 = vmatpush1.bf16.msra.mxu0 %v2888
      %3089 = vmatprep.subr.bf16.mxu0 0
      %3090 = vmatpush1.bf16.msra.mxu0 %v2889
      %3091 = vmatprep.subr.bf16.mxu0 0
      %3092 = vmatpush1.bf16.msra.mxu0 0
      %3093 = vmatprep.subr.bf16.mxu0 0
      %3094 = vmatpush1.bf16.msra.mxu0 0
      %3095 = vmatprep.subr.bf16.mxu0 0
      %3096 = vmatpush1.bf16.msra.mxu0 0
      %3097 = vmatprep.subr.bf16.mxu0 0
      %3098 = vmatpush1.bf16.msra.mxu0 0
      %3099 = vmatprep.subr.bf16.mxu0 0
      %3100 = vmatpush1.bf16.msra.mxu0 0
      %3101 = vmatprep.subr.bf16.mxu0 0
      %3102 = vmatpush1.bf16.msra.mxu0 0
      %3103 = vmatprep.subr.bf16.mxu0 0
      %3104 = vmatpush1.bf16.msra.mxu0 0
      %3105 = vmatprep.subr.bf16.mxu0 0
      %3106 = vmatpush1.bf16.msra.mxu0 0
      %3107 = vmatprep.mubr.bf16.mxu0 0
      %3108 = vmatmul.mubr.bf16.gmra.mrb[0].mxu0 %v2659
      %v3109 = vpop.f32.mrb[0].mxu0
      %v3110 = vadd.f32 %v2949, %v3109
      %v3111 = vpop.f32.mrb[0].mxu0
      %v3112 = vpop.f32.mrb[0].mxu0
      %v3113 = vadd.f32 %v2952, %v3112
      %v3114 = vpop.f32.mrb[0].mxu0
      %3115 = vmatprep.mubr.bf16.mxu0 0
      %3116 = vmatmul.mubr.bf16.gmra.mrb[0].mxu0 %v2662
      %v3117 = vpop.f32.mrb[0].mxu0
      %v3118 = vadd.f32 %v2957, %v3117
      %v3119 = vpop.f32.mrb[0].mxu0
      %v3120 = vpop.f32.mrb[0].mxu0
      %v3121 = vadd.f32 %v2960, %v3120
      %v3122 = vpop.f32.mrb[0].mxu0
      %3123 = vmatprep.mubr.bf16.mxu0 0
      %3124 = vmatmul.mubr.bf16.gmra.mrb[0].mxu0 %v2665
      %v3125 = vpop.f32.mrb[0].mxu0
      %v3126 = vadd.f32 %v2965, %v3125
      %v3127 = vpop.f32.mrb[0].mxu0
      %v3128 = vpop.f32.mrb[0].mxu0
      %v3129 = vadd.f32 %v2968, %v3128
      %v3130 = vpop.f32.mrb[0].mxu0
      %3131 = vmatprep.mubr.bf16.mxu0 0
      %3132 = vmatmul.mubr.bf16.gmra.mrb[0].mxu0 %v2668
      %v3133 = vpop.f32.mrb[0].mxu0
      %v3134 = vadd.f32 %v2973, %v3133
      %v3135 = vpop.f32.mrb[0].mxu0
      %v3136 = vpop.f32.mrb[0].mxu0
      %v3137 = vadd.f32 %v2976, %v3136
      %v3138 = vpop.f32.mrb[0].mxu0
      %3139 = vmatprep.mubr.bf16.mxu0 0
      %3140 = vmatmul.mubr.bf16.gmra.mrb[0].mxu0 %v2671
      %v3141 = vpop.f32.mrb[0].mxu0
      %v3142 = vadd.f32 %v2981, %v3141
      %v3143 = vpop.f32.mrb[0].mxu0
      %v3144 = vpop.f32.mrb[0].mxu0
      %v3145 = vadd.f32 %v2984, %v3144
      %v3146 = vpop.f32.mrb[0].mxu0
      %3147 = vmatprep.mubr.bf16.mxu0 0
      %3148 = vmatmul.mubr.bf16.gmra.mrb[0].mxu0 %v2674
      %v3149 = vpop.f32.mrb[0].mxu0
      %v3150 = vadd.f32 %v2989, %v3149
      %v3151 = vpop.f32.mrb[0].mxu0
      %v3152 = vpop.f32.mrb[0].mxu0
      %v3153 = vadd.f32 %v2992, %v3152
      %v3154 = vpop.f32.mrb[0].mxu0
      %3155 = vmatprep.mubr.bf16.mxu0 0
      %3156 = vmatmul.mubr.bf16.gmra.mrb[0].mxu0 %v2677
      %v3157 = vpop.f32.mrb[0].mxu0
      %v3158 = vadd.f32 %v2997, %v3157
      %v3159 = vpop.f32.mrb[0].mxu0
      %v3160 = vpop.f32.mrb[0].mxu0
      %v3161 = vadd.f32 %v3000, %v3160
      %v3162 = vpop.f32.mrb[0].mxu0
      %3163 = vmatprep.mubr.bf16.mxu0 0
      %3164 = vmatmul.mubr.bf16.gmra.mrb[0].mxu0 %v2680
      %v3165 = vpop.f32.mrb[0].mxu0
      %v3166 = vadd.f32 %v3005, %v3165
      %v3167 = vpop.f32.mrb[0].mxu0
      %v3168 = vpop.f32.mrb[0].mxu0
      %v3169 = vadd.f32 %v3008, %v3168
      %v3170 = vpop.f32.mrb[0].mxu0
      %3171 = vmatprep.mubr.bf16.mxu0 0
      %3172 = vmatmul.mubr.bf16.gmra.mrb[0].mxu0 %v2683
      %v3173 = vpop.f32.mrb[0].mxu0
      %v3174 = vadd.f32 %v3013, %v3173
      %v3175 = vpop.f32.mrb[0].mxu0
      %v3176 = vpop.f32.mrb[0].mxu0
      %v3177 = vadd.f32 %v3016, %v3176
      %v3178 = vpop.f32.mrb[0].mxu0
      %3179 = vmatprep.mubr.bf16.mxu0 0
      %3180 = vmatmul.mubr.bf16.gmra.mrb[0].mxu0 %v2686
      %v3181 = vpop.f32.mrb[0].mxu0
      %v3182 = vadd.f32 %v3021, %v3181
      %v3183 = vpop.f32.mrb[0].mxu0
      %v3184 = vpop.f32.mrb[0].mxu0
      %v3185 = vadd.f32 %v3024, %v3184
      %v3186 = vpop.f32.mrb[0].mxu0
      %3187 = vmatprep.mubr.bf16.mxu0 0
      %3188 = vmatmul.mubr.bf16.gmra.mrb[0].mxu0 %v2689
      %v3189 = vpop.f32.mrb[0].mxu0
      %v3190 = vadd.f32 %v3029, %v3189
      %v3191 = vpop.f32.mrb[0].mxu0
      %v3192 = vpop.f32.mrb[0].mxu0
      %v3193 = vadd.f32 %v3032, %v3192
      %v3194 = vpop.f32.mrb[0].mxu0
      %3195 = vmatprep.mubr.bf16.mxu0 0
      %3196 = vmatmul.mubr.bf16.gmra.mrb[0].mxu0 %v2692
      %v3197 = vpop.f32.mrb[0].mxu0
      %v3198 = vadd.f32 %v3037, %v3197
      %v3199 = vpop.f32.mrb[0].mxu0
      %v3200 = vpop.f32.mrb[0].mxu0
      %v3201 = vadd.f32 %v3040, %v3200
      %v3202 = vpop.f32.mrb[0].mxu0
      %3203 = vmatprep.mubr.bf16.mxu0 0
      %3204 = vmatmul.mubr.bf16.gmra.mrb[0].mxu0 %v2695
      %v3205 = vpop.f32.mrb[0].mxu0
      %v3206 = vadd.f32 %v3045, %v3205
      %v3207 = vpop.f32.mrb[0].mxu0
      %v3208 = vpop.f32.mrb[0].mxu0
      %v3209 = vadd.f32 %v3048, %v3208
      %v3210 = vpop.f32.mrb[0].mxu0
      %3211 = vmatprep.mubr.bf16.mxu0 0
      %3212 = vmatmul.mubr.bf16.gmra.mrb[0].mxu0 %v2698
      %v3213 = vpop.f32.mrb[0].mxu0
      %v3214 = vadd.f32 %v3053, %v3213
      %v3215 = vpop.f32.mrb[0].mxu0
      %v3216 = vpop.f32.mrb[0].mxu0
      %v3217 = vadd.f32 %v3056, %v3216
      %v3218 = vpop.f32.mrb[0].mxu0
      %3219 = vmatprep.mubr.bf16.mxu0 0
      %3220 = vmatmul.mubr.bf16.gmra.mrb[0].mxu0 %v2701
      %v3221 = vpop.f32.mrb[0].mxu0
      %v3222 = vadd.f32 %v3061, %v3221
      %v3223 = vpop.f32.mrb[0].mxu0
      %v3224 = vpop.f32.mrb[0].mxu0
      %v3225 = vadd.f32 %v3064, %v3224
      %v3226 = vpop.f32.mrb[0].mxu0
      %3227 = vmatprep.mubr.bf16.mxu0 0
      %3228 = vmatmul.mubr.bf16.gmra.mrb[0].mxu0 %v2704
      %v3229 = vpop.f32.mrb[0].mxu0
      %v3230 = vadd.f32 %v3069, %v3229
      %v3231 = vpop.f32.mrb[0].mxu0
      %v3232 = vpop.f32.mrb[0].mxu0
      %v3233 = vadd.f32 %v3072, %v3232
      %v3234 = vpop.f32.mrb[0].mxu0
      %3235 = vdwg.mxu0
      %v3284 = vunpack.c.l.b16 %v2144
      %v3285 = vunpack.c.l.b16 %v2145
      %v3286 = vunpack.c.l.b16 %v2146
      %v3287 = vunpack.c.l.b16 %v2147
      %v3288 = vunpack.c.l.b16 %v2148
      %v3289 = vunpack.c.l.b16 %v2149
      %v3290 = vunpack.c.l.b16 %v2150
      %v3291 = vunpack.c.l.b16 %v2151
      %v3292 = vunpack.c.l.b16 %v2152
      %v3293 = vunpack.c.l.b16 %v2153
      %v3294 = vunpack.c.l.b16 %v2154
      %v3295 = vunpack.c.l.b16 %v2155
      %v3296 = vunpack.c.l.b16 %v2156
      %v3297 = vunpack.c.l.b16 %v2157
      %v3298 = vunpack.c.l.b16 %v2158
      %v3299 = vunpack.c.l.b16 %v2159
      %v3300 = vunpack.c.l.b16 %v2160
      %v3301 = vunpack.c.l.b16 %v2161
      %v3302 = vunpack.c.l.b16 %v2162
      %v3303 = vunpack.c.l.b16 %v2163
      %v3304 = vunpack.c.l.b16 %v2164
      %v3305 = vunpack.c.l.b16 %v2165
      %v3306 = vunpack.c.l.b16 %v2166
      %v3307 = vunpack.c.l.b16 %v2167
      %v3308 = vunpack.c.l.b16 %v2168
      %v3309 = vunpack.c.l.b16 %v2169
      %v3310 = vunpack.c.l.b16 %v2170
      %v3311 = vunpack.c.l.b16 %v2171
      %v3312 = vunpack.c.l.b16 %v2172
      %v3313 = vunpack.c.l.b16 %v2173
      %v3314 = vunpack.c.l.b16 %v2174
      %v3315 = vunpack.c.l.b16 %v2175
      %v3316 = vunpack.c.l.b16 %v2176
      %v3317 = vunpack.c.l.b16 %v2177
      %v3318 = vunpack.c.l.b16 %v2178
      %v3319 = vunpack.c.l.b16 %v2179
      %v3320 = vunpack.c.l.b16 %v2180
      %v3321 = vunpack.c.l.b16 %v2181
      %v3322 = vunpack.c.l.b16 %v2182
      %v3323 = vunpack.c.l.b16 %v2183
      %v3324 = vunpack.c.l.b16 %v2184
      %v3325 = vunpack.c.l.b16 %v2185
      %v3326 = vunpack.c.l.b16 %v2186
      %v3327 = vunpack.c.l.b16 %v2187
      %v3328 = vunpack.c.l.b16 %v2188
      %v3329 = vunpack.c.l.b16 %v2189
      %v3330 = vunpack.c.l.b16 %v2190
      %v3331 = vunpack.c.l.b16 %v2191
      %v3332 = vpack.c.b16 %v3285, %v3284
      %v3333 = vpack.c.b16 %v3287, %v3286
      %v3334 = vpack.c.b16 %v3289, %v3288
      %v3335 = vpack.c.b16 %v3291, %v3290
      %v3336 = vpack.c.b16 %v3293, %v3292
      %v3337 = vpack.c.b16 %v3295, %v3294
      %v3338 = vpack.c.b16 %v3297, %v3296
      %v3339 = vpack.c.b16 %v3299, %v3298
      %v3340 = vpack.c.b16 %v3301, %v3300
      %v3341 = vpack.c.b16 %v3303, %v3302
      %v3342 = vpack.c.b16 %v3305, %v3304
      %v3343 = vpack.c.b16 %v3307, %v3306
      %v3344 = vpack.c.b16 %v3309, %v3308
      %v3345 = vpack.c.b16 %v3311, %v3310
      %v3346 = vpack.c.b16 %v3313, %v3312
      %v3347 = vpack.c.b16 %v3315, %v3314
      %v3348 = vpack.c.b16 %v3317, %v3316
      %v3349 = vpack.c.b16 %v3319, %v3318
      %v3350 = vpack.c.b16 %v3321, %v3320
      %v3351 = vpack.c.b16 %v3323, %v3322
      %v3352 = vpack.c.b16 %v3325, %v3324
      %v3353 = vpack.c.b16 %v3327, %v3326
      %v3354 = vpack.c.b16 %v3329, %v3328
      %v3355 = vpack.c.b16 %v3331, %v3330
      %3380 = vmatprep.subr.bf16.mxu0 0
      %3381 = vmatpush1.bf16.msra.mxu0 %v3332
      %3382 = vmatprep.subr.bf16.mxu0 0
      %3383 = vmatpush1.bf16.msra.mxu0 %v3333
      %3384 = vmatprep.subr.bf16.mxu0 0
      %3385 = vmatpush1.bf16.msra.mxu0 %v3334
      %3386 = vmatprep.subr.bf16.mxu0 0
      %3387 = vmatpush1.bf16.msra.mxu0 %v3335
      %3388 = vmatprep.subr.bf16.mxu0 0
      %3389 = vmatpush1.bf16.msra.mxu0 %v3336
      %3390 = vmatprep.subr.bf16.mxu0 0
      %3391 = vmatpush1.bf16.msra.mxu0 %v3337
      %3392 = vmatprep.subr.bf16.mxu0 0
      %3393 = vmatpush1.bf16.msra.mxu0 %v3338
      %3394 = vmatprep.subr.bf16.mxu0 0
      %3395 = vmatpush1.bf16.msra.mxu0 %v3339
      %3396 = vmatprep.subr.bf16.mxu0 0
      %3397 = vmatpush1.bf16.msra.mxu0 %v3340
      %3398 = vmatprep.subr.bf16.mxu0 0
      %3399 = vmatpush1.bf16.msra.mxu0 %v3341
      %3400 = vmatprep.subr.bf16.mxu0 0
      %3401 = vmatpush1.bf16.msra.mxu0 %v3342
      %3402 = vmatprep.subr.bf16.mxu0 0
      %3403 = vmatpush1.bf16.msra.mxu0 %v3343
      %3404 = vmatprep.subr.bf16.mxu0 0
      %3405 = vmatpush1.bf16.msra.mxu0 %v3344
      %3406 = vmatprep.subr.bf16.mxu0 0
      %3407 = vmatpush1.bf16.msra.mxu0 %v3345
      %3408 = vmatprep.subr.bf16.mxu0 0
      %3409 = vmatpush1.bf16.msra.mxu0 %v3346
      %3410 = vmatprep.subr.bf16.mxu0 0
      %3411 = vmatpush1.bf16.msra.mxu0 %v3347
      %3412 = vmatprep.mubr.bf16.mxu0 %v1834
      %3413 = vmatmul.mubr.bf16.gmra.mrb[0].mxu0 %v1742
      %v3414 = vpop.f32.mrb[0].mxu0
      %v3415 = vadd.f32 %v3110, %v3414
      %v3416 = vpop.f32.mrb[0].mxu0
      %v3417 = vpop.f32.mrb[0].mxu0
      %v3418 = vadd.f32 %v3113, %v3417
      %v3419 = vpop.f32.mrb[0].mxu0
      %3420 = vmatprep.mubr.bf16.mxu0 %v1846
      %3421 = vmatmul.mubr.bf16.gmra.mrb[0].mxu0 %v1743
      %v3422 = vpop.f32.mrb[0].mxu0
      %v3423 = vadd.f32 %v3118, %v3422
      %v3424 = vpop.f32.mrb[0].mxu0
      %v3425 = vpop.f32.mrb[0].mxu0
      %v3426 = vadd.f32 %v3121, %v3425
      %v3427 = vpop.f32.mrb[0].mxu0
      %3428 = vmatprep.mubr.bf16.mxu0 %v1858
      %3429 = vmatmul.mubr.bf16.gmra.mrb[0].mxu0 %v1744
      %v3430 = vpop.f32.mrb[0].mxu0
      %v3431 = vadd.f32 %v3126, %v3430
      %v3432 = vpop.f32.mrb[0].mxu0
      %v3433 = vpop.f32.mrb[0].mxu0
      %v3434 = vadd.f32 %v3129, %v3433
      %v3435 = vpop.f32.mrb[0].mxu0
      %3436 = vmatprep.mubr.bf16.mxu0 %v1870
      %3437 = vmatmul.mubr.bf16.gmra.mrb[0].mxu0 %v1745
      %v3438 = vpop.f32.mrb[0].mxu0
      %v3439 = vadd.f32 %v3134, %v3438
      %v3440 = vpop.f32.mrb[0].mxu0
      %v3441 = vpop.f32.mrb[0].mxu0
      %v3442 = vadd.f32 %v3137, %v3441
      %v3443 = vpop.f32.mrb[0].mxu0
      %3444 = vmatprep.mubr.bf16.mxu0 %v1882
      %3445 = vmatmul.mubr.bf16.gmra.mrb[0].mxu0 %v1746
      %v3446 = vpop.f32.mrb[0].mxu0
      %v3447 = vadd.f32 %v3142, %v3446
      %v3448 = vpop.f32.mrb[0].mxu0
      %v3449 = vpop.f32.mrb[0].mxu0
      %v3450 = vadd.f32 %v3145, %v3449
      %v3451 = vpop.f32.mrb[0].mxu0
      %3452 = vmatprep.mubr.bf16.mxu0 %v1894
      %3453 = vmatmul.mubr.bf16.gmra.mrb[0].mxu0 %v1747
      %v3454 = vpop.f32.mrb[0].mxu0
      %v3455 = vadd.f32 %v3150, %v3454
      %v3456 = vpop.f32.mrb[0].mxu0
      %v3457 = vpop.f32.mrb[0].mxu0
      %v3458 = vadd.f32 %v3153, %v3457
      %v3459 = vpop.f32.mrb[0].mxu0
      %3460 = vmatprep.mubr.bf16.mxu0 %v1906
      %3461 = vmatmul.mubr.bf16.gmra.mrb[0].mxu0 %v1748
      %v3462 = vpop.f32.mrb[0].mxu0
      %v3463 = vadd.f32 %v3158, %v3462
      %v3464 = vpop.f32.mrb[0].mxu0
      %v3465 = vpop.f32.mrb[0].mxu0
      %v3466 = vadd.f32 %v3161, %v3465
      %v3467 = vpop.f32.mrb[0].mxu0
      %3468 = vmatprep.mubr.bf16.mxu0 %v1918
      %3469 = vmatmul.mubr.bf16.gmra.mrb[0].mxu0 %v1749
      %v3470 = vpop.f32.mrb[0].mxu0
      %v3471 = vadd.f32 %v3166, %v3470
      %v3472 = vpop.f32.mrb[0].mxu0
      %v3473 = vpop.f32.mrb[0].mxu0
      %v3474 = vadd.f32 %v3169, %v3473
      %v3475 = vpop.f32.mrb[0].mxu0
      %3476 = vmatprep.mubr.bf16.mxu0 %v1930
      %3477 = vmatmul.mubr.bf16.gmra.mrb[0].mxu0 %v1750
      %v3478 = vpop.f32.mrb[0].mxu0
      %v3479 = vadd.f32 %v3174, %v3478
      %v3480 = vpop.f32.mrb[0].mxu0
      %v3481 = vpop.f32.mrb[0].mxu0
      %v3482 = vadd.f32 %v3177, %v3481
      %v3483 = vpop.f32.mrb[0].mxu0
      %3484 = vmatprep.mubr.bf16.mxu0 %v1942
      %3485 = vmatmul.mubr.bf16.gmra.mrb[0].mxu0 %v1751
      %v3486 = vpop.f32.mrb[0].mxu0
      %v3487 = vadd.f32 %v3182, %v3486
      %v3488 = vpop.f32.mrb[0].mxu0
      %v3489 = vpop.f32.mrb[0].mxu0
      %v3490 = vadd.f32 %v3185, %v3489
      %v3491 = vpop.f32.mrb[0].mxu0
      %3492 = vmatprep.mubr.bf16.mxu0 %v1954
      %3493 = vmatmul.mubr.bf16.gmra.mrb[0].mxu0 %v1752
      %v3494 = vpop.f32.mrb[0].mxu0
      %v3495 = vadd.f32 %v3190, %v3494
      %v3496 = vpop.f32.mrb[0].mxu0
      %v3497 = vpop.f32.mrb[0].mxu0
      %v3498 = vadd.f32 %v3193, %v3497
      %v3499 = vpop.f32.mrb[0].mxu0
      %3500 = vmatprep.mubr.bf16.mxu0 %v1966
      %3501 = vmatmul.mubr.bf16.gmra.mrb[0].mxu0 %v1753
      %v3502 = vpop.f32.mrb[0].mxu0
      %v3503 = vadd.f32 %v3198, %v3502
      %v3504 = vpop.f32.mrb[0].mxu0
      %v3505 = vpop.f32.mrb[0].mxu0
      %v3506 = vadd.f32 %v3201, %v3505
      %v3507 = vpop.f32.mrb[0].mxu0
      %3508 = vmatprep.mubr.bf16.mxu0 %v1978
      %3509 = vmatmul.mubr.bf16.gmra.mrb[0].mxu0 %v1754
      %v3510 = vpop.f32.mrb[0].mxu0
      %v3511 = vadd.f32 %v3206, %v3510
      %v3512 = vpop.f32.mrb[0].mxu0
      %v3513 = vpop.f32.mrb[0].mxu0
      %v3514 = vadd.f32 %v3209, %v3513
      %v3515 = vpop.f32.mrb[0].mxu0
      %3516 = vmatprep.mubr.bf16.mxu0 %v1990
      %3517 = vmatmul.mubr.bf16.gmra.mrb[0].mxu0 %v1755
      %v3518 = vpop.f32.mrb[0].mxu0
      %v3519 = vadd.f32 %v3214, %v3518
      %v3520 = vpop.f32.mrb[0].mxu0
      %v3521 = vpop.f32.mrb[0].mxu0
      %v3522 = vadd.f32 %v3217, %v3521
      %v3523 = vpop.f32.mrb[0].mxu0
      %3524 = vmatprep.mubr.bf16.mxu0 %v2002
      %3525 = vmatmul.mubr.bf16.gmra.mrb[0].mxu0 %v1756
      %v3526 = vpop.f32.mrb[0].mxu0
      %v3527 = vadd.f32 %v3222, %v3526
      %v3528 = vpop.f32.mrb[0].mxu0
      %v3529 = vpop.f32.mrb[0].mxu0
      %v3530 = vadd.f32 %v3225, %v3529
      %v3531 = vpop.f32.mrb[0].mxu0
      %3532 = vmatprep.mubr.bf16.mxu0 %v2014
      %3533 = vmatmul.mubr.bf16.gmra.mrb[0].mxu0 %v1757
      %v3534 = vpop.f32.mrb[0].mxu0
      %v3535 = vadd.f32 %v3230, %v3534
      %v3536 = vpop.f32.mrb[0].mxu0
      %v3537 = vpop.f32.mrb[0].mxu0
      %v3538 = vadd.f32 %v3233, %v3537
      %v3539 = vpop.f32.mrb[0].mxu0
      %3540 = vdwg.mxu0
      %3541 = vmatprep.subr.bf16.mxu0 0
      %3542 = vmatpush1.bf16.msra.mxu0 %v3348
      %3543 = vmatprep.subr.bf16.mxu0 0
      %3544 = vmatpush1.bf16.msra.mxu0 %v3349
      %3545 = vmatprep.subr.bf16.mxu0 0
      %3546 = vmatpush1.bf16.msra.mxu0 %v3350
      %3547 = vmatprep.subr.bf16.mxu0 0
      %3548 = vmatpush1.bf16.msra.mxu0 %v3351
      %3549 = vmatprep.subr.bf16.mxu0 0
      %3550 = vmatpush1.bf16.msra.mxu0 %v3352
      %3551 = vmatprep.subr.bf16.mxu0 0
      %3552 = vmatpush1.bf16.msra.mxu0 %v3353
      %3553 = vmatprep.subr.bf16.mxu0 0
      %3554 = vmatpush1.bf16.msra.mxu0 %v3354
      %3555 = vmatprep.subr.bf16.mxu0 0
      %3556 = vmatpush1.bf16.msra.mxu0 %v3355
      %3557 = vmatprep.subr.bf16.mxu0 0
      %3558 = vmatpush1.bf16.msra.mxu0 0
      %3559 = vmatprep.subr.bf16.mxu0 0
      %3560 = vmatpush1.bf16.msra.mxu0 0
      %3561 = vmatprep.subr.bf16.mxu0 0
      %3562 = vmatpush1.bf16.msra.mxu0 0
      %3563 = vmatprep.subr.bf16.mxu0 0
      %3564 = vmatpush1.bf16.msra.mxu0 0
      %3565 = vmatprep.subr.bf16.mxu0 0
      %3566 = vmatpush1.bf16.msra.mxu0 0
      %3567 = vmatprep.subr.bf16.mxu0 0
      %3568 = vmatpush1.bf16.msra.mxu0 0
      %3569 = vmatprep.subr.bf16.mxu0 0
      %3570 = vmatpush1.bf16.msra.mxu0 0
      %3571 = vmatprep.subr.bf16.mxu0 0
      %3572 = vmatpush1.bf16.msra.mxu0 0
      %3573 = vmatprep.mubr.bf16.mxu0 0
      %3574 = vmatmul.mubr.bf16.gmra.mrb[0].mxu0 %v2082
      %v3575 = vpop.f32.mrb[0].mxu0
      %v3576 = vadd.f32 %v3415, %v3575
      %v3577 = vpop.f32.mrb[0].mxu0
      %v3578 = vpop.f32.mrb[0].mxu0
      %v3579 = vadd.f32 %v3418, %v3578
      %v3580 = vpop.f32.mrb[0].mxu0
      %3581 = vmatprep.mubr.bf16.mxu0 0
      %3582 = vmatmul.mubr.bf16.gmra.mrb[0].mxu0 %v2085
      %v3583 = vpop.f32.mrb[0].mxu0
      %v3584 = vadd.f32 %v3423, %v3583
      %v3585 = vpop.f32.mrb[0].mxu0
      %v3586 = vpop.f32.mrb[0].mxu0
      %v3587 = vadd.f32 %v3426, %v3586
      %v3588 = vpop.f32.mrb[0].mxu0
      %3589 = vmatprep.mubr.bf16.mxu0 0
      %3590 = vmatmul.mubr.bf16.gmra.mrb[0].mxu0 %v2088
      %v3591 = vpop.f32.mrb[0].mxu0
      %v3592 = vadd.f32 %v3431, %v3591
      %v3593 = vpop.f32.mrb[0].mxu0
      %v3594 = vpop.f32.mrb[0].mxu0
      %v3595 = vadd.f32 %v3434, %v3594
      %v3596 = vpop.f32.mrb[0].mxu0
      %3597 = vmatprep.mubr.bf16.mxu0 0
      %3598 = vmatmul.mubr.bf16.gmra.mrb[0].mxu0 %v2091
      %v3599 = vpop.f32.mrb[0].mxu0
      %v3600 = vadd.f32 %v3439, %v3599
      %v3601 = vpop.f32.mrb[0].mxu0
      %v3602 = vpop.f32.mrb[0].mxu0
      %v3603 = vadd.f32 %v3442, %v3602
      %v3604 = vpop.f32.mrb[0].mxu0
      %3605 = vmatprep.mubr.bf16.mxu0 0
      %3606 = vmatmul.mubr.bf16.gmra.mrb[0].mxu0 %v2094
      %v3607 = vpop.f32.mrb[0].mxu0
      %v3608 = vadd.f32 %v3447, %v3607
      %v3609 = vpop.f32.mrb[0].mxu0
      %v3610 = vpop.f32.mrb[0].mxu0
      %v3611 = vadd.f32 %v3450, %v3610
      %v3612 = vpop.f32.mrb[0].mxu0
      %3613 = vmatprep.mubr.bf16.mxu0 0
      %3614 = vmatmul.mubr.bf16.gmra.mrb[0].mxu0 %v2097
      %v3615 = vpop.f32.mrb[0].mxu0
      %v3616 = vadd.f32 %v3455, %v3615
      %v3617 = vpop.f32.mrb[0].mxu0
      %v3618 = vpop.f32.mrb[0].mxu0
      %v3619 = vadd.f32 %v3458, %v3618
      %v3620 = vpop.f32.mrb[0].mxu0
      %3621 = vmatprep.mubr.bf16.mxu0 0
      %3622 = vmatmul.mubr.bf16.gmra.mrb[0].mxu0 %v2100
      %v3623 = vpop.f32.mrb[0].mxu0
      %v3624 = vadd.f32 %v3463, %v3623
      %v3625 = vpop.f32.mrb[0].mxu0
      %v3626 = vpop.f32.mrb[0].mxu0
      %v3627 = vadd.f32 %v3466, %v3626
      %v3628 = vpop.f32.mrb[0].mxu0
      %3629 = vmatprep.mubr.bf16.mxu0 0
      %3630 = vmatmul.mubr.bf16.gmra.mrb[0].mxu0 %v2103
      %v3631 = vpop.f32.mrb[0].mxu0
      %v3632 = vadd.f32 %v3471, %v3631
      %v3633 = vpop.f32.mrb[0].mxu0
      %v3634 = vpop.f32.mrb[0].mxu0
      %v3635 = vadd.f32 %v3474, %v3634
      %v3636 = vpop.f32.mrb[0].mxu0
      %3637 = vmatprep.mubr.bf16.mxu0 0
      %3638 = vmatmul.mubr.bf16.gmra.mrb[0].mxu0 %v2106
      %v3639 = vpop.f32.mrb[0].mxu0
      %v3640 = vadd.f32 %v3479, %v3639
      %v3641 = vpop.f32.mrb[0].mxu0
      %v3642 = vpop.f32.mrb[0].mxu0
      %v3643 = vadd.f32 %v3482, %v3642
      %v3644 = vpop.f32.mrb[0].mxu0
      %3645 = vmatprep.mubr.bf16.mxu0 0
      %3646 = vmatmul.mubr.bf16.gmra.mrb[0].mxu0 %v2109
      %v3647 = vpop.f32.mrb[0].mxu0
      %v3648 = vadd.f32 %v3487, %v3647
      %v3649 = vpop.f32.mrb[0].mxu0
      %v3650 = vpop.f32.mrb[0].mxu0
      %v3651 = vadd.f32 %v3490, %v3650
      %v3652 = vpop.f32.mrb[0].mxu0
      %3653 = vmatprep.mubr.bf16.mxu0 0
      %3654 = vmatmul.mubr.bf16.gmra.mrb[0].mxu0 %v2112
      %v3655 = vpop.f32.mrb[0].mxu0
      %v3656 = vadd.f32 %v3495, %v3655
      %v3657 = vpop.f32.mrb[0].mxu0
      %v3658 = vpop.f32.mrb[0].mxu0
      %v3659 = vadd.f32 %v3498, %v3658
      %v3660 = vpop.f32.mrb[0].mxu0
      %3661 = vmatprep.mubr.bf16.mxu0 0
      %3662 = vmatmul.mubr.bf16.gmra.mrb[0].mxu0 %v2115
      %v3663 = vpop.f32.mrb[0].mxu0
      %v3664 = vadd.f32 %v3503, %v3663
      %v3665 = vpop.f32.mrb[0].mxu0
      %v3666 = vpop.f32.mrb[0].mxu0
      %v3667 = vadd.f32 %v3506, %v3666
      %v3668 = vpop.f32.mrb[0].mxu0
      %3669 = vmatprep.mubr.bf16.mxu0 0
      %3670 = vmatmul.mubr.bf16.gmra.mrb[0].mxu0 %v2118
      %v3671 = vpop.f32.mrb[0].mxu0
      %v3672 = vadd.f32 %v3511, %v3671
      %v3673 = vpop.f32.mrb[0].mxu0
      %v3674 = vpop.f32.mrb[0].mxu0
      %v3675 = vadd.f32 %v3514, %v3674
      %v3676 = vpop.f32.mrb[0].mxu0
      %3677 = vmatprep.mubr.bf16.mxu0 0
      %3678 = vmatmul.mubr.bf16.gmra.mrb[0].mxu0 %v2121
      %v3679 = vpop.f32.mrb[0].mxu0
      %v3680 = vadd.f32 %v3519, %v3679
      %v3681 = vpop.f32.mrb[0].mxu0
      %v3682 = vpop.f32.mrb[0].mxu0
      %v3683 = vadd.f32 %v3522, %v3682
      %v3684 = vpop.f32.mrb[0].mxu0
      %3685 = vmatprep.mubr.bf16.mxu0 0
      %3686 = vmatmul.mubr.bf16.gmra.mrb[0].mxu0 %v2124
      %v3687 = vpop.f32.mrb[0].mxu0
      %v3688 = vadd.f32 %v3527, %v3687
      %v3689 = vpop.f32.mrb[0].mxu0
      %v3690 = vpop.f32.mrb[0].mxu0
      %v3691 = vadd.f32 %v3530, %v3690
      %v3692 = vpop.f32.mrb[0].mxu0
      %3693 = vmatprep.mubr.bf16.mxu0 0
      %3694 = vmatmul.mubr.bf16.gmra.mrb[0].mxu0 %v2127
      %v3695 = vpop.f32.mrb[0].mxu0
      %v3696 = vadd.f32 %v3535, %v3695
      %v3697 = vpop.f32.mrb[0].mxu0
      %v3698 = vpop.f32.mrb[0].mxu0
      %v3699 = vadd.f32 %v3538, %v3698
      %v3700 = vpop.f32.mrb[0].mxu0
      %3701 = vdwg.mxu0
      %s3702 = scalar_lea.vmem [#allocation3], 24
      %v3703 = vld [vmem:[%s3702] sm:$0xf]
      %v3704 = vld [vmem:[%s3702 + $0x4] sm:$0xf]
      %v3705 = vld [vmem:[%s3702 + $0xc] sm:$0xf]
      %v3706 = vld [vmem:[%s3702 + $0x10] sm:$0xf]
      %v3707 = vld [vmem:[%s3702 + $0x18] sm:$0xf]
      %v3708 = vld [vmem:[%s3702 + $0x1c] sm:$0xf]
      %v3709 = vld [vmem:[%s3702 + $0x24] sm:$0xf]
      %v3710 = vld [vmem:[%s3702 + $0x28] sm:$0xf]
      %v3711 = vld [vmem:[%s3702 + $0x30] sm:$0xf]
      %v3712 = vld [vmem:[%s3702 + $0x34] sm:$0xf]
      %v3713 = vld [vmem:[%s3702 + $0x3c] sm:$0xf]
      %v3714 = vld [vmem:[%s3702 + $0x40] sm:$0xf]
      %v3715 = vld [vmem:[%s3702 + $0x48] sm:$0xf]
      %v3716 = vld [vmem:[%s3702 + $0x4c] sm:$0xf]
      %v3717 = vld [vmem:[%s3702 + $0x54] sm:$0xf]
      %v3718 = vld [vmem:[%s3702 + $0x58] sm:$0xf]
      %v3719 = vld [vmem:[%s3702 + $0x60] sm:$0xf]
      %v3720 = vld [vmem:[%s3702 + $0x64] sm:$0xf]
      %v3721 = vld [vmem:[%s3702 + $0x6c] sm:$0xf]
      %v3722 = vld [vmem:[%s3702 + $0x70] sm:$0xf]
      %v3723 = vld [vmem:[%s3702 + $0x78] sm:$0xf]
      %v3724 = vld [vmem:[%s3702 + $0x7c] sm:$0xf]
      %v3725 = vld [vmem:[%s3702 + $0x84] sm:$0xf]
      %v3726 = vld [vmem:[%s3702 + $0x88] sm:$0xf]
      %v3727 = vld [vmem:[%s3702 + $0x90] sm:$0xf]
      %v3728 = vld [vmem:[%s3702 + $0x94] sm:$0xf]
      %v3729 = vld [vmem:[%s3702 + $0x9c] sm:$0xf]
      %v3730 = vld [vmem:[%s3702 + $0xa0] sm:$0xf]
      %v3731 = vld [vmem:[%s3702 + $0xa8] sm:$0xf]
      %v3732 = vld [vmem:[%s3702 + $0xac] sm:$0xf]
      %v3733 = vld [vmem:[%s3702 + $0xb4] sm:$0xf]
      %v3734 = vld [vmem:[%s3702 + $0xb8] sm:$0xf]
      %v3735 = vld [vmem:[%s3702 + $0x8] sm:$0x1]
      %v3736 = vld [vmem:[%s3702 + $0x14] sm:$0x1]
      %v3737 = vld [vmem:[%s3702 + $0x20] sm:$0x1]
      %v3738 = vld [vmem:[%s3702 + $0x2c] sm:$0x1]
      %v3739 = vld [vmem:[%s3702 + $0x38] sm:$0x1]
      %v3740 = vld [vmem:[%s3702 + $0x44] sm:$0x1]
      %v3741 = vld [vmem:[%s3702 + $0x50] sm:$0x1]
      %v3742 = vld [vmem:[%s3702 + $0x5c] sm:$0x1]
      %v3743 = vld [vmem:[%s3702 + $0x68] sm:$0x1]
      %v3744 = vld [vmem:[%s3702 + $0x74] sm:$0x1]
      %v3745 = vld [vmem:[%s3702 + $0x80] sm:$0x1]
      %v3746 = vld [vmem:[%s3702 + $0x8c] sm:$0x1]
      %v3747 = vld [vmem:[%s3702 + $0x98] sm:$0x1]
      %v3748 = vld [vmem:[%s3702 + $0xa4] sm:$0x1]
      %v3749 = vld [vmem:[%s3702 + $0xb0] sm:$0x1]
      %v3750 = vld [vmem:[%s3702 + $0xbc] sm:$0x1]
      %v3751 = vld [vmem:[%s3702] sm:$0xe]
      %v3752 = vld [vmem:[%s3702 + $0xc] sm:$0xe]
      %v3753 = vld [vmem:[%s3702 + $0x18] sm:$0xe]
      %v3754 = vld [vmem:[%s3702 + $0x24] sm:$0xe]
      %v3755 = vld [vmem:[%s3702 + $0x30] sm:$0xe]
      %v3756 = vld [vmem:[%s3702 + $0x3c] sm:$0xe]
      %v3757 = vld [vmem:[%s3702 + $0x48] sm:$0xe]
      %v3758 = vld [vmem:[%s3702 + $0x54] sm:$0xe]
      %v3759 = vld [vmem:[%s3702 + $0x60] sm:$0xe]
      %v3760 = vld [vmem:[%s3702 + $0x6c] sm:$0xe]
      %v3761 = vld [vmem:[%s3702 + $0x78] sm:$0xe]
      %v3762 = vld [vmem:[%s3702 + $0x84] sm:$0xe]
      %v3763 = vld [vmem:[%s3702 + $0x90] sm:$0xe]
      %v3764 = vld [vmem:[%s3702 + $0x9c] sm:$0xe]
      %v3765 = vld [vmem:[%s3702 + $0xa8] sm:$0xe]
      %v3766 = vld [vmem:[%s3702 + $0xb4] sm:$0xe]
      %v3799 = vunpack.c.l.b16 %v3703
      %v3800 = vunpack.c.l.b16 %v3704
      %v3801 = vunpack.c.l.b16 %v3705
      %v3802 = vunpack.c.l.b16 %v3706
      %v3803 = vunpack.c.l.b16 %v3707
      %v3804 = vunpack.c.l.b16 %v3708
      %v3805 = vunpack.c.l.b16 %v3709
      %v3806 = vunpack.c.l.b16 %v3710
      %v3807 = vunpack.c.l.b16 %v3711
      %v3808 = vunpack.c.l.b16 %v3712
      %v3809 = vunpack.c.l.b16 %v3713
      %v3810 = vunpack.c.l.b16 %v3714
      %v3811 = vunpack.c.l.b16 %v3715
      %v3812 = vunpack.c.l.b16 %v3716
      %v3813 = vunpack.c.l.b16 %v3717
      %v3814 = vunpack.c.l.b16 %v3718
      %v3815 = vunpack.c.l.b16 %v3719
      %v3816 = vunpack.c.l.b16 %v3720
      %v3817 = vunpack.c.l.b16 %v3721
      %v3818 = vunpack.c.l.b16 %v3722
      %v3819 = vunpack.c.l.b16 %v3723
      %v3820 = vunpack.c.l.b16 %v3724
      %v3821 = vunpack.c.l.b16 %v3725
      %v3822 = vunpack.c.l.b16 %v3726
      %v3823 = vunpack.c.l.b16 %v3727
      %v3824 = vunpack.c.l.b16 %v3728
      %v3825 = vunpack.c.l.b16 %v3729
      %v3826 = vunpack.c.l.b16 %v3730
      %v3827 = vunpack.c.l.b16 %v3731
      %v3828 = vunpack.c.l.b16 %v3732
      %v3829 = vunpack.c.l.b16 %v3733
      %v3830 = vunpack.c.l.b16 %v3734
      %v3831 = vpack.c.b16 %v3800, %v3799
      %v3832 = vpack.c.b16 %v3802, %v3801
      %v3833 = vpack.c.b16 %v3804, %v3803
      %v3834 = vpack.c.b16 %v3806, %v3805
      %v3835 = vpack.c.b16 %v3808, %v3807
      %v3836 = vpack.c.b16 %v3810, %v3809
      %v3837 = vpack.c.b16 %v3812, %v3811
      %v3838 = vpack.c.b16 %v3814, %v3813
      %v3839 = vpack.c.b16 %v3816, %v3815
      %v3840 = vpack.c.b16 %v3818, %v3817
      %v3841 = vpack.c.b16 %v3820, %v3819
      %v3842 = vpack.c.b16 %v3822, %v3821
      %v3843 = vpack.c.b16 %v3824, %v3823
      %v3844 = vpack.c.b16 %v3826, %v3825
      %v3845 = vpack.c.b16 %v3828, %v3827
      %v3846 = vpack.c.b16 %v3830, %v3829
      %v3879 = vunpack.c.l.b16 %v3735
      %v3880 = vunpack.c.l.b16 %v3736
      %v3881 = vunpack.c.l.b16 %v3737
      %v3882 = vunpack.c.l.b16 %v3738
      %v3883 = vunpack.c.l.b16 %v3739
      %v3884 = vunpack.c.l.b16 %v3740
      %v3885 = vunpack.c.l.b16 %v3741
      %v3886 = vunpack.c.l.b16 %v3742
      %v3887 = vunpack.c.l.b16 %v3743
      %v3888 = vunpack.c.l.b16 %v3744
      %v3889 = vunpack.c.l.b16 %v3745
      %v3890 = vunpack.c.l.b16 %v3746
      %v3891 = vunpack.c.l.b16 %v3747
      %v3892 = vunpack.c.l.b16 %v3748
      %v3893 = vunpack.c.l.b16 %v3749
      %v3894 = vunpack.c.l.b16 %v3750
      %v3895 = vpack.c.b16 %v3879, %v3879
      %v3896 = vpack.c.b16 %v3880, %v3880
      %v3897 = vpack.c.b16 %v3881, %v3881
      %v3898 = vpack.c.b16 %v3882, %v3882
      %v3899 = vpack.c.b16 %v3883, %v3883
      %v3900 = vpack.c.b16 %v3884, %v3884
      %v3901 = vpack.c.b16 %v3885, %v3885
      %v3902 = vpack.c.b16 %v3886, %v3886
      %v3903 = vpack.c.b16 %v3887, %v3887
      %v3904 = vpack.c.b16 %v3888, %v3888
      %v3905 = vpack.c.b16 %v3889, %v3889
      %v3906 = vpack.c.b16 %v3890, %v3890
      %v3907 = vpack.c.b16 %v3891, %v3891
      %v3908 = vpack.c.b16 %v3892, %v3892
      %v3909 = vpack.c.b16 %v3893, %v3893
      %v3910 = vpack.c.b16 %v3894, %v3894
      %v3912 = vshrl.u32 %v3831, 16
      %v3914 = vshll.u32 %v3831, 16
      %v3916 = vrot.slane %v3914, 1
      %v3917 = vor.u32 %v3912, %v3916
      %v3919 = vshll.u32 %v3895, 16
      %v3921 = vrot.slane %v3919, 1
      %v3922 = vsel %vm1822, %v3917, %v3921
      %v3924 = vshrl.u32 %v3832, 16
      %v3926 = vshll.u32 %v3832, 16
      %v3928 = vrot.slane %v3926, 1
      %v3929 = vor.u32 %v3924, %v3928
      %v3931 = vshll.u32 %v3896, 16
      %v3933 = vrot.slane %v3931, 1
      %v3934 = vsel %vm1822, %v3929, %v3933
      %v3936 = vshrl.u32 %v3833, 16
      %v3938 = vshll.u32 %v3833, 16
      %v3940 = vrot.slane %v3938, 1
      %v3941 = vor.u32 %v3936, %v3940
      %v3943 = vshll.u32 %v3897, 16
      %v3945 = vrot.slane %v3943, 1
      %v3946 = vsel %vm1822, %v3941, %v3945
      %v3948 = vshrl.u32 %v3834, 16
      %v3950 = vshll.u32 %v3834, 16
      %v3952 = vrot.slane %v3950, 1
      %v3953 = vor.u32 %v3948, %v3952
      %v3955 = vshll.u32 %v3898, 16
      %v3957 = vrot.slane %v3955, 1
      %v3958 = vsel %vm1822, %v3953, %v3957
      %v3960 = vshrl.u32 %v3835, 16
      %v3962 = vshll.u32 %v3835, 16
      %v3964 = vrot.slane %v3962, 1
      %v3965 = vor.u32 %v3960, %v3964
      %v3967 = vshll.u32 %v3899, 16
      %v3969 = vrot.slane %v3967, 1
      %v3970 = vsel %vm1822, %v3965, %v3969
      %v3972 = vshrl.u32 %v3836, 16
      %v3974 = vshll.u32 %v3836, 16
      %v3976 = vrot.slane %v3974, 1
      %v3977 = vor.u32 %v3972, %v3976
      %v3979 = vshll.u32 %v3900, 16
      %v3981 = vrot.slane %v3979, 1
      %v3982 = vsel %vm1822, %v3977, %v3981
      %v3984 = vshrl.u32 %v3837, 16
      %v3986 = vshll.u32 %v3837, 16
      %v3988 = vrot.slane %v3986, 1
      %v3989 = vor.u32 %v3984, %v3988
      %v3991 = vshll.u32 %v3901, 16
      %v3993 = vrot.slane %v3991, 1
      %v3994 = vsel %vm1822, %v3989, %v3993
      %v3996 = vshrl.u32 %v3838, 16
      %v3998 = vshll.u32 %v3838, 16
      %v4000 = vrot.slane %v3998, 1
      %v4001 = vor.u32 %v3996, %v4000
      %v4003 = vshll.u32 %v3902, 16
      %v4005 = vrot.slane %v4003, 1
      %v4006 = vsel %vm1822, %v4001, %v4005
      %v4008 = vshrl.u32 %v3839, 16
      %v4010 = vshll.u32 %v3839, 16
      %v4012 = vrot.slane %v4010, 1
      %v4013 = vor.u32 %v4008, %v4012
      %v4015 = vshll.u32 %v3903, 16
      %v4017 = vrot.slane %v4015, 1
      %v4018 = vsel %vm1822, %v4013, %v4017
      %v4020 = vshrl.u32 %v3840, 16
      %v4022 = vshll.u32 %v3840, 16
      %v4024 = vrot.slane %v4022, 1
      %v4025 = vor.u32 %v4020, %v4024
      %v4027 = vshll.u32 %v3904, 16
      %v4029 = vrot.slane %v4027, 1
      %v4030 = vsel %vm1822, %v4025, %v4029
      %v4032 = vshrl.u32 %v3841, 16
      %v4034 = vshll.u32 %v3841, 16
      %v4036 = vrot.slane %v4034, 1
      %v4037 = vor.u32 %v4032, %v4036
      %v4039 = vshll.u32 %v3905, 16
      %v4041 = vrot.slane %v4039, 1
      %v4042 = vsel %vm1822, %v4037, %v4041
      %v4044 = vshrl.u32 %v3842, 16
      %v4046 = vshll.u32 %v3842, 16
      %v4048 = vrot.slane %v4046, 1
      %v4049 = vor.u32 %v4044, %v4048
      %v4051 = vshll.u32 %v3906, 16
      %v4053 = vrot.slane %v4051, 1
      %v4054 = vsel %vm1822, %v4049, %v4053
      %v4056 = vshrl.u32 %v3843, 16
      %v4058 = vshll.u32 %v3843, 16
      %v4060 = vrot.slane %v4058, 1
      %v4061 = vor.u32 %v4056, %v4060
      %v4063 = vshll.u32 %v3907, 16
      %v4065 = vrot.slane %v4063, 1
      %v4066 = vsel %vm1822, %v4061, %v4065
      %v4068 = vshrl.u32 %v3844, 16
      %v4070 = vshll.u32 %v3844, 16
      %v4072 = vrot.slane %v4070, 1
      %v4073 = vor.u32 %v4068, %v4072
      %v4075 = vshll.u32 %v3908, 16
      %v4077 = vrot.slane %v4075, 1
      %v4078 = vsel %vm1822, %v4073, %v4077
      %v4080 = vshrl.u32 %v3845, 16
      %v4082 = vshll.u32 %v3845, 16
      %v4084 = vrot.slane %v4082, 1
      %v4085 = vor.u32 %v4080, %v4084
      %v4087 = vshll.u32 %v3909, 16
      %v4089 = vrot.slane %v4087, 1
      %v4090 = vsel %vm1822, %v4085, %v4089
      %v4092 = vshrl.u32 %v3846, 16
      %v4094 = vshll.u32 %v3846, 16
      %v4096 = vrot.slane %v4094, 1
      %v4097 = vor.u32 %v4092, %v4096
      %v4099 = vshll.u32 %v3910, 16
      %v4101 = vrot.slane %v4099, 1
      %v4102 = vsel %vm1822, %v4097, %v4101
      %v4135 = vunpack.c.l.b16 %v3751
      %v4136 = vunpack.c.l.b16 %v3752
      %v4137 = vunpack.c.l.b16 %v3753
      %v4138 = vunpack.c.l.b16 %v3754
      %v4139 = vunpack.c.l.b16 %v3755
      %v4140 = vunpack.c.l.b16 %v3756
      %v4141 = vunpack.c.l.b16 %v3757
      %v4142 = vunpack.c.l.b16 %v3758
      %v4143 = vunpack.c.l.b16 %v3759
      %v4144 = vunpack.c.l.b16 %v3760
      %v4145 = vunpack.c.l.b16 %v3761
      %v4146 = vunpack.c.l.b16 %v3762
      %v4147 = vunpack.c.l.b16 %v3763
      %v4148 = vunpack.c.l.b16 %v3764
      %v4149 = vunpack.c.l.b16 %v3765
      %v4150 = vunpack.c.l.b16 %v3766
      %v4151 = vpack.c.b16 %v3800, %v4135
      %v4152 = vpack.c.b16 %v3802, %v4136
      %v4153 = vpack.c.b16 %v3804, %v4137
      %v4154 = vpack.c.b16 %v3806, %v4138
      %v4155 = vpack.c.b16 %v3808, %v4139
      %v4156 = vpack.c.b16 %v3810, %v4140
      %v4157 = vpack.c.b16 %v3812, %v4141
      %v4158 = vpack.c.b16 %v3814, %v4142
      %v4159 = vpack.c.b16 %v3816, %v4143
      %v4160 = vpack.c.b16 %v3818, %v4144
      %v4161 = vpack.c.b16 %v3820, %v4145
      %v4162 = vpack.c.b16 %v3822, %v4146
      %v4163 = vpack.c.b16 %v3824, %v4147
      %v4164 = vpack.c.b16 %v3826, %v4148
      %v4165 = vpack.c.b16 %v3828, %v4149
      %v4166 = vpack.c.b16 %v3830, %v4150
      %v4167 = vrot.slane %v4151, 1
      %v4168 = vrot.slane %v3895, 1
      %v4169 = vsel %vm2079, %v4167, %v4168
      %v4170 = vrot.slane %v4152, 1
      %v4171 = vrot.slane %v3896, 1
      %v4172 = vsel %vm2079, %v4170, %v4171
      %v4173 = vrot.slane %v4153, 1
      %v4174 = vrot.slane %v3897, 1
      %v4175 = vsel %vm2079, %v4173, %v4174
      %v4176 = vrot.slane %v4154, 1
      %v4177 = vrot.slane %v3898, 1
      %v4178 = vsel %vm2079, %v4176, %v4177
      %v4179 = vrot.slane %v4155, 1
      %v4180 = vrot.slane %v3899, 1
      %v4181 = vsel %vm2079, %v4179, %v4180
      %v4182 = vrot.slane %v4156, 1
      %v4183 = vrot.slane %v3900, 1
      %v4184 = vsel %vm2079, %v4182, %v4183
      %v4185 = vrot.slane %v4157, 1
      %v4186 = vrot.slane %v3901, 1
      %v4187 = vsel %vm2079, %v4185, %v4186
      %v4188 = vrot.slane %v4158, 1
      %v4189 = vrot.slane %v3902, 1
      %v4190 = vsel %vm2079, %v4188, %v4189
      %v4191 = vrot.slane %v4159, 1
      %v4192 = vrot.slane %v3903, 1
      %v4193 = vsel %vm2079, %v4191, %v4192
      %v4194 = vrot.slane %v4160, 1
      %v4195 = vrot.slane %v3904, 1
      %v4196 = vsel %vm2079, %v4194, %v4195
      %v4197 = vrot.slane %v4161, 1
      %v4198 = vrot.slane %v3905, 1
      %v4199 = vsel %vm2079, %v4197, %v4198
      %v4200 = vrot.slane %v4162, 1
      %v4201 = vrot.slane %v3906, 1
      %v4202 = vsel %vm2079, %v4200, %v4201
      %v4203 = vrot.slane %v4163, 1
      %v4204 = vrot.slane %v3907, 1
      %v4205 = vsel %vm2079, %v4203, %v4204
      %v4206 = vrot.slane %v4164, 1
      %v4207 = vrot.slane %v3908, 1
      %v4208 = vsel %vm2079, %v4206, %v4207
      %v4209 = vrot.slane %v4165, 1
      %v4210 = vrot.slane %v3909, 1
      %v4211 = vsel %vm2079, %v4209, %v4210
      %v4212 = vrot.slane %v4166, 1
      %v4213 = vrot.slane %v3910, 1
      %v4214 = vsel %vm2079, %v4212, %v4213
      %s4231 = scalar_lea.vmem %s1, 384
      %v4232 = vld [vmem:[%s4231] sm:$0xf]
      %v4233 = vld [vmem:[%s4231 + $0x4] sm:$0xf]
      %v4234 = vld [vmem:[%s4231 + $0x8] sm:$0xf]
      %v4235 = vld [vmem:[%s4231 + $0xc] sm:$0xf]
      %v4236 = vld [vmem:[%s4231 + $0x10] sm:$0xf]
      %v4237 = vld [vmem:[%s4231 + $0x14] sm:$0xf]
      %v4238 = vld [vmem:[%s4231 + $0x18] sm:$0xf]
      %v4239 = vld [vmem:[%s4231 + $0x1c] sm:$0xf]
      %v4240 = vld [vmem:[%s4231 + $0x20] sm:$0xf]
      %v4241 = vld [vmem:[%s4231 + $0x24] sm:$0xf]
      %v4242 = vld [vmem:[%s4231 + $0x28] sm:$0xf]
      %v4243 = vld [vmem:[%s4231 + $0x2c] sm:$0xf]
      %v4244 = vld [vmem:[%s4231 + $0x30] sm:$0xf]
      %v4245 = vld [vmem:[%s4231 + $0x34] sm:$0xf]
      %v4246 = vld [vmem:[%s4231 + $0x38] sm:$0xf]
      %v4247 = vld [vmem:[%s4231 + $0x3c] sm:$0xf]
      %v4248 = vld [vmem:[%s4231 + $0x40] sm:$0xf]
      %v4249 = vld [vmem:[%s4231 + $0x44] sm:$0xf]
      %v4250 = vld [vmem:[%s4231 + $0x48] sm:$0xf]
      %v4251 = vld [vmem:[%s4231 + $0x4c] sm:$0xf]
      %v4252 = vld [vmem:[%s4231 + $0x50] sm:$0xf]
      %v4253 = vld [vmem:[%s4231 + $0x54] sm:$0xf]
      %v4254 = vld [vmem:[%s4231 + $0x58] sm:$0xf]
      %v4255 = vld [vmem:[%s4231 + $0x5c] sm:$0xf]
      %v4256 = vld [vmem:[%s4231 + $0x60] sm:$0xf]
      %v4257 = vld [vmem:[%s4231 + $0x64] sm:$0xf]
      %v4258 = vld [vmem:[%s4231 + $0x68] sm:$0xf]
      %v4259 = vld [vmem:[%s4231 + $0x6c] sm:$0xf]
      %v4260 = vld [vmem:[%s4231 + $0x70] sm:$0xf]
      %v4261 = vld [vmem:[%s4231 + $0x74] sm:$0xf]
      %v4262 = vld [vmem:[%s4231 + $0x78] sm:$0xf]
      %v4263 = vld [vmem:[%s4231 + $0x7c] sm:$0xf]
      %v4264 = vld [vmem:[%s4231 + $0x80] sm:$0xf]
      %v4265 = vld [vmem:[%s4231 + $0x84] sm:$0xf]
      %v4266 = vld [vmem:[%s4231 + $0x88] sm:$0xf]
      %v4267 = vld [vmem:[%s4231 + $0x8c] sm:$0xf]
      %v4268 = vld [vmem:[%s4231 + $0x90] sm:$0xf]
      %v4269 = vld [vmem:[%s4231 + $0x94] sm:$0xf]
      %v4270 = vld [vmem:[%s4231 + $0x98] sm:$0xf]
      %v4271 = vld [vmem:[%s4231 + $0x9c] sm:$0xf]
      %v4272 = vld [vmem:[%s4231 + $0xa0] sm:$0xf]
      %v4273 = vld [vmem:[%s4231 + $0xa4] sm:$0xf]
      %v4274 = vld [vmem:[%s4231 + $0xa8] sm:$0xf]
      %v4275 = vld [vmem:[%s4231 + $0xac] sm:$0xf]
      %v4276 = vld [vmem:[%s4231 + $0xb0] sm:$0xf]
      %v4277 = vld [vmem:[%s4231 + $0xb4] sm:$0xf]
      %v4278 = vld [vmem:[%s4231 + $0xb8] sm:$0xf]
      %v4279 = vld [vmem:[%s4231 + $0xbc] sm:$0xf]
      %v4328 = vunpack.c.l.b16 %v4232
      %v4329 = vunpack.c.l.b16 %v4233
      %v4330 = vunpack.c.l.b16 %v4234
      %v4331 = vunpack.c.l.b16 %v4235
      %v4332 = vunpack.c.l.b16 %v4236
      %v4333 = vunpack.c.l.b16 %v4237
      %v4334 = vunpack.c.l.b16 %v4238
      %v4335 = vunpack.c.l.b16 %v4239
      %v4336 = vunpack.c.l.b16 %v4240
      %v4337 = vunpack.c.l.b16 %v4241
      %v4338 = vunpack.c.l.b16 %v4242
      %v4339 = vunpack.c.l.b16 %v4243
      %v4340 = vunpack.c.l.b16 %v4244
      %v4341 = vunpack.c.l.b16 %v4245
      %v4342 = vunpack.c.l.b16 %v4246
      %v4343 = vunpack.c.l.b16 %v4247
      %v4344 = vunpack.c.l.b16 %v4248
      %v4345 = vunpack.c.l.b16 %v4249
      %v4346 = vunpack.c.l.b16 %v4250
      %v4347 = vunpack.c.l.b16 %v4251
      %v4348 = vunpack.c.l.b16 %v4252
      %v4349 = vunpack.c.l.b16 %v4253
      %v4350 = vunpack.c.l.b16 %v4254
      %v4351 = vunpack.c.l.b16 %v4255
      %v4352 = vunpack.c.l.b16 %v4256
      %v4353 = vunpack.c.l.b16 %v4257
      %v4354 = vunpack.c.l.b16 %v4258
      %v4355 = vunpack.c.l.b16 %v4259
      %v4356 = vunpack.c.l.b16 %v4260
      %v4357 = vunpack.c.l.b16 %v4261
      %v4358 = vunpack.c.l.b16 %v4262
      %v4359 = vunpack.c.l.b16 %v4263
      %v4360 = vunpack.c.l.b16 %v4264
      %v4361 = vunpack.c.l.b16 %v4265
      %v4362 = vunpack.c.l.b16 %v4266
      %v4363 = vunpack.c.l.b16 %v4267
      %v4364 = vunpack.c.l.b16 %v4268
      %v4365 = vunpack.c.l.b16 %v4269
      %v4366 = vunpack.c.l.b16 %v4270
      %v4367 = vunpack.c.l.b16 %v4271
      %v4368 = vunpack.c.l.b16 %v4272
      %v4369 = vunpack.c.l.b16 %v4273
      %v4370 = vunpack.c.l.b16 %v4274
      %v4371 = vunpack.c.l.b16 %v4275
      %v4372 = vunpack.c.l.b16 %v4276
      %v4373 = vunpack.c.l.b16 %v4277
      %v4374 = vunpack.c.l.b16 %v4278
      %v4375 = vunpack.c.l.b16 %v4279
      %v4376 = vpack.c.b16 %v4329, %v4328
      %v4377 = vpack.c.b16 %v4331, %v4330
      %v4378 = vpack.c.b16 %v4333, %v4332
      %v4379 = vpack.c.b16 %v4335, %v4334
      %v4380 = vpack.c.b16 %v4337, %v4336
      %v4381 = vpack.c.b16 %v4339, %v4338
      %v4382 = vpack.c.b16 %v4341, %v4340
      %v4383 = vpack.c.b16 %v4343, %v4342
      %v4384 = vpack.c.b16 %v4345, %v4344
      %v4385 = vpack.c.b16 %v4347, %v4346
      %v4386 = vpack.c.b16 %v4349, %v4348
      %v4387 = vpack.c.b16 %v4351, %v4350
      %v4388 = vpack.c.b16 %v4353, %v4352
      %v4389 = vpack.c.b16 %v4355, %v4354
      %v4390 = vpack.c.b16 %v4357, %v4356
      %v4391 = vpack.c.b16 %v4359, %v4358
      %v4392 = vpack.c.b16 %v4361, %v4360
      %v4393 = vpack.c.b16 %v4363, %v4362
      %v4394 = vpack.c.b16 %v4365, %v4364
      %v4395 = vpack.c.b16 %v4367, %v4366
      %v4396 = vpack.c.b16 %v4369, %v4368
      %v4397 = vpack.c.b16 %v4371, %v4370
      %v4398 = vpack.c.b16 %v4373, %v4372
      %v4399 = vpack.c.b16 %v4375, %v4374
      %4424 = vmatprep.subr.bf16.mxu0 0
      %4425 = vmatpush1.bf16.msra.mxu0 %v4376
      %4426 = vmatprep.subr.bf16.mxu0 0
      %4427 = vmatpush1.bf16.msra.mxu0 %v4377
      %4428 = vmatprep.subr.bf16.mxu0 0
      %4429 = vmatpush1.bf16.msra.mxu0 %v4378
      %4430 = vmatprep.subr.bf16.mxu0 0
      %4431 = vmatpush1.bf16.msra.mxu0 %v4379
      %4432 = vmatprep.subr.bf16.mxu0 0
      %4433 = vmatpush1.bf16.msra.mxu0 %v4380
      %4434 = vmatprep.subr.bf16.mxu0 0
      %4435 = vmatpush1.bf16.msra.mxu0 %v4381
      %4436 = vmatprep.subr.bf16.mxu0 0
      %4437 = vmatpush1.bf16.msra.mxu0 %v4382
      %4438 = vmatprep.subr.bf16.mxu0 0
      %4439 = vmatpush1.bf16.msra.mxu0 %v4383
      %4440 = vmatprep.subr.bf16.mxu0 0
      %4441 = vmatpush1.bf16.msra.mxu0 %v4384
      %4442 = vmatprep.subr.bf16.mxu0 0
      %4443 = vmatpush1.bf16.msra.mxu0 %v4385
      %4444 = vmatprep.subr.bf16.mxu0 0
      %4445 = vmatpush1.bf16.msra.mxu0 %v4386
      %4446 = vmatprep.subr.bf16.mxu0 0
      %4447 = vmatpush1.bf16.msra.mxu0 %v4387
      %4448 = vmatprep.subr.bf16.mxu0 0
      %4449 = vmatpush1.bf16.msra.mxu0 %v4388
      %4450 = vmatprep.subr.bf16.mxu0 0
      %4451 = vmatpush1.bf16.msra.mxu0 %v4389
      %4452 = vmatprep.subr.bf16.mxu0 0
      %4453 = vmatpush1.bf16.msra.mxu0 %v4390
      %4454 = vmatprep.subr.bf16.mxu0 0
      %4455 = vmatpush1.bf16.msra.mxu0 %v4391
      %4456 = vmatprep.mubr.bf16.mxu0 %v3922
      %4457 = vmatmul.mubr.bf16.gmra.mrb[0].mxu0 %v3831
      %v4458 = vpop.f32.mrb[0].mxu0
      %v4459 = vadd.f32 0.0, %v4458
      %v4460 = vpop.f32.mrb[0].mxu0
      %v4461 = vpop.f32.mrb[0].mxu0
      %v4462 = vadd.f32 0.0, %v4461
      %v4463 = vpop.f32.mrb[0].mxu0
      %4464 = vmatprep.mubr.bf16.mxu0 %v3934
      %4465 = vmatmul.mubr.bf16.gmra.mrb[0].mxu0 %v3832
      %v4466 = vpop.f32.mrb[0].mxu0
      %v4467 = vadd.f32 0.0, %v4466
      %v4468 = vpop.f32.mrb[0].mxu0
      %v4469 = vpop.f32.mrb[0].mxu0
      %v4470 = vadd.f32 0.0, %v4469
      %v4471 = vpop.f32.mrb[0].mxu0
      %4472 = vmatprep.mubr.bf16.mxu0 %v3946
      %4473 = vmatmul.mubr.bf16.gmra.mrb[0].mxu0 %v3833
      %v4474 = vpop.f32.mrb[0].mxu0
      %v4475 = vadd.f32 0.0, %v4474
      %v4476 = vpop.f32.mrb[0].mxu0
      %v4477 = vpop.f32.mrb[0].mxu0
      %v4478 = vadd.f32 0.0, %v4477
      %v4479 = vpop.f32.mrb[0].mxu0
      %4480 = vmatprep.mubr.bf16.mxu0 %v3958
      %4481 = vmatmul.mubr.bf16.gmra.mrb[0].mxu0 %v3834
      %v4482 = vpop.f32.mrb[0].mxu0
      %v4483 = vadd.f32 0.0, %v4482
      %v4484 = vpop.f32.mrb[0].mxu0
      %v4485 = vpop.f32.mrb[0].mxu0
      %v4486 = vadd.f32 0.0, %v4485
      %v4487 = vpop.f32.mrb[0].mxu0
      %4488 = vmatprep.mubr.bf16.mxu0 %v3970
      %4489 = vmatmul.mubr.bf16.gmra.mrb[0].mxu0 %v3835
      %v4490 = vpop.f32.mrb[0].mxu0
      %v4491 = vadd.f32 0.0, %v4490
      %v4492 = vpop.f32.mrb[0].mxu0
      %v4493 = vpop.f32.mrb[0].mxu0
      %v4494 = vadd.f32 0.0, %v4493
      %v4495 = vpop.f32.mrb[0].mxu0
      %4496 = vmatprep.mubr.bf16.mxu0 %v3982
      %4497 = vmatmul.mubr.bf16.gmra.mrb[0].mxu0 %v3836
      %v4498 = vpop.f32.mrb[0].mxu0
      %v4499 = vadd.f32 0.0, %v4498
      %v4500 = vpop.f32.mrb[0].mxu0
      %v4501 = vpop.f32.mrb[0].mxu0
      %v4502 = vadd.f32 0.0, %v4501
      %v4503 = vpop.f32.mrb[0].mxu0
      %4504 = vmatprep.mubr.bf16.mxu0 %v3994
      %4505 = vmatmul.mubr.bf16.gmra.mrb[0].mxu0 %v3837
      %v4506 = vpop.f32.mrb[0].mxu0
      %v4507 = vadd.f32 0.0, %v4506
      %v4508 = vpop.f32.mrb[0].mxu0
      %v4509 = vpop.f32.mrb[0].mxu0
      %v4510 = vadd.f32 0.0, %v4509
      %v4511 = vpop.f32.mrb[0].mxu0
      %4512 = vmatprep.mubr.bf16.mxu0 %v4006
      %4513 = vmatmul.mubr.bf16.gmra.mrb[0].mxu0 %v3838
      %v4514 = vpop.f32.mrb[0].mxu0
      %v4515 = vadd.f32 0.0, %v4514
      %v4516 = vpop.f32.mrb[0].mxu0
      %v4517 = vpop.f32.mrb[0].mxu0
      %v4518 = vadd.f32 0.0, %v4517
      %v4519 = vpop.f32.mrb[0].mxu0
      %4520 = vmatprep.mubr.bf16.mxu0 %v4018
      %4521 = vmatmul.mubr.bf16.gmra.mrb[0].mxu0 %v3839
      %v4522 = vpop.f32.mrb[0].mxu0
      %v4523 = vadd.f32 0.0, %v4522
      %v4524 = vpop.f32.mrb[0].mxu0
      %v4525 = vpop.f32.mrb[0].mxu0
      %v4526 = vadd.f32 0.0, %v4525
      %v4527 = vpop.f32.mrb[0].mxu0
      %4528 = vmatprep.mubr.bf16.mxu0 %v4030
      %4529 = vmatmul.mubr.bf16.gmra.mrb[0].mxu0 %v3840
      %v4530 = vpop.f32.mrb[0].mxu0
      %v4531 = vadd.f32 0.0, %v4530
      %v4532 = vpop.f32.mrb[0].mxu0
      %v4533 = vpop.f32.mrb[0].mxu0
      %v4534 = vadd.f32 0.0, %v4533
      %v4535 = vpop.f32.mrb[0].mxu0
      %4536 = vmatprep.mubr.bf16.mxu0 %v4042
      %4537 = vmatmul.mubr.bf16.gmra.mrb[0].mxu0 %v3841
      %v4538 = vpop.f32.mrb[0].mxu0
      %v4539 = vadd.f32 0.0, %v4538
      %v4540 = vpop.f32.mrb[0].mxu0
      %v4541 = vpop.f32.mrb[0].mxu0
      %v4542 = vadd.f32 0.0, %v4541
      %v4543 = vpop.f32.mrb[0].mxu0
      %4544 = vmatprep.mubr.bf16.mxu0 %v4054
      %4545 = vmatmul.mubr.bf16.gmra.mrb[0].mxu0 %v3842
      %v4546 = vpop.f32.mrb[0].mxu0
      %v4547 = vadd.f32 0.0, %v4546
      %v4548 = vpop.f32.mrb[0].mxu0
      %v4549 = vpop.f32.mrb[0].mxu0
      %v4550 = vadd.f32 0.0, %v4549
      %v4551 = vpop.f32.mrb[0].mxu0
      %4552 = vmatprep.mubr.bf16.mxu0 %v4066
      %4553 = vmatmul.mubr.bf16.gmra.mrb[0].mxu0 %v3843
      %v4554 = vpop.f32.mrb[0].mxu0
      %v4555 = vadd.f32 0.0, %v4554
      %v4556 = vpop.f32.mrb[0].mxu0
      %v4557 = vpop.f32.mrb[0].mxu0
      %v4558 = vadd.f32 0.0, %v4557
      %v4559 = vpop.f32.mrb[0].mxu0
      %4560 = vmatprep.mubr.bf16.mxu0 %v4078
      %4561 = vmatmul.mubr.bf16.gmra.mrb[0].mxu0 %v3844
      %v4562 = vpop.f32.mrb[0].mxu0
      %v4563 = vadd.f32 0.0, %v4562
      %v4564 = vpop.f32.mrb[0].mxu0
      %v4565 = vpop.f32.mrb[0].mxu0
      %v4566 = vadd.f32 0.0, %v4565
      %v4567 = vpop.f32.mrb[0].mxu0
      %4568 = vmatprep.mubr.bf16.mxu0 %v4090
      %4569 = vmatmul.mubr.bf16.gmra.mrb[0].mxu0 %v3845
      %v4570 = vpop.f32.mrb[0].mxu0
      %v4571 = vadd.f32 0.0, %v4570
      %v4572 = vpop.f32.mrb[0].mxu0
      %v4573 = vpop.f32.mrb[0].mxu0
      %v4574 = vadd.f32 0.0, %v4573
      %v4575 = vpop.f32.mrb[0].mxu0
      %4576 = vmatprep.mubr.bf16.mxu0 %v4102
      %4577 = vmatmul.mubr.bf16.gmra.mrb[0].mxu0 %v3846
      %v4578 = vpop.f32.mrb[0].mxu0
      %v4579 = vadd.f32 0.0, %v4578
      %v4580 = vpop.f32.mrb[0].mxu0
      %v4581 = vpop.f32.mrb[0].mxu0
      %v4582 = vadd.f32 0.0, %v4581
      %v4583 = vpop.f32.mrb[0].mxu0
      %4584 = vdwg.mxu0
      %4585 = vmatprep.subr.bf16.mxu0 0
      %4586 = vmatpush1.bf16.msra.mxu0 %v4392
      %4587 = vmatprep.subr.bf16.mxu0 0
      %4588 = vmatpush1.bf16.msra.mxu0 %v4393
      %4589 = vmatprep.subr.bf16.mxu0 0
      %4590 = vmatpush1.bf16.msra.mxu0 %v4394
      %4591 = vmatprep.subr.bf16.mxu0 0
      %4592 = vmatpush1.bf16.msra.mxu0 %v4395
      %4593 = vmatprep.subr.bf16.mxu0 0
      %4594 = vmatpush1.bf16.msra.mxu0 %v4396
      %4595 = vmatprep.subr.bf16.mxu0 0
      %4596 = vmatpush1.bf16.msra.mxu0 %v4397
      %4597 = vmatprep.subr.bf16.mxu0 0
      %4598 = vmatpush1.bf16.msra.mxu0 %v4398
      %4599 = vmatprep.subr.bf16.mxu0 0
      %4600 = vmatpush1.bf16.msra.mxu0 %v4399
      %4601 = vmatprep.subr.bf16.mxu0 0
      %4602 = vmatpush1.bf16.msra.mxu0 0
      %4603 = vmatprep.subr.bf16.mxu0 0
      %4604 = vmatpush1.bf16.msra.mxu0 0
      %4605 = vmatprep.subr.bf16.mxu0 0
      %4606 = vmatpush1.bf16.msra.mxu0 0
      %4607 = vmatprep.subr.bf16.mxu0 0
      %4608 = vmatpush1.bf16.msra.mxu0 0
      %4609 = vmatprep.subr.bf16.mxu0 0
      %4610 = vmatpush1.bf16.msra.mxu0 0
      %4611 = vmatprep.subr.bf16.mxu0 0
      %4612 = vmatpush1.bf16.msra.mxu0 0
      %4613 = vmatprep.subr.bf16.mxu0 0
      %4614 = vmatpush1.bf16.msra.mxu0 0
      %4615 = vmatprep.subr.bf16.mxu0 0
      %4616 = vmatpush1.bf16.msra.mxu0 0
      %4617 = vmatprep.mubr.bf16.mxu0 0
      %4618 = vmatmul.mubr.bf16.gmra.mrb[0].mxu0 %v4169
      %v4619 = vpop.f32.mrb[0].mxu0
      %v4620 = vadd.f32 %v4459, %v4619
      %v4621 = vpop.f32.mrb[0].mxu0
      %v4622 = vpop.f32.mrb[0].mxu0
      %v4623 = vadd.f32 %v4462, %v4622
      %v4624 = vpop.f32.mrb[0].mxu0
      %4625 = vmatprep.mubr.bf16.mxu0 0
      %4626 = vmatmul.mubr.bf16.gmra.mrb[0].mxu0 %v4172
      %v4627 = vpop.f32.mrb[0].mxu0
      %v4628 = vadd.f32 %v4467, %v4627
      %v4629 = vpop.f32.mrb[0].mxu0
      %v4630 = vpop.f32.mrb[0].mxu0
      %v4631 = vadd.f32 %v4470, %v4630
      %v4632 = vpop.f32.mrb[0].mxu0
      %4633 = vmatprep.mubr.bf16.mxu0 0
      %4634 = vmatmul.mubr.bf16.gmra.mrb[0].mxu0 %v4175
      %v4635 = vpop.f32.mrb[0].mxu0
      %v4636 = vadd.f32 %v4475, %v4635
      %v4637 = vpop.f32.mrb[0].mxu0
      %v4638 = vpop.f32.mrb[0].mxu0
      %v4639 = vadd.f32 %v4478, %v4638
      %v4640 = vpop.f32.mrb[0].mxu0
      %4641 = vmatprep.mubr.bf16.mxu0 0
      %4642 = vmatmul.mubr.bf16.gmra.mrb[0].mxu0 %v4178
      %v4643 = vpop.f32.mrb[0].mxu0
      %v4644 = vadd.f32 %v4483, %v4643
      %v4645 = vpop.f32.mrb[0].mxu0
      %v4646 = vpop.f32.mrb[0].mxu0
      %v4647 = vadd.f32 %v4486, %v4646
      %v4648 = vpop.f32.mrb[0].mxu0
      %4649 = vmatprep.mubr.bf16.mxu0 0
      %4650 = vmatmul.mubr.bf16.gmra.mrb[0].mxu0 %v4181
      %v4651 = vpop.f32.mrb[0].mxu0
      %v4652 = vadd.f32 %v4491, %v4651
      %v4653 = vpop.f32.mrb[0].mxu0
      %v4654 = vpop.f32.mrb[0].mxu0
      %v4655 = vadd.f32 %v4494, %v4654
      %v4656 = vpop.f32.mrb[0].mxu0
      %4657 = vmatprep.mubr.bf16.mxu0 0
      %4658 = vmatmul.mubr.bf16.gmra.mrb[0].mxu0 %v4184
      %v4659 = vpop.f32.mrb[0].mxu0
      %v4660 = vadd.f32 %v4499, %v4659
      %v4661 = vpop.f32.mrb[0].mxu0
      %v4662 = vpop.f32.mrb[0].mxu0
      %v4663 = vadd.f32 %v4502, %v4662
      %v4664 = vpop.f32.mrb[0].mxu0
      %4665 = vmatprep.mubr.bf16.mxu0 0
      %4666 = vmatmul.mubr.bf16.gmra.mrb[0].mxu0 %v4187
      %v4667 = vpop.f32.mrb[0].mxu0
      %v4668 = vadd.f32 %v4507, %v4667
      %v4669 = vpop.f32.mrb[0].mxu0
      %v4670 = vpop.f32.mrb[0].mxu0
      %v4671 = vadd.f32 %v4510, %v4670
      %v4672 = vpop.f32.mrb[0].mxu0
      %4673 = vmatprep.mubr.bf16.mxu0 0
      %4674 = vmatmul.mubr.bf16.gmra.mrb[0].mxu0 %v4190
      %v4675 = vpop.f32.mrb[0].mxu0
      %v4676 = vadd.f32 %v4515, %v4675
      %v4677 = vpop.f32.mrb[0].mxu0
      %v4678 = vpop.f32.mrb[0].mxu0
      %v4679 = vadd.f32 %v4518, %v4678
      %v4680 = vpop.f32.mrb[0].mxu0
      %4681 = vmatprep.mubr.bf16.mxu0 0
      %4682 = vmatmul.mubr.bf16.gmra.mrb[0].mxu0 %v4193
      %v4683 = vpop.f32.mrb[0].mxu0
      %v4684 = vadd.f32 %v4523, %v4683
      %v4685 = vpop.f32.mrb[0].mxu0
      %v4686 = vpop.f32.mrb[0].mxu0
      %v4687 = vadd.f32 %v4526, %v4686
      %v4688 = vpop.f32.mrb[0].mxu0
      %4689 = vmatprep.mubr.bf16.mxu0 0
      %4690 = vmatmul.mubr.bf16.gmra.mrb[0].mxu0 %v4196
      %v4691 = vpop.f32.mrb[0].mxu0
      %v4692 = vadd.f32 %v4531, %v4691
      %v4693 = vpop.f32.mrb[0].mxu0
      %v4694 = vpop.f32.mrb[0].mxu0
      %v4695 = vadd.f32 %v4534, %v4694
      %v4696 = vpop.f32.mrb[0].mxu0
      %4697 = vmatprep.mubr.bf16.mxu0 0
      %4698 = vmatmul.mubr.bf16.gmra.mrb[0].mxu0 %v4199
      %v4699 = vpop.f32.mrb[0].mxu0
      %v4700 = vadd.f32 %v4539, %v4699
      %v4701 = vpop.f32.mrb[0].mxu0
      %v4702 = vpop.f32.mrb[0].mxu0
      %v4703 = vadd.f32 %v4542, %v4702
      %v4704 = vpop.f32.mrb[0].mxu0
      %4705 = vmatprep.mubr.bf16.mxu0 0
      %4706 = vmatmul.mubr.bf16.gmra.mrb[0].mxu0 %v4202
      %v4707 = vpop.f32.mrb[0].mxu0
      %v4708 = vadd.f32 %v4547, %v4707
      %v4709 = vpop.f32.mrb[0].mxu0
      %v4710 = vpop.f32.mrb[0].mxu0
      %v4711 = vadd.f32 %v4550, %v4710
      %v4712 = vpop.f32.mrb[0].mxu0
      %4713 = vmatprep.mubr.bf16.mxu0 0
      %4714 = vmatmul.mubr.bf16.gmra.mrb[0].mxu0 %v4205
      %v4715 = vpop.f32.mrb[0].mxu0
      %v4716 = vadd.f32 %v4555, %v4715
      %v4717 = vpop.f32.mrb[0].mxu0
      %v4718 = vpop.f32.mrb[0].mxu0
      %v4719 = vadd.f32 %v4558, %v4718
      %v4720 = vpop.f32.mrb[0].mxu0
      %4721 = vmatprep.mubr.bf16.mxu0 0
      %4722 = vmatmul.mubr.bf16.gmra.mrb[0].mxu0 %v4208
      %v4723 = vpop.f32.mrb[0].mxu0
      %v4724 = vadd.f32 %v4563, %v4723
      %v4725 = vpop.f32.mrb[0].mxu0
      %v4726 = vpop.f32.mrb[0].mxu0
      %v4727 = vadd.f32 %v4566, %v4726
      %v4728 = vpop.f32.mrb[0].mxu0
      %4729 = vmatprep.mubr.bf16.mxu0 0
      %4730 = vmatmul.mubr.bf16.gmra.mrb[0].mxu0 %v4211
      %v4731 = vpop.f32.mrb[0].mxu0
      %v4732 = vadd.f32 %v4571, %v4731
      %v4733 = vpop.f32.mrb[0].mxu0
      %v4734 = vpop.f32.mrb[0].mxu0
      %v4735 = vadd.f32 %v4574, %v4734
      %v4736 = vpop.f32.mrb[0].mxu0
      %4737 = vmatprep.mubr.bf16.mxu0 0
      %4738 = vmatmul.mubr.bf16.gmra.mrb[0].mxu0 %v4214
      %v4739 = vpop.f32.mrb[0].mxu0
      %v4740 = vadd.f32 %v4579, %v4739
      %v4741 = vpop.f32.mrb[0].mxu0
      %v4742 = vpop.f32.mrb[0].mxu0
      %v4743 = vadd.f32 %v4582, %v4742
      %v4744 = vpop.f32.mrb[0].mxu0
      %4745 = vdwg.mxu0
      %v4746 = vadd.f32 %v3576, %v4620
      %v4747 = vadd.f32 %v3579, %v4623
      %v4748 = vadd.f32 %v3584, %v4628
      %v4749 = vadd.f32 %v3587, %v4631
      %v4750 = vadd.f32 %v3592, %v4636
      %v4751 = vadd.f32 %v3595, %v4639
      %v4752 = vadd.f32 %v3600, %v4644
      %v4753 = vadd.f32 %v3603, %v4647
      %v4754 = vadd.f32 %v3608, %v4652
      %v4755 = vadd.f32 %v3611, %v4655
      %v4756 = vadd.f32 %v3616, %v4660
      %v4757 = vadd.f32 %v3619, %v4663
      %v4758 = vadd.f32 %v3624, %v4668
      %v4759 = vadd.f32 %v3627, %v4671
      %v4760 = vadd.f32 %v3632, %v4676
      %v4761 = vadd.f32 %v3635, %v4679
      %v4762 = vadd.f32 %v3640, %v4684
      %v4763 = vadd.f32 %v3643, %v4687
      %v4764 = vadd.f32 %v3648, %v4692
      %v4765 = vadd.f32 %v3651, %v4695
      %v4766 = vadd.f32 %v3656, %v4700
      %v4767 = vadd.f32 %v3659, %v4703
      %v4768 = vadd.f32 %v3664, %v4708
      %v4769 = vadd.f32 %v3667, %v4711
      %v4770 = vadd.f32 %v3672, %v4716
      %v4771 = vadd.f32 %v3675, %v4719
      %v4772 = vadd.f32 %v3680, %v4724
      %v4773 = vadd.f32 %v3683, %v4727
      %v4774 = vadd.f32 %v3688, %v4732
      %v4775 = vadd.f32 %v3691, %v4735
      %v4776 = vadd.f32 %v3696, %v4740
      %v4777 = vadd.f32 %v3699, %v4743
      %v4778 = vpack.c.bf16 %v4747, %v4746
      %v4779 = vpack.c.bf16 %v4749, %v4748
      %v4780 = vpack.c.bf16 %v4751, %v4750
      %v4781 = vpack.c.bf16 %v4753, %v4752
      %v4782 = vpack.c.bf16 %v4755, %v4754
      %v4783 = vpack.c.bf16 %v4757, %v4756
      %v4784 = vpack.c.bf16 %v4759, %v4758
      %v4785 = vpack.c.bf16 %v4761, %v4760
      %v4786 = vpack.c.bf16 %v4763, %v4762
      %v4787 = vpack.c.bf16 %v4765, %v4764
      %v4788 = vpack.c.bf16 %v4767, %v4766
      %v4789 = vpack.c.bf16 %v4769, %v4768
      %v4790 = vpack.c.bf16 %v4771, %v4770
      %v4791 = vpack.c.bf16 %v4773, %v4772
      %v4792 = vpack.c.bf16 %v4775, %v4774
      %v4793 = vpack.c.bf16 %v4777, %v4776
      %v4810 = vunpack.c.l.b16 %v4778
      %v4811 = vunpack.c.h.b16 %v4778
      %v4812 = vunpack.c.l.b16 %v4779
      %v4813 = vunpack.c.h.b16 %v4779
      %v4814 = vunpack.c.l.b16 %v4780
      %v4815 = vunpack.c.h.b16 %v4780
      %v4816 = vunpack.c.l.b16 %v4781
      %v4817 = vunpack.c.h.b16 %v4781
      %v4818 = vunpack.c.l.b16 %v4782
      %v4819 = vunpack.c.h.b16 %v4782
      %v4820 = vunpack.c.l.b16 %v4783
      %v4821 = vunpack.c.h.b16 %v4783
      %v4822 = vunpack.c.l.b16 %v4784
      %v4823 = vunpack.c.h.b16 %v4784
      %v4824 = vunpack.c.l.b16 %v4785
      %v4825 = vunpack.c.h.b16 %v4785
      %v4826 = vunpack.c.l.b16 %v4786
      %v4827 = vunpack.c.h.b16 %v4786
      %v4828 = vunpack.c.l.b16 %v4787
      %v4829 = vunpack.c.h.b16 %v4787
      %v4830 = vunpack.c.l.b16 %v4788
      %v4831 = vunpack.c.h.b16 %v4788
      %v4832 = vunpack.c.l.b16 %v4789
      %v4833 = vunpack.c.h.b16 %v4789
      %v4834 = vunpack.c.l.b16 %v4790
      %v4835 = vunpack.c.h.b16 %v4790
      %v4836 = vunpack.c.l.b16 %v4791
      %v4837 = vunpack.c.h.b16 %v4791
      %v4838 = vunpack.c.l.b16 %v4792
      %v4839 = vunpack.c.h.b16 %v4792
      %v4840 = vunpack.c.l.b16 %v4793
      %v4841 = vunpack.c.h.b16 %v4793
      %v4842 = vpack.c.b16 %v4810, %v4810
      %v4843 = vpack.c.b16 %v4811, %v4811
      %v4844 = vpack.c.b16 %v4812, %v4812
      %v4845 = vpack.c.b16 %v4813, %v4813
      %v4846 = vpack.c.b16 %v4814, %v4814
      %v4847 = vpack.c.b16 %v4815, %v4815
      %v4848 = vpack.c.b16 %v4816, %v4816
      %v4849 = vpack.c.b16 %v4817, %v4817
      %v4850 = vpack.c.b16 %v4818, %v4818
      %v4851 = vpack.c.b16 %v4819, %v4819
      %v4852 = vpack.c.b16 %v4820, %v4820
      %v4853 = vpack.c.b16 %v4821, %v4821
      %v4854 = vpack.c.b16 %v4822, %v4822
      %v4855 = vpack.c.b16 %v4823, %v4823
      %v4856 = vpack.c.b16 %v4824, %v4824
      %v4857 = vpack.c.b16 %v4825, %v4825
      %v4858 = vpack.c.b16 %v4826, %v4826
      %v4859 = vpack.c.b16 %v4827, %v4827
      %v4860 = vpack.c.b16 %v4828, %v4828
      %v4861 = vpack.c.b16 %v4829, %v4829
      %v4862 = vpack.c.b16 %v4830, %v4830
      %v4863 = vpack.c.b16 %v4831, %v4831
      %v4864 = vpack.c.b16 %v4832, %v4832
      %v4865 = vpack.c.b16 %v4833, %v4833
      %v4866 = vpack.c.b16 %v4834, %v4834
      %v4867 = vpack.c.b16 %v4835, %v4835
      %v4868 = vpack.c.b16 %v4836, %v4836
      %v4869 = vpack.c.b16 %v4837, %v4837
      %v4870 = vpack.c.b16 %v4838, %v4838
      %v4871 = vpack.c.b16 %v4839, %v4839
      %v4872 = vpack.c.b16 %v4840, %v4840
      %v4873 = vpack.c.b16 %v4841, %v4841
      %4906 = vst [vmem:[%s248] sm:$0xf] %v4842
      %4907 = vst [vmem:[%s248 + $0x4] sm:$0xf] %v4843
      %4908 = vst [vmem:[%s248 + $0x8] sm:$0xf] %v4844
      %4909 = vst [vmem:[%s248 + $0xc] sm:$0xf] %v4845
      %4910 = vst [vmem:[%s248 + $0x10] sm:$0xf] %v4846
      %4911 = vst [vmem:[%s248 + $0x14] sm:$0xf] %v4847
      %4912 = vst [vmem:[%s248 + $0x18] sm:$0xf] %v4848
      %4913 = vst [vmem:[%s248 + $0x1c] sm:$0xf] %v4849
      %4914 = vst [vmem:[%s248 + $0x20] sm:$0xf] %v4850
      %4915 = vst [vmem:[%s248 + $0x24] sm:$0xf] %v4851
      %4916 = vst [vmem:[%s248 + $0x28] sm:$0xf] %v4852
      %4917 = vst [vmem:[%s248 + $0x2c] sm:$0xf] %v4853
      %4918 = vst [vmem:[%s248 + $0x30] sm:$0xf] %v4854
      %4919 = vst [vmem:[%s248 + $0x34] sm:$0xf] %v4855
      %4920 = vst [vmem:[%s248 + $0x38] sm:$0xf] %v4856
      %4921 = vst [vmem:[%s248 + $0x3c] sm:$0xf] %v4857
      %4922 = vst [vmem:[%s248 + $0x40] sm:$0xf] %v4858
      %4923 = vst [vmem:[%s248 + $0x44] sm:$0xf] %v4859
      %4924 = vst [vmem:[%s248 + $0x48] sm:$0xf] %v4860
      %4925 = vst [vmem:[%s248 + $0x4c] sm:$0xf] %v4861
      %4926 = vst [vmem:[%s248 + $0x50] sm:$0xf] %v4862
      %4927 = vst [vmem:[%s248 + $0x54] sm:$0xf] %v4863
      %4928 = vst [vmem:[%s248 + $0x58] sm:$0xf] %v4864
      %4929 = vst [vmem:[%s248 + $0x5c] sm:$0xf] %v4865
      %4930 = vst [vmem:[%s248 + $0x60] sm:$0xf] %v4866
      %4931 = vst [vmem:[%s248 + $0x64] sm:$0xf] %v4867
      %4932 = vst [vmem:[%s248 + $0x68] sm:$0xf] %v4868
      %4933 = vst [vmem:[%s248 + $0x6c] sm:$0xf] %v4869
      %4934 = vst [vmem:[%s248 + $0x70] sm:$0xf] %v4870
      %4935 = vst [vmem:[%s248 + $0x74] sm:$0xf] %v4871
      %4936 = vst [vmem:[%s248 + $0x78] sm:$0xf] %v4872
      %4937 = vst [vmem:[%s248 + $0x7c] sm:$0xf] %v4873
      %v4938 = vadd.f32 %v4746, %v4747
      %v4939 = vadd.f32 %v4938, %v4748
      %v4940 = vadd.f32 %v4939, %v4749
      %v4941 = vadd.f32 %v4940, %v4750
      %v4942 = vadd.f32 %v4941, %v4751
      %v4943 = vadd.f32 %v4942, %v4752
      %v4944 = vadd.f32 %v4943, %v4753
      %v4945 = vadd.f32 %v4944, %v4754
      %v4946 = vadd.f32 %v4945, %v4755
      %v4947 = vadd.f32 %v4946, %v4756
      %v4948 = vadd.f32 %v4947, %v4757
      %v4949 = vadd.f32 %v4948, %v4758
      %v4950 = vadd.f32 %v4949, %v4759
      %v4951 = vadd.f32 %v4950, %v4760
      %v4952 = vadd.f32 %v4951, %v4761
      %v4953 = vadd.f32 %v4952, %v4762
      %v4954 = vadd.f32 %v4953, %v4763
      %v4955 = vadd.f32 %v4954, %v4764
      %v4956 = vadd.f32 %v4955, %v4765
      %v4957 = vadd.f32 %v4956, %v4766
      %v4958 = vadd.f32 %v4957, %v4767
      %v4959 = vadd.f32 %v4958, %v4768
      %v4960 = vadd.f32 %v4959, %v4769
      %v4961 = vadd.f32 %v4960, %v4770
      %v4962 = vadd.f32 %v4961, %v4771
      %v4963 = vadd.f32 %v4962, %v4772
      %v4964 = vadd.f32 %v4963, %v4773
      %v4965 = vadd.f32 %v4964, %v4774
      %v4966 = vadd.f32 %v4965, %v4775
      %v4967 = vadd.f32 %v4966, %v4776
      %v4968 = vadd.f32 %v4967, %v4777
      %v4969 = vrot.slane %v4968, 4
      %v4970 = vadd.f32 %v4968, %v4969
      %v4971 = vrot.slane %v4970, 2
      %v4972 = vadd.f32 %v4970, %v4971
      %v4973 = vrot.slane %v4972, 1
      %v4974 = vadd.f32 %v4972, %v4973
      %4975 = vst [vmem:[%s254] sm:$0x1] %v4974
      %v4976 = vmul.f32 %v4746, %v4746
      %v4977 = vmul.f32 %v4747, %v4747
      %v4978 = vmul.f32 %v4748, %v4748
      %v4979 = vmul.f32 %v4749, %v4749
      %v4980 = vmul.f32 %v4750, %v4750
      %v4981 = vmul.f32 %v4751, %v4751
      %v4982 = vmul.f32 %v4752, %v4752
      %v4983 = vmul.f32 %v4753, %v4753
      %v4984 = vmul.f32 %v4754, %v4754
      %v4985 = vmul.f32 %v4755, %v4755
      %v4986 = vmul.f32 %v4756, %v4756
      %v4987 = vmul.f32 %v4757, %v4757
      %v4988 = vmul.f32 %v4758, %v4758
      %v4989 = vmul.f32 %v4759, %v4759
      %v4990 = vmul.f32 %v4760, %v4760
      %v4991 = vmul.f32 %v4761, %v4761
      %v4992 = vmul.f32 %v4762, %v4762
      %v4993 = vmul.f32 %v4763, %v4763
      %v4994 = vmul.f32 %v4764, %v4764
      %v4995 = vmul.f32 %v4765, %v4765
      %v4996 = vmul.f32 %v4766, %v4766
      %v4997 = vmul.f32 %v4767, %v4767
      %v4998 = vmul.f32 %v4768, %v4768
      %v4999 = vmul.f32 %v4769, %v4769
      %v5000 = vmul.f32 %v4770, %v4770
      %v5001 = vmul.f32 %v4771, %v4771
      %v5002 = vmul.f32 %v4772, %v4772
      %v5003 = vmul.f32 %v4773, %v4773
      %v5004 = vmul.f32 %v4774, %v4774
      %v5005 = vmul.f32 %v4775, %v4775
      %v5006 = vmul.f32 %v4776, %v4776
      %v5007 = vmul.f32 %v4777, %v4777
      %v5008 = vadd.f32 %v4976, %v4977
      %v5009 = vadd.f32 %v5008, %v4978
      %v5010 = vadd.f32 %v5009, %v4979
      %v5011 = vadd.f32 %v5010, %v4980
      %v5012 = vadd.f32 %v5011, %v4981
      %v5013 = vadd.f32 %v5012, %v4982
      %v5014 = vadd.f32 %v5013, %v4983
      %v5015 = vadd.f32 %v5014, %v4984
      %v5016 = vadd.f32 %v5015, %v4985
      %v5017 = vadd.f32 %v5016, %v4986
      %v5018 = vadd.f32 %v5017, %v4987
      %v5019 = vadd.f32 %v5018, %v4988
      %v5020 = vadd.f32 %v5019, %v4989
      %v5021 = vadd.f32 %v5020, %v4990
      %v5022 = vadd.f32 %v5021, %v4991
      %v5023 = vadd.f32 %v5022, %v4992
      %v5024 = vadd.f32 %v5023, %v4993
      %v5025 = vadd.f32 %v5024, %v4994
      %v5026 = vadd.f32 %v5025, %v4995
      %v5027 = vadd.f32 %v5026, %v4996
      %v5028 = vadd.f32 %v5027, %v4997
      %v5029 = vadd.f32 %v5028, %v4998
      %v5030 = vadd.f32 %v5029, %v4999
      %v5031 = vadd.f32 %v5030, %v5000
      %v5032 = vadd.f32 %v5031, %v5001
      %v5033 = vadd.f32 %v5032, %v5002
      %v5034 = vadd.f32 %v5033, %v5003
      %v5035 = vadd.f32 %v5034, %v5004
      %v5036 = vadd.f32 %v5035, %v5005
      %v5037 = vadd.f32 %v5036, %v5006
      %v5038 = vadd.f32 %v5037, %v5007
      %v5039 = vrot.slane %v5038, 4
      %v5040 = vadd.f32 %v5038, %v5039
      %v5041 = vrot.slane %v5040, 2
      %v5042 = vadd.f32 %v5040, %v5041
      %v5043 = vrot.slane %v5042, 1
      %v5044 = vadd.f32 %v5042, %v5043
      %5045 = vst [vmem:[%s260] sm:$0x1] %v5044
      %p5046 = scmp.lt.s32.totalorder %s22, 1
      %s5047 = scalar_select %p5046, %s22, 1
      %p5048 = scmp.lt.s32.totalorder %s23, 0
      %s5049 = scalar_select %p5048, %s23, 0
      %s5050 = smul.addr %s5049, 32
      %s5051 = smul.addr %s5047, 32
      %s5052 = sadd.s32 %s5050, %s5051
      %s5053 = smul.addr %s5052, 4
      %s5054 = scalar_lea.vmem %s4, %s5053
      %p5055 = scmp.lt.s32.totalorder %s22, 1
      %s5056 = scalar_select %p5055, %s22, 1
      %p5057 = scmp.lt.s32.totalorder %s23, 0
      %s5058 = scalar_select %p5057, %s23, 0
      %s5059 = sadd.s32 %s5058, %s5056
      %s5060 = scalar_lea.vmem %s5, %s5059
      %p5061 = scmp.lt.s32.totalorder %s22, 1
      %s5062 = scalar_select %p5061, %s22, 1
      %p5063 = scmp.lt.s32.totalorder %s23, 0
      %s5064 = scalar_select %p5063, %s23, 0
      %s5065 = sadd.s32 %s5064, %s5062
      %s5066 = scalar_lea.vmem %s6, %s5065
      // Predicated region
      $region273: #{segnet_enc_forward.5} parent=31 // pred_check
        %p5067 = pneg %p113
      $region274: #{segnet_enc_forward.5} parent=31 // pred_check_branch
        %5069 = sbr.rel (%p5067) target = $region276
      $region275: #{segnet_enc_forward.5} parent=31 // pred_region
        _
      $region276: #{segnet_enc_forward.5} parent=31 // pred_fallthru
        _
      // Predicated region
      $region277: #{segnet_enc_forward.5} parent=31 // pred_check
        %p5070 = pneg %p141
      $region278: #{segnet_enc_forward.5} parent=31 // pred_check_branch
        %5072 = sbr.rel (%p5070) target = $region280
      $region279: #{segnet_enc_forward.5} parent=31 // pred_region
        _
      $region280: #{segnet_enc_forward.5} parent=31 // pred_fallthru
        _
      // Predicated region
      $region281: #{segnet_enc_forward.5} parent=31 // pred_check
        %p5073 = pneg %p169
      $region282: #{segnet_enc_forward.5} parent=31 // pred_check_branch
        %5075 = sbr.rel (%p5073) target = $region284
      $region283: #{segnet_enc_forward.5} parent=31 // pred_region
        _
      $region284: #{segnet_enc_forward.5} parent=31 // pred_fallthru
        _
    $region32: #{segnet_enc_forward.5} parent=5 // pred_fallthru
      _
    %p5076 = scmp.le.s32.totalorder 2, %s13
    // Predicated region
    $region285: #{segnet_enc_forward.5} parent=5 // pred_check
      %p5077 = pneg %p5076
    $region286: #{segnet_enc_forward.5} parent=5 // pred_check_branch
      %5079 = sbr.rel (%p5077) target = $region288
    $region287: #{segnet_enc_forward.5} parent=5 // pred_region
      %s5080 = ssub.s32 %s13, 2
      // Predicated region
      $region289: #{segnet_enc_forward.5} parent=287 // pred_check
        %p5081 = pneg %p119
      $region290: #{segnet_enc_forward.5} parent=287 // pred_check_branch
        %5083 = sbr.rel (%p5081) target = $region292
      $region291: #{segnet_enc_forward.5} parent=287 // pred_region
        %p5084 = scmp.lt.s32.totalorder %s24, 1
        %s5085 = scalar_select %p5084, %s24, 1
        %p5086 = scmp.lt.s32.totalorder %s25, 0
        %s5087 = scalar_select %p5086, %s25, 0
        %s5088 = smul.addr %s5087, 32
        %s5089 = smul.addr %s5085, 32
        %s5090 = sadd.s32 %s5088, %s5089
        %s5091 = smul.addr %s5090, 4
        %s5092 = scalar_lea.vmem %s4, %s5091
      $region292: #{segnet_enc_forward.5} parent=287 // pred_fallthru
        _
      // Predicated region
      $region293: #{segnet_enc_forward.5} parent=287 // pred_check
        %p5093 = pneg %p147
      $region294: #{segnet_enc_forward.5} parent=287 // pred_check_branch
        %5095 = sbr.rel (%p5093) target = $region296
      $region295: #{segnet_enc_forward.5} parent=287 // pred_region
        %p5096 = scmp.lt.s32.totalorder %s24, 1
        %s5097 = scalar_select %p5096, %s24, 1
        %p5098 = scmp.lt.s32.totalorder %s25, 0
        %s5099 = scalar_select %p5098, %s25, 0
        %s5100 = sadd.s32 %s5099, %s5097
        %s5101 = scalar_lea.vmem %s5, %s5100
      $region296: #{segnet_enc_forward.5} parent=287 // pred_fallthru
        _
      // Predicated region
      $region297: #{segnet_enc_forward.5} parent=287 // pred_check
        %p5102 = pneg %p175
      $region298: #{segnet_enc_forward.5} parent=287 // pred_check_branch
        %5104 = sbr.rel (%p5102) target = $region300
      $region299: #{segnet_enc_forward.5} parent=287 // pred_region
        %p5105 = scmp.lt.s32.totalorder %s24, 1
        %s5106 = scalar_select %p5105, %s24, 1
        %p5107 = scmp.lt.s32.totalorder %s25, 0
        %s5108 = scalar_select %p5107, %s25, 0
        %s5109 = sadd.s32 %s5108, %s5106
        %s5110 = scalar_lea.vmem %s6, %s5109
      $region300: #{segnet_enc_forward.5} parent=287 // pred_fallthru
        _
    $region288: #{segnet_enc_forward.5} parent=5 // pred_fallthru
      _
  $region6: #{segnet_enc_forward.5} parent=0 // loop_footer
    %s17 = sadd.s32 1, %s13
  $region7: #{segnet_enc_forward.5} parent=0 // loop_footer_branch
    %12 = sbr.rel target = $region3
  $region8: #{segnet_enc_forward.5} parent=0 // loop_exit
    _
  %5111 = vsyncmov [#allocation4]
  %s5112 = vpop.sfrf %5111
  %p5113 = scmp.eq.s32.totalorder %s5112, 0
  %p5114 = pneg %p5113
  %5116 = shalt.err (%p5114)
  %s5117 = scalar_lea.sflag [#allocation4], 1
  %5118 = vsyncmov %s5117
  %s5119 = vpop.sfrf %5118
  %p5120 = scmp.eq.s32.totalorder %s5119, 0
  %p5121 = pneg %p5120
  %5123 = shalt.err (%p5121)
  %s5124 = scalar_lea.sflag [#allocation4], 2
  %5125 = vsyncmov %s5124
  %s5126 = vpop.sfrf %5125
  %p5127 = scmp.eq.s32.totalorder %s5126, 0
  %p5128 = pneg %p5127
  %5130 = shalt.err (%p5128)
  %s5131 = scalar_lea.sflag [#allocation4], 3
  %5132 = vsyncmov %s5131
  %s5133 = vpop.sfrf %5132
  %p5134 = scmp.eq.s32.totalorder %s5133, 0
  %p5135 = pneg %p5134
  %5137 = shalt.err (%p5135)
  %s5138 = scalar_lea.sflag [#allocation4], 4
  %5139 = vsyncmov %s5138
  %s5140 = vpop.sfrf %5139
  %p5141 = scmp.eq.s32.totalorder %s5140, 0
  %p5142 = pneg %p5141
  %5144 = shalt.err (%p5142)
  %s5145 = scalar_lea.sflag [#allocation4], 5
  %5146 = vsyncmov %s5145
  %s5147 = vpop.sfrf %5146
  %p5148 = scmp.eq.s32.totalorder %s5147, 0
  %p5149 = pneg %p5148
  %5151 = shalt.err (%p5149)

</llo_original>
